<compile_context>
chip_gen: v7x
topology: tpu7x:2x2x1
jax: 0.10.0
libtpu: 0.0.40
codegen_flags: <defaults>
</compile_context>

<pallas_src>
import jax
import jax.numpy as jnp
from jax.experimental import pallas as pl
from jax.experimental.pallas import tpu as pltpu

BN_EPS = 1e-5


def _double_conv_kernel(x_ref, w1_ref, g1_ref, beta1_ref,
                        w2_ref, g2_ref, beta2_ref,
                        o_ref, xpad_ref, hpad_ref):
    """Fused (conv3x3 => BN(train) => ReLU) * 2.

    x_ref    : (N, H, W, Cin)            NHWC input (f32, VMEM)
    w1_ref   : (9*Cin, Cout)             stage-1 conv weights, im2col layout
    g1/beta1 : (1, Cout)                 stage-1 BN gamma / beta
    w2_ref   : (9*Cout, Cout)            stage-2 conv weights, im2col layout
    g2/beta2 : (1, Cout)                 stage-2 BN gamma / beta
    o_ref    : (N*H, W*Cout)             lane-dense output (reshaped in wrapper)
    xpad_ref : (N, H+2, W+2, Cin)        VMEM scratch, zero-padded stage-1 input
    hpad_ref : (N, H+2, W+2, Cout)       VMEM scratch, zero-padded stage-1 output
    """
    n, h, w, cin = x_ref.shape
    cout = w1_ref.shape[-1]

    def conv_bn_relu(pad_ref, w_mat_ref, g_ref, b_ref, c_in):
        # im2col: concatenate the 9 shifted slices along the lane axis and do a
        # single (N*H*W, 9*c_in) @ (9*c_in, cout) MXU matmul (f32 accumulation).
        cols = []
        for kh in range(3):
            for kw in range(3):
                cols.append(
                    pad_ref[:, kh:kh + h, kw:kw + w, :].reshape(n * h * w, c_in))
        patches = jnp.concatenate(cols, axis=-1)               # (N*H*W, 9*c_in)
        acc = jnp.dot(patches, w_mat_ref[...],
                      preferred_element_type=jnp.float32)      # (N*H*W, cout)

        # Conv bias intentionally omitted: training-mode BN subtracts the batch
        # mean, which cancels any per-channel constant exactly.

        # BatchNorm2d (training mode, biased variance) folded to scale/shift.
        inv_m = 1.0 / float(n * h * w)
        mean = jnp.sum(acc, axis=0, keepdims=True) * inv_m           # (1, cout)
        ex2 = jnp.sum(acc * acc, axis=0, keepdims=True) * inv_m      # (1, cout)
        var = ex2 - mean * mean
        scale = g_ref[...] * jax.lax.rsqrt(var + BN_EPS)             # (1, cout)
        shift = b_ref[...] - mean * scale                            # (1, cout)

        # Fused affine + ReLU in a single elementwise pass.
        return jnp.maximum(acc * scale + shift, 0.0)                 # (N*H*W, cout)

    # ---- stage 1: pad the input into a zeroed VMEM scratch (implicit padding) ----
    xpad_ref[...] = jnp.zeros(xpad_ref.shape, xpad_ref.dtype)
    xpad_ref[:, 1:1 + h, 1:1 + w, :] = x_ref[...]
    y1 = conv_bn_relu(xpad_ref, w1_ref, g1_ref, beta1_ref, cin)

    # ---- stage 2: stage-1 activation stays in VMEM, re-padded in scratch ----
    hpad_ref[...] = jnp.zeros(hpad_ref.shape, hpad_ref.dtype)
    hpad_ref[:, 1:1 + h, 1:1 + w, :] = y1.reshape(n, h, w, cout)
    y2 = conv_bn_relu(hpad_ref, w2_ref, g2_ref, beta2_ref, cout)

    # ---- lane-dense store: pack (N*H*W, Cout) -> (N*H, W*Cout) so the output
    # minor dim is W*Cout (=128 here) instead of Cout (=8): unmasked stores. ----
    y2b = y2.reshape(n * h, w, cout)
    o_ref[...] = jnp.concatenate([y2b[:, i, :] for i in range(w)], axis=-1)


def _double_conv_nhwc(x_nhwc, params):
    """Native NHWC entry point (no layout transposes). x_nhwc: (N,H,W,Cin)."""
    (w1, _b1, g1, beta1), (w2, _b2, g2, beta2) = params
    n, h, w, cin = x_nhwc.shape
    cout = w1.shape[-1]

    # Weights reshaped once to the im2col layout (kh, kw, cin) -> rows.
    w1m = w1.reshape(9 * cin, cout)
    w2m = w2.reshape(9 * cout, cout)

    vmem = pl.BlockSpec(memory_space=pltpu.MemorySpace.VMEM)
    out = pl.pallas_call(
        _double_conv_kernel,
        out_shape=jax.ShapeDtypeStruct((n * h, w * cout), jnp.float32),
        in_specs=[vmem] * 7,
        out_specs=vmem,
        scratch_shapes=[
            pltpu.VMEM((n, h + 2, w + 2, cin), jnp.float32),
            pltpu.VMEM((n, h + 2, w + 2, cout), jnp.float32),
        ],
    )(x_nhwc.astype(jnp.float32), w1m, g1, beta1, w2m, g2, beta2)

    return out.reshape(n, h, w, cout)


double_conv_forward_nhwc = jax.jit(_double_conv_nhwc)


@jax.jit
def double_conv_forward(x_nchw, params):
    """PyTorch-compatible NCHW interface. params = ((w,b,g,beta), (w,b,g,beta))."""
    x = jnp.transpose(x_nchw, (0, 2, 3, 1)).astype(jnp.float32)   # NCHW -> NHWC
    y = _double_conv_nhwc(x, params)
    return jnp.transpose(y, (0, 3, 1, 2))                         # NHWC -> NCHW


def init_params(key, in_ch, out_ch):
    """Deterministic synthetic parameters (conv weights in (3,3,Cin,Cout) layout).

    Conv biases are kept in the param tree to mirror nn.Conv2d, but the kernel
    skips them (exactly cancelled by training-mode BatchNorm).
    """
    keys = jax.random.split(key, 8)

    def conv_init(kw, kb, cin, cout):
        w = 0.1 * jax.random.normal(kw, (3, 3, cin, cout), jnp.float32)
        b = 0.1 * jax.random.normal(kb, (1, cout), jnp.float32)
        return w, b

    def bn_init(kg, kb, cout):
        g = 1.0 + 0.1 * jax.random.normal(kg, (1, cout), jnp.float32)
        be = 0.1 * jax.random.normal(kb, (1, cout), jnp.float32)
        return g, be

    w1, b1 = conv_init(keys[0], keys[1], in_ch, out_ch)
    g1, beta1 = bn_init(keys[2], keys[3], out_ch)
    w2, b2 = conv_init(keys[4], keys[5], out_ch, out_ch)
    g2, beta2 = bn_init(keys[6], keys[7], out_ch)
    return ((w1, b1, g1, beta1), (w2, b2, g2, beta2))


def _reference(x_nchw, params):
    """Pure-JAX reference (lax conv + bias + training-mode BN + ReLU)."""
    x = x_nchw.astype(jnp.float32)
    for (w, b, g, beta) in params:
        y = jax.lax.conv_general_dilated(
            x, w, window_strides=(1, 1), padding="SAME",
            dimension_numbers=("NCHW", "HWIO", "NCHW"),
        ) + b.reshape(1, -1, 1, 1)
        mean = jnp.mean(y, axis=(0, 2, 3), keepdims=True)
        var = jnp.mean((y - mean) ** 2, axis=(0, 2, 3), keepdims=True)
        y = (y - mean) * jax.lax.rsqrt(var + BN_EPS)
        y = y * g.reshape(1, -1, 1, 1) + beta.reshape(1, -1, 1, 1)
        x = jnp.maximum(y, 0.0)
    return x


if __name__ == "__main__":
    key = jax.random.PRNGKey(0)
    k_x, k_p = jax.random.split(key)

    N, IN_CH, OUT_CH, H, W = 2, 4, 8, 16, 16   # W * OUT_CH = 128 -> lane-dense out
    x = jax.random.normal(k_x, (N, IN_CH, H, W), jnp.float32)  # NCHW like PyTorch
    params = init_params(k_p, IN_CH, OUT_CH)

    out = double_conv_forward(x, params)
    out = jax.block_until_ready(out)

    ref = _reference(x, params)
    assert out.shape == (N, OUT_CH, H, W), out.shape
    assert jnp.allclose(out, ref, atol=1e-4, rtol=1e-4), (
        float(jnp.max(jnp.abs(out - ref)))
    )
    print("KERNEL_OK")
</pallas_src>

<mosaic_0001>
module attributes {stable_mosaic.version = 11 : i64} {
  func.func @_double_conv_kernel(%arg0: memref<2x16x16x4xf32, #tpu.memory_space<vmem>>, %arg1: memref<36x8xf32, #tpu.memory_space<vmem>>, %arg2: memref<1x8xf32, #tpu.memory_space<vmem>>, %arg3: memref<1x8xf32, #tpu.memory_space<vmem>>, %arg4: memref<72x8xf32, #tpu.memory_space<vmem>>, %arg5: memref<1x8xf32, #tpu.memory_space<vmem>>, %arg6: memref<1x8xf32, #tpu.memory_space<vmem>>, %arg7: memref<32x128xf32, #tpu.memory_space<vmem>>, %arg8: memref<2x18x18x4xf32, #tpu.memory_space<vmem>>, %arg9: memref<2x18x18x8xf32, #tpu.memory_space<vmem>>) attributes {dimension_semantics = [], scalar_prefetch = 0 : i64, scratch_operands = 2 : i64, tpu.core_type = #tpu.core_type<tc>} {
    %cst = arith.constant 0.000000e+00 : f32
    %0 = vector.broadcast %cst : f32 to vector<2x18x18x4xf32>
    %c0 = arith.constant 0 : index
    %c0_0 = arith.constant 0 : index
    %c0_1 = arith.constant 0 : index
    %c0_2 = arith.constant 0 : index
    %1 = vector.load %arg8[%c0, %c0_0, %c0_1, %c0_2] : memref<2x18x18x4xf32, #tpu.memory_space<vmem>>, vector<2x18x18x4xf32>
    tpu.vector_store %arg8[%c0, %c0_0, %c0_1, %c0_2], %0 {strides = array<i32>} : memref<2x18x18x4xf32, #tpu.memory_space<vmem>>, vector<2x18x18x4xf32>,
    %c0_3 = arith.constant 0 : index
    %c0_4 = arith.constant 0 : index
    %c0_5 = arith.constant 0 : index
    %c0_6 = arith.constant 0 : index
    %2 = vector.load %arg0[%c0_3, %c0_4, %c0_5, %c0_6] : memref<2x16x16x4xf32, #tpu.memory_space<vmem>>, vector<2x16x16x4xf32>
    %c0_7 = arith.constant 0 : index
    %c1 = arith.constant 1 : index
    %c1_8 = arith.constant 1 : index
    %c0_9 = arith.constant 0 : index
    %3 = vector.load %arg8[%c0_7, %c1, %c1_8, %c0_9] : memref<2x18x18x4xf32, #tpu.memory_space<vmem>>, vector<2x16x16x4xf32>
    tpu.vector_store %arg8[%c0_7, %c1, %c1_8, %c0_9], %2 {strides = array<i32>} : memref<2x18x18x4xf32, #tpu.memory_space<vmem>>, vector<2x16x16x4xf32>,
    %c0_10 = arith.constant 0 : index
    %c0_11 = arith.constant 0 : index
    %c0_12 = arith.constant 0 : index
    %c0_13 = arith.constant 0 : index
    %4 = vector.load %arg8[%c0_10, %c0_11, %c0_12, %c0_13] : memref<2x18x18x4xf32, #tpu.memory_space<vmem>>, vector<2x16x16x4xf32>
    %5 = vector.shape_cast %4 : vector<2x16x16x4xf32> to vector<512x4xf32>
    %c0_14 = arith.constant 0 : index
    %c0_15 = arith.constant 0 : index
    %c1_16 = arith.constant 1 : index
    %c0_17 = arith.constant 0 : index
    %6 = vector.load %arg8[%c0_14, %c0_15, %c1_16, %c0_17] : memref<2x18x18x4xf32, #tpu.memory_space<vmem>>, vector<2x16x16x4xf32>
    %7 = vector.shape_cast %6 : vector<2x16x16x4xf32> to vector<512x4xf32>
    %c0_18 = arith.constant 0 : index
    %c0_19 = arith.constant 0 : index
    %c2 = arith.constant 2 : index
    %c0_20 = arith.constant 0 : index
    %8 = vector.load %arg8[%c0_18, %c0_19, %c2, %c0_20] : memref<2x18x18x4xf32, #tpu.memory_space<vmem>>, vector<2x16x16x4xf32>
    %9 = vector.shape_cast %8 : vector<2x16x16x4xf32> to vector<512x4xf32>
    %c0_21 = arith.constant 0 : index
    %c1_22 = arith.constant 1 : index
    %c0_23 = arith.constant 0 : index
    %c0_24 = arith.constant 0 : index
    %10 = vector.load %arg8[%c0_21, %c1_22, %c0_23, %c0_24] : memref<2x18x18x4xf32, #tpu.memory_space<vmem>>, vector<2x16x16x4xf32>
    %11 = vector.shape_cast %10 : vector<2x16x16x4xf32> to vector<512x4xf32>
    %c0_25 = arith.constant 0 : index
    %c1_26 = arith.constant 1 : index
    %c1_27 = arith.constant 1 : index
    %c0_28 = arith.constant 0 : index
    %12 = vector.load %arg8[%c0_25, %c1_26, %c1_27, %c0_28] : memref<2x18x18x4xf32, #tpu.memory_space<vmem>>, vector<2x16x16x4xf32>
    %13 = vector.shape_cast %12 : vector<2x16x16x4xf32> to vector<512x4xf32>
    %c0_29 = arith.constant 0 : index
    %c1_30 = arith.constant 1 : index
    %c2_31 = arith.constant 2 : index
    %c0_32 = arith.constant 0 : index
    %14 = vector.load %arg8[%c0_29, %c1_30, %c2_31, %c0_32] : memref<2x18x18x4xf32, #tpu.memory_space<vmem>>, vector<2x16x16x4xf32>
    %15 = vector.shape_cast %14 : vector<2x16x16x4xf32> to vector<512x4xf32>
    %c0_33 = arith.constant 0 : index
    %c2_34 = arith.constant 2 : index
    %c0_35 = arith.constant 0 : index
    %c0_36 = arith.constant 0 : index
    %16 = vector.load %arg8[%c0_33, %c2_34, %c0_35, %c0_36] : memref<2x18x18x4xf32, #tpu.memory_space<vmem>>, vector<2x16x16x4xf32>
    %17 = vector.shape_cast %16 : vector<2x16x16x4xf32> to vector<512x4xf32>
    %c0_37 = arith.constant 0 : index
    %c2_38 = arith.constant 2 : index
    %c1_39 = arith.constant 1 : index
    %c0_40 = arith.constant 0 : index
    %18 = vector.load %arg8[%c0_37, %c2_38, %c1_39, %c0_40] : memref<2x18x18x4xf32, #tpu.memory_space<vmem>>, vector<2x16x16x4xf32>
    %19 = vector.shape_cast %18 : vector<2x16x16x4xf32> to vector<512x4xf32>
    %c0_41 = arith.constant 0 : index
    %c2_42 = arith.constant 2 : index
    %c2_43 = arith.constant 2 : index
    %c0_44 = arith.constant 0 : index
    %20 = vector.load %arg8[%c0_41, %c2_42, %c2_43, %c0_44] : memref<2x18x18x4xf32, #tpu.memory_space<vmem>>, vector<2x16x16x4xf32>
    %21 = vector.shape_cast %20 : vector<2x16x16x4xf32> to vector<512x4xf32>
    %22 = tpu.concatenate %5, %7, %9, %11, %13, %15, %17, %19, %21 in 1 : vector<512x4xf32>, vector<512x4xf32>, vector<512x4xf32>, vector<512x4xf32>, vector<512x4xf32>, vector<512x4xf32>, vector<512x4xf32>, vector<512x4xf32>, vector<512x4xf32> -> vector<512x36xf32>
    %c0_45 = arith.constant 0 : index
    %c0_46 = arith.constant 0 : index
    %23 = vector.load %arg1[%c0_45, %c0_46] : memref<36x8xf32, #tpu.memory_space<vmem>>, vector<36x8xf32>
    %cst_47 = arith.constant dense<0.000000e+00> : vector<512x8xf32>
    %24 = tpu.matmul %22, %23, %cst_47 {dimension_numbers = #tpu.dot_dimension_numbers<[1], [0], [0], [1], [0, 0, 1, 1], [], []>} : vector<512x36xf32>, vector<36x8xf32>, vector<512x8xf32> -> vector<512x8xf32>
    %cst_48 = arith.constant dense<0.000000e+00> : vector<8xf32>
    %25 = vector.multi_reduction <add>, %24, %cst_48 [0] : vector<512x8xf32> to vector<8xf32>
    %26 = vector.shape_cast %25 : vector<8xf32> to vector<1x8xf32>
    %cst_49 = arith.constant 0.001953125 : f32
    %27 = vector.broadcast %cst_49 : f32 to vector<1x8xf32>
    %28 = arith.mulf %26, %27 : vector<1x8xf32>
    %29 = arith.mulf %24, %24 : vector<512x8xf32>
    %cst_50 = arith.constant dense<0.000000e+00> : vector<8xf32>
    %30 = vector.multi_reduction <add>, %29, %cst_50 [0] : vector<512x8xf32> to vector<8xf32>
    %31 = vector.shape_cast %30 : vector<8xf32> to vector<1x8xf32>
    %cst_51 = arith.constant 0.001953125 : f32
    %32 = vector.broadcast %cst_51 : f32 to vector<1x8xf32>
    %33 = arith.mulf %31, %32 : vector<1x8xf32>
    %34 = arith.mulf %28, %28 : vector<1x8xf32>
    %35 = arith.subf %33, %34 : vector<1x8xf32>
    %c0_52 = arith.constant 0 : index
    %c0_53 = arith.constant 0 : index
    %36 = vector.load %arg2[%c0_52, %c0_53] : memref<1x8xf32, #tpu.memory_space<vmem>>, vector<1x8xf32>
    %cst_54 = arith.constant 9.99999974E-6 : f32
    %37 = vector.broadcast %cst_54 : f32 to vector<1x8xf32>
    %38 = arith.addf %35, %37 : vector<1x8xf32>
    %39 = math.rsqrt %38 : vector<1x8xf32>
    %40 = arith.mulf %36, %39 : vector<1x8xf32>
    %c0_55 = arith.constant 0 : index
    %c0_56 = arith.constant 0 : index
    %41 = vector.load %arg3[%c0_55, %c0_56] : memref<1x8xf32, #tpu.memory_space<vmem>>, vector<1x8xf32>
    %42 = arith.mulf %28, %40 : vector<1x8xf32>
    %43 = arith.subf %41, %42 : vector<1x8xf32>
    %44 = vector.broadcast %40 : vector<1x8xf32> to vector<512x8xf32>
    %45 = arith.mulf %24, %44 : vector<512x8xf32>
    %46 = vector.broadcast %43 : vector<1x8xf32> to vector<512x8xf32>
    %47 = arith.addf %45, %46 : vector<512x8xf32>
    %cst_57 = arith.constant 0.000000e+00 : f32
    %48 = vector.broadcast %cst_57 : f32 to vector<512x8xf32>
    %49 = arith.maximumf %47, %48 : vector<512x8xf32>
    %cst_58 = arith.constant 0.000000e+00 : f32
    %50 = vector.broadcast %cst_58 : f32 to vector<2x18x18x8xf32>
    %c0_59 = arith.constant 0 : index
    %c0_60 = arith.constant 0 : index
    %c0_61 = arith.constant 0 : index
    %c0_62 = arith.constant 0 : index
    %51 = vector.load %arg9[%c0_59, %c0_60, %c0_61, %c0_62] : memref<2x18x18x8xf32, #tpu.memory_space<vmem>>, vector<2x18x18x8xf32>
    tpu.vector_store %arg9[%c0_59, %c0_60, %c0_61, %c0_62], %50 {strides = array<i32>} : memref<2x18x18x8xf32, #tpu.memory_space<vmem>>, vector<2x18x18x8xf32>,
    %52 = vector.shape_cast %49 : vector<512x8xf32> to vector<2x16x16x8xf32>
    %c0_63 = arith.constant 0 : index
    %c1_64 = arith.constant 1 : index
    %c1_65 = arith.constant 1 : index
    %c0_66 = arith.constant 0 : index
    %53 = vector.load %arg9[%c0_63, %c1_64, %c1_65, %c0_66] : memref<2x18x18x8xf32, #tpu.memory_space<vmem>>, vector<2x16x16x8xf32>
    tpu.vector_store %arg9[%c0_63, %c1_64, %c1_65, %c0_66], %52 {strides = array<i32>} : memref<2x18x18x8xf32, #tpu.memory_space<vmem>>, vector<2x16x16x8xf32>,
    %c0_67 = arith.constant 0 : index
    %c0_68 = arith.constant 0 : index
    %c0_69 = arith.constant 0 : index
    %c0_70 = arith.constant 0 : index
    %54 = vector.load %arg9[%c0_67, %c0_68, %c0_69, %c0_70] : memref<2x18x18x8xf32, #tpu.memory_space<vmem>>, vector<2x16x16x8xf32>
    %55 = vector.shape_cast %54 : vector<2x16x16x8xf32> to vector<512x8xf32>
    %c0_71 = arith.constant 0 : index
    %c0_72 = arith.constant 0 : index
    %c1_73 = arith.constant 1 : index
    %c0_74 = arith.constant 0 : index
    %56 = vector.load %arg9[%c0_71, %c0_72, %c1_73, %c0_74] : memref<2x18x18x8xf32, #tpu.memory_space<vmem>>, vector<2x16x16x8xf32>
    %57 = vector.shape_cast %56 : vector<2x16x16x8xf32> to vector<512x8xf32>
    %c0_75 = arith.constant 0 : index
    %c0_76 = arith.constant 0 : index
    %c2_77 = arith.constant 2 : index
    %c0_78 = arith.constant 0 : index
    %58 = vector.load %arg9[%c0_75, %c0_76, %c2_77, %c0_78] : memref<2x18x18x8xf32, #tpu.memory_space<vmem>>, vector<2x16x16x8xf32>
    %59 = vector.shape_cast %58 : vector<2x16x16x8xf32> to vector<512x8xf32>
    %c0_79 = arith.constant 0 : index
    %c1_80 = arith.constant 1 : index
    %c0_81 = arith.constant 0 : index
    %c0_82 = arith.constant 0 : index
    %60 = vector.load %arg9[%c0_79, %c1_80, %c0_81, %c0_82] : memref<2x18x18x8xf32, #tpu.memory_space<vmem>>, vector<2x16x16x8xf32>
    %61 = vector.shape_cast %60 : vector<2x16x16x8xf32> to vector<512x8xf32>
    %c0_83 = arith.constant 0 : index
    %c1_84 = arith.constant 1 : index
    %c1_85 = arith.constant 1 : index
    %c0_86 = arith.constant 0 : index
    %62 = vector.load %arg9[%c0_83, %c1_84, %c1_85, %c0_86] : memref<2x18x18x8xf32, #tpu.memory_space<vmem>>, vector<2x16x16x8xf32>
    %63 = vector.shape_cast %62 : vector<2x16x16x8xf32> to vector<512x8xf32>
    %c0_87 = arith.constant 0 : index
    %c1_88 = arith.constant 1 : index
    %c2_89 = arith.constant 2 : index
    %c0_90 = arith.constant 0 : index
    %64 = vector.load %arg9[%c0_87, %c1_88, %c2_89, %c0_90] : memref<2x18x18x8xf32, #tpu.memory_space<vmem>>, vector<2x16x16x8xf32>
    %65 = vector.shape_cast %64 : vector<2x16x16x8xf32> to vector<512x8xf32>
    %c0_91 = arith.constant 0 : index
    %c2_92 = arith.constant 2 : index
    %c0_93 = arith.constant 0 : index
    %c0_94 = arith.constant 0 : index
    %66 = vector.load %arg9[%c0_91, %c2_92, %c0_93, %c0_94] : memref<2x18x18x8xf32, #tpu.memory_space<vmem>>, vector<2x16x16x8xf32>
    %67 = vector.shape_cast %66 : vector<2x16x16x8xf32> to vector<512x8xf32>
    %c0_95 = arith.constant 0 : index
    %c2_96 = arith.constant 2 : index
    %c1_97 = arith.constant 1 : index
    %c0_98 = arith.constant 0 : index
    %68 = vector.load %arg9[%c0_95, %c2_96, %c1_97, %c0_98] : memref<2x18x18x8xf32, #tpu.memory_space<vmem>>, vector<2x16x16x8xf32>
    %69 = vector.shape_cast %68 : vector<2x16x16x8xf32> to vector<512x8xf32>
    %c0_99 = arith.constant 0 : index
    %c2_100 = arith.constant 2 : index
    %c2_101 = arith.constant 2 : index
    %c0_102 = arith.constant 0 : index
    %70 = vector.load %arg9[%c0_99, %c2_100, %c2_101, %c0_102] : memref<2x18x18x8xf32, #tpu.memory_space<vmem>>, vector<2x16x16x8xf32>
    %71 = vector.shape_cast %70 : vector<2x16x16x8xf32> to vector<512x8xf32>
    %72 = tpu.concatenate %55, %57, %59, %61, %63, %65, %67, %69, %71 in 1 : vector<512x8xf32>, vector<512x8xf32>, vector<512x8xf32>, vector<512x8xf32>, vector<512x8xf32>, vector<512x8xf32>, vector<512x8xf32>, vector<512x8xf32>, vector<512x8xf32> -> vector<512x72xf32>
    %c0_103 = arith.constant 0 : index
    %c0_104 = arith.constant 0 : index
    %73 = vector.load %arg4[%c0_103, %c0_104] : memref<72x8xf32, #tpu.memory_space<vmem>>, vector<72x8xf32>
    %cst_105 = arith.constant dense<0.000000e+00> : vector<512x8xf32>
    %74 = tpu.matmul %72, %73, %cst_105 {dimension_numbers = #tpu.dot_dimension_numbers<[1], [0], [0], [1], [0, 0, 1, 1], [], []>} : vector<512x72xf32>, vector<72x8xf32>, vector<512x8xf32> -> vector<512x8xf32>
    %cst_106 = arith.constant dense<0.000000e+00> : vector<8xf32>
    %75 = vector.multi_reduction <add>, %74, %cst_106 [0] : vector<512x8xf32> to vector<8xf32>
    %76 = vector.shape_cast %75 : vector<8xf32> to vector<1x8xf32>
    %cst_107 = arith.constant 0.001953125 : f32
    %77 = vector.broadcast %cst_107 : f32 to vector<1x8xf32>
    %78 = arith.mulf %76, %77 : vector<1x8xf32>
    %79 = arith.mulf %74, %74 : vector<512x8xf32>
    %cst_108 = arith.constant dense<0.000000e+00> : vector<8xf32>
    %80 = vector.multi_reduction <add>, %79, %cst_108 [0] : vector<512x8xf32> to vector<8xf32>
    %81 = vector.shape_cast %80 : vector<8xf32> to vector<1x8xf32>
    %cst_109 = arith.constant 0.001953125 : f32
    %82 = vector.broadcast %cst_109 : f32 to vector<1x8xf32>
    %83 = arith.mulf %81, %82 : vector<1x8xf32>
    %84 = arith.mulf %78, %78 : vector<1x8xf32>
    %85 = arith.subf %83, %84 : vector<1x8xf32>
    %c0_110 = arith.constant 0 : index
    %c0_111 = arith.constant 0 : index
    %86 = vector.load %arg5[%c0_110, %c0_111] : memref<1x8xf32, #tpu.memory_space<vmem>>, vector<1x8xf32>
    %cst_112 = arith.constant 9.99999974E-6 : f32
    %87 = vector.broadcast %cst_112 : f32 to vector<1x8xf32>
    %88 = arith.addf %85, %87 : vector<1x8xf32>
    %89 = math.rsqrt %88 : vector<1x8xf32>
    %90 = arith.mulf %86, %89 : vector<1x8xf32>
    %c0_113 = arith.constant 0 : index
    %c0_114 = arith.constant 0 : index
    %91 = vector.load %arg6[%c0_113, %c0_114] : memref<1x8xf32, #tpu.memory_space<vmem>>, vector<1x8xf32>
    %92 = arith.mulf %78, %90 : vector<1x8xf32>
    %93 = arith.subf %91, %92 : vector<1x8xf32>
    %94 = vector.broadcast %90 : vector<1x8xf32> to vector<512x8xf32>
    %95 = arith.mulf %74, %94 : vector<512x8xf32>
    %96 = vector.broadcast %93 : vector<1x8xf32> to vector<512x8xf32>
    %97 = arith.addf %95, %96 : vector<512x8xf32>
    %cst_115 = arith.constant 0.000000e+00 : f32
    %98 = vector.broadcast %cst_115 : f32 to vector<512x8xf32>
    %99 = arith.maximumf %97, %98 : vector<512x8xf32>
    %100 = vector.shape_cast %99 : vector<512x8xf32> to vector<32x16x8xf32>
    %101 = vector.extract_strided_slice %100 {offsets = [0, 0, 0], sizes = [32, 1, 8], strides = [1, 1, 1]} : vector<32x16x8xf32> to vector<32x1x8xf32>
    %102 = vector.shape_cast %101 : vector<32x1x8xf32> to vector<32x8xf32>
    %103 = vector.extract_strided_slice %100 {offsets = [0, 1, 0], sizes = [32, 1, 8], strides = [1, 1, 1]} : vector<32x16x8xf32> to vector<32x1x8xf32>
    %104 = vector.shape_cast %103 : vector<32x1x8xf32> to vector<32x8xf32>
    %105 = vector.extract_strided_slice %100 {offsets = [0, 2, 0], sizes = [32, 1, 8], strides = [1, 1, 1]} : vector<32x16x8xf32> to vector<32x1x8xf32>
    %106 = vector.shape_cast %105 : vector<32x1x8xf32> to vector<32x8xf32>
    %107 = vector.extract_strided_slice %100 {offsets = [0, 3, 0], sizes = [32, 1, 8], strides = [1, 1, 1]} : vector<32x16x8xf32> to vector<32x1x8xf32>
    %108 = vector.shape_cast %107 : vector<32x1x8xf32> to vector<32x8xf32>
    %109 = vector.extract_strided_slice %100 {offsets = [0, 4, 0], sizes = [32, 1, 8], strides = [1, 1, 1]} : vector<32x16x8xf32> to vector<32x1x8xf32>
    %110 = vector.shape_cast %109 : vector<32x1x8xf32> to vector<32x8xf32>
    %111 = vector.extract_strided_slice %100 {offsets = [0, 5, 0], sizes = [32, 1, 8], strides = [1, 1, 1]} : vector<32x16x8xf32> to vector<32x1x8xf32>
    %112 = vector.shape_cast %111 : vector<32x1x8xf32> to vector<32x8xf32>
    %113 = vector.extract_strided_slice %100 {offsets = [0, 6, 0], sizes = [32, 1, 8], strides = [1, 1, 1]} : vector<32x16x8xf32> to vector<32x1x8xf32>
    %114 = vector.shape_cast %113 : vector<32x1x8xf32> to vector<32x8xf32>
    %115 = vector.extract_strided_slice %100 {offsets = [0, 7, 0], sizes = [32, 1, 8], strides = [1, 1, 1]} : vector<32x16x8xf32> to vector<32x1x8xf32>
    %116 = vector.shape_cast %115 : vector<32x1x8xf32> to vector<32x8xf32>
    %117 = vector.extract_strided_slice %100 {offsets = [0, 8, 0], sizes = [32, 1, 8], strides = [1, 1, 1]} : vector<32x16x8xf32> to vector<32x1x8xf32>
    %118 = vector.shape_cast %117 : vector<32x1x8xf32> to vector<32x8xf32>
    %119 = vector.extract_strided_slice %100 {offsets = [0, 9, 0], sizes = [32, 1, 8], strides = [1, 1, 1]} : vector<32x16x8xf32> to vector<32x1x8xf32>
    %120 = vector.shape_cast %119 : vector<32x1x8xf32> to vector<32x8xf32>
    %121 = vector.extract_strided_slice %100 {offsets = [0, 10, 0], sizes = [32, 1, 8], strides = [1, 1, 1]} : vector<32x16x8xf32> to vector<32x1x8xf32>
    %122 = vector.shape_cast %121 : vector<32x1x8xf32> to vector<32x8xf32>
    %123 = vector.extract_strided_slice %100 {offsets = [0, 11, 0], sizes = [32, 1, 8], strides = [1, 1, 1]} : vector<32x16x8xf32> to vector<32x1x8xf32>
    %124 = vector.shape_cast %123 : vector<32x1x8xf32> to vector<32x8xf32>
    %125 = vector.extract_strided_slice %100 {offsets = [0, 12, 0], sizes = [32, 1, 8], strides = [1, 1, 1]} : vector<32x16x8xf32> to vector<32x1x8xf32>
    %126 = vector.shape_cast %125 : vector<32x1x8xf32> to vector<32x8xf32>
    %127 = vector.extract_strided_slice %100 {offsets = [0, 13, 0], sizes = [32, 1, 8], strides = [1, 1, 1]} : vector<32x16x8xf32> to vector<32x1x8xf32>
    %128 = vector.shape_cast %127 : vector<32x1x8xf32> to vector<32x8xf32>
    %129 = vector.extract_strided_slice %100 {offsets = [0, 14, 0], sizes = [32, 1, 8], strides = [1, 1, 1]} : vector<32x16x8xf32> to vector<32x1x8xf32>
    %130 = vector.shape_cast %129 : vector<32x1x8xf32> to vector<32x8xf32>
    %131 = vector.extract_strided_slice %100 {offsets = [0, 15, 0], sizes = [32, 1, 8], strides = [1, 1, 1]} : vector<32x16x8xf32> to vector<32x1x8xf32>
    %132 = vector.shape_cast %131 : vector<32x1x8xf32> to vector<32x8xf32>
    %133 = tpu.concatenate %102, %104, %106, %108, %110, %112, %114, %116, %118, %120, %122, %124, %126, %128, %130, %132 in 1 : vector<32x8xf32>, vector<32x8xf32>, vector<32x8xf32>, vector<32x8xf32>, vector<32x8xf32>, vector<32x8xf32>, vector<32x8xf32>, vector<32x8xf32>, vector<32x8xf32>, vector<32x8xf32>, vector<32x8xf32>, vector<32x8xf32>, vector<32x8xf32>, vector<32x8xf32>, vector<32x8xf32>, vector<32x8xf32> -> vector<32x128xf32>
    %c0_116 = arith.constant 0 : index
    %c0_117 = arith.constant 0 : index
    %134 = vector.load %arg7[%c0_116, %c0_117] : memref<32x128xf32, #tpu.memory_space<vmem>>, vector<32x128xf32>
    tpu.vector_store %arg7[%c0_116, %c0_117], %133 {strides = array<i32>} : memref<32x128xf32, #tpu.memory_space<vmem>>, vector<32x128xf32>,
    return
  }
}

</mosaic_0001>

<llo_original>
// kernel: double_conv_forward.1
$region0: #{double_conv_forward.1}
  #allocation0 [shape = 'u32[]', space=smem, size = 0x4, offset = 0x4, fixed_abs, tag = 'smem constant byte address 0x4 - core index']
  #allocation1 [shape = 'u32[144,128]{1,0:T(1,128)}', space=vmem, size = 0x12000, scoped, tag = 'internal scratch']
  #allocation2 [shape = 'f32[2,18,18,4]{3,2,1,0:T(8,128)}', space=vmem, size = 0x6c000, scoped, tag = 'scratch operand']
  #allocation3 [shape = 'f32[2,18,18,8]{3,2,1,0:T(8,128)}', space=vmem, size = 0x6c000, scoped, tag = 'scratch operand']
  %s0 = inlined_call_operand.vmem [shape: f32[2,16,16,4], index: 0, kind: input, shape index: {}]
  %s1 = inlined_call_operand.vmem [shape: f32[36,8], index: 1, kind: input, shape index: {}]
  %s2 = inlined_call_operand.vmem [shape: f32[1,8], index: 2, kind: input, shape index: {}]
  %s3 = inlined_call_operand.vmem [shape: f32[1,8], index: 3, kind: input, shape index: {}]
  %s4 = inlined_call_operand.vmem [shape: f32[72,8], index: 4, kind: input, shape index: {}]
  %s5 = inlined_call_operand.vmem [shape: f32[1,8], index: 5, kind: input, shape index: {}]
  %s6 = inlined_call_operand.vmem [shape: f32[1,8], index: 6, kind: input, shape index: {}]
  %s7 = inlined_call_operand.vmem [shape: f32[32,128], index: 7, kind: output, shape index: {}]
  %s8 = sld [smem:[#allocation0]]
  $region38: #{double_conv_forward.1} parent=0
    _
  %s10 = ssub.s32 1, %s8
  %s11 = scalar_select 0, %s10, %s8
  // Predicated region
  $region2: #{double_conv_forward.1} parent=0 // pred_check
    _
  $region3: #{double_conv_forward.1} parent=0 // pred_check_branch
    %13 = sbr.rel (0) target = $region5
  $region4: #{double_conv_forward.1} parent=0 // pred_region
    _
  $region5: #{double_conv_forward.1} parent=0 // pred_fallthru
    _
  // Predicated region
  $region6: #{double_conv_forward.1} parent=0 // pred_check
    _
  $region7: #{double_conv_forward.1} parent=0 // pred_check_branch
    %15 = sbr.rel (0) target = $region9
  $region8: #{double_conv_forward.1} parent=0 // pred_region
    _
  $region9: #{double_conv_forward.1} parent=0 // pred_fallthru
    _
  // Predicated region
  $region10: #{double_conv_forward.1} parent=0 // pred_check
    _
  $region11: #{double_conv_forward.1} parent=0 // pred_check_branch
    %17 = sbr.rel (0) target = $region13
  $region12: #{double_conv_forward.1} parent=0 // pred_region
    _
  $region13: #{double_conv_forward.1} parent=0 // pred_fallthru
    _
  // Predicated region
  $region14: #{double_conv_forward.1} parent=0 // pred_check
    _
  $region15: #{double_conv_forward.1} parent=0 // pred_check_branch
    %19 = sbr.rel (0) target = $region17
  $region16: #{double_conv_forward.1} parent=0 // pred_region
    _
  $region17: #{double_conv_forward.1} parent=0 // pred_fallthru
    _
  // Predicated region
  $region18: #{double_conv_forward.1} parent=0 // pred_check
    _
  $region19: #{double_conv_forward.1} parent=0 // pred_check_branch
    %21 = sbr.rel (0) target = $region21
  $region20: #{double_conv_forward.1} parent=0 // pred_region
    _
  $region21: #{double_conv_forward.1} parent=0 // pred_fallthru
    _
  // Predicated region
  $region22: #{double_conv_forward.1} parent=0 // pred_check
    _
  $region23: #{double_conv_forward.1} parent=0 // pred_check_branch
    %23 = sbr.rel (0) target = $region25
  $region24: #{double_conv_forward.1} parent=0 // pred_region
    _
  $region25: #{double_conv_forward.1} parent=0 // pred_fallthru
    _
  // Predicated region
  $region26: #{double_conv_forward.1} parent=0 // pred_check
    _
  $region27: #{double_conv_forward.1} parent=0 // pred_check_branch
    %25 = sbr.rel (0) target = $region29
  $region28: #{double_conv_forward.1} parent=0 // pred_region
    _
  $region29: #{double_conv_forward.1} parent=0 // pred_fallthru
    _
  %vm26 = vcmask 31744
  %27 = vst.msk [vmem:[#allocation2] sm:$0xff] %vm26, 0.0
  %28 = vst.msk [vmem:[#allocation2 + $0x8] sm:$0xff] %vm26, 0.0
  %vm29 = vcmask 25600
  %30 = vst.msk [vmem:[#allocation2 + $0x10] sm:$0x3] %vm29, 0.0
  %31 = vst.msk [vmem:[#allocation2 + $0x18] sm:$0xff] %vm26, 0.0
  %32 = vst.msk [vmem:[#allocation2 + $0x20] sm:$0xff] %vm26, 0.0
  %33 = vst.msk [vmem:[#allocation2 + $0x28] sm:$0x3] %vm29, 0.0
  %34 = vst.msk [vmem:[#allocation2 + $0x30] sm:$0xff] %vm26, 0.0
  %35 = vst.msk [vmem:[#allocation2 + $0x38] sm:$0xff] %vm26, 0.0
  %36 = vst.msk [vmem:[#allocation2 + $0x40] sm:$0x3] %vm29, 0.0
  %37 = vst.msk [vmem:[#allocation2 + $0x48] sm:$0xff] %vm26, 0.0
  %38 = vst.msk [vmem:[#allocation2 + $0x50] sm:$0xff] %vm26, 0.0
  %39 = vst.msk [vmem:[#allocation2 + $0x58] sm:$0x3] %vm29, 0.0
  %40 = vst.msk [vmem:[#allocation2 + $0x60] sm:$0xff] %vm26, 0.0
  %41 = vst.msk [vmem:[#allocation2 + $0x68] sm:$0xff] %vm26, 0.0
  %42 = vst.msk [vmem:[#allocation2 + $0x70] sm:$0x3] %vm29, 0.0
  %43 = vst.msk [vmem:[#allocation2 + $0x78] sm:$0xff] %vm26, 0.0
  %44 = vst.msk [vmem:[#allocation2 + $0x80] sm:$0xff] %vm26, 0.0
  %45 = vst.msk [vmem:[#allocation2 + $0x88] sm:$0x3] %vm29, 0.0
  %46 = vst.msk [vmem:[#allocation2 + $0x90] sm:$0xff] %vm26, 0.0
  %47 = vst.msk [vmem:[#allocation2 + $0x98] sm:$0xff] %vm26, 0.0
  %48 = vst.msk [vmem:[#allocation2 + $0xa0] sm:$0x3] %vm29, 0.0
  %49 = vst.msk [vmem:[#allocation2 + $0xa8] sm:$0xff] %vm26, 0.0
  %50 = vst.msk [vmem:[#allocation2 + $0xb0] sm:$0xff] %vm26, 0.0
  %51 = vst.msk [vmem:[#allocation2 + $0xb8] sm:$0x3] %vm29, 0.0
  %52 = vst.msk [vmem:[#allocation2 + $0xc0] sm:$0xff] %vm26, 0.0
  %53 = vst.msk [vmem:[#allocation2 + $0xc8] sm:$0xff] %vm26, 0.0
  %54 = vst.msk [vmem:[#allocation2 + $0xd0] sm:$0x3] %vm29, 0.0
  %55 = vst.msk [vmem:[#allocation2 + $0xd8] sm:$0xff] %vm26, 0.0
  %56 = vst.msk [vmem:[#allocation2 + $0xe0] sm:$0xff] %vm26, 0.0
  %57 = vst.msk [vmem:[#allocation2 + $0xe8] sm:$0x3] %vm29, 0.0
  %58 = vst.msk [vmem:[#allocation2 + $0xf0] sm:$0xff] %vm26, 0.0
  %59 = vst.msk [vmem:[#allocation2 + $0xf8] sm:$0xff] %vm26, 0.0
  %60 = vst.msk [vmem:[#allocation2 + $0x100] sm:$0x3] %vm29, 0.0
  %61 = vst.msk [vmem:[#allocation2 + $0x108] sm:$0xff] %vm26, 0.0
  %62 = vst.msk [vmem:[#allocation2 + $0x110] sm:$0xff] %vm26, 0.0
  %63 = vst.msk [vmem:[#allocation2 + $0x118] sm:$0x3] %vm29, 0.0
  %64 = vst.msk [vmem:[#allocation2 + $0x120] sm:$0xff] %vm26, 0.0
  %65 = vst.msk [vmem:[#allocation2 + $0x128] sm:$0xff] %vm26, 0.0
  %66 = vst.msk [vmem:[#allocation2 + $0x130] sm:$0x3] %vm29, 0.0
  %67 = vst.msk [vmem:[#allocation2 + $0x138] sm:$0xff] %vm26, 0.0
  %68 = vst.msk [vmem:[#allocation2 + $0x140] sm:$0xff] %vm26, 0.0
  %69 = vst.msk [vmem:[#allocation2 + $0x148] sm:$0x3] %vm29, 0.0
  %70 = vst.msk [vmem:[#allocation2 + $0x150] sm:$0xff] %vm26, 0.0
  %71 = vst.msk [vmem:[#allocation2 + $0x158] sm:$0xff] %vm26, 0.0
  %72 = vst.msk [vmem:[#allocation2 + $0x160] sm:$0x3] %vm29, 0.0
  %73 = vst.msk [vmem:[#allocation2 + $0x168] sm:$0xff] %vm26, 0.0
  %74 = vst.msk [vmem:[#allocation2 + $0x170] sm:$0xff] %vm26, 0.0
  %75 = vst.msk [vmem:[#allocation2 + $0x178] sm:$0x3] %vm29, 0.0
  %76 = vst.msk [vmem:[#allocation2 + $0x180] sm:$0xff] %vm26, 0.0
  %77 = vst.msk [vmem:[#allocation2 + $0x188] sm:$0xff] %vm26, 0.0
  %78 = vst.msk [vmem:[#allocation2 + $0x190] sm:$0x3] %vm29, 0.0
  %79 = vst.msk [vmem:[#allocation2 + $0x198] sm:$0xff] %vm26, 0.0
  %80 = vst.msk [vmem:[#allocation2 + $0x1a0] sm:$0xff] %vm26, 0.0
  %81 = vst.msk [vmem:[#allocation2 + $0x1a8] sm:$0x3] %vm29, 0.0
  %82 = vst.msk [vmem:[#allocation2 + $0x1b0] sm:$0xff] %vm26, 0.0
  %83 = vst.msk [vmem:[#allocation2 + $0x1b8] sm:$0xff] %vm26, 0.0
  %84 = vst.msk [vmem:[#allocation2 + $0x1c0] sm:$0x3] %vm29, 0.0
  %85 = vst.msk [vmem:[#allocation2 + $0x1c8] sm:$0xff] %vm26, 0.0
  %86 = vst.msk [vmem:[#allocation2 + $0x1d0] sm:$0xff] %vm26, 0.0
  %87 = vst.msk [vmem:[#allocation2 + $0x1d8] sm:$0x3] %vm29, 0.0
  %88 = vst.msk [vmem:[#allocation2 + $0x1e0] sm:$0xff] %vm26, 0.0
  %89 = vst.msk [vmem:[#allocation2 + $0x1e8] sm:$0xff] %vm26, 0.0
  %90 = vst.msk [vmem:[#allocation2 + $0x1f0] sm:$0x3] %vm29, 0.0
  %91 = vst.msk [vmem:[#allocation2 + $0x1f8] sm:$0xff] %vm26, 0.0
  %92 = vst.msk [vmem:[#allocation2 + $0x200] sm:$0xff] %vm26, 0.0
  %93 = vst.msk [vmem:[#allocation2 + $0x208] sm:$0x3] %vm29, 0.0
  %94 = vst.msk [vmem:[#allocation2 + $0x210] sm:$0xff] %vm26, 0.0
  %95 = vst.msk [vmem:[#allocation2 + $0x218] sm:$0xff] %vm26, 0.0
  %96 = vst.msk [vmem:[#allocation2 + $0x220] sm:$0x3] %vm29, 0.0
  %97 = vst.msk [vmem:[#allocation2 + $0x228] sm:$0xff] %vm26, 0.0
  %98 = vst.msk [vmem:[#allocation2 + $0x230] sm:$0xff] %vm26, 0.0
  %99 = vst.msk [vmem:[#allocation2 + $0x238] sm:$0x3] %vm29, 0.0
  %100 = vst.msk [vmem:[#allocation2 + $0x240] sm:$0xff] %vm26, 0.0
  %101 = vst.msk [vmem:[#allocation2 + $0x248] sm:$0xff] %vm26, 0.0
  %102 = vst.msk [vmem:[#allocation2 + $0x250] sm:$0x3] %vm29, 0.0
  %103 = vst.msk [vmem:[#allocation2 + $0x258] sm:$0xff] %vm26, 0.0
  %104 = vst.msk [vmem:[#allocation2 + $0x260] sm:$0xff] %vm26, 0.0
  %105 = vst.msk [vmem:[#allocation2 + $0x268] sm:$0x3] %vm29, 0.0
  %106 = vst.msk [vmem:[#allocation2 + $0x270] sm:$0xff] %vm26, 0.0
  %107 = vst.msk [vmem:[#allocation2 + $0x278] sm:$0xff] %vm26, 0.0
  %108 = vst.msk [vmem:[#allocation2 + $0x280] sm:$0x3] %vm29, 0.0
  %109 = vst.msk [vmem:[#allocation2 + $0x288] sm:$0xff] %vm26, 0.0
  %110 = vst.msk [vmem:[#allocation2 + $0x290] sm:$0xff] %vm26, 0.0
  %111 = vst.msk [vmem:[#allocation2 + $0x298] sm:$0x3] %vm29, 0.0
  %112 = vst.msk [vmem:[#allocation2 + $0x2a0] sm:$0xff] %vm26, 0.0
  %113 = vst.msk [vmem:[#allocation2 + $0x2a8] sm:$0xff] %vm26, 0.0
  %114 = vst.msk [vmem:[#allocation2 + $0x2b0] sm:$0x3] %vm29, 0.0
  %115 = vst.msk [vmem:[#allocation2 + $0x2b8] sm:$0xff] %vm26, 0.0
  %116 = vst.msk [vmem:[#allocation2 + $0x2c0] sm:$0xff] %vm26, 0.0
  %117 = vst.msk [vmem:[#allocation2 + $0x2c8] sm:$0x3] %vm29, 0.0
  %118 = vst.msk [vmem:[#allocation2 + $0x2d0] sm:$0xff] %vm26, 0.0
  %119 = vst.msk [vmem:[#allocation2 + $0x2d8] sm:$0xff] %vm26, 0.0
  %120 = vst.msk [vmem:[#allocation2 + $0x2e0] sm:$0x3] %vm29, 0.0
  %121 = vst.msk [vmem:[#allocation2 + $0x2e8] sm:$0xff] %vm26, 0.0
  %122 = vst.msk [vmem:[#allocation2 + $0x2f0] sm:$0xff] %vm26, 0.0
  %123 = vst.msk [vmem:[#allocation2 + $0x2f8] sm:$0x3] %vm29, 0.0
  %124 = vst.msk [vmem:[#allocation2 + $0x300] sm:$0xff] %vm26, 0.0
  %125 = vst.msk [vmem:[#allocation2 + $0x308] sm:$0xff] %vm26, 0.0
  %126 = vst.msk [vmem:[#allocation2 + $0x310] sm:$0x3] %vm29, 0.0
  %127 = vst.msk [vmem:[#allocation2 + $0x318] sm:$0xff] %vm26, 0.0
  %128 = vst.msk [vmem:[#allocation2 + $0x320] sm:$0xff] %vm26, 0.0
  %129 = vst.msk [vmem:[#allocation2 + $0x328] sm:$0x3] %vm29, 0.0
  %130 = vst.msk [vmem:[#allocation2 + $0x330] sm:$0xff] %vm26, 0.0
  %131 = vst.msk [vmem:[#allocation2 + $0x338] sm:$0xff] %vm26, 0.0
  %132 = vst.msk [vmem:[#allocation2 + $0x340] sm:$0x3] %vm29, 0.0
  %133 = vst.msk [vmem:[#allocation2 + $0x348] sm:$0xff] %vm26, 0.0
  %134 = vst.msk [vmem:[#allocation2 + $0x350] sm:$0xff] %vm26, 0.0
  %135 = vst.msk [vmem:[#allocation2 + $0x358] sm:$0x3] %vm29, 0.0
  %v136 = vld [vmem:[%s0] sm:$0xff]
  %v137 = vld [vmem:[%s0 + $0x8] sm:$0xff]
  %v138 = vld [vmem:[%s0 + $0x10] sm:$0xff]
  %v139 = vld [vmem:[%s0 + $0x18] sm:$0xff]
  %v140 = vld [vmem:[%s0 + $0x20] sm:$0xff]
  %v141 = vld [vmem:[%s0 + $0x28] sm:$0xff]
  %v142 = vld [vmem:[%s0 + $0x30] sm:$0xff]
  %v143 = vld [vmem:[%s0 + $0x38] sm:$0xff]
  %v144 = vld [vmem:[%s0 + $0x40] sm:$0xff]
  %v145 = vld [vmem:[%s0 + $0x48] sm:$0xff]
  %v146 = vld [vmem:[%s0 + $0x50] sm:$0xff]
  %v147 = vld [vmem:[%s0 + $0x58] sm:$0xff]
  %v148 = vld [vmem:[%s0 + $0x60] sm:$0xff]
  %v149 = vld [vmem:[%s0 + $0x68] sm:$0xff]
  %v150 = vld [vmem:[%s0 + $0x70] sm:$0xff]
  %v151 = vld [vmem:[%s0 + $0x78] sm:$0xff]
  %v152 = vld [vmem:[%s0 + $0x80] sm:$0xff]
  %v153 = vld [vmem:[%s0 + $0x88] sm:$0xff]
  %v154 = vld [vmem:[%s0 + $0x90] sm:$0xff]
  %v155 = vld [vmem:[%s0 + $0x98] sm:$0xff]
  %v156 = vld [vmem:[%s0 + $0xa0] sm:$0xff]
  %v157 = vld [vmem:[%s0 + $0xa8] sm:$0xff]
  %v158 = vld [vmem:[%s0 + $0xb0] sm:$0xff]
  %v159 = vld [vmem:[%s0 + $0xb8] sm:$0xff]
  %v160 = vld [vmem:[%s0 + $0xc0] sm:$0xff]
  %v161 = vld [vmem:[%s0 + $0xc8] sm:$0xff]
  %v162 = vld [vmem:[%s0 + $0xd0] sm:$0xff]
  %v163 = vld [vmem:[%s0 + $0xd8] sm:$0xff]
  %v164 = vld [vmem:[%s0 + $0xe0] sm:$0xff]
  %v165 = vld [vmem:[%s0 + $0xe8] sm:$0xff]
  %v166 = vld [vmem:[%s0 + $0xf0] sm:$0xff]
  %v167 = vld [vmem:[%s0 + $0xf8] sm:$0xff]
  %v168 = vld [vmem:[%s0 + $0x100] sm:$0xff]
  %v169 = vld [vmem:[%s0 + $0x108] sm:$0xff]
  %v170 = vld [vmem:[%s0 + $0x110] sm:$0xff]
  %v171 = vld [vmem:[%s0 + $0x118] sm:$0xff]
  %v172 = vld [vmem:[%s0 + $0x120] sm:$0xff]
  %v173 = vld [vmem:[%s0 + $0x128] sm:$0xff]
  %v174 = vld [vmem:[%s0 + $0x130] sm:$0xff]
  %v175 = vld [vmem:[%s0 + $0x138] sm:$0xff]
  %v176 = vld [vmem:[%s0 + $0x140] sm:$0xff]
  %v177 = vld [vmem:[%s0 + $0x148] sm:$0xff]
  %v178 = vld [vmem:[%s0 + $0x150] sm:$0xff]
  %v179 = vld [vmem:[%s0 + $0x158] sm:$0xff]
  %v180 = vld [vmem:[%s0 + $0x160] sm:$0xff]
  %v181 = vld [vmem:[%s0 + $0x168] sm:$0xff]
  %v182 = vld [vmem:[%s0 + $0x170] sm:$0xff]
  %v183 = vld [vmem:[%s0 + $0x178] sm:$0xff]
  %v184 = vld [vmem:[%s0 + $0x180] sm:$0xff]
  %v185 = vld [vmem:[%s0 + $0x188] sm:$0xff]
  %v186 = vld [vmem:[%s0 + $0x190] sm:$0xff]
  %v187 = vld [vmem:[%s0 + $0x198] sm:$0xff]
  %v188 = vld [vmem:[%s0 + $0x1a0] sm:$0xff]
  %v189 = vld [vmem:[%s0 + $0x1a8] sm:$0xff]
  %v190 = vld [vmem:[%s0 + $0x1b0] sm:$0xff]
  %v191 = vld [vmem:[%s0 + $0x1b8] sm:$0xff]
  %v192 = vld [vmem:[%s0 + $0x1c0] sm:$0xff]
  %v193 = vld [vmem:[%s0 + $0x1c8] sm:$0xff]
  %v194 = vld [vmem:[%s0 + $0x1d0] sm:$0xff]
  %v195 = vld [vmem:[%s0 + $0x1d8] sm:$0xff]
  %v196 = vld [vmem:[%s0 + $0x1e0] sm:$0xff]
  %v197 = vld [vmem:[%s0 + $0x1e8] sm:$0xff]
  %v198 = vld [vmem:[%s0 + $0x1f0] sm:$0xff]
  %v199 = vld [vmem:[%s0 + $0x1f8] sm:$0xff]
  %s200 = scalar_lea.vmem [#allocation2], 24
  %201 = vst.msk [vmem:[%s200 + $0x1] sm:$0xff] %vm26, %v136
  %202 = vst.msk [vmem:[%s200 + $0x9] sm:$0xff] %vm26, %v137
  %203 = vst.msk [vmem:[%s200 + $0x19] sm:$0xff] %vm26, %v138
  %204 = vst.msk [vmem:[%s200 + $0x21] sm:$0xff] %vm26, %v139
  %205 = vst.msk [vmem:[%s200 + $0x31] sm:$0xff] %vm26, %v140
  %206 = vst.msk [vmem:[%s200 + $0x39] sm:$0xff] %vm26, %v141
  %207 = vst.msk [vmem:[%s200 + $0x49] sm:$0xff] %vm26, %v142
  %208 = vst.msk [vmem:[%s200 + $0x51] sm:$0xff] %vm26, %v143
  %209 = vst.msk [vmem:[%s200 + $0x61] sm:$0xff] %vm26, %v144
  %210 = vst.msk [vmem:[%s200 + $0x69] sm:$0xff] %vm26, %v145
  %211 = vst.msk [vmem:[%s200 + $0x79] sm:$0xff] %vm26, %v146
  %212 = vst.msk [vmem:[%s200 + $0x81] sm:$0xff] %vm26, %v147
  %213 = vst.msk [vmem:[%s200 + $0x91] sm:$0xff] %vm26, %v148
  %214 = vst.msk [vmem:[%s200 + $0x99] sm:$0xff] %vm26, %v149
  %215 = vst.msk [vmem:[%s200 + $0xa9] sm:$0xff] %vm26, %v150
  %216 = vst.msk [vmem:[%s200 + $0xb1] sm:$0xff] %vm26, %v151
  %217 = vst.msk [vmem:[%s200 + $0xc1] sm:$0xff] %vm26, %v152
  %218 = vst.msk [vmem:[%s200 + $0xc9] sm:$0xff] %vm26, %v153
  %219 = vst.msk [vmem:[%s200 + $0xd9] sm:$0xff] %vm26, %v154
  %220 = vst.msk [vmem:[%s200 + $0xe1] sm:$0xff] %vm26, %v155
  %221 = vst.msk [vmem:[%s200 + $0xf1] sm:$0xff] %vm26, %v156
  %222 = vst.msk [vmem:[%s200 + $0xf9] sm:$0xff] %vm26, %v157
  %223 = vst.msk [vmem:[%s200 + $0x109] sm:$0xff] %vm26, %v158
  %224 = vst.msk [vmem:[%s200 + $0x111] sm:$0xff] %vm26, %v159
  %225 = vst.msk [vmem:[%s200 + $0x121] sm:$0xff] %vm26, %v160
  %226 = vst.msk [vmem:[%s200 + $0x129] sm:$0xff] %vm26, %v161
  %227 = vst.msk [vmem:[%s200 + $0x139] sm:$0xff] %vm26, %v162
  %228 = vst.msk [vmem:[%s200 + $0x141] sm:$0xff] %vm26, %v163
  %229 = vst.msk [vmem:[%s200 + $0x151] sm:$0xff] %vm26, %v164
  %230 = vst.msk [vmem:[%s200 + $0x159] sm:$0xff] %vm26, %v165
  %231 = vst.msk [vmem:[%s200 + $0x169] sm:$0xff] %vm26, %v166
  %232 = vst.msk [vmem:[%s200 + $0x171] sm:$0xff] %vm26, %v167
  %233 = vst.msk [vmem:[%s200 + $0x1b1] sm:$0xff] %vm26, %v168
  %234 = vst.msk [vmem:[%s200 + $0x1b9] sm:$0xff] %vm26, %v169
  %235 = vst.msk [vmem:[%s200 + $0x1c9] sm:$0xff] %vm26, %v170
  %236 = vst.msk [vmem:[%s200 + $0x1d1] sm:$0xff] %vm26, %v171
  %237 = vst.msk [vmem:[%s200 + $0x1e1] sm:$0xff] %vm26, %v172
  %238 = vst.msk [vmem:[%s200 + $0x1e9] sm:$0xff] %vm26, %v173
  %239 = vst.msk [vmem:[%s200 + $0x1f9] sm:$0xff] %vm26, %v174
  %240 = vst.msk [vmem:[%s200 + $0x201] sm:$0xff] %vm26, %v175
  %241 = vst.msk [vmem:[%s200 + $0x211] sm:$0xff] %vm26, %v176
  %242 = vst.msk [vmem:[%s200 + $0x219] sm:$0xff] %vm26, %v177
  %243 = vst.msk [vmem:[%s200 + $0x229] sm:$0xff] %vm26, %v178
  %244 = vst.msk [vmem:[%s200 + $0x231] sm:$0xff] %vm26, %v179
  %245 = vst.msk [vmem:[%s200 + $0x241] sm:$0xff] %vm26, %v180
  %246 = vst.msk [vmem:[%s200 + $0x249] sm:$0xff] %vm26, %v181
  %247 = vst.msk [vmem:[%s200 + $0x259] sm:$0xff] %vm26, %v182
  %248 = vst.msk [vmem:[%s200 + $0x261] sm:$0xff] %vm26, %v183
  %249 = vst.msk [vmem:[%s200 + $0x271] sm:$0xff] %vm26, %v184
  %250 = vst.msk [vmem:[%s200 + $0x279] sm:$0xff] %vm26, %v185
  %251 = vst.msk [vmem:[%s200 + $0x289] sm:$0xff] %vm26, %v186
  %252 = vst.msk [vmem:[%s200 + $0x291] sm:$0xff] %vm26, %v187
  %253 = vst.msk [vmem:[%s200 + $0x2a1] sm:$0xff] %vm26, %v188
  %254 = vst.msk [vmem:[%s200 + $0x2a9] sm:$0xff] %vm26, %v189
  %255 = vst.msk [vmem:[%s200 + $0x2b9] sm:$0xff] %vm26, %v190
  %256 = vst.msk [vmem:[%s200 + $0x2c1] sm:$0xff] %vm26, %v191
  %257 = vst.msk [vmem:[%s200 + $0x2d1] sm:$0xff] %vm26, %v192
  %258 = vst.msk [vmem:[%s200 + $0x2d9] sm:$0xff] %vm26, %v193
  %259 = vst.msk [vmem:[%s200 + $0x2e9] sm:$0xff] %vm26, %v194
  %260 = vst.msk [vmem:[%s200 + $0x2f1] sm:$0xff] %vm26, %v195
  %261 = vst.msk [vmem:[%s200 + $0x301] sm:$0xff] %vm26, %v196
  %262 = vst.msk [vmem:[%s200 + $0x309] sm:$0xff] %vm26, %v197
  %263 = vst.msk [vmem:[%s200 + $0x319] sm:$0xff] %vm26, %v198
  %264 = vst.msk [vmem:[%s200 + $0x321] sm:$0xff] %vm26, %v199
  %v265 = vld [vmem:[#allocation2] sm:$0xff]
  %v266 = vld [vmem:[#allocation2 + $0x8] sm:$0xff]
  %v267 = vld [vmem:[#allocation2 + $0x18] sm:$0xff]
  %v268 = vld [vmem:[#allocation2 + $0x20] sm:$0xff]
  %v269 = vld [vmem:[#allocation2 + $0x30] sm:$0xff]
  %v270 = vld [vmem:[#allocation2 + $0x38] sm:$0xff]
  %v271 = vld [vmem:[#allocation2 + $0x48] sm:$0xff]
  %v272 = vld [vmem:[#allocation2 + $0x50] sm:$0xff]
  %v273 = vld [vmem:[#allocation2 + $0x60] sm:$0xff]
  %v274 = vld [vmem:[#allocation2 + $0x68] sm:$0xff]
  %v275 = vld [vmem:[#allocation2 + $0x78] sm:$0xff]
  %v276 = vld [vmem:[#allocation2 + $0x80] sm:$0xff]
  %v277 = vld [vmem:[#allocation2 + $0x90] sm:$0xff]
  %v278 = vld [vmem:[#allocation2 + $0x98] sm:$0xff]
  %v279 = vld [vmem:[#allocation2 + $0xa8] sm:$0xff]
  %v280 = vld [vmem:[#allocation2 + $0xb0] sm:$0xff]
  %v281 = vld [vmem:[#allocation2 + $0xc0] sm:$0xff]
  %v282 = vld [vmem:[#allocation2 + $0xc8] sm:$0xff]
  %v283 = vld [vmem:[#allocation2 + $0xd8] sm:$0xff]
  %v284 = vld [vmem:[#allocation2 + $0xe0] sm:$0xff]
  %v285 = vld [vmem:[#allocation2 + $0xf0] sm:$0xff]
  %v286 = vld [vmem:[#allocation2 + $0xf8] sm:$0xff]
  %v287 = vld [vmem:[#allocation2 + $0x108] sm:$0xff]
  %v288 = vld [vmem:[#allocation2 + $0x110] sm:$0xff]
  %v289 = vld [vmem:[#allocation2 + $0x120] sm:$0xff]
  %v290 = vld [vmem:[#allocation2 + $0x128] sm:$0xff]
  %v291 = vld [vmem:[#allocation2 + $0x138] sm:$0xff]
  %v292 = vld [vmem:[#allocation2 + $0x140] sm:$0xff]
  %v293 = vld [vmem:[#allocation2 + $0x150] sm:$0xff]
  %v294 = vld [vmem:[#allocation2 + $0x158] sm:$0xff]
  %v295 = vld [vmem:[#allocation2 + $0x168] sm:$0xff]
  %v296 = vld [vmem:[#allocation2 + $0x170] sm:$0xff]
  %v297 = vld [vmem:[#allocation2 + $0x1b0] sm:$0xff]
  %v298 = vld [vmem:[#allocation2 + $0x1b8] sm:$0xff]
  %v299 = vld [vmem:[#allocation2 + $0x1c8] sm:$0xff]
  %v300 = vld [vmem:[#allocation2 + $0x1d0] sm:$0xff]
  %v301 = vld [vmem:[#allocation2 + $0x1e0] sm:$0xff]
  %v302 = vld [vmem:[#allocation2 + $0x1e8] sm:$0xff]
  %v303 = vld [vmem:[#allocation2 + $0x1f8] sm:$0xff]
  %v304 = vld [vmem:[#allocation2 + $0x200] sm:$0xff]
  %v305 = vld [vmem:[#allocation2 + $0x210] sm:$0xff]
  %v306 = vld [vmem:[#allocation2 + $0x218] sm:$0xff]
  %v307 = vld [vmem:[#allocation2 + $0x228] sm:$0xff]
  %v308 = vld [vmem:[#allocation2 + $0x230] sm:$0xff]
  %v309 = vld [vmem:[#allocation2 + $0x240] sm:$0xff]
  %v310 = vld [vmem:[#allocation2 + $0x248] sm:$0xff]
  %v311 = vld [vmem:[#allocation2 + $0x258] sm:$0xff]
  %v312 = vld [vmem:[#allocation2 + $0x260] sm:$0xff]
  %v313 = vld [vmem:[#allocation2 + $0x270] sm:$0xff]
  %v314 = vld [vmem:[#allocation2 + $0x278] sm:$0xff]
  %v315 = vld [vmem:[#allocation2 + $0x288] sm:$0xff]
  %v316 = vld [vmem:[#allocation2 + $0x290] sm:$0xff]
  %v317 = vld [vmem:[#allocation2 + $0x2a0] sm:$0xff]
  %v318 = vld [vmem:[#allocation2 + $0x2a8] sm:$0xff]
  %v319 = vld [vmem:[#allocation2 + $0x2b8] sm:$0xff]
  %v320 = vld [vmem:[#allocation2 + $0x2c0] sm:$0xff]
  %v321 = vld [vmem:[#allocation2 + $0x2d0] sm:$0xff]
  %v322 = vld [vmem:[#allocation2 + $0x2d8] sm:$0xff]
  %v323 = vld [vmem:[#allocation2 + $0x2e8] sm:$0xff]
  %v324 = vld [vmem:[#allocation2 + $0x2f0] sm:$0xff]
  %v325 = vld [vmem:[#allocation2 + $0x300] sm:$0xff]
  %v326 = vld [vmem:[#allocation2 + $0x308] sm:$0xff]
  %v327 = vld [vmem:[#allocation2 + $0x318] sm:$0xff]
  %v328 = vld [vmem:[#allocation2 + $0x320] sm:$0xff]
  %v329 = vld [vmem:[#allocation2 + $0x1] sm:$0xff]
  %v330 = vld [vmem:[#allocation2 + $0x9] sm:$0xff]
  %v331 = vld [vmem:[#allocation2 + $0x19] sm:$0xff]
  %v332 = vld [vmem:[#allocation2 + $0x21] sm:$0xff]
  %v333 = vld [vmem:[#allocation2 + $0x31] sm:$0xff]
  %v334 = vld [vmem:[#allocation2 + $0x39] sm:$0xff]
  %v335 = vld [vmem:[#allocation2 + $0x49] sm:$0xff]
  %v336 = vld [vmem:[#allocation2 + $0x51] sm:$0xff]
  %v337 = vld [vmem:[#allocation2 + $0x61] sm:$0xff]
  %v338 = vld [vmem:[#allocation2 + $0x69] sm:$0xff]
  %v339 = vld [vmem:[#allocation2 + $0x79] sm:$0xff]
  %v340 = vld [vmem:[#allocation2 + $0x81] sm:$0xff]
  %v341 = vld [vmem:[#allocation2 + $0x91] sm:$0xff]
  %v342 = vld [vmem:[#allocation2 + $0x99] sm:$0xff]
  %v343 = vld [vmem:[#allocation2 + $0xa9] sm:$0xff]
  %v344 = vld [vmem:[#allocation2 + $0xb1] sm:$0xff]
  %v345 = vld [vmem:[#allocation2 + $0xc1] sm:$0xff]
  %v346 = vld [vmem:[#allocation2 + $0xc9] sm:$0xff]
  %v347 = vld [vmem:[#allocation2 + $0xd9] sm:$0xff]
  %v348 = vld [vmem:[#allocation2 + $0xe1] sm:$0xff]
  %v349 = vld [vmem:[#allocation2 + $0xf1] sm:$0xff]
  %v350 = vld [vmem:[#allocation2 + $0xf9] sm:$0xff]
  %v351 = vld [vmem:[#allocation2 + $0x109] sm:$0xff]
  %v352 = vld [vmem:[#allocation2 + $0x111] sm:$0xff]
  %v353 = vld [vmem:[#allocation2 + $0x121] sm:$0xff]
  %v354 = vld [vmem:[#allocation2 + $0x129] sm:$0xff]
  %v355 = vld [vmem:[#allocation2 + $0x139] sm:$0xff]
  %v356 = vld [vmem:[#allocation2 + $0x141] sm:$0xff]
  %v357 = vld [vmem:[#allocation2 + $0x151] sm:$0xff]
  %v358 = vld [vmem:[#allocation2 + $0x159] sm:$0xff]
  %v359 = vld [vmem:[#allocation2 + $0x169] sm:$0xff]
  %v360 = vld [vmem:[#allocation2 + $0x171] sm:$0xff]
  %v361 = vld [vmem:[#allocation2 + $0x1b1] sm:$0xff]
  %v362 = vld [vmem:[#allocation2 + $0x1b9] sm:$0xff]
  %v363 = vld [vmem:[#allocation2 + $0x1c9] sm:$0xff]
  %v364 = vld [vmem:[#allocation2 + $0x1d1] sm:$0xff]
  %v365 = vld [vmem:[#allocation2 + $0x1e1] sm:$0xff]
  %v366 = vld [vmem:[#allocation2 + $0x1e9] sm:$0xff]
  %v367 = vld [vmem:[#allocation2 + $0x1f9] sm:$0xff]
  %v368 = vld [vmem:[#allocation2 + $0x201] sm:$0xff]
  %v369 = vld [vmem:[#allocation2 + $0x211] sm:$0xff]
  %v370 = vld [vmem:[#allocation2 + $0x219] sm:$0xff]
  %v371 = vld [vmem:[#allocation2 + $0x229] sm:$0xff]
  %v372 = vld [vmem:[#allocation2 + $0x231] sm:$0xff]
  %v373 = vld [vmem:[#allocation2 + $0x241] sm:$0xff]
  %v374 = vld [vmem:[#allocation2 + $0x249] sm:$0xff]
  %v375 = vld [vmem:[#allocation2 + $0x259] sm:$0xff]
  %v376 = vld [vmem:[#allocation2 + $0x261] sm:$0xff]
  %v377 = vld [vmem:[#allocation2 + $0x271] sm:$0xff]
  %v378 = vld [vmem:[#allocation2 + $0x279] sm:$0xff]
  %v379 = vld [vmem:[#allocation2 + $0x289] sm:$0xff]
  %v380 = vld [vmem:[#allocation2 + $0x291] sm:$0xff]
  %v381 = vld [vmem:[#allocation2 + $0x2a1] sm:$0xff]
  %v382 = vld [vmem:[#allocation2 + $0x2a9] sm:$0xff]
  %v383 = vld [vmem:[#allocation2 + $0x2b9] sm:$0xff]
  %v384 = vld [vmem:[#allocation2 + $0x2c1] sm:$0xff]
  %v385 = vld [vmem:[#allocation2 + $0x2d1] sm:$0xff]
  %v386 = vld [vmem:[#allocation2 + $0x2d9] sm:$0xff]
  %v387 = vld [vmem:[#allocation2 + $0x2e9] sm:$0xff]
  %v388 = vld [vmem:[#allocation2 + $0x2f1] sm:$0xff]
  %v389 = vld [vmem:[#allocation2 + $0x301] sm:$0xff]
  %v390 = vld [vmem:[#allocation2 + $0x309] sm:$0xff]
  %v391 = vld [vmem:[#allocation2 + $0x319] sm:$0xff]
  %v392 = vld [vmem:[#allocation2 + $0x321] sm:$0xff]
  %v393 = vld [vmem:[#allocation2 + $0x2] sm:$0xff]
  %v394 = vld [vmem:[#allocation2 + $0xa] sm:$0xff]
  %v395 = vld [vmem:[#allocation2 + $0x1a] sm:$0xff]
  %v396 = vld [vmem:[#allocation2 + $0x22] sm:$0xff]
  %v397 = vld [vmem:[#allocation2 + $0x32] sm:$0xff]
  %v398 = vld [vmem:[#allocation2 + $0x3a] sm:$0xff]
  %v399 = vld [vmem:[#allocation2 + $0x4a] sm:$0xff]
  %v400 = vld [vmem:[#allocation2 + $0x52] sm:$0xff]
  %v401 = vld [vmem:[#allocation2 + $0x62] sm:$0xff]
  %v402 = vld [vmem:[#allocation2 + $0x6a] sm:$0xff]
  %v403 = vld [vmem:[#allocation2 + $0x7a] sm:$0xff]
  %v404 = vld [vmem:[#allocation2 + $0x82] sm:$0xff]
  %v405 = vld [vmem:[#allocation2 + $0x92] sm:$0xff]
  %v406 = vld [vmem:[#allocation2 + $0x9a] sm:$0xff]
  %v407 = vld [vmem:[#allocation2 + $0xaa] sm:$0xff]
  %v408 = vld [vmem:[#allocation2 + $0xb2] sm:$0xff]
  %v409 = vld [vmem:[#allocation2 + $0xc2] sm:$0xff]
  %v410 = vld [vmem:[#allocation2 + $0xca] sm:$0xff]
  %v411 = vld [vmem:[#allocation2 + $0xda] sm:$0xff]
  %v412 = vld [vmem:[#allocation2 + $0xe2] sm:$0xff]
  %v413 = vld [vmem:[#allocation2 + $0xf2] sm:$0xff]
  %v414 = vld [vmem:[#allocation2 + $0xfa] sm:$0xff]
  %v415 = vld [vmem:[#allocation2 + $0x10a] sm:$0xff]
  %v416 = vld [vmem:[#allocation2 + $0x112] sm:$0xff]
  %v417 = vld [vmem:[#allocation2 + $0x122] sm:$0xff]
  %v418 = vld [vmem:[#allocation2 + $0x12a] sm:$0xff]
  %v419 = vld [vmem:[#allocation2 + $0x13a] sm:$0xff]
  %v420 = vld [vmem:[#allocation2 + $0x142] sm:$0xff]
  %v421 = vld [vmem:[#allocation2 + $0x152] sm:$0xff]
  %v422 = vld [vmem:[#allocation2 + $0x15a] sm:$0xff]
  %v423 = vld [vmem:[#allocation2 + $0x16a] sm:$0xff]
  %v424 = vld [vmem:[#allocation2 + $0x172] sm:$0xff]
  %v425 = vld [vmem:[#allocation2 + $0x1b2] sm:$0xff]
  %v426 = vld [vmem:[#allocation2 + $0x1ba] sm:$0xff]
  %v427 = vld [vmem:[#allocation2 + $0x1ca] sm:$0xff]
  %v428 = vld [vmem:[#allocation2 + $0x1d2] sm:$0xff]
  %v429 = vld [vmem:[#allocation2 + $0x1e2] sm:$0xff]
  %v430 = vld [vmem:[#allocation2 + $0x1ea] sm:$0xff]
  %v431 = vld [vmem:[#allocation2 + $0x1fa] sm:$0xff]
  %v432 = vld [vmem:[#allocation2 + $0x202] sm:$0xff]
  %v433 = vld [vmem:[#allocation2 + $0x212] sm:$0xff]
  %v434 = vld [vmem:[#allocation2 + $0x21a] sm:$0xff]
  %v435 = vld [vmem:[#allocation2 + $0x22a] sm:$0xff]
  %v436 = vld [vmem:[#allocation2 + $0x232] sm:$0xff]
  %v437 = vld [vmem:[#allocation2 + $0x242] sm:$0xff]
  %v438 = vld [vmem:[#allocation2 + $0x24a] sm:$0xff]
  %v439 = vld [vmem:[#allocation2 + $0x25a] sm:$0xff]
  %v440 = vld [vmem:[#allocation2 + $0x262] sm:$0xff]
  %v441 = vld [vmem:[#allocation2 + $0x272] sm:$0xff]
  %v442 = vld [vmem:[#allocation2 + $0x27a] sm:$0xff]
  %v443 = vld [vmem:[#allocation2 + $0x28a] sm:$0xff]
  %v444 = vld [vmem:[#allocation2 + $0x292] sm:$0xff]
  %v445 = vld [vmem:[#allocation2 + $0x2a2] sm:$0xff]
  %v446 = vld [vmem:[#allocation2 + $0x2aa] sm:$0xff]
  %v447 = vld [vmem:[#allocation2 + $0x2ba] sm:$0xff]
  %v448 = vld [vmem:[#allocation2 + $0x2c2] sm:$0xff]
  %v449 = vld [vmem:[#allocation2 + $0x2d2] sm:$0xff]
  %v450 = vld [vmem:[#allocation2 + $0x2da] sm:$0xff]
  %v451 = vld [vmem:[#allocation2 + $0x2ea] sm:$0xff]
  %v452 = vld [vmem:[#allocation2 + $0x2f2] sm:$0xff]
  %v453 = vld [vmem:[#allocation2 + $0x302] sm:$0xff]
  %v454 = vld [vmem:[#allocation2 + $0x30a] sm:$0xff]
  %v455 = vld [vmem:[#allocation2 + $0x31a] sm:$0xff]
  %v456 = vld [vmem:[#allocation2 + $0x322] sm:$0xff]
  %v457 = vld [vmem:[%s200] sm:$0xff]
  %v458 = vld [vmem:[%s200 + $0x8] sm:$0xff]
  %v459 = vld [vmem:[%s200 + $0x18] sm:$0xff]
  %v460 = vld [vmem:[%s200 + $0x20] sm:$0xff]
  %v461 = vld [vmem:[%s200 + $0x30] sm:$0xff]
  %v462 = vld [vmem:[%s200 + $0x38] sm:$0xff]
  %v463 = vld [vmem:[%s200 + $0x48] sm:$0xff]
  %v464 = vld [vmem:[%s200 + $0x50] sm:$0xff]
  %v465 = vld [vmem:[%s200 + $0x60] sm:$0xff]
  %v466 = vld [vmem:[%s200 + $0x68] sm:$0xff]
  %v467 = vld [vmem:[%s200 + $0x78] sm:$0xff]
  %v468 = vld [vmem:[%s200 + $0x80] sm:$0xff]
  %v469 = vld [vmem:[%s200 + $0x90] sm:$0xff]
  %v470 = vld [vmem:[%s200 + $0x98] sm:$0xff]
  %v471 = vld [vmem:[%s200 + $0xa8] sm:$0xff]
  %v472 = vld [vmem:[%s200 + $0xb0] sm:$0xff]
  %v473 = vld [vmem:[%s200 + $0xc0] sm:$0xff]
  %v474 = vld [vmem:[%s200 + $0xc8] sm:$0xff]
  %v475 = vld [vmem:[%s200 + $0xd8] sm:$0xff]
  %v476 = vld [vmem:[%s200 + $0xe0] sm:$0xff]
  %v477 = vld [vmem:[%s200 + $0xf0] sm:$0xff]
  %v478 = vld [vmem:[%s200 + $0xf8] sm:$0xff]
  %v479 = vld [vmem:[%s200 + $0x108] sm:$0xff]
  %v480 = vld [vmem:[%s200 + $0x110] sm:$0xff]
  %v481 = vld [vmem:[%s200 + $0x120] sm:$0xff]
  %v482 = vld [vmem:[%s200 + $0x128] sm:$0xff]
  %v483 = vld [vmem:[%s200 + $0x138] sm:$0xff]
  %v484 = vld [vmem:[%s200 + $0x140] sm:$0xff]
  %v485 = vld [vmem:[%s200 + $0x150] sm:$0xff]
  %v486 = vld [vmem:[%s200 + $0x158] sm:$0xff]
  %v487 = vld [vmem:[%s200 + $0x168] sm:$0xff]
  %v488 = vld [vmem:[%s200 + $0x170] sm:$0xff]
  %v489 = vld [vmem:[%s200 + $0x1b0] sm:$0xff]
  %v490 = vld [vmem:[%s200 + $0x1b8] sm:$0xff]
  %v491 = vld [vmem:[%s200 + $0x1c8] sm:$0xff]
  %v492 = vld [vmem:[%s200 + $0x1d0] sm:$0xff]
  %v493 = vld [vmem:[%s200 + $0x1e0] sm:$0xff]
  %v494 = vld [vmem:[%s200 + $0x1e8] sm:$0xff]
  %v495 = vld [vmem:[%s200 + $0x1f8] sm:$0xff]
  %v496 = vld [vmem:[%s200 + $0x200] sm:$0xff]
  %v497 = vld [vmem:[%s200 + $0x210] sm:$0xff]
  %v498 = vld [vmem:[%s200 + $0x218] sm:$0xff]
  %v499 = vld [vmem:[%s200 + $0x228] sm:$0xff]
  %v500 = vld [vmem:[%s200 + $0x230] sm:$0xff]
  %v501 = vld [vmem:[%s200 + $0x240] sm:$0xff]
  %v502 = vld [vmem:[%s200 + $0x248] sm:$0xff]
  %v503 = vld [vmem:[%s200 + $0x258] sm:$0xff]
  %v504 = vld [vmem:[%s200 + $0x260] sm:$0xff]
  %v505 = vld [vmem:[%s200 + $0x270] sm:$0xff]
  %v506 = vld [vmem:[%s200 + $0x278] sm:$0xff]
  %v507 = vld [vmem:[%s200 + $0x288] sm:$0xff]
  %v508 = vld [vmem:[%s200 + $0x290] sm:$0xff]
  %v509 = vld [vmem:[%s200 + $0x2a0] sm:$0xff]
  %v510 = vld [vmem:[%s200 + $0x2a8] sm:$0xff]
  %v511 = vld [vmem:[%s200 + $0x2b8] sm:$0xff]
  %v512 = vld [vmem:[%s200 + $0x2c0] sm:$0xff]
  %v513 = vld [vmem:[%s200 + $0x2d0] sm:$0xff]
  %v514 = vld [vmem:[%s200 + $0x2d8] sm:$0xff]
  %v515 = vld [vmem:[%s200 + $0x2e8] sm:$0xff]
  %v516 = vld [vmem:[%s200 + $0x2f0] sm:$0xff]
  %v517 = vld [vmem:[%s200 + $0x300] sm:$0xff]
  %v518 = vld [vmem:[%s200 + $0x308] sm:$0xff]
  %v519 = vld [vmem:[%s200 + $0x318] sm:$0xff]
  %v520 = vld [vmem:[%s200 + $0x320] sm:$0xff]
  %v521 = vld [vmem:[%s200 + $0x1] sm:$0xff]
  %v522 = vld [vmem:[%s200 + $0x9] sm:$0xff]
  %v523 = vld [vmem:[%s200 + $0x19] sm:$0xff]
  %v524 = vld [vmem:[%s200 + $0x21] sm:$0xff]
  %v525 = vld [vmem:[%s200 + $0x31] sm:$0xff]
  %v526 = vld [vmem:[%s200 + $0x39] sm:$0xff]
  %v527 = vld [vmem:[%s200 + $0x49] sm:$0xff]
  %v528 = vld [vmem:[%s200 + $0x51] sm:$0xff]
  %v529 = vld [vmem:[%s200 + $0x61] sm:$0xff]
  %v530 = vld [vmem:[%s200 + $0x69] sm:$0xff]
  %v531 = vld [vmem:[%s200 + $0x79] sm:$0xff]
  %v532 = vld [vmem:[%s200 + $0x81] sm:$0xff]
  %v533 = vld [vmem:[%s200 + $0x91] sm:$0xff]
  %v534 = vld [vmem:[%s200 + $0x99] sm:$0xff]
  %v535 = vld [vmem:[%s200 + $0xa9] sm:$0xff]
  %v536 = vld [vmem:[%s200 + $0xb1] sm:$0xff]
  %v537 = vld [vmem:[%s200 + $0xc1] sm:$0xff]
  %v538 = vld [vmem:[%s200 + $0xc9] sm:$0xff]
  %v539 = vld [vmem:[%s200 + $0xd9] sm:$0xff]
  %v540 = vld [vmem:[%s200 + $0xe1] sm:$0xff]
  %v541 = vld [vmem:[%s200 + $0xf1] sm:$0xff]
  %v542 = vld [vmem:[%s200 + $0xf9] sm:$0xff]
  %v543 = vld [vmem:[%s200 + $0x109] sm:$0xff]
  %v544 = vld [vmem:[%s200 + $0x111] sm:$0xff]
  %v545 = vld [vmem:[%s200 + $0x121] sm:$0xff]
  %v546 = vld [vmem:[%s200 + $0x129] sm:$0xff]
  %v547 = vld [vmem:[%s200 + $0x139] sm:$0xff]
  %v548 = vld [vmem:[%s200 + $0x141] sm:$0xff]
  %v549 = vld [vmem:[%s200 + $0x151] sm:$0xff]
  %v550 = vld [vmem:[%s200 + $0x159] sm:$0xff]
  %v551 = vld [vmem:[%s200 + $0x169] sm:$0xff]
  %v552 = vld [vmem:[%s200 + $0x171] sm:$0xff]
  %v553 = vld [vmem:[%s200 + $0x1b1] sm:$0xff]
  %v554 = vld [vmem:[%s200 + $0x1b9] sm:$0xff]
  %v555 = vld [vmem:[%s200 + $0x1c9] sm:$0xff]
  %v556 = vld [vmem:[%s200 + $0x1d1] sm:$0xff]
  %v557 = vld [vmem:[%s200 + $0x1e1] sm:$0xff]
  %v558 = vld [vmem:[%s200 + $0x1e9] sm:$0xff]
  %v559 = vld [vmem:[%s200 + $0x1f9] sm:$0xff]
  %v560 = vld [vmem:[%s200 + $0x201] sm:$0xff]
  %v561 = vld [vmem:[%s200 + $0x211] sm:$0xff]
  %v562 = vld [vmem:[%s200 + $0x219] sm:$0xff]
  %v563 = vld [vmem:[%s200 + $0x229] sm:$0xff]
  %v564 = vld [vmem:[%s200 + $0x231] sm:$0xff]
  %v565 = vld [vmem:[%s200 + $0x241] sm:$0xff]
  %v566 = vld [vmem:[%s200 + $0x249] sm:$0xff]
  %v567 = vld [vmem:[%s200 + $0x259] sm:$0xff]
  %v568 = vld [vmem:[%s200 + $0x261] sm:$0xff]
  %v569 = vld [vmem:[%s200 + $0x271] sm:$0xff]
  %v570 = vld [vmem:[%s200 + $0x279] sm:$0xff]
  %v571 = vld [vmem:[%s200 + $0x289] sm:$0xff]
  %v572 = vld [vmem:[%s200 + $0x291] sm:$0xff]
  %v573 = vld [vmem:[%s200 + $0x2a1] sm:$0xff]
  %v574 = vld [vmem:[%s200 + $0x2a9] sm:$0xff]
  %v575 = vld [vmem:[%s200 + $0x2b9] sm:$0xff]
  %v576 = vld [vmem:[%s200 + $0x2c1] sm:$0xff]
  %v577 = vld [vmem:[%s200 + $0x2d1] sm:$0xff]
  %v578 = vld [vmem:[%s200 + $0x2d9] sm:$0xff]
  %v579 = vld [vmem:[%s200 + $0x2e9] sm:$0xff]
  %v580 = vld [vmem:[%s200 + $0x2f1] sm:$0xff]
  %v581 = vld [vmem:[%s200 + $0x301] sm:$0xff]
  %v582 = vld [vmem:[%s200 + $0x309] sm:$0xff]
  %v583 = vld [vmem:[%s200 + $0x319] sm:$0xff]
  %v584 = vld [vmem:[%s200 + $0x321] sm:$0xff]
  %v585 = vld [vmem:[%s200 + $0x2] sm:$0xff]
  %v586 = vld [vmem:[%s200 + $0xa] sm:$0xff]
  %v587 = vld [vmem:[%s200 + $0x1a] sm:$0xff]
  %v588 = vld [vmem:[%s200 + $0x22] sm:$0xff]
  %v589 = vld [vmem:[%s200 + $0x32] sm:$0xff]
  %v590 = vld [vmem:[%s200 + $0x3a] sm:$0xff]
  %v591 = vld [vmem:[%s200 + $0x4a] sm:$0xff]
  %v592 = vld [vmem:[%s200 + $0x52] sm:$0xff]
  %v593 = vld [vmem:[%s200 + $0x62] sm:$0xff]
  %v594 = vld [vmem:[%s200 + $0x6a] sm:$0xff]
  %v595 = vld [vmem:[%s200 + $0x7a] sm:$0xff]
  %v596 = vld [vmem:[%s200 + $0x82] sm:$0xff]
  %v597 = vld [vmem:[%s200 + $0x92] sm:$0xff]
  %v598 = vld [vmem:[%s200 + $0x9a] sm:$0xff]
  %v599 = vld [vmem:[%s200 + $0xaa] sm:$0xff]
  %v600 = vld [vmem:[%s200 + $0xb2] sm:$0xff]
  %v601 = vld [vmem:[%s200 + $0xc2] sm:$0xff]
  %v602 = vld [vmem:[%s200 + $0xca] sm:$0xff]
  %v603 = vld [vmem:[%s200 + $0xda] sm:$0xff]
  %v604 = vld [vmem:[%s200 + $0xe2] sm:$0xff]
  %v605 = vld [vmem:[%s200 + $0xf2] sm:$0xff]
  %v606 = vld [vmem:[%s200 + $0xfa] sm:$0xff]
  %v607 = vld [vmem:[%s200 + $0x10a] sm:$0xff]
  %v608 = vld [vmem:[%s200 + $0x112] sm:$0xff]
  %v609 = vld [vmem:[%s200 + $0x122] sm:$0xff]
  %v610 = vld [vmem:[%s200 + $0x12a] sm:$0xff]
  %v611 = vld [vmem:[%s200 + $0x13a] sm:$0xff]
  %v612 = vld [vmem:[%s200 + $0x142] sm:$0xff]
  %v613 = vld [vmem:[%s200 + $0x152] sm:$0xff]
  %v614 = vld [vmem:[%s200 + $0x15a] sm:$0xff]
  %v615 = vld [vmem:[%s200 + $0x16a] sm:$0xff]
  %v616 = vld [vmem:[%s200 + $0x172] sm:$0xff]
  %v617 = vld [vmem:[%s200 + $0x1b2] sm:$0xff]
  %v618 = vld [vmem:[%s200 + $0x1ba] sm:$0xff]
  %v619 = vld [vmem:[%s200 + $0x1ca] sm:$0xff]
  %v620 = vld [vmem:[%s200 + $0x1d2] sm:$0xff]
  %v621 = vld [vmem:[%s200 + $0x1e2] sm:$0xff]
  %v622 = vld [vmem:[%s200 + $0x1ea] sm:$0xff]
  %v623 = vld [vmem:[%s200 + $0x1fa] sm:$0xff]
  %v624 = vld [vmem:[%s200 + $0x202] sm:$0xff]
  %v625 = vld [vmem:[%s200 + $0x212] sm:$0xff]
  %v626 = vld [vmem:[%s200 + $0x21a] sm:$0xff]
  %v627 = vld [vmem:[%s200 + $0x22a] sm:$0xff]
  %v628 = vld [vmem:[%s200 + $0x232] sm:$0xff]
  %v629 = vld [vmem:[%s200 + $0x242] sm:$0xff]
  %v630 = vld [vmem:[%s200 + $0x24a] sm:$0xff]
  %v631 = vld [vmem:[%s200 + $0x25a] sm:$0xff]
  %v632 = vld [vmem:[%s200 + $0x262] sm:$0xff]
  %v633 = vld [vmem:[%s200 + $0x272] sm:$0xff]
  %v634 = vld [vmem:[%s200 + $0x27a] sm:$0xff]
  %v635 = vld [vmem:[%s200 + $0x28a] sm:$0xff]
  %v636 = vld [vmem:[%s200 + $0x292] sm:$0xff]
  %v637 = vld [vmem:[%s200 + $0x2a2] sm:$0xff]
  %v638 = vld [vmem:[%s200 + $0x2aa] sm:$0xff]
  %v639 = vld [vmem:[%s200 + $0x2ba] sm:$0xff]
  %v640 = vld [vmem:[%s200 + $0x2c2] sm:$0xff]
  %v641 = vld [vmem:[%s200 + $0x2d2] sm:$0xff]
  %v642 = vld [vmem:[%s200 + $0x2da] sm:$0xff]
  %v643 = vld [vmem:[%s200 + $0x2ea] sm:$0xff]
  %v644 = vld [vmem:[%s200 + $0x2f2] sm:$0xff]
  %v645 = vld [vmem:[%s200 + $0x302] sm:$0xff]
  %v646 = vld [vmem:[%s200 + $0x30a] sm:$0xff]
  %v647 = vld [vmem:[%s200 + $0x31a] sm:$0xff]
  %v648 = vld [vmem:[%s200 + $0x322] sm:$0xff]
  %s649 = scalar_lea.vmem [#allocation2], 48
  %v650 = vld [vmem:[%s649] sm:$0xff]
  %v651 = vld [vmem:[%s649 + $0x8] sm:$0xff]
  %v652 = vld [vmem:[%s649 + $0x18] sm:$0xff]
  %v653 = vld [vmem:[%s649 + $0x20] sm:$0xff]
  %v654 = vld [vmem:[%s649 + $0x30] sm:$0xff]
  %v655 = vld [vmem:[%s649 + $0x38] sm:$0xff]
  %v656 = vld [vmem:[%s649 + $0x48] sm:$0xff]
  %v657 = vld [vmem:[%s649 + $0x50] sm:$0xff]
  %v658 = vld [vmem:[%s649 + $0x60] sm:$0xff]
  %v659 = vld [vmem:[%s649 + $0x68] sm:$0xff]
  %v660 = vld [vmem:[%s649 + $0x78] sm:$0xff]
  %v661 = vld [vmem:[%s649 + $0x80] sm:$0xff]
  %v662 = vld [vmem:[%s649 + $0x90] sm:$0xff]
  %v663 = vld [vmem:[%s649 + $0x98] sm:$0xff]
  %v664 = vld [vmem:[%s649 + $0xa8] sm:$0xff]
  %v665 = vld [vmem:[%s649 + $0xb0] sm:$0xff]
  %v666 = vld [vmem:[%s649 + $0xc0] sm:$0xff]
  %v667 = vld [vmem:[%s649 + $0xc8] sm:$0xff]
  %v668 = vld [vmem:[%s649 + $0xd8] sm:$0xff]
  %v669 = vld [vmem:[%s649 + $0xe0] sm:$0xff]
  %v670 = vld [vmem:[%s649 + $0xf0] sm:$0xff]
  %v671 = vld [vmem:[%s649 + $0xf8] sm:$0xff]
  %v672 = vld [vmem:[%s649 + $0x108] sm:$0xff]
  %v673 = vld [vmem:[%s649 + $0x110] sm:$0xff]
  %v674 = vld [vmem:[%s649 + $0x120] sm:$0xff]
  %v675 = vld [vmem:[%s649 + $0x128] sm:$0xff]
  %v676 = vld [vmem:[%s649 + $0x138] sm:$0xff]
  %v677 = vld [vmem:[%s649 + $0x140] sm:$0xff]
  %v678 = vld [vmem:[%s649 + $0x150] sm:$0xff]
  %v679 = vld [vmem:[%s649 + $0x158] sm:$0xff]
  %v680 = vld [vmem:[%s649 + $0x168] sm:$0xff]
  %v681 = vld [vmem:[%s649 + $0x170] sm:$0xff]
  %v682 = vld [vmem:[%s649 + $0x1b0] sm:$0xff]
  %v683 = vld [vmem:[%s649 + $0x1b8] sm:$0xff]
  %v684 = vld [vmem:[%s649 + $0x1c8] sm:$0xff]
  %v685 = vld [vmem:[%s649 + $0x1d0] sm:$0xff]
  %v686 = vld [vmem:[%s649 + $0x1e0] sm:$0xff]
  %v687 = vld [vmem:[%s649 + $0x1e8] sm:$0xff]
  %v688 = vld [vmem:[%s649 + $0x1f8] sm:$0xff]
  %v689 = vld [vmem:[%s649 + $0x200] sm:$0xff]
  %v690 = vld [vmem:[%s649 + $0x210] sm:$0xff]
  %v691 = vld [vmem:[%s649 + $0x218] sm:$0xff]
  %v692 = vld [vmem:[%s649 + $0x228] sm:$0xff]
  %v693 = vld [vmem:[%s649 + $0x230] sm:$0xff]
  %v694 = vld [vmem:[%s649 + $0x240] sm:$0xff]
  %v695 = vld [vmem:[%s649 + $0x248] sm:$0xff]
  %v696 = vld [vmem:[%s649 + $0x258] sm:$0xff]
  %v697 = vld [vmem:[%s649 + $0x260] sm:$0xff]
  %v698 = vld [vmem:[%s649 + $0x270] sm:$0xff]
  %v699 = vld [vmem:[%s649 + $0x278] sm:$0xff]
  %v700 = vld [vmem:[%s649 + $0x288] sm:$0xff]
  %v701 = vld [vmem:[%s649 + $0x290] sm:$0xff]
  %v702 = vld [vmem:[%s649 + $0x2a0] sm:$0xff]
  %v703 = vld [vmem:[%s649 + $0x2a8] sm:$0xff]
  %v704 = vld [vmem:[%s649 + $0x2b8] sm:$0xff]
  %v705 = vld [vmem:[%s649 + $0x2c0] sm:$0xff]
  %v706 = vld [vmem:[%s649 + $0x2d0] sm:$0xff]
  %v707 = vld [vmem:[%s649 + $0x2d8] sm:$0xff]
  %v708 = vld [vmem:[%s649 + $0x2e8] sm:$0xff]
  %v709 = vld [vmem:[%s649 + $0x2f0] sm:$0xff]
  %v710 = vld [vmem:[%s649 + $0x300] sm:$0xff]
  %v711 = vld [vmem:[%s649 + $0x308] sm:$0xff]
  %v712 = vld [vmem:[%s649 + $0x318] sm:$0xff]
  %v713 = vld [vmem:[%s649 + $0x320] sm:$0xff]
  %v714 = vld [vmem:[%s649 + $0x1] sm:$0xff]
  %v715 = vld [vmem:[%s649 + $0x9] sm:$0xff]
  %v716 = vld [vmem:[%s649 + $0x19] sm:$0xff]
  %v717 = vld [vmem:[%s649 + $0x21] sm:$0xff]
  %v718 = vld [vmem:[%s649 + $0x31] sm:$0xff]
  %v719 = vld [vmem:[%s649 + $0x39] sm:$0xff]
  %v720 = vld [vmem:[%s649 + $0x49] sm:$0xff]
  %v721 = vld [vmem:[%s649 + $0x51] sm:$0xff]
  %v722 = vld [vmem:[%s649 + $0x61] sm:$0xff]
  %v723 = vld [vmem:[%s649 + $0x69] sm:$0xff]
  %v724 = vld [vmem:[%s649 + $0x79] sm:$0xff]
  %v725 = vld [vmem:[%s649 + $0x81] sm:$0xff]
  %v726 = vld [vmem:[%s649 + $0x91] sm:$0xff]
  %v727 = vld [vmem:[%s649 + $0x99] sm:$0xff]
  %v728 = vld [vmem:[%s649 + $0xa9] sm:$0xff]
  %v729 = vld [vmem:[%s649 + $0xb1] sm:$0xff]
  %v730 = vld [vmem:[%s649 + $0xc1] sm:$0xff]
  %v731 = vld [vmem:[%s649 + $0xc9] sm:$0xff]
  %v732 = vld [vmem:[%s649 + $0xd9] sm:$0xff]
  %v733 = vld [vmem:[%s649 + $0xe1] sm:$0xff]
  %v734 = vld [vmem:[%s649 + $0xf1] sm:$0xff]
  %v735 = vld [vmem:[%s649 + $0xf9] sm:$0xff]
  %v736 = vld [vmem:[%s649 + $0x109] sm:$0xff]
  %v737 = vld [vmem:[%s649 + $0x111] sm:$0xff]
  %v738 = vld [vmem:[%s649 + $0x121] sm:$0xff]
  %v739 = vld [vmem:[%s649 + $0x129] sm:$0xff]
  %v740 = vld [vmem:[%s649 + $0x139] sm:$0xff]
  %v741 = vld [vmem:[%s649 + $0x141] sm:$0xff]
  %v742 = vld [vmem:[%s649 + $0x151] sm:$0xff]
  %v743 = vld [vmem:[%s649 + $0x159] sm:$0xff]
  %v744 = vld [vmem:[%s649 + $0x169] sm:$0xff]
  %v745 = vld [vmem:[%s649 + $0x171] sm:$0xff]
  %v746 = vld [vmem:[%s649 + $0x1b1] sm:$0xff]
  %v747 = vld [vmem:[%s649 + $0x1b9] sm:$0xff]
  %v748 = vld [vmem:[%s649 + $0x1c9] sm:$0xff]
  %v749 = vld [vmem:[%s649 + $0x1d1] sm:$0xff]
  %v750 = vld [vmem:[%s649 + $0x1e1] sm:$0xff]
  %v751 = vld [vmem:[%s649 + $0x1e9] sm:$0xff]
  %v752 = vld [vmem:[%s649 + $0x1f9] sm:$0xff]
  %v753 = vld [vmem:[%s649 + $0x201] sm:$0xff]
  %v754 = vld [vmem:[%s649 + $0x211] sm:$0xff]
  %v755 = vld [vmem:[%s649 + $0x219] sm:$0xff]
  %v756 = vld [vmem:[%s649 + $0x229] sm:$0xff]
  %v757 = vld [vmem:[%s649 + $0x231] sm:$0xff]
  %v758 = vld [vmem:[%s649 + $0x241] sm:$0xff]
  %v759 = vld [vmem:[%s649 + $0x249] sm:$0xff]
  %v760 = vld [vmem:[%s649 + $0x259] sm:$0xff]
  %v761 = vld [vmem:[%s649 + $0x261] sm:$0xff]
  %v762 = vld [vmem:[%s649 + $0x271] sm:$0xff]
  %v763 = vld [vmem:[%s649 + $0x279] sm:$0xff]
  %v764 = vld [vmem:[%s649 + $0x289] sm:$0xff]
  %v765 = vld [vmem:[%s649 + $0x291] sm:$0xff]
  %v766 = vld [vmem:[%s649 + $0x2a1] sm:$0xff]
  %v767 = vld [vmem:[%s649 + $0x2a9] sm:$0xff]
  %v768 = vld [vmem:[%s649 + $0x2b9] sm:$0xff]
  %v769 = vld [vmem:[%s649 + $0x2c1] sm:$0xff]
  %v770 = vld [vmem:[%s649 + $0x2d1] sm:$0xff]
  %v771 = vld [vmem:[%s649 + $0x2d9] sm:$0xff]
  %v772 = vld [vmem:[%s649 + $0x2e9] sm:$0xff]
  %v773 = vld [vmem:[%s649 + $0x2f1] sm:$0xff]
  %v774 = vld [vmem:[%s649 + $0x301] sm:$0xff]
  %v775 = vld [vmem:[%s649 + $0x309] sm:$0xff]
  %v776 = vld [vmem:[%s649 + $0x319] sm:$0xff]
  %v777 = vld [vmem:[%s649 + $0x321] sm:$0xff]
  %v778 = vld [vmem:[%s649 + $0x2] sm:$0xff]
  %v779 = vld [vmem:[%s649 + $0xa] sm:$0xff]
  %v780 = vld [vmem:[%s649 + $0x1a] sm:$0xff]
  %v781 = vld [vmem:[%s649 + $0x22] sm:$0xff]
  %v782 = vld [vmem:[%s649 + $0x32] sm:$0xff]
  %v783 = vld [vmem:[%s649 + $0x3a] sm:$0xff]
  %v784 = vld [vmem:[%s649 + $0x4a] sm:$0xff]
  %v785 = vld [vmem:[%s649 + $0x52] sm:$0xff]
  %v786 = vld [vmem:[%s649 + $0x62] sm:$0xff]
  %v787 = vld [vmem:[%s649 + $0x6a] sm:$0xff]
  %v788 = vld [vmem:[%s649 + $0x7a] sm:$0xff]
  %v789 = vld [vmem:[%s649 + $0x82] sm:$0xff]
  %v790 = vld [vmem:[%s649 + $0x92] sm:$0xff]
  %v791 = vld [vmem:[%s649 + $0x9a] sm:$0xff]
  %v792 = vld [vmem:[%s649 + $0xaa] sm:$0xff]
  %v793 = vld [vmem:[%s649 + $0xb2] sm:$0xff]
  %v794 = vld [vmem:[%s649 + $0xc2] sm:$0xff]
  %v795 = vld [vmem:[%s649 + $0xca] sm:$0xff]
  %v796 = vld [vmem:[%s649 + $0xda] sm:$0xff]
  %v797 = vld [vmem:[%s649 + $0xe2] sm:$0xff]
  %v798 = vld [vmem:[%s649 + $0xf2] sm:$0xff]
  %v799 = vld [vmem:[%s649 + $0xfa] sm:$0xff]
  %v800 = vld [vmem:[%s649 + $0x10a] sm:$0xff]
  %v801 = vld [vmem:[%s649 + $0x112] sm:$0xff]
  %v802 = vld [vmem:[%s649 + $0x122] sm:$0xff]
  %v803 = vld [vmem:[%s649 + $0x12a] sm:$0xff]
  %v804 = vld [vmem:[%s649 + $0x13a] sm:$0xff]
  %v805 = vld [vmem:[%s649 + $0x142] sm:$0xff]
  %v806 = vld [vmem:[%s649 + $0x152] sm:$0xff]
  %v807 = vld [vmem:[%s649 + $0x15a] sm:$0xff]
  %v808 = vld [vmem:[%s649 + $0x16a] sm:$0xff]
  %v809 = vld [vmem:[%s649 + $0x172] sm:$0xff]
  %v810 = vld [vmem:[%s649 + $0x1b2] sm:$0xff]
  %v811 = vld [vmem:[%s649 + $0x1ba] sm:$0xff]
  %v812 = vld [vmem:[%s649 + $0x1ca] sm:$0xff]
  %v813 = vld [vmem:[%s649 + $0x1d2] sm:$0xff]
  %v814 = vld [vmem:[%s649 + $0x1e2] sm:$0xff]
  %v815 = vld [vmem:[%s649 + $0x1ea] sm:$0xff]
  %v816 = vld [vmem:[%s649 + $0x1fa] sm:$0xff]
  %v817 = vld [vmem:[%s649 + $0x202] sm:$0xff]
  %v818 = vld [vmem:[%s649 + $0x212] sm:$0xff]
  %v819 = vld [vmem:[%s649 + $0x21a] sm:$0xff]
  %v820 = vld [vmem:[%s649 + $0x22a] sm:$0xff]
  %v821 = vld [vmem:[%s649 + $0x232] sm:$0xff]
  %v822 = vld [vmem:[%s649 + $0x242] sm:$0xff]
  %v823 = vld [vmem:[%s649 + $0x24a] sm:$0xff]
  %v824 = vld [vmem:[%s649 + $0x25a] sm:$0xff]
  %v825 = vld [vmem:[%s649 + $0x262] sm:$0xff]
  %v826 = vld [vmem:[%s649 + $0x272] sm:$0xff]
  %v827 = vld [vmem:[%s649 + $0x27a] sm:$0xff]
  %v828 = vld [vmem:[%s649 + $0x28a] sm:$0xff]
  %v829 = vld [vmem:[%s649 + $0x292] sm:$0xff]
  %v830 = vld [vmem:[%s649 + $0x2a2] sm:$0xff]
  %v831 = vld [vmem:[%s649 + $0x2aa] sm:$0xff]
  %v832 = vld [vmem:[%s649 + $0x2ba] sm:$0xff]
  %v833 = vld [vmem:[%s649 + $0x2c2] sm:$0xff]
  %v834 = vld [vmem:[%s649 + $0x2d2] sm:$0xff]
  %v835 = vld [vmem:[%s649 + $0x2da] sm:$0xff]
  %v836 = vld [vmem:[%s649 + $0x2ea] sm:$0xff]
  %v837 = vld [vmem:[%s649 + $0x2f2] sm:$0xff]
  %v838 = vld [vmem:[%s649 + $0x302] sm:$0xff]
  %v839 = vld [vmem:[%s649 + $0x30a] sm:$0xff]
  %v840 = vld [vmem:[%s649 + $0x31a] sm:$0xff]
  %v841 = vld [vmem:[%s649 + $0x322] sm:$0xff]
  %906 = vrot.lane.b32.xlu0 %v329, 4
  %v907 = vpop.permute.xlu0 %906
  %908 = vrot.lane.b32.xlu0 %v330, 4
  %v909 = vpop.permute.xlu0 %908
  %910 = vrot.lane.b32.xlu0 %v331, 4
  %v911 = vpop.permute.xlu0 %910
  %912 = vrot.lane.b32.xlu0 %v332, 4
  %v913 = vpop.permute.xlu0 %912
  %914 = vrot.lane.b32.xlu0 %v333, 4
  %v915 = vpop.permute.xlu0 %914
  %916 = vrot.lane.b32.xlu0 %v334, 4
  %v917 = vpop.permute.xlu0 %916
  %918 = vrot.lane.b32.xlu0 %v335, 4
  %v919 = vpop.permute.xlu0 %918
  %920 = vrot.lane.b32.xlu0 %v336, 4
  %v921 = vpop.permute.xlu0 %920
  %922 = vrot.lane.b32.xlu0 %v337, 4
  %v923 = vpop.permute.xlu0 %922
  %924 = vrot.lane.b32.xlu0 %v338, 4
  %v925 = vpop.permute.xlu0 %924
  %926 = vrot.lane.b32.xlu0 %v339, 4
  %v927 = vpop.permute.xlu0 %926
  %928 = vrot.lane.b32.xlu0 %v340, 4
  %v929 = vpop.permute.xlu0 %928
  %930 = vrot.lane.b32.xlu0 %v341, 4
  %v931 = vpop.permute.xlu0 %930
  %932 = vrot.lane.b32.xlu0 %v342, 4
  %v933 = vpop.permute.xlu0 %932
  %934 = vrot.lane.b32.xlu0 %v343, 4
  %v935 = vpop.permute.xlu0 %934
  %936 = vrot.lane.b32.xlu0 %v344, 4
  %v937 = vpop.permute.xlu0 %936
  %938 = vrot.lane.b32.xlu0 %v345, 4
  %v939 = vpop.permute.xlu0 %938
  %940 = vrot.lane.b32.xlu0 %v346, 4
  %v941 = vpop.permute.xlu0 %940
  %942 = vrot.lane.b32.xlu0 %v347, 4
  %v943 = vpop.permute.xlu0 %942
  %944 = vrot.lane.b32.xlu0 %v348, 4
  %v945 = vpop.permute.xlu0 %944
  %946 = vrot.lane.b32.xlu0 %v349, 4
  %v947 = vpop.permute.xlu0 %946
  %948 = vrot.lane.b32.xlu0 %v350, 4
  %v949 = vpop.permute.xlu0 %948
  %950 = vrot.lane.b32.xlu0 %v351, 4
  %v951 = vpop.permute.xlu0 %950
  %952 = vrot.lane.b32.xlu0 %v352, 4
  %v953 = vpop.permute.xlu0 %952
  %954 = vrot.lane.b32.xlu0 %v353, 4
  %v955 = vpop.permute.xlu0 %954
  %956 = vrot.lane.b32.xlu0 %v354, 4
  %v957 = vpop.permute.xlu0 %956
  %958 = vrot.lane.b32.xlu0 %v355, 4
  %v959 = vpop.permute.xlu0 %958
  %960 = vrot.lane.b32.xlu0 %v356, 4
  %v961 = vpop.permute.xlu0 %960
  %962 = vrot.lane.b32.xlu0 %v357, 4
  %v963 = vpop.permute.xlu0 %962
  %964 = vrot.lane.b32.xlu0 %v358, 4
  %v965 = vpop.permute.xlu0 %964
  %966 = vrot.lane.b32.xlu0 %v359, 4
  %v967 = vpop.permute.xlu0 %966
  %968 = vrot.lane.b32.xlu0 %v360, 4
  %v969 = vpop.permute.xlu0 %968
  %970 = vrot.lane.b32.xlu0 %v361, 4
  %v971 = vpop.permute.xlu0 %970
  %972 = vrot.lane.b32.xlu0 %v362, 4
  %v973 = vpop.permute.xlu0 %972
  %974 = vrot.lane.b32.xlu0 %v363, 4
  %v975 = vpop.permute.xlu0 %974
  %976 = vrot.lane.b32.xlu0 %v364, 4
  %v977 = vpop.permute.xlu0 %976
  %978 = vrot.lane.b32.xlu0 %v365, 4
  %v979 = vpop.permute.xlu0 %978
  %980 = vrot.lane.b32.xlu0 %v366, 4
  %v981 = vpop.permute.xlu0 %980
  %982 = vrot.lane.b32.xlu0 %v367, 4
  %v983 = vpop.permute.xlu0 %982
  %984 = vrot.lane.b32.xlu0 %v368, 4
  %v985 = vpop.permute.xlu0 %984
  %986 = vrot.lane.b32.xlu0 %v369, 4
  %v987 = vpop.permute.xlu0 %986
  %988 = vrot.lane.b32.xlu0 %v370, 4
  %v989 = vpop.permute.xlu0 %988
  %990 = vrot.lane.b32.xlu0 %v371, 4
  %v991 = vpop.permute.xlu0 %990
  %992 = vrot.lane.b32.xlu0 %v372, 4
  %v993 = vpop.permute.xlu0 %992
  %994 = vrot.lane.b32.xlu0 %v373, 4
  %v995 = vpop.permute.xlu0 %994
  %996 = vrot.lane.b32.xlu0 %v374, 4
  %v997 = vpop.permute.xlu0 %996
  %998 = vrot.lane.b32.xlu0 %v375, 4
  %v999 = vpop.permute.xlu0 %998
  %1000 = vrot.lane.b32.xlu0 %v376, 4
  %v1001 = vpop.permute.xlu0 %1000
  %1002 = vrot.lane.b32.xlu0 %v377, 4
  %v1003 = vpop.permute.xlu0 %1002
  %1004 = vrot.lane.b32.xlu0 %v378, 4
  %v1005 = vpop.permute.xlu0 %1004
  %1006 = vrot.lane.b32.xlu0 %v379, 4
  %v1007 = vpop.permute.xlu0 %1006
  %1008 = vrot.lane.b32.xlu0 %v380, 4
  %v1009 = vpop.permute.xlu0 %1008
  %1010 = vrot.lane.b32.xlu0 %v381, 4
  %v1011 = vpop.permute.xlu0 %1010
  %1012 = vrot.lane.b32.xlu0 %v382, 4
  %v1013 = vpop.permute.xlu0 %1012
  %1014 = vrot.lane.b32.xlu0 %v383, 4
  %v1015 = vpop.permute.xlu0 %1014
  %1016 = vrot.lane.b32.xlu0 %v384, 4
  %v1017 = vpop.permute.xlu0 %1016
  %1018 = vrot.lane.b32.xlu0 %v385, 4
  %v1019 = vpop.permute.xlu0 %1018
  %1020 = vrot.lane.b32.xlu0 %v386, 4
  %v1021 = vpop.permute.xlu0 %1020
  %1022 = vrot.lane.b32.xlu0 %v387, 4
  %v1023 = vpop.permute.xlu0 %1022
  %1024 = vrot.lane.b32.xlu0 %v388, 4
  %v1025 = vpop.permute.xlu0 %1024
  %1026 = vrot.lane.b32.xlu0 %v389, 4
  %v1027 = vpop.permute.xlu0 %1026
  %1028 = vrot.lane.b32.xlu0 %v390, 4
  %v1029 = vpop.permute.xlu0 %1028
  %1030 = vrot.lane.b32.xlu0 %v391, 4
  %v1031 = vpop.permute.xlu0 %1030
  %1032 = vrot.lane.b32.xlu0 %v392, 4
  %v1033 = vpop.permute.xlu0 %1032
  %1162 = vrot.lane.b32.xlu0 %v393, 8
  %v1163 = vpop.permute.xlu0 %1162
  %1164 = vrot.lane.b32.xlu0 %v394, 8
  %v1165 = vpop.permute.xlu0 %1164
  %1166 = vrot.lane.b32.xlu0 %v395, 8
  %v1167 = vpop.permute.xlu0 %1166
  %1168 = vrot.lane.b32.xlu0 %v396, 8
  %v1169 = vpop.permute.xlu0 %1168
  %1170 = vrot.lane.b32.xlu0 %v397, 8
  %v1171 = vpop.permute.xlu0 %1170
  %1172 = vrot.lane.b32.xlu0 %v398, 8
  %v1173 = vpop.permute.xlu0 %1172
  %1174 = vrot.lane.b32.xlu0 %v399, 8
  %v1175 = vpop.permute.xlu0 %1174
  %1176 = vrot.lane.b32.xlu0 %v400, 8
  %v1177 = vpop.permute.xlu0 %1176
  %1178 = vrot.lane.b32.xlu0 %v401, 8
  %v1179 = vpop.permute.xlu0 %1178
  %1180 = vrot.lane.b32.xlu0 %v402, 8
  %v1181 = vpop.permute.xlu0 %1180
  %1182 = vrot.lane.b32.xlu0 %v403, 8
  %v1183 = vpop.permute.xlu0 %1182
  %1184 = vrot.lane.b32.xlu0 %v404, 8
  %v1185 = vpop.permute.xlu0 %1184
  %1186 = vrot.lane.b32.xlu0 %v405, 8
  %v1187 = vpop.permute.xlu0 %1186
  %1188 = vrot.lane.b32.xlu0 %v406, 8
  %v1189 = vpop.permute.xlu0 %1188
  %1190 = vrot.lane.b32.xlu0 %v407, 8
  %v1191 = vpop.permute.xlu0 %1190
  %1192 = vrot.lane.b32.xlu0 %v408, 8
  %v1193 = vpop.permute.xlu0 %1192
  %1194 = vrot.lane.b32.xlu0 %v409, 8
  %v1195 = vpop.permute.xlu0 %1194
  %1196 = vrot.lane.b32.xlu0 %v410, 8
  %v1197 = vpop.permute.xlu0 %1196
  %1198 = vrot.lane.b32.xlu0 %v411, 8
  %v1199 = vpop.permute.xlu0 %1198
  %1200 = vrot.lane.b32.xlu0 %v412, 8
  %v1201 = vpop.permute.xlu0 %1200
  %1202 = vrot.lane.b32.xlu0 %v413, 8
  %v1203 = vpop.permute.xlu0 %1202
  %1204 = vrot.lane.b32.xlu0 %v414, 8
  %v1205 = vpop.permute.xlu0 %1204
  %1206 = vrot.lane.b32.xlu0 %v415, 8
  %v1207 = vpop.permute.xlu0 %1206
  %1208 = vrot.lane.b32.xlu0 %v416, 8
  %v1209 = vpop.permute.xlu0 %1208
  %1210 = vrot.lane.b32.xlu0 %v417, 8
  %v1211 = vpop.permute.xlu0 %1210
  %1212 = vrot.lane.b32.xlu0 %v418, 8
  %v1213 = vpop.permute.xlu0 %1212
  %1214 = vrot.lane.b32.xlu0 %v419, 8
  %v1215 = vpop.permute.xlu0 %1214
  %1216 = vrot.lane.b32.xlu0 %v420, 8
  %v1217 = vpop.permute.xlu0 %1216
  %1218 = vrot.lane.b32.xlu0 %v421, 8
  %v1219 = vpop.permute.xlu0 %1218
  %1220 = vrot.lane.b32.xlu0 %v422, 8
  %v1221 = vpop.permute.xlu0 %1220
  %1222 = vrot.lane.b32.xlu0 %v423, 8
  %v1223 = vpop.permute.xlu0 %1222
  %1224 = vrot.lane.b32.xlu0 %v424, 8
  %v1225 = vpop.permute.xlu0 %1224
  %1226 = vrot.lane.b32.xlu0 %v425, 8
  %v1227 = vpop.permute.xlu0 %1226
  %1228 = vrot.lane.b32.xlu0 %v426, 8
  %v1229 = vpop.permute.xlu0 %1228
  %1230 = vrot.lane.b32.xlu0 %v427, 8
  %v1231 = vpop.permute.xlu0 %1230
  %1232 = vrot.lane.b32.xlu0 %v428, 8
  %v1233 = vpop.permute.xlu0 %1232
  %1234 = vrot.lane.b32.xlu0 %v429, 8
  %v1235 = vpop.permute.xlu0 %1234
  %1236 = vrot.lane.b32.xlu0 %v430, 8
  %v1237 = vpop.permute.xlu0 %1236
  %1238 = vrot.lane.b32.xlu0 %v431, 8
  %v1239 = vpop.permute.xlu0 %1238
  %1240 = vrot.lane.b32.xlu0 %v432, 8
  %v1241 = vpop.permute.xlu0 %1240
  %1242 = vrot.lane.b32.xlu0 %v433, 8
  %v1243 = vpop.permute.xlu0 %1242
  %1244 = vrot.lane.b32.xlu0 %v434, 8
  %v1245 = vpop.permute.xlu0 %1244
  %1246 = vrot.lane.b32.xlu0 %v435, 8
  %v1247 = vpop.permute.xlu0 %1246
  %1248 = vrot.lane.b32.xlu0 %v436, 8
  %v1249 = vpop.permute.xlu0 %1248
  %1250 = vrot.lane.b32.xlu0 %v437, 8
  %v1251 = vpop.permute.xlu0 %1250
  %1252 = vrot.lane.b32.xlu0 %v438, 8
  %v1253 = vpop.permute.xlu0 %1252
  %1254 = vrot.lane.b32.xlu0 %v439, 8
  %v1255 = vpop.permute.xlu0 %1254
  %1256 = vrot.lane.b32.xlu0 %v440, 8
  %v1257 = vpop.permute.xlu0 %1256
  %1258 = vrot.lane.b32.xlu0 %v441, 8
  %v1259 = vpop.permute.xlu0 %1258
  %1260 = vrot.lane.b32.xlu0 %v442, 8
  %v1261 = vpop.permute.xlu0 %1260
  %1262 = vrot.lane.b32.xlu0 %v443, 8
  %v1263 = vpop.permute.xlu0 %1262
  %1264 = vrot.lane.b32.xlu0 %v444, 8
  %v1265 = vpop.permute.xlu0 %1264
  %1266 = vrot.lane.b32.xlu0 %v445, 8
  %v1267 = vpop.permute.xlu0 %1266
  %1268 = vrot.lane.b32.xlu0 %v446, 8
  %v1269 = vpop.permute.xlu0 %1268
  %1270 = vrot.lane.b32.xlu0 %v447, 8
  %v1271 = vpop.permute.xlu0 %1270
  %1272 = vrot.lane.b32.xlu0 %v448, 8
  %v1273 = vpop.permute.xlu0 %1272
  %1274 = vrot.lane.b32.xlu0 %v449, 8
  %v1275 = vpop.permute.xlu0 %1274
  %1276 = vrot.lane.b32.xlu0 %v450, 8
  %v1277 = vpop.permute.xlu0 %1276
  %1278 = vrot.lane.b32.xlu0 %v451, 8
  %v1279 = vpop.permute.xlu0 %1278
  %1280 = vrot.lane.b32.xlu0 %v452, 8
  %v1281 = vpop.permute.xlu0 %1280
  %1282 = vrot.lane.b32.xlu0 %v453, 8
  %v1283 = vpop.permute.xlu0 %1282
  %1284 = vrot.lane.b32.xlu0 %v454, 8
  %v1285 = vpop.permute.xlu0 %1284
  %1286 = vrot.lane.b32.xlu0 %v455, 8
  %v1287 = vpop.permute.xlu0 %1286
  %1288 = vrot.lane.b32.xlu0 %v456, 8
  %v1289 = vpop.permute.xlu0 %1288
  %1418 = vrot.lane.b32.xlu0 %v457, 12
  %v1419 = vpop.permute.xlu0 %1418
  %1420 = vrot.lane.b32.xlu0 %v458, 12
  %v1421 = vpop.permute.xlu0 %1420
  %1422 = vrot.lane.b32.xlu0 %v459, 12
  %v1423 = vpop.permute.xlu0 %1422
  %1424 = vrot.lane.b32.xlu0 %v460, 12
  %v1425 = vpop.permute.xlu0 %1424
  %1426 = vrot.lane.b32.xlu0 %v461, 12
  %v1427 = vpop.permute.xlu0 %1426
  %1428 = vrot.lane.b32.xlu0 %v462, 12
  %v1429 = vpop.permute.xlu0 %1428
  %1430 = vrot.lane.b32.xlu0 %v463, 12
  %v1431 = vpop.permute.xlu0 %1430
  %1432 = vrot.lane.b32.xlu0 %v464, 12
  %v1433 = vpop.permute.xlu0 %1432
  %1434 = vrot.lane.b32.xlu0 %v465, 12
  %v1435 = vpop.permute.xlu0 %1434
  %1436 = vrot.lane.b32.xlu0 %v466, 12
  %v1437 = vpop.permute.xlu0 %1436
  %1438 = vrot.lane.b32.xlu0 %v467, 12
  %v1439 = vpop.permute.xlu0 %1438
  %1440 = vrot.lane.b32.xlu0 %v468, 12
  %v1441 = vpop.permute.xlu0 %1440
  %1442 = vrot.lane.b32.xlu0 %v469, 12
  %v1443 = vpop.permute.xlu0 %1442
  %1444 = vrot.lane.b32.xlu0 %v470, 12
  %v1445 = vpop.permute.xlu0 %1444
  %1446 = vrot.lane.b32.xlu0 %v471, 12
  %v1447 = vpop.permute.xlu0 %1446
  %1448 = vrot.lane.b32.xlu0 %v472, 12
  %v1449 = vpop.permute.xlu0 %1448
  %1450 = vrot.lane.b32.xlu0 %v473, 12
  %v1451 = vpop.permute.xlu0 %1450
  %1452 = vrot.lane.b32.xlu0 %v474, 12
  %v1453 = vpop.permute.xlu0 %1452
  %1454 = vrot.lane.b32.xlu0 %v475, 12
  %v1455 = vpop.permute.xlu0 %1454
  %1456 = vrot.lane.b32.xlu0 %v476, 12
  %v1457 = vpop.permute.xlu0 %1456
  %1458 = vrot.lane.b32.xlu0 %v477, 12
  %v1459 = vpop.permute.xlu0 %1458
  %1460 = vrot.lane.b32.xlu0 %v478, 12
  %v1461 = vpop.permute.xlu0 %1460
  %1462 = vrot.lane.b32.xlu0 %v479, 12
  %v1463 = vpop.permute.xlu0 %1462
  %1464 = vrot.lane.b32.xlu0 %v480, 12
  %v1465 = vpop.permute.xlu0 %1464
  %1466 = vrot.lane.b32.xlu0 %v481, 12
  %v1467 = vpop.permute.xlu0 %1466
  %1468 = vrot.lane.b32.xlu0 %v482, 12
  %v1469 = vpop.permute.xlu0 %1468
  %1470 = vrot.lane.b32.xlu0 %v483, 12
  %v1471 = vpop.permute.xlu0 %1470
  %1472 = vrot.lane.b32.xlu0 %v484, 12
  %v1473 = vpop.permute.xlu0 %1472
  %1474 = vrot.lane.b32.xlu0 %v485, 12
  %v1475 = vpop.permute.xlu0 %1474
  %1476 = vrot.lane.b32.xlu0 %v486, 12
  %v1477 = vpop.permute.xlu0 %1476
  %1478 = vrot.lane.b32.xlu0 %v487, 12
  %v1479 = vpop.permute.xlu0 %1478
  %1480 = vrot.lane.b32.xlu0 %v488, 12
  %v1481 = vpop.permute.xlu0 %1480
  %1482 = vrot.lane.b32.xlu0 %v489, 12
  %v1483 = vpop.permute.xlu0 %1482
  %1484 = vrot.lane.b32.xlu0 %v490, 12
  %v1485 = vpop.permute.xlu0 %1484
  %1486 = vrot.lane.b32.xlu0 %v491, 12
  %v1487 = vpop.permute.xlu0 %1486
  %1488 = vrot.lane.b32.xlu0 %v492, 12
  %v1489 = vpop.permute.xlu0 %1488
  %1490 = vrot.lane.b32.xlu0 %v493, 12
  %v1491 = vpop.permute.xlu0 %1490
  %1492 = vrot.lane.b32.xlu0 %v494, 12
  %v1493 = vpop.permute.xlu0 %1492
  %1494 = vrot.lane.b32.xlu0 %v495, 12
  %v1495 = vpop.permute.xlu0 %1494
  %1496 = vrot.lane.b32.xlu0 %v496, 12
  %v1497 = vpop.permute.xlu0 %1496
  %1498 = vrot.lane.b32.xlu0 %v497, 12
  %v1499 = vpop.permute.xlu0 %1498
  %1500 = vrot.lane.b32.xlu0 %v498, 12
  %v1501 = vpop.permute.xlu0 %1500
  %1502 = vrot.lane.b32.xlu0 %v499, 12
  %v1503 = vpop.permute.xlu0 %1502
  %1504 = vrot.lane.b32.xlu0 %v500, 12
  %v1505 = vpop.permute.xlu0 %1504
  %1506 = vrot.lane.b32.xlu0 %v501, 12
  %v1507 = vpop.permute.xlu0 %1506
  %1508 = vrot.lane.b32.xlu0 %v502, 12
  %v1509 = vpop.permute.xlu0 %1508
  %1510 = vrot.lane.b32.xlu0 %v503, 12
  %v1511 = vpop.permute.xlu0 %1510
  %1512 = vrot.lane.b32.xlu0 %v504, 12
  %v1513 = vpop.permute.xlu0 %1512
  %1514 = vrot.lane.b32.xlu0 %v505, 12
  %v1515 = vpop.permute.xlu0 %1514
  %1516 = vrot.lane.b32.xlu0 %v506, 12
  %v1517 = vpop.permute.xlu0 %1516
  %1518 = vrot.lane.b32.xlu0 %v507, 12
  %v1519 = vpop.permute.xlu0 %1518
  %1520 = vrot.lane.b32.xlu0 %v508, 12
  %v1521 = vpop.permute.xlu0 %1520
  %1522 = vrot.lane.b32.xlu0 %v509, 12
  %v1523 = vpop.permute.xlu0 %1522
  %1524 = vrot.lane.b32.xlu0 %v510, 12
  %v1525 = vpop.permute.xlu0 %1524
  %1526 = vrot.lane.b32.xlu0 %v511, 12
  %v1527 = vpop.permute.xlu0 %1526
  %1528 = vrot.lane.b32.xlu0 %v512, 12
  %v1529 = vpop.permute.xlu0 %1528
  %1530 = vrot.lane.b32.xlu0 %v513, 12
  %v1531 = vpop.permute.xlu0 %1530
  %1532 = vrot.lane.b32.xlu0 %v514, 12
  %v1533 = vpop.permute.xlu0 %1532
  %1534 = vrot.lane.b32.xlu0 %v515, 12
  %v1535 = vpop.permute.xlu0 %1534
  %1536 = vrot.lane.b32.xlu0 %v516, 12
  %v1537 = vpop.permute.xlu0 %1536
  %1538 = vrot.lane.b32.xlu0 %v517, 12
  %v1539 = vpop.permute.xlu0 %1538
  %1540 = vrot.lane.b32.xlu0 %v518, 12
  %v1541 = vpop.permute.xlu0 %1540
  %1542 = vrot.lane.b32.xlu0 %v519, 12
  %v1543 = vpop.permute.xlu0 %1542
  %1544 = vrot.lane.b32.xlu0 %v520, 12
  %v1545 = vpop.permute.xlu0 %1544
  %1674 = vrot.lane.b32.xlu0 %v521, 16
  %v1675 = vpop.permute.xlu0 %1674
  %1676 = vrot.lane.b32.xlu0 %v522, 16
  %v1677 = vpop.permute.xlu0 %1676
  %1678 = vrot.lane.b32.xlu0 %v523, 16
  %v1679 = vpop.permute.xlu0 %1678
  %1680 = vrot.lane.b32.xlu0 %v524, 16
  %v1681 = vpop.permute.xlu0 %1680
  %1682 = vrot.lane.b32.xlu0 %v525, 16
  %v1683 = vpop.permute.xlu0 %1682
  %1684 = vrot.lane.b32.xlu0 %v526, 16
  %v1685 = vpop.permute.xlu0 %1684
  %1686 = vrot.lane.b32.xlu0 %v527, 16
  %v1687 = vpop.permute.xlu0 %1686
  %1688 = vrot.lane.b32.xlu0 %v528, 16
  %v1689 = vpop.permute.xlu0 %1688
  %1690 = vrot.lane.b32.xlu0 %v529, 16
  %v1691 = vpop.permute.xlu0 %1690
  %1692 = vrot.lane.b32.xlu0 %v530, 16
  %v1693 = vpop.permute.xlu0 %1692
  %1694 = vrot.lane.b32.xlu0 %v531, 16
  %v1695 = vpop.permute.xlu0 %1694
  %1696 = vrot.lane.b32.xlu0 %v532, 16
  %v1697 = vpop.permute.xlu0 %1696
  %1698 = vrot.lane.b32.xlu0 %v533, 16
  %v1699 = vpop.permute.xlu0 %1698
  %1700 = vrot.lane.b32.xlu0 %v534, 16
  %v1701 = vpop.permute.xlu0 %1700
  %1702 = vrot.lane.b32.xlu0 %v535, 16
  %v1703 = vpop.permute.xlu0 %1702
  %1704 = vrot.lane.b32.xlu0 %v536, 16
  %v1705 = vpop.permute.xlu0 %1704
  %1706 = vrot.lane.b32.xlu0 %v537, 16
  %v1707 = vpop.permute.xlu0 %1706
  %1708 = vrot.lane.b32.xlu0 %v538, 16
  %v1709 = vpop.permute.xlu0 %1708
  %1710 = vrot.lane.b32.xlu0 %v539, 16
  %v1711 = vpop.permute.xlu0 %1710
  %1712 = vrot.lane.b32.xlu0 %v540, 16
  %v1713 = vpop.permute.xlu0 %1712
  %1714 = vrot.lane.b32.xlu0 %v541, 16
  %v1715 = vpop.permute.xlu0 %1714
  %1716 = vrot.lane.b32.xlu0 %v542, 16
  %v1717 = vpop.permute.xlu0 %1716
  %1718 = vrot.lane.b32.xlu0 %v543, 16
  %v1719 = vpop.permute.xlu0 %1718
  %1720 = vrot.lane.b32.xlu0 %v544, 16
  %v1721 = vpop.permute.xlu0 %1720
  %1722 = vrot.lane.b32.xlu0 %v545, 16
  %v1723 = vpop.permute.xlu0 %1722
  %1724 = vrot.lane.b32.xlu0 %v546, 16
  %v1725 = vpop.permute.xlu0 %1724
  %1726 = vrot.lane.b32.xlu0 %v547, 16
  %v1727 = vpop.permute.xlu0 %1726
  %1728 = vrot.lane.b32.xlu0 %v548, 16
  %v1729 = vpop.permute.xlu0 %1728
  %1730 = vrot.lane.b32.xlu0 %v549, 16
  %v1731 = vpop.permute.xlu0 %1730
  %1732 = vrot.lane.b32.xlu0 %v550, 16
  %v1733 = vpop.permute.xlu0 %1732
  %1734 = vrot.lane.b32.xlu0 %v551, 16
  %v1735 = vpop.permute.xlu0 %1734
  %1736 = vrot.lane.b32.xlu0 %v552, 16
  %v1737 = vpop.permute.xlu0 %1736
  %1738 = vrot.lane.b32.xlu0 %v553, 16
  %v1739 = vpop.permute.xlu0 %1738
  %1740 = vrot.lane.b32.xlu0 %v554, 16
  %v1741 = vpop.permute.xlu0 %1740
  %1742 = vrot.lane.b32.xlu0 %v555, 16
  %v1743 = vpop.permute.xlu0 %1742
  %1744 = vrot.lane.b32.xlu0 %v556, 16
  %v1745 = vpop.permute.xlu0 %1744
  %1746 = vrot.lane.b32.xlu0 %v557, 16
  %v1747 = vpop.permute.xlu0 %1746
  %1748 = vrot.lane.b32.xlu0 %v558, 16
  %v1749 = vpop.permute.xlu0 %1748
  %1750 = vrot.lane.b32.xlu0 %v559, 16
  %v1751 = vpop.permute.xlu0 %1750
  %1752 = vrot.lane.b32.xlu0 %v560, 16
  %v1753 = vpop.permute.xlu0 %1752
  %1754 = vrot.lane.b32.xlu0 %v561, 16
  %v1755 = vpop.permute.xlu0 %1754
  %1756 = vrot.lane.b32.xlu0 %v562, 16
  %v1757 = vpop.permute.xlu0 %1756
  %1758 = vrot.lane.b32.xlu0 %v563, 16
  %v1759 = vpop.permute.xlu0 %1758
  %1760 = vrot.lane.b32.xlu0 %v564, 16
  %v1761 = vpop.permute.xlu0 %1760
  %1762 = vrot.lane.b32.xlu0 %v565, 16
  %v1763 = vpop.permute.xlu0 %1762
  %1764 = vrot.lane.b32.xlu0 %v566, 16
  %v1765 = vpop.permute.xlu0 %1764
  %1766 = vrot.lane.b32.xlu0 %v567, 16
  %v1767 = vpop.permute.xlu0 %1766
  %1768 = vrot.lane.b32.xlu0 %v568, 16
  %v1769 = vpop.permute.xlu0 %1768
  %1770 = vrot.lane.b32.xlu0 %v569, 16
  %v1771 = vpop.permute.xlu0 %1770
  %1772 = vrot.lane.b32.xlu0 %v570, 16
  %v1773 = vpop.permute.xlu0 %1772
  %1774 = vrot.lane.b32.xlu0 %v571, 16
  %v1775 = vpop.permute.xlu0 %1774
  %1776 = vrot.lane.b32.xlu0 %v572, 16
  %v1777 = vpop.permute.xlu0 %1776
  %1778 = vrot.lane.b32.xlu0 %v573, 16
  %v1779 = vpop.permute.xlu0 %1778
  %1780 = vrot.lane.b32.xlu0 %v574, 16
  %v1781 = vpop.permute.xlu0 %1780
  %1782 = vrot.lane.b32.xlu0 %v575, 16
  %v1783 = vpop.permute.xlu0 %1782
  %1784 = vrot.lane.b32.xlu0 %v576, 16
  %v1785 = vpop.permute.xlu0 %1784
  %1786 = vrot.lane.b32.xlu0 %v577, 16
  %v1787 = vpop.permute.xlu0 %1786
  %1788 = vrot.lane.b32.xlu0 %v578, 16
  %v1789 = vpop.permute.xlu0 %1788
  %1790 = vrot.lane.b32.xlu0 %v579, 16
  %v1791 = vpop.permute.xlu0 %1790
  %1792 = vrot.lane.b32.xlu0 %v580, 16
  %v1793 = vpop.permute.xlu0 %1792
  %1794 = vrot.lane.b32.xlu0 %v581, 16
  %v1795 = vpop.permute.xlu0 %1794
  %1796 = vrot.lane.b32.xlu0 %v582, 16
  %v1797 = vpop.permute.xlu0 %1796
  %1798 = vrot.lane.b32.xlu0 %v583, 16
  %v1799 = vpop.permute.xlu0 %1798
  %1800 = vrot.lane.b32.xlu0 %v584, 16
  %v1801 = vpop.permute.xlu0 %1800
  %1930 = vrot.lane.b32.xlu0 %v585, 20
  %v1931 = vpop.permute.xlu0 %1930
  %1932 = vrot.lane.b32.xlu0 %v586, 20
  %v1933 = vpop.permute.xlu0 %1932
  %1934 = vrot.lane.b32.xlu0 %v587, 20
  %v1935 = vpop.permute.xlu0 %1934
  %1936 = vrot.lane.b32.xlu0 %v588, 20
  %v1937 = vpop.permute.xlu0 %1936
  %1938 = vrot.lane.b32.xlu0 %v589, 20
  %v1939 = vpop.permute.xlu0 %1938
  %1940 = vrot.lane.b32.xlu0 %v590, 20
  %v1941 = vpop.permute.xlu0 %1940
  %1942 = vrot.lane.b32.xlu0 %v591, 20
  %v1943 = vpop.permute.xlu0 %1942
  %1944 = vrot.lane.b32.xlu0 %v592, 20
  %v1945 = vpop.permute.xlu0 %1944
  %1946 = vrot.lane.b32.xlu0 %v593, 20
  %v1947 = vpop.permute.xlu0 %1946
  %1948 = vrot.lane.b32.xlu0 %v594, 20
  %v1949 = vpop.permute.xlu0 %1948
  %1950 = vrot.lane.b32.xlu0 %v595, 20
  %v1951 = vpop.permute.xlu0 %1950
  %1952 = vrot.lane.b32.xlu0 %v596, 20
  %v1953 = vpop.permute.xlu0 %1952
  %1954 = vrot.lane.b32.xlu0 %v597, 20
  %v1955 = vpop.permute.xlu0 %1954
  %1956 = vrot.lane.b32.xlu0 %v598, 20
  %v1957 = vpop.permute.xlu0 %1956
  %1958 = vrot.lane.b32.xlu0 %v599, 20
  %v1959 = vpop.permute.xlu0 %1958
  %1960 = vrot.lane.b32.xlu0 %v600, 20
  %v1961 = vpop.permute.xlu0 %1960
  %1962 = vrot.lane.b32.xlu0 %v601, 20
  %v1963 = vpop.permute.xlu0 %1962
  %1964 = vrot.lane.b32.xlu0 %v602, 20
  %v1965 = vpop.permute.xlu0 %1964
  %1966 = vrot.lane.b32.xlu0 %v603, 20
  %v1967 = vpop.permute.xlu0 %1966
  %1968 = vrot.lane.b32.xlu0 %v604, 20
  %v1969 = vpop.permute.xlu0 %1968
  %1970 = vrot.lane.b32.xlu0 %v605, 20
  %v1971 = vpop.permute.xlu0 %1970
  %1972 = vrot.lane.b32.xlu0 %v606, 20
  %v1973 = vpop.permute.xlu0 %1972
  %1974 = vrot.lane.b32.xlu0 %v607, 20
  %v1975 = vpop.permute.xlu0 %1974
  %1976 = vrot.lane.b32.xlu0 %v608, 20
  %v1977 = vpop.permute.xlu0 %1976
  %1978 = vrot.lane.b32.xlu0 %v609, 20
  %v1979 = vpop.permute.xlu0 %1978
  %1980 = vrot.lane.b32.xlu0 %v610, 20
  %v1981 = vpop.permute.xlu0 %1980
  %1982 = vrot.lane.b32.xlu0 %v611, 20
  %v1983 = vpop.permute.xlu0 %1982
  %1984 = vrot.lane.b32.xlu0 %v612, 20
  %v1985 = vpop.permute.xlu0 %1984
  %1986 = vrot.lane.b32.xlu0 %v613, 20
  %v1987 = vpop.permute.xlu0 %1986
  %1988 = vrot.lane.b32.xlu0 %v614, 20
  %v1989 = vpop.permute.xlu0 %1988
  %1990 = vrot.lane.b32.xlu0 %v615, 20
  %v1991 = vpop.permute.xlu0 %1990
  %1992 = vrot.lane.b32.xlu0 %v616, 20
  %v1993 = vpop.permute.xlu0 %1992
  %1994 = vrot.lane.b32.xlu0 %v617, 20
  %v1995 = vpop.permute.xlu0 %1994
  %1996 = vrot.lane.b32.xlu0 %v618, 20
  %v1997 = vpop.permute.xlu0 %1996
  %1998 = vrot.lane.b32.xlu0 %v619, 20
  %v1999 = vpop.permute.xlu0 %1998
  %2000 = vrot.lane.b32.xlu0 %v620, 20
  %v2001 = vpop.permute.xlu0 %2000
  %2002 = vrot.lane.b32.xlu0 %v621, 20
  %v2003 = vpop.permute.xlu0 %2002
  %2004 = vrot.lane.b32.xlu0 %v622, 20
  %v2005 = vpop.permute.xlu0 %2004
  %2006 = vrot.lane.b32.xlu0 %v623, 20
  %v2007 = vpop.permute.xlu0 %2006
  %2008 = vrot.lane.b32.xlu0 %v624, 20
  %v2009 = vpop.permute.xlu0 %2008
  %2010 = vrot.lane.b32.xlu0 %v625, 20
  %v2011 = vpop.permute.xlu0 %2010
  %2012 = vrot.lane.b32.xlu0 %v626, 20
  %v2013 = vpop.permute.xlu0 %2012
  %2014 = vrot.lane.b32.xlu0 %v627, 20
  %v2015 = vpop.permute.xlu0 %2014
  %2016 = vrot.lane.b32.xlu0 %v628, 20
  %v2017 = vpop.permute.xlu0 %2016
  %2018 = vrot.lane.b32.xlu0 %v629, 20
  %v2019 = vpop.permute.xlu0 %2018
  %2020 = vrot.lane.b32.xlu0 %v630, 20
  %v2021 = vpop.permute.xlu0 %2020
  %2022 = vrot.lane.b32.xlu0 %v631, 20
  %v2023 = vpop.permute.xlu0 %2022
  %2024 = vrot.lane.b32.xlu0 %v632, 20
  %v2025 = vpop.permute.xlu0 %2024
  %2026 = vrot.lane.b32.xlu0 %v633, 20
  %v2027 = vpop.permute.xlu0 %2026
  %2028 = vrot.lane.b32.xlu0 %v634, 20
  %v2029 = vpop.permute.xlu0 %2028
  %2030 = vrot.lane.b32.xlu0 %v635, 20
  %v2031 = vpop.permute.xlu0 %2030
  %2032 = vrot.lane.b32.xlu0 %v636, 20
  %v2033 = vpop.permute.xlu0 %2032
  %2034 = vrot.lane.b32.xlu0 %v637, 20
  %v2035 = vpop.permute.xlu0 %2034
  %2036 = vrot.lane.b32.xlu0 %v638, 20
  %v2037 = vpop.permute.xlu0 %2036
  %2038 = vrot.lane.b32.xlu0 %v639, 20
  %v2039 = vpop.permute.xlu0 %2038
  %2040 = vrot.lane.b32.xlu0 %v640, 20
  %v2041 = vpop.permute.xlu0 %2040
  %2042 = vrot.lane.b32.xlu0 %v641, 20
  %v2043 = vpop.permute.xlu0 %2042
  %2044 = vrot.lane.b32.xlu0 %v642, 20
  %v2045 = vpop.permute.xlu0 %2044
  %2046 = vrot.lane.b32.xlu0 %v643, 20
  %v2047 = vpop.permute.xlu0 %2046
  %2048 = vrot.lane.b32.xlu0 %v644, 20
  %v2049 = vpop.permute.xlu0 %2048
  %2050 = vrot.lane.b32.xlu0 %v645, 20
  %v2051 = vpop.permute.xlu0 %2050
  %2052 = vrot.lane.b32.xlu0 %v646, 20
  %v2053 = vpop.permute.xlu0 %2052
  %2054 = vrot.lane.b32.xlu0 %v647, 20
  %v2055 = vpop.permute.xlu0 %2054
  %2056 = vrot.lane.b32.xlu0 %v648, 20
  %v2057 = vpop.permute.xlu0 %2056
  %2186 = vrot.lane.b32.xlu0 %v650, 24
  %v2187 = vpop.permute.xlu0 %2186
  %2188 = vrot.lane.b32.xlu0 %v651, 24
  %v2189 = vpop.permute.xlu0 %2188
  %2190 = vrot.lane.b32.xlu0 %v652, 24
  %v2191 = vpop.permute.xlu0 %2190
  %2192 = vrot.lane.b32.xlu0 %v653, 24
  %v2193 = vpop.permute.xlu0 %2192
  %2194 = vrot.lane.b32.xlu0 %v654, 24
  %v2195 = vpop.permute.xlu0 %2194
  %2196 = vrot.lane.b32.xlu0 %v655, 24
  %v2197 = vpop.permute.xlu0 %2196
  %2198 = vrot.lane.b32.xlu0 %v656, 24
  %v2199 = vpop.permute.xlu0 %2198
  %2200 = vrot.lane.b32.xlu0 %v657, 24
  %v2201 = vpop.permute.xlu0 %2200
  %2202 = vrot.lane.b32.xlu0 %v658, 24
  %v2203 = vpop.permute.xlu0 %2202
  %2204 = vrot.lane.b32.xlu0 %v659, 24
  %v2205 = vpop.permute.xlu0 %2204
  %2206 = vrot.lane.b32.xlu0 %v660, 24
  %v2207 = vpop.permute.xlu0 %2206
  %2208 = vrot.lane.b32.xlu0 %v661, 24
  %v2209 = vpop.permute.xlu0 %2208
  %2210 = vrot.lane.b32.xlu0 %v662, 24
  %v2211 = vpop.permute.xlu0 %2210
  %2212 = vrot.lane.b32.xlu0 %v663, 24
  %v2213 = vpop.permute.xlu0 %2212
  %2214 = vrot.lane.b32.xlu0 %v664, 24
  %v2215 = vpop.permute.xlu0 %2214
  %2216 = vrot.lane.b32.xlu0 %v665, 24
  %v2217 = vpop.permute.xlu0 %2216
  %2218 = vrot.lane.b32.xlu0 %v666, 24
  %v2219 = vpop.permute.xlu0 %2218
  %2220 = vrot.lane.b32.xlu0 %v667, 24
  %v2221 = vpop.permute.xlu0 %2220
  %2222 = vrot.lane.b32.xlu0 %v668, 24
  %v2223 = vpop.permute.xlu0 %2222
  %2224 = vrot.lane.b32.xlu0 %v669, 24
  %v2225 = vpop.permute.xlu0 %2224
  %2226 = vrot.lane.b32.xlu0 %v670, 24
  %v2227 = vpop.permute.xlu0 %2226
  %2228 = vrot.lane.b32.xlu0 %v671, 24
  %v2229 = vpop.permute.xlu0 %2228
  %2230 = vrot.lane.b32.xlu0 %v672, 24
  %v2231 = vpop.permute.xlu0 %2230
  %2232 = vrot.lane.b32.xlu0 %v673, 24
  %v2233 = vpop.permute.xlu0 %2232
  %2234 = vrot.lane.b32.xlu0 %v674, 24
  %v2235 = vpop.permute.xlu0 %2234
  %2236 = vrot.lane.b32.xlu0 %v675, 24
  %v2237 = vpop.permute.xlu0 %2236
  %2238 = vrot.lane.b32.xlu0 %v676, 24
  %v2239 = vpop.permute.xlu0 %2238
  %2240 = vrot.lane.b32.xlu0 %v677, 24
  %v2241 = vpop.permute.xlu0 %2240
  %2242 = vrot.lane.b32.xlu0 %v678, 24
  %v2243 = vpop.permute.xlu0 %2242
  %2244 = vrot.lane.b32.xlu0 %v679, 24
  %v2245 = vpop.permute.xlu0 %2244
  %2246 = vrot.lane.b32.xlu0 %v680, 24
  %v2247 = vpop.permute.xlu0 %2246
  %2248 = vrot.lane.b32.xlu0 %v681, 24
  %v2249 = vpop.permute.xlu0 %2248
  %2250 = vrot.lane.b32.xlu0 %v682, 24
  %v2251 = vpop.permute.xlu0 %2250
  %2252 = vrot.lane.b32.xlu0 %v683, 24
  %v2253 = vpop.permute.xlu0 %2252
  %2254 = vrot.lane.b32.xlu0 %v684, 24
  %v2255 = vpop.permute.xlu0 %2254
  %2256 = vrot.lane.b32.xlu0 %v685, 24
  %v2257 = vpop.permute.xlu0 %2256
  %2258 = vrot.lane.b32.xlu0 %v686, 24
  %v2259 = vpop.permute.xlu0 %2258
  %2260 = vrot.lane.b32.xlu0 %v687, 24
  %v2261 = vpop.permute.xlu0 %2260
  %2262 = vrot.lane.b32.xlu0 %v688, 24
  %v2263 = vpop.permute.xlu0 %2262
  %2264 = vrot.lane.b32.xlu0 %v689, 24
  %v2265 = vpop.permute.xlu0 %2264
  %2266 = vrot.lane.b32.xlu0 %v690, 24
  %v2267 = vpop.permute.xlu0 %2266
  %2268 = vrot.lane.b32.xlu0 %v691, 24
  %v2269 = vpop.permute.xlu0 %2268
  %2270 = vrot.lane.b32.xlu0 %v692, 24
  %v2271 = vpop.permute.xlu0 %2270
  %2272 = vrot.lane.b32.xlu0 %v693, 24
  %v2273 = vpop.permute.xlu0 %2272
  %2274 = vrot.lane.b32.xlu0 %v694, 24
  %v2275 = vpop.permute.xlu0 %2274
  %2276 = vrot.lane.b32.xlu0 %v695, 24
  %v2277 = vpop.permute.xlu0 %2276
  %2278 = vrot.lane.b32.xlu0 %v696, 24
  %v2279 = vpop.permute.xlu0 %2278
  %2280 = vrot.lane.b32.xlu0 %v697, 24
  %v2281 = vpop.permute.xlu0 %2280
  %2282 = vrot.lane.b32.xlu0 %v698, 24
  %v2283 = vpop.permute.xlu0 %2282
  %2284 = vrot.lane.b32.xlu0 %v699, 24
  %v2285 = vpop.permute.xlu0 %2284
  %2286 = vrot.lane.b32.xlu0 %v700, 24
  %v2287 = vpop.permute.xlu0 %2286
  %2288 = vrot.lane.b32.xlu0 %v701, 24
  %v2289 = vpop.permute.xlu0 %2288
  %2290 = vrot.lane.b32.xlu0 %v702, 24
  %v2291 = vpop.permute.xlu0 %2290
  %2292 = vrot.lane.b32.xlu0 %v703, 24
  %v2293 = vpop.permute.xlu0 %2292
  %2294 = vrot.lane.b32.xlu0 %v704, 24
  %v2295 = vpop.permute.xlu0 %2294
  %2296 = vrot.lane.b32.xlu0 %v705, 24
  %v2297 = vpop.permute.xlu0 %2296
  %2298 = vrot.lane.b32.xlu0 %v706, 24
  %v2299 = vpop.permute.xlu0 %2298
  %2300 = vrot.lane.b32.xlu0 %v707, 24
  %v2301 = vpop.permute.xlu0 %2300
  %2302 = vrot.lane.b32.xlu0 %v708, 24
  %v2303 = vpop.permute.xlu0 %2302
  %2304 = vrot.lane.b32.xlu0 %v709, 24
  %v2305 = vpop.permute.xlu0 %2304
  %2306 = vrot.lane.b32.xlu0 %v710, 24
  %v2307 = vpop.permute.xlu0 %2306
  %2308 = vrot.lane.b32.xlu0 %v711, 24
  %v2309 = vpop.permute.xlu0 %2308
  %2310 = vrot.lane.b32.xlu0 %v712, 24
  %v2311 = vpop.permute.xlu0 %2310
  %2312 = vrot.lane.b32.xlu0 %v713, 24
  %v2313 = vpop.permute.xlu0 %2312
  %2442 = vrot.lane.b32.xlu0 %v714, 28
  %v2443 = vpop.permute.xlu0 %2442
  %2444 = vrot.lane.b32.xlu0 %v715, 28
  %v2445 = vpop.permute.xlu0 %2444
  %2446 = vrot.lane.b32.xlu0 %v716, 28
  %v2447 = vpop.permute.xlu0 %2446
  %2448 = vrot.lane.b32.xlu0 %v717, 28
  %v2449 = vpop.permute.xlu0 %2448
  %2450 = vrot.lane.b32.xlu0 %v718, 28
  %v2451 = vpop.permute.xlu0 %2450
  %2452 = vrot.lane.b32.xlu0 %v719, 28
  %v2453 = vpop.permute.xlu0 %2452
  %2454 = vrot.lane.b32.xlu0 %v720, 28
  %v2455 = vpop.permute.xlu0 %2454
  %2456 = vrot.lane.b32.xlu0 %v721, 28
  %v2457 = vpop.permute.xlu0 %2456
  %2458 = vrot.lane.b32.xlu0 %v722, 28
  %v2459 = vpop.permute.xlu0 %2458
  %2460 = vrot.lane.b32.xlu0 %v723, 28
  %v2461 = vpop.permute.xlu0 %2460
  %2462 = vrot.lane.b32.xlu0 %v724, 28
  %v2463 = vpop.permute.xlu0 %2462
  %2464 = vrot.lane.b32.xlu0 %v725, 28
  %v2465 = vpop.permute.xlu0 %2464
  %2466 = vrot.lane.b32.xlu0 %v726, 28
  %v2467 = vpop.permute.xlu0 %2466
  %2468 = vrot.lane.b32.xlu0 %v727, 28
  %v2469 = vpop.permute.xlu0 %2468
  %2470 = vrot.lane.b32.xlu0 %v728, 28
  %v2471 = vpop.permute.xlu0 %2470
  %2472 = vrot.lane.b32.xlu0 %v729, 28
  %v2473 = vpop.permute.xlu0 %2472
  %2474 = vrot.lane.b32.xlu0 %v730, 28
  %v2475 = vpop.permute.xlu0 %2474
  %2476 = vrot.lane.b32.xlu0 %v731, 28
  %v2477 = vpop.permute.xlu0 %2476
  %2478 = vrot.lane.b32.xlu0 %v732, 28
  %v2479 = vpop.permute.xlu0 %2478
  %2480 = vrot.lane.b32.xlu0 %v733, 28
  %v2481 = vpop.permute.xlu0 %2480
  %2482 = vrot.lane.b32.xlu0 %v734, 28
  %v2483 = vpop.permute.xlu0 %2482
  %2484 = vrot.lane.b32.xlu0 %v735, 28
  %v2485 = vpop.permute.xlu0 %2484
  %2486 = vrot.lane.b32.xlu0 %v736, 28
  %v2487 = vpop.permute.xlu0 %2486
  %2488 = vrot.lane.b32.xlu0 %v737, 28
  %v2489 = vpop.permute.xlu0 %2488
  %2490 = vrot.lane.b32.xlu0 %v738, 28
  %v2491 = vpop.permute.xlu0 %2490
  %2492 = vrot.lane.b32.xlu0 %v739, 28
  %v2493 = vpop.permute.xlu0 %2492
  %2494 = vrot.lane.b32.xlu0 %v740, 28
  %v2495 = vpop.permute.xlu0 %2494
  %2496 = vrot.lane.b32.xlu0 %v741, 28
  %v2497 = vpop.permute.xlu0 %2496
  %2498 = vrot.lane.b32.xlu0 %v742, 28
  %v2499 = vpop.permute.xlu0 %2498
  %2500 = vrot.lane.b32.xlu0 %v743, 28
  %v2501 = vpop.permute.xlu0 %2500
  %2502 = vrot.lane.b32.xlu0 %v744, 28
  %v2503 = vpop.permute.xlu0 %2502
  %2504 = vrot.lane.b32.xlu0 %v745, 28
  %v2505 = vpop.permute.xlu0 %2504
  %2506 = vrot.lane.b32.xlu0 %v746, 28
  %v2507 = vpop.permute.xlu0 %2506
  %2508 = vrot.lane.b32.xlu0 %v747, 28
  %v2509 = vpop.permute.xlu0 %2508
  %2510 = vrot.lane.b32.xlu0 %v748, 28
  %v2511 = vpop.permute.xlu0 %2510
  %2512 = vrot.lane.b32.xlu0 %v749, 28
  %v2513 = vpop.permute.xlu0 %2512
  %2514 = vrot.lane.b32.xlu0 %v750, 28
  %v2515 = vpop.permute.xlu0 %2514
  %2516 = vrot.lane.b32.xlu0 %v751, 28
  %v2517 = vpop.permute.xlu0 %2516
  %2518 = vrot.lane.b32.xlu0 %v752, 28
  %v2519 = vpop.permute.xlu0 %2518
  %2520 = vrot.lane.b32.xlu0 %v753, 28
  %v2521 = vpop.permute.xlu0 %2520
  %2522 = vrot.lane.b32.xlu0 %v754, 28
  %v2523 = vpop.permute.xlu0 %2522
  %2524 = vrot.lane.b32.xlu0 %v755, 28
  %v2525 = vpop.permute.xlu0 %2524
  %2526 = vrot.lane.b32.xlu0 %v756, 28
  %v2527 = vpop.permute.xlu0 %2526
  %2528 = vrot.lane.b32.xlu0 %v757, 28
  %v2529 = vpop.permute.xlu0 %2528
  %2530 = vrot.lane.b32.xlu0 %v758, 28
  %v2531 = vpop.permute.xlu0 %2530
  %2532 = vrot.lane.b32.xlu0 %v759, 28
  %v2533 = vpop.permute.xlu0 %2532
  %2534 = vrot.lane.b32.xlu0 %v760, 28
  %v2535 = vpop.permute.xlu0 %2534
  %2536 = vrot.lane.b32.xlu0 %v761, 28
  %v2537 = vpop.permute.xlu0 %2536
  %2538 = vrot.lane.b32.xlu0 %v762, 28
  %v2539 = vpop.permute.xlu0 %2538
  %2540 = vrot.lane.b32.xlu0 %v763, 28
  %v2541 = vpop.permute.xlu0 %2540
  %2542 = vrot.lane.b32.xlu0 %v764, 28
  %v2543 = vpop.permute.xlu0 %2542
  %2544 = vrot.lane.b32.xlu0 %v765, 28
  %v2545 = vpop.permute.xlu0 %2544
  %2546 = vrot.lane.b32.xlu0 %v766, 28
  %v2547 = vpop.permute.xlu0 %2546
  %2548 = vrot.lane.b32.xlu0 %v767, 28
  %v2549 = vpop.permute.xlu0 %2548
  %2550 = vrot.lane.b32.xlu0 %v768, 28
  %v2551 = vpop.permute.xlu0 %2550
  %2552 = vrot.lane.b32.xlu0 %v769, 28
  %v2553 = vpop.permute.xlu0 %2552
  %2554 = vrot.lane.b32.xlu0 %v770, 28
  %v2555 = vpop.permute.xlu0 %2554
  %2556 = vrot.lane.b32.xlu0 %v771, 28
  %v2557 = vpop.permute.xlu0 %2556
  %2558 = vrot.lane.b32.xlu0 %v772, 28
  %v2559 = vpop.permute.xlu0 %2558
  %2560 = vrot.lane.b32.xlu0 %v773, 28
  %v2561 = vpop.permute.xlu0 %2560
  %2562 = vrot.lane.b32.xlu0 %v774, 28
  %v2563 = vpop.permute.xlu0 %2562
  %2564 = vrot.lane.b32.xlu0 %v775, 28
  %v2565 = vpop.permute.xlu0 %2564
  %2566 = vrot.lane.b32.xlu0 %v776, 28
  %v2567 = vpop.permute.xlu0 %2566
  %2568 = vrot.lane.b32.xlu0 %v777, 28
  %v2569 = vpop.permute.xlu0 %2568
  %2698 = vrot.lane.b32.xlu0 %v778, 32
  %v2699 = vpop.permute.xlu0 %2698
  %2700 = vrot.lane.b32.xlu0 %v779, 32
  %v2701 = vpop.permute.xlu0 %2700
  %2702 = vrot.lane.b32.xlu0 %v780, 32
  %v2703 = vpop.permute.xlu0 %2702
  %2704 = vrot.lane.b32.xlu0 %v781, 32
  %v2705 = vpop.permute.xlu0 %2704
  %2706 = vrot.lane.b32.xlu0 %v782, 32
  %v2707 = vpop.permute.xlu0 %2706
  %2708 = vrot.lane.b32.xlu0 %v783, 32
  %v2709 = vpop.permute.xlu0 %2708
  %2710 = vrot.lane.b32.xlu0 %v784, 32
  %v2711 = vpop.permute.xlu0 %2710
  %2712 = vrot.lane.b32.xlu0 %v785, 32
  %v2713 = vpop.permute.xlu0 %2712
  %2714 = vrot.lane.b32.xlu0 %v786, 32
  %v2715 = vpop.permute.xlu0 %2714
  %2716 = vrot.lane.b32.xlu0 %v787, 32
  %v2717 = vpop.permute.xlu0 %2716
  %2718 = vrot.lane.b32.xlu0 %v788, 32
  %v2719 = vpop.permute.xlu0 %2718
  %2720 = vrot.lane.b32.xlu0 %v789, 32
  %v2721 = vpop.permute.xlu0 %2720
  %2722 = vrot.lane.b32.xlu0 %v790, 32
  %v2723 = vpop.permute.xlu0 %2722
  %2724 = vrot.lane.b32.xlu0 %v791, 32
  %v2725 = vpop.permute.xlu0 %2724
  %2726 = vrot.lane.b32.xlu0 %v792, 32
  %v2727 = vpop.permute.xlu0 %2726
  %2728 = vrot.lane.b32.xlu0 %v793, 32
  %v2729 = vpop.permute.xlu0 %2728
  %2730 = vrot.lane.b32.xlu0 %v794, 32
  %v2731 = vpop.permute.xlu0 %2730
  %2732 = vrot.lane.b32.xlu0 %v795, 32
  %v2733 = vpop.permute.xlu0 %2732
  %2734 = vrot.lane.b32.xlu0 %v796, 32
  %v2735 = vpop.permute.xlu0 %2734
  %2736 = vrot.lane.b32.xlu0 %v797, 32
  %v2737 = vpop.permute.xlu0 %2736
  %2738 = vrot.lane.b32.xlu0 %v798, 32
  %v2739 = vpop.permute.xlu0 %2738
  %2740 = vrot.lane.b32.xlu0 %v799, 32
  %v2741 = vpop.permute.xlu0 %2740
  %2742 = vrot.lane.b32.xlu0 %v800, 32
  %v2743 = vpop.permute.xlu0 %2742
  %2744 = vrot.lane.b32.xlu0 %v801, 32
  %v2745 = vpop.permute.xlu0 %2744
  %2746 = vrot.lane.b32.xlu0 %v802, 32
  %v2747 = vpop.permute.xlu0 %2746
  %2748 = vrot.lane.b32.xlu0 %v803, 32
  %v2749 = vpop.permute.xlu0 %2748
  %2750 = vrot.lane.b32.xlu0 %v804, 32
  %v2751 = vpop.permute.xlu0 %2750
  %2752 = vrot.lane.b32.xlu0 %v805, 32
  %v2753 = vpop.permute.xlu0 %2752
  %2754 = vrot.lane.b32.xlu0 %v806, 32
  %v2755 = vpop.permute.xlu0 %2754
  %2756 = vrot.lane.b32.xlu0 %v807, 32
  %v2757 = vpop.permute.xlu0 %2756
  %2758 = vrot.lane.b32.xlu0 %v808, 32
  %v2759 = vpop.permute.xlu0 %2758
  %2760 = vrot.lane.b32.xlu0 %v809, 32
  %v2761 = vpop.permute.xlu0 %2760
  %2762 = vrot.lane.b32.xlu0 %v810, 32
  %v2763 = vpop.permute.xlu0 %2762
  %2764 = vrot.lane.b32.xlu0 %v811, 32
  %v2765 = vpop.permute.xlu0 %2764
  %2766 = vrot.lane.b32.xlu0 %v812, 32
  %v2767 = vpop.permute.xlu0 %2766
  %2768 = vrot.lane.b32.xlu0 %v813, 32
  %v2769 = vpop.permute.xlu0 %2768
  %2770 = vrot.lane.b32.xlu0 %v814, 32
  %v2771 = vpop.permute.xlu0 %2770
  %2772 = vrot.lane.b32.xlu0 %v815, 32
  %v2773 = vpop.permute.xlu0 %2772
  %2774 = vrot.lane.b32.xlu0 %v816, 32
  %v2775 = vpop.permute.xlu0 %2774
  %2776 = vrot.lane.b32.xlu0 %v817, 32
  %v2777 = vpop.permute.xlu0 %2776
  %2778 = vrot.lane.b32.xlu0 %v818, 32
  %v2779 = vpop.permute.xlu0 %2778
  %2780 = vrot.lane.b32.xlu0 %v819, 32
  %v2781 = vpop.permute.xlu0 %2780
  %2782 = vrot.lane.b32.xlu0 %v820, 32
  %v2783 = vpop.permute.xlu0 %2782
  %2784 = vrot.lane.b32.xlu0 %v821, 32
  %v2785 = vpop.permute.xlu0 %2784
  %2786 = vrot.lane.b32.xlu0 %v822, 32
  %v2787 = vpop.permute.xlu0 %2786
  %2788 = vrot.lane.b32.xlu0 %v823, 32
  %v2789 = vpop.permute.xlu0 %2788
  %2790 = vrot.lane.b32.xlu0 %v824, 32
  %v2791 = vpop.permute.xlu0 %2790
  %2792 = vrot.lane.b32.xlu0 %v825, 32
  %v2793 = vpop.permute.xlu0 %2792
  %2794 = vrot.lane.b32.xlu0 %v826, 32
  %v2795 = vpop.permute.xlu0 %2794
  %2796 = vrot.lane.b32.xlu0 %v827, 32
  %v2797 = vpop.permute.xlu0 %2796
  %2798 = vrot.lane.b32.xlu0 %v828, 32
  %v2799 = vpop.permute.xlu0 %2798
  %2800 = vrot.lane.b32.xlu0 %v829, 32
  %v2801 = vpop.permute.xlu0 %2800
  %2802 = vrot.lane.b32.xlu0 %v830, 32
  %v2803 = vpop.permute.xlu0 %2802
  %2804 = vrot.lane.b32.xlu0 %v831, 32
  %v2805 = vpop.permute.xlu0 %2804
  %2806 = vrot.lane.b32.xlu0 %v832, 32
  %v2807 = vpop.permute.xlu0 %2806
  %2808 = vrot.lane.b32.xlu0 %v833, 32
  %v2809 = vpop.permute.xlu0 %2808
  %2810 = vrot.lane.b32.xlu0 %v834, 32
  %v2811 = vpop.permute.xlu0 %2810
  %2812 = vrot.lane.b32.xlu0 %v835, 32
  %v2813 = vpop.permute.xlu0 %2812
  %2814 = vrot.lane.b32.xlu0 %v836, 32
  %v2815 = vpop.permute.xlu0 %2814
  %2816 = vrot.lane.b32.xlu0 %v837, 32
  %v2817 = vpop.permute.xlu0 %2816
  %2818 = vrot.lane.b32.xlu0 %v838, 32
  %v2819 = vpop.permute.xlu0 %2818
  %2820 = vrot.lane.b32.xlu0 %v839, 32
  %v2821 = vpop.permute.xlu0 %2820
  %2822 = vrot.lane.b32.xlu0 %v840, 32
  %v2823 = vpop.permute.xlu0 %2822
  %2824 = vrot.lane.b32.xlu0 %v841, 32
  %v2825 = vpop.permute.xlu0 %2824
  %v2890 = vsel %vm26, %v265, %v907
  %v2891 = vsel %vm26, %v266, %v909
  %v2892 = vsel %vm26, %v267, %v911
  %v2893 = vsel %vm26, %v268, %v913
  %v2894 = vsel %vm26, %v269, %v915
  %v2895 = vsel %vm26, %v270, %v917
  %v2896 = vsel %vm26, %v271, %v919
  %v2897 = vsel %vm26, %v272, %v921
  %v2898 = vsel %vm26, %v273, %v923
  %v2899 = vsel %vm26, %v274, %v925
  %v2900 = vsel %vm26, %v275, %v927
  %v2901 = vsel %vm26, %v276, %v929
  %v2902 = vsel %vm26, %v277, %v931
  %v2903 = vsel %vm26, %v278, %v933
  %v2904 = vsel %vm26, %v279, %v935
  %v2905 = vsel %vm26, %v280, %v937
  %v2906 = vsel %vm26, %v281, %v939
  %v2907 = vsel %vm26, %v282, %v941
  %v2908 = vsel %vm26, %v283, %v943
  %v2909 = vsel %vm26, %v284, %v945
  %v2910 = vsel %vm26, %v285, %v947
  %v2911 = vsel %vm26, %v286, %v949
  %v2912 = vsel %vm26, %v287, %v951
  %v2913 = vsel %vm26, %v288, %v953
  %v2914 = vsel %vm26, %v289, %v955
  %v2915 = vsel %vm26, %v290, %v957
  %v2916 = vsel %vm26, %v291, %v959
  %v2917 = vsel %vm26, %v292, %v961
  %v2918 = vsel %vm26, %v293, %v963
  %v2919 = vsel %vm26, %v294, %v965
  %v2920 = vsel %vm26, %v295, %v967
  %v2921 = vsel %vm26, %v296, %v969
  %v2922 = vsel %vm26, %v297, %v971
  %v2923 = vsel %vm26, %v298, %v973
  %v2924 = vsel %vm26, %v299, %v975
  %v2925 = vsel %vm26, %v300, %v977
  %v2926 = vsel %vm26, %v301, %v979
  %v2927 = vsel %vm26, %v302, %v981
  %v2928 = vsel %vm26, %v303, %v983
  %v2929 = vsel %vm26, %v304, %v985
  %v2930 = vsel %vm26, %v305, %v987
  %v2931 = vsel %vm26, %v306, %v989
  %v2932 = vsel %vm26, %v307, %v991
  %v2933 = vsel %vm26, %v308, %v993
  %v2934 = vsel %vm26, %v309, %v995
  %v2935 = vsel %vm26, %v310, %v997
  %v2936 = vsel %vm26, %v311, %v999
  %v2937 = vsel %vm26, %v312, %v1001
  %v2938 = vsel %vm26, %v313, %v1003
  %v2939 = vsel %vm26, %v314, %v1005
  %v2940 = vsel %vm26, %v315, %v1007
  %v2941 = vsel %vm26, %v316, %v1009
  %v2942 = vsel %vm26, %v317, %v1011
  %v2943 = vsel %vm26, %v318, %v1013
  %v2944 = vsel %vm26, %v319, %v1015
  %v2945 = vsel %vm26, %v320, %v1017
  %v2946 = vsel %vm26, %v321, %v1019
  %v2947 = vsel %vm26, %v322, %v1021
  %v2948 = vsel %vm26, %v323, %v1023
  %v2949 = vsel %vm26, %v324, %v1025
  %v2950 = vsel %vm26, %v325, %v1027
  %v2951 = vsel %vm26, %v326, %v1029
  %v2952 = vsel %vm26, %v327, %v1031
  %v2953 = vsel %vm26, %v328, %v1033
  %vm2954 = vcmask 64512
  %v2955 = vsel %vm2954, %v2890, %v1163
  %v2956 = vsel %vm2954, %v2891, %v1165
  %v2957 = vsel %vm2954, %v2892, %v1167
  %v2958 = vsel %vm2954, %v2893, %v1169
  %v2959 = vsel %vm2954, %v2894, %v1171
  %v2960 = vsel %vm2954, %v2895, %v1173
  %v2961 = vsel %vm2954, %v2896, %v1175
  %v2962 = vsel %vm2954, %v2897, %v1177
  %v2963 = vsel %vm2954, %v2898, %v1179
  %v2964 = vsel %vm2954, %v2899, %v1181
  %v2965 = vsel %vm2954, %v2900, %v1183
  %v2966 = vsel %vm2954, %v2901, %v1185
  %v2967 = vsel %vm2954, %v2902, %v1187
  %v2968 = vsel %vm2954, %v2903, %v1189
  %v2969 = vsel %vm2954, %v2904, %v1191
  %v2970 = vsel %vm2954, %v2905, %v1193
  %v2971 = vsel %vm2954, %v2906, %v1195
  %v2972 = vsel %vm2954, %v2907, %v1197
  %v2973 = vsel %vm2954, %v2908, %v1199
  %v2974 = vsel %vm2954, %v2909, %v1201
  %v2975 = vsel %vm2954, %v2910, %v1203
  %v2976 = vsel %vm2954, %v2911, %v1205
  %v2977 = vsel %vm2954, %v2912, %v1207
  %v2978 = vsel %vm2954, %v2913, %v1209
  %v2979 = vsel %vm2954, %v2914, %v1211
  %v2980 = vsel %vm2954, %v2915, %v1213
  %v2981 = vsel %vm2954, %v2916, %v1215
  %v2982 = vsel %vm2954, %v2917, %v1217
  %v2983 = vsel %vm2954, %v2918, %v1219
  %v2984 = vsel %vm2954, %v2919, %v1221
  %v2985 = vsel %vm2954, %v2920, %v1223
  %v2986 = vsel %vm2954, %v2921, %v1225
  %v2987 = vsel %vm2954, %v2922, %v1227
  %v2988 = vsel %vm2954, %v2923, %v1229
  %v2989 = vsel %vm2954, %v2924, %v1231
  %v2990 = vsel %vm2954, %v2925, %v1233
  %v2991 = vsel %vm2954, %v2926, %v1235
  %v2992 = vsel %vm2954, %v2927, %v1237
  %v2993 = vsel %vm2954, %v2928, %v1239
  %v2994 = vsel %vm2954, %v2929, %v1241
  %v2995 = vsel %vm2954, %v2930, %v1243
  %v2996 = vsel %vm2954, %v2931, %v1245
  %v2997 = vsel %vm2954, %v2932, %v1247
  %v2998 = vsel %vm2954, %v2933, %v1249
  %v2999 = vsel %vm2954, %v2934, %v1251
  %v3000 = vsel %vm2954, %v2935, %v1253
  %v3001 = vsel %vm2954, %v2936, %v1255
  %v3002 = vsel %vm2954, %v2937, %v1257
  %v3003 = vsel %vm2954, %v2938, %v1259
  %v3004 = vsel %vm2954, %v2939, %v1261
  %v3005 = vsel %vm2954, %v2940, %v1263
  %v3006 = vsel %vm2954, %v2941, %v1265
  %v3007 = vsel %vm2954, %v2942, %v1267
  %v3008 = vsel %vm2954, %v2943, %v1269
  %v3009 = vsel %vm2954, %v2944, %v1271
  %v3010 = vsel %vm2954, %v2945, %v1273
  %v3011 = vsel %vm2954, %v2946, %v1275
  %v3012 = vsel %vm2954, %v2947, %v1277
  %v3013 = vsel %vm2954, %v2948, %v1279
  %v3014 = vsel %vm2954, %v2949, %v1281
  %v3015 = vsel %vm2954, %v2950, %v1283
  %v3016 = vsel %vm2954, %v2951, %v1285
  %v3017 = vsel %vm2954, %v2952, %v1287
  %v3018 = vsel %vm2954, %v2953, %v1289
  %vm3019 = vcmask 97280
  %v3020 = vsel %vm3019, %v2955, %v1419
  %v3021 = vsel %vm3019, %v2956, %v1421
  %v3022 = vsel %vm3019, %v2957, %v1423
  %v3023 = vsel %vm3019, %v2958, %v1425
  %v3024 = vsel %vm3019, %v2959, %v1427
  %v3025 = vsel %vm3019, %v2960, %v1429
  %v3026 = vsel %vm3019, %v2961, %v1431
  %v3027 = vsel %vm3019, %v2962, %v1433
  %v3028 = vsel %vm3019, %v2963, %v1435
  %v3029 = vsel %vm3019, %v2964, %v1437
  %v3030 = vsel %vm3019, %v2965, %v1439
  %v3031 = vsel %vm3019, %v2966, %v1441
  %v3032 = vsel %vm3019, %v2967, %v1443
  %v3033 = vsel %vm3019, %v2968, %v1445
  %v3034 = vsel %vm3019, %v2969, %v1447
  %v3035 = vsel %vm3019, %v2970, %v1449
  %v3036 = vsel %vm3019, %v2971, %v1451
  %v3037 = vsel %vm3019, %v2972, %v1453
  %v3038 = vsel %vm3019, %v2973, %v1455
  %v3039 = vsel %vm3019, %v2974, %v1457
  %v3040 = vsel %vm3019, %v2975, %v1459
  %v3041 = vsel %vm3019, %v2976, %v1461
  %v3042 = vsel %vm3019, %v2977, %v1463
  %v3043 = vsel %vm3019, %v2978, %v1465
  %v3044 = vsel %vm3019, %v2979, %v1467
  %v3045 = vsel %vm3019, %v2980, %v1469
  %v3046 = vsel %vm3019, %v2981, %v1471
  %v3047 = vsel %vm3019, %v2982, %v1473
  %v3048 = vsel %vm3019, %v2983, %v1475
  %v3049 = vsel %vm3019, %v2984, %v1477
  %v3050 = vsel %vm3019, %v2985, %v1479
  %v3051 = vsel %vm3019, %v2986, %v1481
  %v3052 = vsel %vm3019, %v2987, %v1483
  %v3053 = vsel %vm3019, %v2988, %v1485
  %v3054 = vsel %vm3019, %v2989, %v1487
  %v3055 = vsel %vm3019, %v2990, %v1489
  %v3056 = vsel %vm3019, %v2991, %v1491
  %v3057 = vsel %vm3019, %v2992, %v1493
  %v3058 = vsel %vm3019, %v2993, %v1495
  %v3059 = vsel %vm3019, %v2994, %v1497
  %v3060 = vsel %vm3019, %v2995, %v1499
  %v3061 = vsel %vm3019, %v2996, %v1501
  %v3062 = vsel %vm3019, %v2997, %v1503
  %v3063 = vsel %vm3019, %v2998, %v1505
  %v3064 = vsel %vm3019, %v2999, %v1507
  %v3065 = vsel %vm3019, %v3000, %v1509
  %v3066 = vsel %vm3019, %v3001, %v1511
  %v3067 = vsel %vm3019, %v3002, %v1513
  %v3068 = vsel %vm3019, %v3003, %v1515
  %v3069 = vsel %vm3019, %v3004, %v1517
  %v3070 = vsel %vm3019, %v3005, %v1519
  %v3071 = vsel %vm3019, %v3006, %v1521
  %v3072 = vsel %vm3019, %v3007, %v1523
  %v3073 = vsel %vm3019, %v3008, %v1525
  %v3074 = vsel %vm3019, %v3009, %v1527
  %v3075 = vsel %vm3019, %v3010, %v1529
  %v3076 = vsel %vm3019, %v3011, %v1531
  %v3077 = vsel %vm3019, %v3012, %v1533
  %v3078 = vsel %vm3019, %v3013, %v1535
  %v3079 = vsel %vm3019, %v3014, %v1537
  %v3080 = vsel %vm3019, %v3015, %v1539
  %v3081 = vsel %vm3019, %v3016, %v1541
  %v3082 = vsel %vm3019, %v3017, %v1543
  %v3083 = vsel %vm3019, %v3018, %v1545
  %vm3084 = vcmask 130048
  %v3085 = vsel %vm3084, %v3020, %v1675
  %v3086 = vsel %vm3084, %v3021, %v1677
  %v3087 = vsel %vm3084, %v3022, %v1679
  %v3088 = vsel %vm3084, %v3023, %v1681
  %v3089 = vsel %vm3084, %v3024, %v1683
  %v3090 = vsel %vm3084, %v3025, %v1685
  %v3091 = vsel %vm3084, %v3026, %v1687
  %v3092 = vsel %vm3084, %v3027, %v1689
  %v3093 = vsel %vm3084, %v3028, %v1691
  %v3094 = vsel %vm3084, %v3029, %v1693
  %v3095 = vsel %vm3084, %v3030, %v1695
  %v3096 = vsel %vm3084, %v3031, %v1697
  %v3097 = vsel %vm3084, %v3032, %v1699
  %v3098 = vsel %vm3084, %v3033, %v1701
  %v3099 = vsel %vm3084, %v3034, %v1703
  %v3100 = vsel %vm3084, %v3035, %v1705
  %v3101 = vsel %vm3084, %v3036, %v1707
  %v3102 = vsel %vm3084, %v3037, %v1709
  %v3103 = vsel %vm3084, %v3038, %v1711
  %v3104 = vsel %vm3084, %v3039, %v1713
  %v3105 = vsel %vm3084, %v3040, %v1715
  %v3106 = vsel %vm3084, %v3041, %v1717
  %v3107 = vsel %vm3084, %v3042, %v1719
  %v3108 = vsel %vm3084, %v3043, %v1721
  %v3109 = vsel %vm3084, %v3044, %v1723
  %v3110 = vsel %vm3084, %v3045, %v1725
  %v3111 = vsel %vm3084, %v3046, %v1727
  %v3112 = vsel %vm3084, %v3047, %v1729
  %v3113 = vsel %vm3084, %v3048, %v1731
  %v3114 = vsel %vm3084, %v3049, %v1733
  %v3115 = vsel %vm3084, %v3050, %v1735
  %v3116 = vsel %vm3084, %v3051, %v1737
  %v3117 = vsel %vm3084, %v3052, %v1739
  %v3118 = vsel %vm3084, %v3053, %v1741
  %v3119 = vsel %vm3084, %v3054, %v1743
  %v3120 = vsel %vm3084, %v3055, %v1745
  %v3121 = vsel %vm3084, %v3056, %v1747
  %v3122 = vsel %vm3084, %v3057, %v1749
  %v3123 = vsel %vm3084, %v3058, %v1751
  %v3124 = vsel %vm3084, %v3059, %v1753
  %v3125 = vsel %vm3084, %v3060, %v1755
  %v3126 = vsel %vm3084, %v3061, %v1757
  %v3127 = vsel %vm3084, %v3062, %v1759
  %v3128 = vsel %vm3084, %v3063, %v1761
  %v3129 = vsel %vm3084, %v3064, %v1763
  %v3130 = vsel %vm3084, %v3065, %v1765
  %v3131 = vsel %vm3084, %v3066, %v1767
  %v3132 = vsel %vm3084, %v3067, %v1769
  %v3133 = vsel %vm3084, %v3068, %v1771
  %v3134 = vsel %vm3084, %v3069, %v1773
  %v3135 = vsel %vm3084, %v3070, %v1775
  %v3136 = vsel %vm3084, %v3071, %v1777
  %v3137 = vsel %vm3084, %v3072, %v1779
  %v3138 = vsel %vm3084, %v3073, %v1781
  %v3139 = vsel %vm3084, %v3074, %v1783
  %v3140 = vsel %vm3084, %v3075, %v1785
  %v3141 = vsel %vm3084, %v3076, %v1787
  %v3142 = vsel %vm3084, %v3077, %v1789
  %v3143 = vsel %vm3084, %v3078, %v1791
  %v3144 = vsel %vm3084, %v3079, %v1793
  %v3145 = vsel %vm3084, %v3080, %v1795
  %v3146 = vsel %vm3084, %v3081, %v1797
  %v3147 = vsel %vm3084, %v3082, %v1799
  %v3148 = vsel %vm3084, %v3083, %v1801
  %vm3149 = vcmask 162816
  %v3150 = vsel %vm3149, %v3085, %v1931
  %v3151 = vsel %vm3149, %v3086, %v1933
  %v3152 = vsel %vm3149, %v3087, %v1935
  %v3153 = vsel %vm3149, %v3088, %v1937
  %v3154 = vsel %vm3149, %v3089, %v1939
  %v3155 = vsel %vm3149, %v3090, %v1941
  %v3156 = vsel %vm3149, %v3091, %v1943
  %v3157 = vsel %vm3149, %v3092, %v1945
  %v3158 = vsel %vm3149, %v3093, %v1947
  %v3159 = vsel %vm3149, %v3094, %v1949
  %v3160 = vsel %vm3149, %v3095, %v1951
  %v3161 = vsel %vm3149, %v3096, %v1953
  %v3162 = vsel %vm3149, %v3097, %v1955
  %v3163 = vsel %vm3149, %v3098, %v1957
  %v3164 = vsel %vm3149, %v3099, %v1959
  %v3165 = vsel %vm3149, %v3100, %v1961
  %v3166 = vsel %vm3149, %v3101, %v1963
  %v3167 = vsel %vm3149, %v3102, %v1965
  %v3168 = vsel %vm3149, %v3103, %v1967
  %v3169 = vsel %vm3149, %v3104, %v1969
  %v3170 = vsel %vm3149, %v3105, %v1971
  %v3171 = vsel %vm3149, %v3106, %v1973
  %v3172 = vsel %vm3149, %v3107, %v1975
  %v3173 = vsel %vm3149, %v3108, %v1977
  %v3174 = vsel %vm3149, %v3109, %v1979
  %v3175 = vsel %vm3149, %v3110, %v1981
  %v3176 = vsel %vm3149, %v3111, %v1983
  %v3177 = vsel %vm3149, %v3112, %v1985
  %v3178 = vsel %vm3149, %v3113, %v1987
  %v3179 = vsel %vm3149, %v3114, %v1989
  %v3180 = vsel %vm3149, %v3115, %v1991
  %v3181 = vsel %vm3149, %v3116, %v1993
  %v3182 = vsel %vm3149, %v3117, %v1995
  %v3183 = vsel %vm3149, %v3118, %v1997
  %v3184 = vsel %vm3149, %v3119, %v1999
  %v3185 = vsel %vm3149, %v3120, %v2001
  %v3186 = vsel %vm3149, %v3121, %v2003
  %v3187 = vsel %vm3149, %v3122, %v2005
  %v3188 = vsel %vm3149, %v3123, %v2007
  %v3189 = vsel %vm3149, %v3124, %v2009
  %v3190 = vsel %vm3149, %v3125, %v2011
  %v3191 = vsel %vm3149, %v3126, %v2013
  %v3192 = vsel %vm3149, %v3127, %v2015
  %v3193 = vsel %vm3149, %v3128, %v2017
  %v3194 = vsel %vm3149, %v3129, %v2019
  %v3195 = vsel %vm3149, %v3130, %v2021
  %v3196 = vsel %vm3149, %v3131, %v2023
  %v3197 = vsel %vm3149, %v3132, %v2025
  %v3198 = vsel %vm3149, %v3133, %v2027
  %v3199 = vsel %vm3149, %v3134, %v2029
  %v3200 = vsel %vm3149, %v3135, %v2031
  %v3201 = vsel %vm3149, %v3136, %v2033
  %v3202 = vsel %vm3149, %v3137, %v2035
  %v3203 = vsel %vm3149, %v3138, %v2037
  %v3204 = vsel %vm3149, %v3139, %v2039
  %v3205 = vsel %vm3149, %v3140, %v2041
  %v3206 = vsel %vm3149, %v3141, %v2043
  %v3207 = vsel %vm3149, %v3142, %v2045
  %v3208 = vsel %vm3149, %v3143, %v2047
  %v3209 = vsel %vm3149, %v3144, %v2049
  %v3210 = vsel %vm3149, %v3145, %v2051
  %v3211 = vsel %vm3149, %v3146, %v2053
  %v3212 = vsel %vm3149, %v3147, %v2055
  %v3213 = vsel %vm3149, %v3148, %v2057
  %vm3214 = vcmask 195584
  %v3215 = vsel %vm3214, %v3150, %v2187
  %v3216 = vsel %vm3214, %v3151, %v2189
  %v3217 = vsel %vm3214, %v3152, %v2191
  %v3218 = vsel %vm3214, %v3153, %v2193
  %v3219 = vsel %vm3214, %v3154, %v2195
  %v3220 = vsel %vm3214, %v3155, %v2197
  %v3221 = vsel %vm3214, %v3156, %v2199
  %v3222 = vsel %vm3214, %v3157, %v2201
  %v3223 = vsel %vm3214, %v3158, %v2203
  %v3224 = vsel %vm3214, %v3159, %v2205
  %v3225 = vsel %vm3214, %v3160, %v2207
  %v3226 = vsel %vm3214, %v3161, %v2209
  %v3227 = vsel %vm3214, %v3162, %v2211
  %v3228 = vsel %vm3214, %v3163, %v2213
  %v3229 = vsel %vm3214, %v3164, %v2215
  %v3230 = vsel %vm3214, %v3165, %v2217
  %v3231 = vsel %vm3214, %v3166, %v2219
  %v3232 = vsel %vm3214, %v3167, %v2221
  %v3233 = vsel %vm3214, %v3168, %v2223
  %v3234 = vsel %vm3214, %v3169, %v2225
  %v3235 = vsel %vm3214, %v3170, %v2227
  %v3236 = vsel %vm3214, %v3171, %v2229
  %v3237 = vsel %vm3214, %v3172, %v2231
  %v3238 = vsel %vm3214, %v3173, %v2233
  %v3239 = vsel %vm3214, %v3174, %v2235
  %v3240 = vsel %vm3214, %v3175, %v2237
  %v3241 = vsel %vm3214, %v3176, %v2239
  %v3242 = vsel %vm3214, %v3177, %v2241
  %v3243 = vsel %vm3214, %v3178, %v2243
  %v3244 = vsel %vm3214, %v3179, %v2245
  %v3245 = vsel %vm3214, %v3180, %v2247
  %v3246 = vsel %vm3214, %v3181, %v2249
  %v3247 = vsel %vm3214, %v3182, %v2251
  %v3248 = vsel %vm3214, %v3183, %v2253
  %v3249 = vsel %vm3214, %v3184, %v2255
  %v3250 = vsel %vm3214, %v3185, %v2257
  %v3251 = vsel %vm3214, %v3186, %v2259
  %v3252 = vsel %vm3214, %v3187, %v2261
  %v3253 = vsel %vm3214, %v3188, %v2263
  %v3254 = vsel %vm3214, %v3189, %v2265
  %v3255 = vsel %vm3214, %v3190, %v2267
  %v3256 = vsel %vm3214, %v3191, %v2269
  %v3257 = vsel %vm3214, %v3192, %v2271
  %v3258 = vsel %vm3214, %v3193, %v2273
  %v3259 = vsel %vm3214, %v3194, %v2275
  %v3260 = vsel %vm3214, %v3195, %v2277
  %v3261 = vsel %vm3214, %v3196, %v2279
  %v3262 = vsel %vm3214, %v3197, %v2281
  %v3263 = vsel %vm3214, %v3198, %v2283
  %v3264 = vsel %vm3214, %v3199, %v2285
  %v3265 = vsel %vm3214, %v3200, %v2287
  %v3266 = vsel %vm3214, %v3201, %v2289
  %v3267 = vsel %vm3214, %v3202, %v2291
  %v3268 = vsel %vm3214, %v3203, %v2293
  %v3269 = vsel %vm3214, %v3204, %v2295
  %v3270 = vsel %vm3214, %v3205, %v2297
  %v3271 = vsel %vm3214, %v3206, %v2299
  %v3272 = vsel %vm3214, %v3207, %v2301
  %v3273 = vsel %vm3214, %v3208, %v2303
  %v3274 = vsel %vm3214, %v3209, %v2305
  %v3275 = vsel %vm3214, %v3210, %v2307
  %v3276 = vsel %vm3214, %v3211, %v2309
  %v3277 = vsel %vm3214, %v3212, %v2311
  %v3278 = vsel %vm3214, %v3213, %v2313
  %vm3279 = vcmask 228352
  %v3280 = vsel %vm3279, %v3215, %v2443
  %v3281 = vsel %vm3279, %v3216, %v2445
  %v3282 = vsel %vm3279, %v3217, %v2447
  %v3283 = vsel %vm3279, %v3218, %v2449
  %v3284 = vsel %vm3279, %v3219, %v2451
  %v3285 = vsel %vm3279, %v3220, %v2453
  %v3286 = vsel %vm3279, %v3221, %v2455
  %v3287 = vsel %vm3279, %v3222, %v2457
  %v3288 = vsel %vm3279, %v3223, %v2459
  %v3289 = vsel %vm3279, %v3224, %v2461
  %v3290 = vsel %vm3279, %v3225, %v2463
  %v3291 = vsel %vm3279, %v3226, %v2465
  %v3292 = vsel %vm3279, %v3227, %v2467
  %v3293 = vsel %vm3279, %v3228, %v2469
  %v3294 = vsel %vm3279, %v3229, %v2471
  %v3295 = vsel %vm3279, %v3230, %v2473
  %v3296 = vsel %vm3279, %v3231, %v2475
  %v3297 = vsel %vm3279, %v3232, %v2477
  %v3298 = vsel %vm3279, %v3233, %v2479
  %v3299 = vsel %vm3279, %v3234, %v2481
  %v3300 = vsel %vm3279, %v3235, %v2483
  %v3301 = vsel %vm3279, %v3236, %v2485
  %v3302 = vsel %vm3279, %v3237, %v2487
  %v3303 = vsel %vm3279, %v3238, %v2489
  %v3304 = vsel %vm3279, %v3239, %v2491
  %v3305 = vsel %vm3279, %v3240, %v2493
  %v3306 = vsel %vm3279, %v3241, %v2495
  %v3307 = vsel %vm3279, %v3242, %v2497
  %v3308 = vsel %vm3279, %v3243, %v2499
  %v3309 = vsel %vm3279, %v3244, %v2501
  %v3310 = vsel %vm3279, %v3245, %v2503
  %v3311 = vsel %vm3279, %v3246, %v2505
  %v3312 = vsel %vm3279, %v3247, %v2507
  %v3313 = vsel %vm3279, %v3248, %v2509
  %v3314 = vsel %vm3279, %v3249, %v2511
  %v3315 = vsel %vm3279, %v3250, %v2513
  %v3316 = vsel %vm3279, %v3251, %v2515
  %v3317 = vsel %vm3279, %v3252, %v2517
  %v3318 = vsel %vm3279, %v3253, %v2519
  %v3319 = vsel %vm3279, %v3254, %v2521
  %v3320 = vsel %vm3279, %v3255, %v2523
  %v3321 = vsel %vm3279, %v3256, %v2525
  %v3322 = vsel %vm3279, %v3257, %v2527
  %v3323 = vsel %vm3279, %v3258, %v2529
  %v3324 = vsel %vm3279, %v3259, %v2531
  %v3325 = vsel %vm3279, %v3260, %v2533
  %v3326 = vsel %vm3279, %v3261, %v2535
  %v3327 = vsel %vm3279, %v3262, %v2537
  %v3328 = vsel %vm3279, %v3263, %v2539
  %v3329 = vsel %vm3279, %v3264, %v2541
  %v3330 = vsel %vm3279, %v3265, %v2543
  %v3331 = vsel %vm3279, %v3266, %v2545
  %v3332 = vsel %vm3279, %v3267, %v2547
  %v3333 = vsel %vm3279, %v3268, %v2549
  %v3334 = vsel %vm3279, %v3269, %v2551
  %v3335 = vsel %vm3279, %v3270, %v2553
  %v3336 = vsel %vm3279, %v3271, %v2555
  %v3337 = vsel %vm3279, %v3272, %v2557
  %v3338 = vsel %vm3279, %v3273, %v2559
  %v3339 = vsel %vm3279, %v3274, %v2561
  %v3340 = vsel %vm3279, %v3275, %v2563
  %v3341 = vsel %vm3279, %v3276, %v2565
  %v3342 = vsel %vm3279, %v3277, %v2567
  %v3343 = vsel %vm3279, %v3278, %v2569
  %vm3344 = vcmask 261120
  %v3345 = vsel %vm3344, %v3280, %v2699
  %v3346 = vsel %vm3344, %v3281, %v2701
  %v3347 = vsel %vm3344, %v3282, %v2703
  %v3348 = vsel %vm3344, %v3283, %v2705
  %v3349 = vsel %vm3344, %v3284, %v2707
  %v3350 = vsel %vm3344, %v3285, %v2709
  %v3351 = vsel %vm3344, %v3286, %v2711
  %v3352 = vsel %vm3344, %v3287, %v2713
  %v3353 = vsel %vm3344, %v3288, %v2715
  %v3354 = vsel %vm3344, %v3289, %v2717
  %v3355 = vsel %vm3344, %v3290, %v2719
  %v3356 = vsel %vm3344, %v3291, %v2721
  %v3357 = vsel %vm3344, %v3292, %v2723
  %v3358 = vsel %vm3344, %v3293, %v2725
  %v3359 = vsel %vm3344, %v3294, %v2727
  %v3360 = vsel %vm3344, %v3295, %v2729
  %v3361 = vsel %vm3344, %v3296, %v2731
  %v3362 = vsel %vm3344, %v3297, %v2733
  %v3363 = vsel %vm3344, %v3298, %v2735
  %v3364 = vsel %vm3344, %v3299, %v2737
  %v3365 = vsel %vm3344, %v3300, %v2739
  %v3366 = vsel %vm3344, %v3301, %v2741
  %v3367 = vsel %vm3344, %v3302, %v2743
  %v3368 = vsel %vm3344, %v3303, %v2745
  %v3369 = vsel %vm3344, %v3304, %v2747
  %v3370 = vsel %vm3344, %v3305, %v2749
  %v3371 = vsel %vm3344, %v3306, %v2751
  %v3372 = vsel %vm3344, %v3307, %v2753
  %v3373 = vsel %vm3344, %v3308, %v2755
  %v3374 = vsel %vm3344, %v3309, %v2757
  %v3375 = vsel %vm3344, %v3310, %v2759
  %v3376 = vsel %vm3344, %v3311, %v2761
  %v3377 = vsel %vm3344, %v3312, %v2763
  %v3378 = vsel %vm3344, %v3313, %v2765
  %v3379 = vsel %vm3344, %v3314, %v2767
  %v3380 = vsel %vm3344, %v3315, %v2769
  %v3381 = vsel %vm3344, %v3316, %v2771
  %v3382 = vsel %vm3344, %v3317, %v2773
  %v3383 = vsel %vm3344, %v3318, %v2775
  %v3384 = vsel %vm3344, %v3319, %v2777
  %v3385 = vsel %vm3344, %v3320, %v2779
  %v3386 = vsel %vm3344, %v3321, %v2781
  %v3387 = vsel %vm3344, %v3322, %v2783
  %v3388 = vsel %vm3344, %v3323, %v2785
  %v3389 = vsel %vm3344, %v3324, %v2787
  %v3390 = vsel %vm3344, %v3325, %v2789
  %v3391 = vsel %vm3344, %v3326, %v2791
  %v3392 = vsel %vm3344, %v3327, %v2793
  %v3393 = vsel %vm3344, %v3328, %v2795
  %v3394 = vsel %vm3344, %v3329, %v2797
  %v3395 = vsel %vm3344, %v3330, %v2799
  %v3396 = vsel %vm3344, %v3331, %v2801
  %v3397 = vsel %vm3344, %v3332, %v2803
  %v3398 = vsel %vm3344, %v3333, %v2805
  %v3399 = vsel %vm3344, %v3334, %v2807
  %v3400 = vsel %vm3344, %v3335, %v2809
  %v3401 = vsel %vm3344, %v3336, %v2811
  %v3402 = vsel %vm3344, %v3337, %v2813
  %v3403 = vsel %vm3344, %v3338, %v2815
  %v3404 = vsel %vm3344, %v3339, %v2817
  %v3405 = vsel %vm3344, %v3340, %v2819
  %v3406 = vsel %vm3344, %v3341, %v2821
  %v3407 = vsel %vm3344, %v3342, %v2823
  %v3408 = vsel %vm3344, %v3343, %v2825
  %v3409 = vld [vmem:[%s1] sm:$0xff]
  %v3410 = vld [vmem:[%s1 + $0x8] sm:$0xff]
  %v3411 = vld [vmem:[%s1 + $0x10] sm:$0xff]
  %v3412 = vld [vmem:[%s1 + $0x18] sm:$0xff]
  %v3413 = vld [vmem:[%s1 + $0x20] sm:$0xf]
  %vm3414 = vcmask 293888
  %v3416 = vsel %vm3414, %v3345, 0
  %v3419 = vsel %vm3414, %v3346, 0
  %v3422 = vsel %vm3414, %v3347, 0
  %v3425 = vsel %vm3414, %v3348, 0
  %v3428 = vsel %vm3414, %v3349, 0
  %v3431 = vsel %vm3414, %v3350, 0
  %v3434 = vsel %vm3414, %v3351, 0
  %v3437 = vsel %vm3414, %v3352, 0
  %v3440 = vsel %vm3414, %v3353, 0
  %v3443 = vsel %vm3414, %v3354, 0
  %v3446 = vsel %vm3414, %v3355, 0
  %v3449 = vsel %vm3414, %v3356, 0
  %v3452 = vsel %vm3414, %v3357, 0
  %v3455 = vsel %vm3414, %v3358, 0
  %v3458 = vsel %vm3414, %v3359, 0
  %v3461 = vsel %vm3414, %v3360, 0
  %v3464 = vsel %vm3414, %v3361, 0
  %v3467 = vsel %vm3414, %v3362, 0
  %v3470 = vsel %vm3414, %v3363, 0
  %v3473 = vsel %vm3414, %v3364, 0
  %v3476 = vsel %vm3414, %v3365, 0
  %v3479 = vsel %vm3414, %v3366, 0
  %v3482 = vsel %vm3414, %v3367, 0
  %v3485 = vsel %vm3414, %v3368, 0
  %v3488 = vsel %vm3414, %v3369, 0
  %v3491 = vsel %vm3414, %v3370, 0
  %v3494 = vsel %vm3414, %v3371, 0
  %v3497 = vsel %vm3414, %v3372, 0
  %v3500 = vsel %vm3414, %v3373, 0
  %v3503 = vsel %vm3414, %v3374, 0
  %v3506 = vsel %vm3414, %v3375, 0
  %v3509 = vsel %vm3414, %v3376, 0
  %v3512 = vsel %vm3414, %v3377, 0
  %v3515 = vsel %vm3414, %v3378, 0
  %v3518 = vsel %vm3414, %v3379, 0
  %v3521 = vsel %vm3414, %v3380, 0
  %v3524 = vsel %vm3414, %v3381, 0
  %v3527 = vsel %vm3414, %v3382, 0
  %v3530 = vsel %vm3414, %v3383, 0
  %v3533 = vsel %vm3414, %v3384, 0
  %v3536 = vsel %vm3414, %v3385, 0
  %v3539 = vsel %vm3414, %v3386, 0
  %v3542 = vsel %vm3414, %v3387, 0
  %v3545 = vsel %vm3414, %v3388, 0
  %v3548 = vsel %vm3414, %v3389, 0
  %v3551 = vsel %vm3414, %v3390, 0
  %v3554 = vsel %vm3414, %v3391, 0
  %v3557 = vsel %vm3414, %v3392, 0
  %v3560 = vsel %vm3414, %v3393, 0
  %v3563 = vsel %vm3414, %v3394, 0
  %v3566 = vsel %vm3414, %v3395, 0
  %v3569 = vsel %vm3414, %v3396, 0
  %v3572 = vsel %vm3414, %v3397, 0
  %v3575 = vsel %vm3414, %v3398, 0
  %v3578 = vsel %vm3414, %v3399, 0
  %v3581 = vsel %vm3414, %v3400, 0
  %v3584 = vsel %vm3414, %v3401, 0
  %v3587 = vsel %vm3414, %v3402, 0
  %v3590 = vsel %vm3414, %v3403, 0
  %v3593 = vsel %vm3414, %v3404, 0
  %v3596 = vsel %vm3414, %v3405, 0
  %v3599 = vsel %vm3414, %v3406, 0
  %v3602 = vsel %vm3414, %v3407, 0
  %v3605 = vsel %vm3414, %v3408, 0
  %vm3607 = vcmask 1043456
  %v3609 = vsel %vm3607, %v3413, 0
  %3611 = vmatprep.subr.mxu0 0.0
  %3612 = vmatpush1.msra.mxu0 %v3409
  %3613 = vmatprep.subr.mxu0 0.0
  %3614 = vmatpush1.msra.mxu0 %v3410
  %3615 = vmatprep.subr.mxu0 0.0
  %3616 = vmatpush1.msra.mxu0 %v3411
  %3617 = vmatprep.subr.mxu0 0.0
  %3618 = vmatpush1.msra.mxu0 %v3412
  %3619 = vmatprep.subr.mxu0 0.0
  %3620 = vmatpush1.msra.mxu0 %v3609
  %3621 = vmatprep.subr.mxu0 0.0
  %3622 = vmatpush1.msra.mxu0 0.0
  %3623 = vmatprep.subr.mxu0 0.0
  %3624 = vmatpush1.msra.mxu0 0.0
  %3625 = vmatprep.subr.mxu0 0.0
  %3626 = vmatpush1.msra.mxu0 0.0
  %3627 = vmatprep.subr.mxu0 0.0
  %3628 = vmatpush1.msra.mxu0 0.0
  %3629 = vmatprep.subr.mxu0 0.0
  %3630 = vmatpush1.msra.mxu0 0.0
  %3631 = vmatprep.subr.mxu0 0.0
  %3632 = vmatpush1.msra.mxu0 0.0
  %3633 = vmatprep.subr.mxu0 0.0
  %3634 = vmatpush1.msra.mxu0 0.0
  %3635 = vmatprep.subr.mxu0 0.0
  %3636 = vmatpush1.msra.mxu0 0.0
  %3637 = vmatprep.subr.mxu0 0.0
  %3638 = vmatpush1.msra.mxu0 0.0
  %3639 = vmatprep.subr.mxu0 0.0
  %3640 = vmatpush1.msra.mxu0 0.0
  %3641 = vmatprep.subr.mxu0 0.0
  %3642 = vmatpush1.msra.mxu0 0.0
  %3643 = vmatprep.subr.mxu0 0.0
  %3644 = vmatpush1.msra.mxu0 0.0
  %3645 = vmatprep.subr.mxu0 0.0
  %3646 = vmatpush1.msra.mxu0 0.0
  %3647 = vmatprep.subr.mxu0 0.0
  %3648 = vmatpush1.msra.mxu0 0.0
  %3649 = vmatprep.subr.mxu0 0.0
  %3650 = vmatpush1.msra.mxu0 0.0
  %3651 = vmatprep.subr.mxu0 0.0
  %3652 = vmatpush1.msra.mxu0 0.0
  %3653 = vmatprep.subr.mxu0 0.0
  %3654 = vmatpush1.msra.mxu0 0.0
  %3655 = vmatprep.subr.mxu0 0.0
  %3656 = vmatpush1.msra.mxu0 0.0
  %3657 = vmatprep.subr.mxu0 0.0
  %3658 = vmatpush1.msra.mxu0 0.0
  %3659 = vmatprep.subr.mxu0 0.0
  %3660 = vmatpush1.msra.mxu0 0.0
  %3661 = vmatprep.subr.mxu0 0.0
  %3662 = vmatpush1.msra.mxu0 0.0
  %3663 = vmatprep.subr.mxu0 0.0
  %3664 = vmatpush1.msra.mxu0 0.0
  %3665 = vmatprep.subr.mxu0 0.0
  %3666 = vmatpush1.msra.mxu0 0.0
  %3667 = vmatprep.subr.mxu0 0.0
  %3668 = vmatpush1.msra.mxu0 0.0
  %3669 = vmatprep.subr.mxu0 0.0
  %3670 = vmatpush1.msra.mxu0 0.0
  %3671 = vmatprep.subr.mxu0 0.0
  %3672 = vmatpush1.msra.mxu0 0.0
  %3673 = vmatprep.subr.mxu0 0.0
  %3674 = vmatpush1.msra.mxu0 0.0
  %3675 = vmatprep.mubr.f32.mxu0 0.0
  %3676 = vmatmul.mubr.f32.gmra.mrb[0].mxu0 %v3416
  %v3677 = vpop.f32.mrb[0].mxu0
  %v3678 = vadd.f32 0.0, %v3677
  %v3679 = vpop.f32.mrb[0].mxu0
  %3680 = vmatprep.mubr.f32.mxu0 0.0
  %3681 = vmatmul.mubr.f32.gmra.mrb[0].mxu0 %v3419
  %v3682 = vpop.f32.mrb[0].mxu0
  %v3683 = vadd.f32 0.0, %v3682
  %v3684 = vpop.f32.mrb[0].mxu0
  %3685 = vmatprep.mubr.f32.mxu0 0.0
  %3686 = vmatmul.mubr.f32.gmra.mrb[0].mxu0 %v3422
  %v3687 = vpop.f32.mrb[0].mxu0
  %v3688 = vadd.f32 0.0, %v3687
  %v3689 = vpop.f32.mrb[0].mxu0
  %3690 = vmatprep.mubr.f32.mxu0 0.0
  %3691 = vmatmul.mubr.f32.gmra.mrb[0].mxu0 %v3425
  %v3692 = vpop.f32.mrb[0].mxu0
  %v3693 = vadd.f32 0.0, %v3692
  %v3694 = vpop.f32.mrb[0].mxu0
  %3695 = vmatprep.mubr.f32.mxu0 0.0
  %3696 = vmatmul.mubr.f32.gmra.mrb[0].mxu0 %v3428
  %v3697 = vpop.f32.mrb[0].mxu0
  %v3698 = vadd.f32 0.0, %v3697
  %v3699 = vpop.f32.mrb[0].mxu0
  %3700 = vmatprep.mubr.f32.mxu0 0.0
  %3701 = vmatmul.mubr.f32.gmra.mrb[0].mxu0 %v3431
  %v3702 = vpop.f32.mrb[0].mxu0
  %v3703 = vadd.f32 0.0, %v3702
  %v3704 = vpop.f32.mrb[0].mxu0
  %3705 = vmatprep.mubr.f32.mxu0 0.0
  %3706 = vmatmul.mubr.f32.gmra.mrb[0].mxu0 %v3434
  %v3707 = vpop.f32.mrb[0].mxu0
  %v3708 = vadd.f32 0.0, %v3707
  %v3709 = vpop.f32.mrb[0].mxu0
  %3710 = vmatprep.mubr.f32.mxu0 0.0
  %3711 = vmatmul.mubr.f32.gmra.mrb[0].mxu0 %v3437
  %v3712 = vpop.f32.mrb[0].mxu0
  %v3713 = vadd.f32 0.0, %v3712
  %v3714 = vpop.f32.mrb[0].mxu0
  %3715 = vmatprep.mubr.f32.mxu0 0.0
  %3716 = vmatmul.mubr.f32.gmra.mrb[0].mxu0 %v3440
  %v3717 = vpop.f32.mrb[0].mxu0
  %v3718 = vadd.f32 0.0, %v3717
  %v3719 = vpop.f32.mrb[0].mxu0
  %3720 = vmatprep.mubr.f32.mxu0 0.0
  %3721 = vmatmul.mubr.f32.gmra.mrb[0].mxu0 %v3443
  %v3722 = vpop.f32.mrb[0].mxu0
  %v3723 = vadd.f32 0.0, %v3722
  %v3724 = vpop.f32.mrb[0].mxu0
  %3725 = vmatprep.mubr.f32.mxu0 0.0
  %3726 = vmatmul.mubr.f32.gmra.mrb[0].mxu0 %v3446
  %v3727 = vpop.f32.mrb[0].mxu0
  %v3728 = vadd.f32 0.0, %v3727
  %v3729 = vpop.f32.mrb[0].mxu0
  %3730 = vmatprep.mubr.f32.mxu0 0.0
  %3731 = vmatmul.mubr.f32.gmra.mrb[0].mxu0 %v3449
  %v3732 = vpop.f32.mrb[0].mxu0
  %v3733 = vadd.f32 0.0, %v3732
  %v3734 = vpop.f32.mrb[0].mxu0
  %3735 = vmatprep.mubr.f32.mxu0 0.0
  %3736 = vmatmul.mubr.f32.gmra.mrb[0].mxu0 %v3452
  %v3737 = vpop.f32.mrb[0].mxu0
  %v3738 = vadd.f32 0.0, %v3737
  %v3739 = vpop.f32.mrb[0].mxu0
  %3740 = vmatprep.mubr.f32.mxu0 0.0
  %3741 = vmatmul.mubr.f32.gmra.mrb[0].mxu0 %v3455
  %v3742 = vpop.f32.mrb[0].mxu0
  %v3743 = vadd.f32 0.0, %v3742
  %v3744 = vpop.f32.mrb[0].mxu0
  %3745 = vmatprep.mubr.f32.mxu0 0.0
  %3746 = vmatmul.mubr.f32.gmra.mrb[0].mxu0 %v3458
  %v3747 = vpop.f32.mrb[0].mxu0
  %v3748 = vadd.f32 0.0, %v3747
  %v3749 = vpop.f32.mrb[0].mxu0
  %3750 = vmatprep.mubr.f32.mxu0 0.0
  %3751 = vmatmul.mubr.f32.gmra.mrb[0].mxu0 %v3461
  %v3752 = vpop.f32.mrb[0].mxu0
  %v3753 = vadd.f32 0.0, %v3752
  %v3754 = vpop.f32.mrb[0].mxu0
  %3755 = vmatprep.mubr.f32.mxu0 0.0
  %3756 = vmatmul.mubr.f32.gmra.mrb[0].mxu0 %v3464
  %v3757 = vpop.f32.mrb[0].mxu0
  %v3758 = vadd.f32 0.0, %v3757
  %v3759 = vpop.f32.mrb[0].mxu0
  %3760 = vmatprep.mubr.f32.mxu0 0.0
  %3761 = vmatmul.mubr.f32.gmra.mrb[0].mxu0 %v3467
  %v3762 = vpop.f32.mrb[0].mxu0
  %v3763 = vadd.f32 0.0, %v3762
  %v3764 = vpop.f32.mrb[0].mxu0
  %3765 = vmatprep.mubr.f32.mxu0 0.0
  %3766 = vmatmul.mubr.f32.gmra.mrb[0].mxu0 %v3470
  %v3767 = vpop.f32.mrb[0].mxu0
  %v3768 = vadd.f32 0.0, %v3767
  %v3769 = vpop.f32.mrb[0].mxu0
  %3770 = vmatprep.mubr.f32.mxu0 0.0
  %3771 = vmatmul.mubr.f32.gmra.mrb[0].mxu0 %v3473
  %v3772 = vpop.f32.mrb[0].mxu0
  %v3773 = vadd.f32 0.0, %v3772
  %v3774 = vpop.f32.mrb[0].mxu0
  %3775 = vmatprep.mubr.f32.mxu0 0.0
  %3776 = vmatmul.mubr.f32.gmra.mrb[0].mxu0 %v3476
  %v3777 = vpop.f32.mrb[0].mxu0
  %v3778 = vadd.f32 0.0, %v3777
  %v3779 = vpop.f32.mrb[0].mxu0
  %3780 = vmatprep.mubr.f32.mxu0 0.0
  %3781 = vmatmul.mubr.f32.gmra.mrb[0].mxu0 %v3479
  %v3782 = vpop.f32.mrb[0].mxu0
  %v3783 = vadd.f32 0.0, %v3782
  %v3784 = vpop.f32.mrb[0].mxu0
  %3785 = vmatprep.mubr.f32.mxu0 0.0
  %3786 = vmatmul.mubr.f32.gmra.mrb[0].mxu0 %v3482
  %v3787 = vpop.f32.mrb[0].mxu0
  %v3788 = vadd.f32 0.0, %v3787
  %v3789 = vpop.f32.mrb[0].mxu0
  %3790 = vmatprep.mubr.f32.mxu0 0.0
  %3791 = vmatmul.mubr.f32.gmra.mrb[0].mxu0 %v3485
  %v3792 = vpop.f32.mrb[0].mxu0
  %v3793 = vadd.f32 0.0, %v3792
  %v3794 = vpop.f32.mrb[0].mxu0
  %3795 = vmatprep.mubr.f32.mxu0 0.0
  %3796 = vmatmul.mubr.f32.gmra.mrb[0].mxu0 %v3488
  %v3797 = vpop.f32.mrb[0].mxu0
  %v3798 = vadd.f32 0.0, %v3797
  %v3799 = vpop.f32.mrb[0].mxu0
  %3800 = vmatprep.mubr.f32.mxu0 0.0
  %3801 = vmatmul.mubr.f32.gmra.mrb[0].mxu0 %v3491
  %v3802 = vpop.f32.mrb[0].mxu0
  %v3803 = vadd.f32 0.0, %v3802
  %v3804 = vpop.f32.mrb[0].mxu0
  %3805 = vmatprep.mubr.f32.mxu0 0.0
  %3806 = vmatmul.mubr.f32.gmra.mrb[0].mxu0 %v3494
  %v3807 = vpop.f32.mrb[0].mxu0
  %v3808 = vadd.f32 0.0, %v3807
  %v3809 = vpop.f32.mrb[0].mxu0
  %3810 = vmatprep.mubr.f32.mxu0 0.0
  %3811 = vmatmul.mubr.f32.gmra.mrb[0].mxu0 %v3497
  %v3812 = vpop.f32.mrb[0].mxu0
  %v3813 = vadd.f32 0.0, %v3812
  %v3814 = vpop.f32.mrb[0].mxu0
  %3815 = vmatprep.mubr.f32.mxu0 0.0
  %3816 = vmatmul.mubr.f32.gmra.mrb[0].mxu0 %v3500
  %v3817 = vpop.f32.mrb[0].mxu0
  %v3818 = vadd.f32 0.0, %v3817
  %v3819 = vpop.f32.mrb[0].mxu0
  %3820 = vmatprep.mubr.f32.mxu0 0.0
  %3821 = vmatmul.mubr.f32.gmra.mrb[0].mxu0 %v3503
  %v3822 = vpop.f32.mrb[0].mxu0
  %v3823 = vadd.f32 0.0, %v3822
  %v3824 = vpop.f32.mrb[0].mxu0
  %3825 = vmatprep.mubr.f32.mxu0 0.0
  %3826 = vmatmul.mubr.f32.gmra.mrb[0].mxu0 %v3506
  %v3827 = vpop.f32.mrb[0].mxu0
  %v3828 = vadd.f32 0.0, %v3827
  %v3829 = vpop.f32.mrb[0].mxu0
  %3830 = vmatprep.mubr.f32.mxu0 0.0
  %3831 = vmatmul.mubr.f32.gmra.mrb[0].mxu0 %v3509
  %v3832 = vpop.f32.mrb[0].mxu0
  %v3833 = vadd.f32 0.0, %v3832
  %v3834 = vpop.f32.mrb[0].mxu0
  %3835 = vmatprep.mubr.f32.mxu0 0.0
  %3836 = vmatmul.mubr.f32.gmra.mrb[0].mxu0 %v3512
  %v3837 = vpop.f32.mrb[0].mxu0
  %v3838 = vadd.f32 0.0, %v3837
  %v3839 = vpop.f32.mrb[0].mxu0
  %3840 = vmatprep.mubr.f32.mxu0 0.0
  %3841 = vmatmul.mubr.f32.gmra.mrb[0].mxu0 %v3515
  %v3842 = vpop.f32.mrb[0].mxu0
  %v3843 = vadd.f32 0.0, %v3842
  %v3844 = vpop.f32.mrb[0].mxu0
  %3845 = vmatprep.mubr.f32.mxu0 0.0
  %3846 = vmatmul.mubr.f32.gmra.mrb[0].mxu0 %v3518
  %v3847 = vpop.f32.mrb[0].mxu0
  %v3848 = vadd.f32 0.0, %v3847
  %v3849 = vpop.f32.mrb[0].mxu0
  %3850 = vmatprep.mubr.f32.mxu0 0.0
  %3851 = vmatmul.mubr.f32.gmra.mrb[0].mxu0 %v3521
  %v3852 = vpop.f32.mrb[0].mxu0
  %v3853 = vadd.f32 0.0, %v3852
  %v3854 = vpop.f32.mrb[0].mxu0
  %3855 = vmatprep.mubr.f32.mxu0 0.0
  %3856 = vmatmul.mubr.f32.gmra.mrb[0].mxu0 %v3524
  %v3857 = vpop.f32.mrb[0].mxu0
  %v3858 = vadd.f32 0.0, %v3857
  %v3859 = vpop.f32.mrb[0].mxu0
  %3860 = vmatprep.mubr.f32.mxu0 0.0
  %3861 = vmatmul.mubr.f32.gmra.mrb[0].mxu0 %v3527
  %v3862 = vpop.f32.mrb[0].mxu0
  %v3863 = vadd.f32 0.0, %v3862
  %v3864 = vpop.f32.mrb[0].mxu0
  %3865 = vmatprep.mubr.f32.mxu0 0.0
  %3866 = vmatmul.mubr.f32.gmra.mrb[0].mxu0 %v3530
  %v3867 = vpop.f32.mrb[0].mxu0
  %v3868 = vadd.f32 0.0, %v3867
  %v3869 = vpop.f32.mrb[0].mxu0
  %3870 = vmatprep.mubr.f32.mxu0 0.0
  %3871 = vmatmul.mubr.f32.gmra.mrb[0].mxu0 %v3533
  %v3872 = vpop.f32.mrb[0].mxu0
  %v3873 = vadd.f32 0.0, %v3872
  %v3874 = vpop.f32.mrb[0].mxu0
  %3875 = vmatprep.mubr.f32.mxu0 0.0
  %3876 = vmatmul.mubr.f32.gmra.mrb[0].mxu0 %v3536
  %v3877 = vpop.f32.mrb[0].mxu0
  %v3878 = vadd.f32 0.0, %v3877
  %v3879 = vpop.f32.mrb[0].mxu0
  %3880 = vmatprep.mubr.f32.mxu0 0.0
  %3881 = vmatmul.mubr.f32.gmra.mrb[0].mxu0 %v3539
  %v3882 = vpop.f32.mrb[0].mxu0
  %v3883 = vadd.f32 0.0, %v3882
  %v3884 = vpop.f32.mrb[0].mxu0
  %3885 = vmatprep.mubr.f32.mxu0 0.0
  %3886 = vmatmul.mubr.f32.gmra.mrb[0].mxu0 %v3542
  %v3887 = vpop.f32.mrb[0].mxu0
  %v3888 = vadd.f32 0.0, %v3887
  %v3889 = vpop.f32.mrb[0].mxu0
  %3890 = vmatprep.mubr.f32.mxu0 0.0
  %3891 = vmatmul.mubr.f32.gmra.mrb[0].mxu0 %v3545
  %v3892 = vpop.f32.mrb[0].mxu0
  %v3893 = vadd.f32 0.0, %v3892
  %v3894 = vpop.f32.mrb[0].mxu0
  %3895 = vmatprep.mubr.f32.mxu0 0.0
  %3896 = vmatmul.mubr.f32.gmra.mrb[0].mxu0 %v3548
  %v3897 = vpop.f32.mrb[0].mxu0
  %v3898 = vadd.f32 0.0, %v3897
  %v3899 = vpop.f32.mrb[0].mxu0
  %3900 = vmatprep.mubr.f32.mxu0 0.0
  %3901 = vmatmul.mubr.f32.gmra.mrb[0].mxu0 %v3551
  %v3902 = vpop.f32.mrb[0].mxu0
  %v3903 = vadd.f32 0.0, %v3902
  %v3904 = vpop.f32.mrb[0].mxu0
  %3905 = vmatprep.mubr.f32.mxu0 0.0
  %3906 = vmatmul.mubr.f32.gmra.mrb[0].mxu0 %v3554
  %v3907 = vpop.f32.mrb[0].mxu0
  %v3908 = vadd.f32 0.0, %v3907
  %v3909 = vpop.f32.mrb[0].mxu0
  %3910 = vmatprep.mubr.f32.mxu0 0.0
  %3911 = vmatmul.mubr.f32.gmra.mrb[0].mxu0 %v3557
  %v3912 = vpop.f32.mrb[0].mxu0
  %v3913 = vadd.f32 0.0, %v3912
  %v3914 = vpop.f32.mrb[0].mxu0
  %3915 = vmatprep.mubr.f32.mxu0 0.0
  %3916 = vmatmul.mubr.f32.gmra.mrb[0].mxu0 %v3560
  %v3917 = vpop.f32.mrb[0].mxu0
  %v3918 = vadd.f32 0.0, %v3917
  %v3919 = vpop.f32.mrb[0].mxu0
  %3920 = vmatprep.mubr.f32.mxu0 0.0
  %3921 = vmatmul.mubr.f32.gmra.mrb[0].mxu0 %v3563
  %v3922 = vpop.f32.mrb[0].mxu0
  %v3923 = vadd.f32 0.0, %v3922
  %v3924 = vpop.f32.mrb[0].mxu0
  %3925 = vmatprep.mubr.f32.mxu0 0.0
  %3926 = vmatmul.mubr.f32.gmra.mrb[0].mxu0 %v3566
  %v3927 = vpop.f32.mrb[0].mxu0
  %v3928 = vadd.f32 0.0, %v3927
  %v3929 = vpop.f32.mrb[0].mxu0
  %3930 = vmatprep.mubr.f32.mxu0 0.0
  %3931 = vmatmul.mubr.f32.gmra.mrb[0].mxu0 %v3569
  %v3932 = vpop.f32.mrb[0].mxu0
  %v3933 = vadd.f32 0.0, %v3932
  %v3934 = vpop.f32.mrb[0].mxu0
  %3935 = vmatprep.mubr.f32.mxu0 0.0
  %3936 = vmatmul.mubr.f32.gmra.mrb[0].mxu0 %v3572
  %v3937 = vpop.f32.mrb[0].mxu0
  %v3938 = vadd.f32 0.0, %v3937
  %v3939 = vpop.f32.mrb[0].mxu0
  %3940 = vmatprep.mubr.f32.mxu0 0.0
  %3941 = vmatmul.mubr.f32.gmra.mrb[0].mxu0 %v3575
  %v3942 = vpop.f32.mrb[0].mxu0
  %v3943 = vadd.f32 0.0, %v3942
  %v3944 = vpop.f32.mrb[0].mxu0
  %3945 = vmatprep.mubr.f32.mxu0 0.0
  %3946 = vmatmul.mubr.f32.gmra.mrb[0].mxu0 %v3578
  %v3947 = vpop.f32.mrb[0].mxu0
  %v3948 = vadd.f32 0.0, %v3947
  %v3949 = vpop.f32.mrb[0].mxu0
  %3950 = vmatprep.mubr.f32.mxu0 0.0
  %3951 = vmatmul.mubr.f32.gmra.mrb[0].mxu0 %v3581
  %v3952 = vpop.f32.mrb[0].mxu0
  %v3953 = vadd.f32 0.0, %v3952
  %v3954 = vpop.f32.mrb[0].mxu0
  %3955 = vmatprep.mubr.f32.mxu0 0.0
  %3956 = vmatmul.mubr.f32.gmra.mrb[0].mxu0 %v3584
  %v3957 = vpop.f32.mrb[0].mxu0
  %v3958 = vadd.f32 0.0, %v3957
  %v3959 = vpop.f32.mrb[0].mxu0
  %3960 = vmatprep.mubr.f32.mxu0 0.0
  %3961 = vmatmul.mubr.f32.gmra.mrb[0].mxu0 %v3587
  %v3962 = vpop.f32.mrb[0].mxu0
  %v3963 = vadd.f32 0.0, %v3962
  %v3964 = vpop.f32.mrb[0].mxu0
  %3965 = vmatprep.mubr.f32.mxu0 0.0
  %3966 = vmatmul.mubr.f32.gmra.mrb[0].mxu0 %v3590
  %v3967 = vpop.f32.mrb[0].mxu0
  %v3968 = vadd.f32 0.0, %v3967
  %v3969 = vpop.f32.mrb[0].mxu0
  %3970 = vmatprep.mubr.f32.mxu0 0.0
  %3971 = vmatmul.mubr.f32.gmra.mrb[0].mxu0 %v3593
  %v3972 = vpop.f32.mrb[0].mxu0
  %v3973 = vadd.f32 0.0, %v3972
  %v3974 = vpop.f32.mrb[0].mxu0
  %3975 = vmatprep.mubr.f32.mxu0 0.0
  %3976 = vmatmul.mubr.f32.gmra.mrb[0].mxu0 %v3596
  %v3977 = vpop.f32.mrb[0].mxu0
  %v3978 = vadd.f32 0.0, %v3977
  %v3979 = vpop.f32.mrb[0].mxu0
  %3980 = vmatprep.mubr.f32.mxu0 0.0
  %3981 = vmatmul.mubr.f32.gmra.mrb[0].mxu0 %v3599
  %v3982 = vpop.f32.mrb[0].mxu0
  %v3983 = vadd.f32 0.0, %v3982
  %v3984 = vpop.f32.mrb[0].mxu0
  %3985 = vmatprep.mubr.f32.mxu0 0.0
  %3986 = vmatmul.mubr.f32.gmra.mrb[0].mxu0 %v3602
  %v3987 = vpop.f32.mrb[0].mxu0
  %v3988 = vadd.f32 0.0, %v3987
  %v3989 = vpop.f32.mrb[0].mxu0
  %3990 = vmatprep.mubr.f32.mxu0 0.0
  %3991 = vmatmul.mubr.f32.gmra.mrb[0].mxu0 %v3605
  %v3992 = vpop.f32.mrb[0].mxu0
  %v3993 = vadd.f32 0.0, %v3992
  %v3994 = vpop.f32.mrb[0].mxu0
  %3995 = vdwg.mxu0
  %v3996 = vsel %vm2954, %v3678, 0.0
  %v3997 = vsel %vm2954, %v3683, 0.0
  %v3998 = vadd.f32 %v3996, %v3997
  %v3999 = vsel %vm2954, %v3688, 0.0
  %v4000 = vadd.f32 %v3998, %v3999
  %v4001 = vsel %vm2954, %v3693, 0.0
  %v4002 = vadd.f32 %v4000, %v4001
  %v4003 = vsel %vm2954, %v3698, 0.0
  %v4004 = vadd.f32 %v4002, %v4003
  %v4005 = vsel %vm2954, %v3703, 0.0
  %v4006 = vadd.f32 %v4004, %v4005
  %v4007 = vsel %vm2954, %v3708, 0.0
  %v4008 = vadd.f32 %v4006, %v4007
  %v4009 = vsel %vm2954, %v3713, 0.0
  %v4010 = vadd.f32 %v4008, %v4009
  %v4011 = vsel %vm2954, %v3718, 0.0
  %v4012 = vadd.f32 %v4010, %v4011
  %v4013 = vsel %vm2954, %v3723, 0.0
  %v4014 = vadd.f32 %v4012, %v4013
  %v4015 = vsel %vm2954, %v3728, 0.0
  %v4016 = vadd.f32 %v4014, %v4015
  %v4017 = vsel %vm2954, %v3733, 0.0
  %v4018 = vadd.f32 %v4016, %v4017
  %v4019 = vsel %vm2954, %v3738, 0.0
  %v4020 = vadd.f32 %v4018, %v4019
  %v4021 = vsel %vm2954, %v3743, 0.0
  %v4022 = vadd.f32 %v4020, %v4021
  %v4023 = vsel %vm2954, %v3748, 0.0
  %v4024 = vadd.f32 %v4022, %v4023
  %v4025 = vsel %vm2954, %v3753, 0.0
  %v4026 = vadd.f32 %v4024, %v4025
  %v4027 = vsel %vm2954, %v3758, 0.0
  %v4028 = vadd.f32 %v4026, %v4027
  %v4029 = vsel %vm2954, %v3763, 0.0
  %v4030 = vadd.f32 %v4028, %v4029
  %v4031 = vsel %vm2954, %v3768, 0.0
  %v4032 = vadd.f32 %v4030, %v4031
  %v4033 = vsel %vm2954, %v3773, 0.0
  %v4034 = vadd.f32 %v4032, %v4033
  %v4035 = vsel %vm2954, %v3778, 0.0
  %v4036 = vadd.f32 %v4034, %v4035
  %v4037 = vsel %vm2954, %v3783, 0.0
  %v4038 = vadd.f32 %v4036, %v4037
  %v4039 = vsel %vm2954, %v3788, 0.0
  %v4040 = vadd.f32 %v4038, %v4039
  %v4041 = vsel %vm2954, %v3793, 0.0
  %v4042 = vadd.f32 %v4040, %v4041
  %v4043 = vsel %vm2954, %v3798, 0.0
  %v4044 = vadd.f32 %v4042, %v4043
  %v4045 = vsel %vm2954, %v3803, 0.0
  %v4046 = vadd.f32 %v4044, %v4045
  %v4047 = vsel %vm2954, %v3808, 0.0
  %v4048 = vadd.f32 %v4046, %v4047
  %v4049 = vsel %vm2954, %v3813, 0.0
  %v4050 = vadd.f32 %v4048, %v4049
  %v4051 = vsel %vm2954, %v3818, 0.0
  %v4052 = vadd.f32 %v4050, %v4051
  %v4053 = vsel %vm2954, %v3823, 0.0
  %v4054 = vadd.f32 %v4052, %v4053
  %v4055 = vsel %vm2954, %v3828, 0.0
  %v4056 = vadd.f32 %v4054, %v4055
  %v4057 = vsel %vm2954, %v3833, 0.0
  %v4058 = vadd.f32 %v4056, %v4057
  %v4059 = vsel %vm2954, %v3838, 0.0
  %v4060 = vadd.f32 %v4058, %v4059
  %v4061 = vsel %vm2954, %v3843, 0.0
  %v4062 = vadd.f32 %v4060, %v4061
  %v4063 = vsel %vm2954, %v3848, 0.0
  %v4064 = vadd.f32 %v4062, %v4063
  %v4065 = vsel %vm2954, %v3853, 0.0
  %v4066 = vadd.f32 %v4064, %v4065
  %v4067 = vsel %vm2954, %v3858, 0.0
  %v4068 = vadd.f32 %v4066, %v4067
  %v4069 = vsel %vm2954, %v3863, 0.0
  %v4070 = vadd.f32 %v4068, %v4069
  %v4071 = vsel %vm2954, %v3868, 0.0
  %v4072 = vadd.f32 %v4070, %v4071
  %v4073 = vsel %vm2954, %v3873, 0.0
  %v4074 = vadd.f32 %v4072, %v4073
  %v4075 = vsel %vm2954, %v3878, 0.0
  %v4076 = vadd.f32 %v4074, %v4075
  %v4077 = vsel %vm2954, %v3883, 0.0
  %v4078 = vadd.f32 %v4076, %v4077
  %v4079 = vsel %vm2954, %v3888, 0.0
  %v4080 = vadd.f32 %v4078, %v4079
  %v4081 = vsel %vm2954, %v3893, 0.0
  %v4082 = vadd.f32 %v4080, %v4081
  %v4083 = vsel %vm2954, %v3898, 0.0
  %v4084 = vadd.f32 %v4082, %v4083
  %v4085 = vsel %vm2954, %v3903, 0.0
  %v4086 = vadd.f32 %v4084, %v4085
  %v4087 = vsel %vm2954, %v3908, 0.0
  %v4088 = vadd.f32 %v4086, %v4087
  %v4089 = vsel %vm2954, %v3913, 0.0
  %v4090 = vadd.f32 %v4088, %v4089
  %v4091 = vsel %vm2954, %v3918, 0.0
  %v4092 = vadd.f32 %v4090, %v4091
  %v4093 = vsel %vm2954, %v3923, 0.0
  %v4094 = vadd.f32 %v4092, %v4093
  %v4095 = vsel %vm2954, %v3928, 0.0
  %v4096 = vadd.f32 %v4094, %v4095
  %v4097 = vsel %vm2954, %v3933, 0.0
  %v4098 = vadd.f32 %v4096, %v4097
  %v4099 = vsel %vm2954, %v3938, 0.0
  %v4100 = vadd.f32 %v4098, %v4099
  %v4101 = vsel %vm2954, %v3943, 0.0
  %v4102 = vadd.f32 %v4100, %v4101
  %v4103 = vsel %vm2954, %v3948, 0.0
  %v4104 = vadd.f32 %v4102, %v4103
  %v4105 = vsel %vm2954, %v3953, 0.0
  %v4106 = vadd.f32 %v4104, %v4105
  %v4107 = vsel %vm2954, %v3958, 0.0
  %v4108 = vadd.f32 %v4106, %v4107
  %v4109 = vsel %vm2954, %v3963, 0.0
  %v4110 = vadd.f32 %v4108, %v4109
  %v4111 = vsel %vm2954, %v3968, 0.0
  %v4112 = vadd.f32 %v4110, %v4111
  %v4113 = vsel %vm2954, %v3973, 0.0
  %v4114 = vadd.f32 %v4112, %v4113
  %v4115 = vsel %vm2954, %v3978, 0.0
  %v4116 = vadd.f32 %v4114, %v4115
  %v4117 = vsel %vm2954, %v3983, 0.0
  %v4118 = vadd.f32 %v4116, %v4117
  %v4119 = vsel %vm2954, %v3988, 0.0
  %v4120 = vadd.f32 %v4118, %v4119
  %v4121 = vsel %vm2954, %v3993, 0.0
  %v4122 = vadd.f32 %v4120, %v4121
  %v4123 = vrot.slane %v4122, 4
  %v4124 = vadd.f32 %v4122, %v4123
  %v4125 = vrot.slane %v4124, 2
  %v4126 = vadd.f32 %v4124, %v4125
  %v4127 = vrot.slane %v4126, 1
  %v4128 = vadd.f32 %v4126, %v4127
  %v4129 = vmul.f32 %v4128, 0.001953125
  %v4130 = vmul.f32 %v3678, %v3678
  %v4131 = vmul.f32 %v3683, %v3683
  %v4132 = vmul.f32 %v3688, %v3688
  %v4133 = vmul.f32 %v3693, %v3693
  %v4134 = vmul.f32 %v3698, %v3698
  %v4135 = vmul.f32 %v3703, %v3703
  %v4136 = vmul.f32 %v3708, %v3708
  %v4137 = vmul.f32 %v3713, %v3713
  %v4138 = vmul.f32 %v3718, %v3718
  %v4139 = vmul.f32 %v3723, %v3723
  %v4140 = vmul.f32 %v3728, %v3728
  %v4141 = vmul.f32 %v3733, %v3733
  %v4142 = vmul.f32 %v3738, %v3738
  %v4143 = vmul.f32 %v3743, %v3743
  %v4144 = vmul.f32 %v3748, %v3748
  %v4145 = vmul.f32 %v3753, %v3753
  %v4146 = vmul.f32 %v3758, %v3758
  %v4147 = vmul.f32 %v3763, %v3763
  %v4148 = vmul.f32 %v3768, %v3768
  %v4149 = vmul.f32 %v3773, %v3773
  %v4150 = vmul.f32 %v3778, %v3778
  %v4151 = vmul.f32 %v3783, %v3783
  %v4152 = vmul.f32 %v3788, %v3788
  %v4153 = vmul.f32 %v3793, %v3793
  %v4154 = vmul.f32 %v3798, %v3798
  %v4155 = vmul.f32 %v3803, %v3803
  %v4156 = vmul.f32 %v3808, %v3808
  %v4157 = vmul.f32 %v3813, %v3813
  %v4158 = vmul.f32 %v3818, %v3818
  %v4159 = vmul.f32 %v3823, %v3823
  %v4160 = vmul.f32 %v3828, %v3828
  %v4161 = vmul.f32 %v3833, %v3833
  %v4162 = vmul.f32 %v3838, %v3838
  %v4163 = vmul.f32 %v3843, %v3843
  %v4164 = vmul.f32 %v3848, %v3848
  %v4165 = vmul.f32 %v3853, %v3853
  %v4166 = vmul.f32 %v3858, %v3858
  %v4167 = vmul.f32 %v3863, %v3863
  %v4168 = vmul.f32 %v3868, %v3868
  %v4169 = vmul.f32 %v3873, %v3873
  %v4170 = vmul.f32 %v3878, %v3878
  %v4171 = vmul.f32 %v3883, %v3883
  %v4172 = vmul.f32 %v3888, %v3888
  %v4173 = vmul.f32 %v3893, %v3893
  %v4174 = vmul.f32 %v3898, %v3898
  %v4175 = vmul.f32 %v3903, %v3903
  %v4176 = vmul.f32 %v3908, %v3908
  %v4177 = vmul.f32 %v3913, %v3913
  %v4178 = vmul.f32 %v3918, %v3918
  %v4179 = vmul.f32 %v3923, %v3923
  %v4180 = vmul.f32 %v3928, %v3928
  %v4181 = vmul.f32 %v3933, %v3933
  %v4182 = vmul.f32 %v3938, %v3938
  %v4183 = vmul.f32 %v3943, %v3943
  %v4184 = vmul.f32 %v3948, %v3948
  %v4185 = vmul.f32 %v3953, %v3953
  %v4186 = vmul.f32 %v3958, %v3958
  %v4187 = vmul.f32 %v3963, %v3963
  %v4188 = vmul.f32 %v3968, %v3968
  %v4189 = vmul.f32 %v3973, %v3973
  %v4190 = vmul.f32 %v3978, %v3978
  %v4191 = vmul.f32 %v3983, %v3983
  %v4192 = vmul.f32 %v3988, %v3988
  %v4193 = vmul.f32 %v3993, %v3993
  %v4194 = vsel %vm2954, %v4130, 0.0
  %v4195 = vsel %vm2954, %v4131, 0.0
  %v4196 = vadd.f32 %v4194, %v4195
  %v4197 = vsel %vm2954, %v4132, 0.0
  %v4198 = vadd.f32 %v4196, %v4197
  %v4199 = vsel %vm2954, %v4133, 0.0
  %v4200 = vadd.f32 %v4198, %v4199
  %v4201 = vsel %vm2954, %v4134, 0.0
  %v4202 = vadd.f32 %v4200, %v4201
  %v4203 = vsel %vm2954, %v4135, 0.0
  %v4204 = vadd.f32 %v4202, %v4203
  %v4205 = vsel %vm2954, %v4136, 0.0
  %v4206 = vadd.f32 %v4204, %v4205
  %v4207 = vsel %vm2954, %v4137, 0.0
  %v4208 = vadd.f32 %v4206, %v4207
  %v4209 = vsel %vm2954, %v4138, 0.0
  %v4210 = vadd.f32 %v4208, %v4209
  %v4211 = vsel %vm2954, %v4139, 0.0
  %v4212 = vadd.f32 %v4210, %v4211
  %v4213 = vsel %vm2954, %v4140, 0.0
  %v4214 = vadd.f32 %v4212, %v4213
  %v4215 = vsel %vm2954, %v4141, 0.0
  %v4216 = vadd.f32 %v4214, %v4215
  %v4217 = vsel %vm2954, %v4142, 0.0
  %v4218 = vadd.f32 %v4216, %v4217
  %v4219 = vsel %vm2954, %v4143, 0.0
  %v4220 = vadd.f32 %v4218, %v4219
  %v4221 = vsel %vm2954, %v4144, 0.0
  %v4222 = vadd.f32 %v4220, %v4221
  %v4223 = vsel %vm2954, %v4145, 0.0
  %v4224 = vadd.f32 %v4222, %v4223
  %v4225 = vsel %vm2954, %v4146, 0.0
  %v4226 = vadd.f32 %v4224, %v4225
  %v4227 = vsel %vm2954, %v4147, 0.0
  %v4228 = vadd.f32 %v4226, %v4227
  %v4229 = vsel %vm2954, %v4148, 0.0
  %v4230 = vadd.f32 %v4228, %v4229
  %v4231 = vsel %vm2954, %v4149, 0.0
  %v4232 = vadd.f32 %v4230, %v4231
  %v4233 = vsel %vm2954, %v4150, 0.0
  %v4234 = vadd.f32 %v4232, %v4233
  %v4235 = vsel %vm2954, %v4151, 0.0
  %v4236 = vadd.f32 %v4234, %v4235
  %v4237 = vsel %vm2954, %v4152, 0.0
  %v4238 = vadd.f32 %v4236, %v4237
  %v4239 = vsel %vm2954, %v4153, 0.0
  %v4240 = vadd.f32 %v4238, %v4239
  %v4241 = vsel %vm2954, %v4154, 0.0
  %v4242 = vadd.f32 %v4240, %v4241
  %v4243 = vsel %vm2954, %v4155, 0.0
  %v4244 = vadd.f32 %v4242, %v4243
  %v4245 = vsel %vm2954, %v4156, 0.0
  %v4246 = vadd.f32 %v4244, %v4245
  %v4247 = vsel %vm2954, %v4157, 0.0
  %v4248 = vadd.f32 %v4246, %v4247
  %v4249 = vsel %vm2954, %v4158, 0.0
  %v4250 = vadd.f32 %v4248, %v4249
  %v4251 = vsel %vm2954, %v4159, 0.0
  %v4252 = vadd.f32 %v4250, %v4251
  %v4253 = vsel %vm2954, %v4160, 0.0
  %v4254 = vadd.f32 %v4252, %v4253
  %v4255 = vsel %vm2954, %v4161, 0.0
  %v4256 = vadd.f32 %v4254, %v4255
  %v4257 = vsel %vm2954, %v4162, 0.0
  %v4258 = vadd.f32 %v4256, %v4257
  %v4259 = vsel %vm2954, %v4163, 0.0
  %v4260 = vadd.f32 %v4258, %v4259
  %v4261 = vsel %vm2954, %v4164, 0.0
  %v4262 = vadd.f32 %v4260, %v4261
  %v4263 = vsel %vm2954, %v4165, 0.0
  %v4264 = vadd.f32 %v4262, %v4263
  %v4265 = vsel %vm2954, %v4166, 0.0
  %v4266 = vadd.f32 %v4264, %v4265
  %v4267 = vsel %vm2954, %v4167, 0.0
  %v4268 = vadd.f32 %v4266, %v4267
  %v4269 = vsel %vm2954, %v4168, 0.0
  %v4270 = vadd.f32 %v4268, %v4269
  %v4271 = vsel %vm2954, %v4169, 0.0
  %v4272 = vadd.f32 %v4270, %v4271
  %v4273 = vsel %vm2954, %v4170, 0.0
  %v4274 = vadd.f32 %v4272, %v4273
  %v4275 = vsel %vm2954, %v4171, 0.0
  %v4276 = vadd.f32 %v4274, %v4275
  %v4277 = vsel %vm2954, %v4172, 0.0
  %v4278 = vadd.f32 %v4276, %v4277
  %v4279 = vsel %vm2954, %v4173, 0.0
  %v4280 = vadd.f32 %v4278, %v4279
  %v4281 = vsel %vm2954, %v4174, 0.0
  %v4282 = vadd.f32 %v4280, %v4281
  %v4283 = vsel %vm2954, %v4175, 0.0
  %v4284 = vadd.f32 %v4282, %v4283
  %v4285 = vsel %vm2954, %v4176, 0.0
  %v4286 = vadd.f32 %v4284, %v4285
  %v4287 = vsel %vm2954, %v4177, 0.0
  %v4288 = vadd.f32 %v4286, %v4287
  %v4289 = vsel %vm2954, %v4178, 0.0
  %v4290 = vadd.f32 %v4288, %v4289
  %v4291 = vsel %vm2954, %v4179, 0.0
  %v4292 = vadd.f32 %v4290, %v4291
  %v4293 = vsel %vm2954, %v4180, 0.0
  %v4294 = vadd.f32 %v4292, %v4293
  %v4295 = vsel %vm2954, %v4181, 0.0
  %v4296 = vadd.f32 %v4294, %v4295
  %v4297 = vsel %vm2954, %v4182, 0.0
  %v4298 = vadd.f32 %v4296, %v4297
  %v4299 = vsel %vm2954, %v4183, 0.0
  %v4300 = vadd.f32 %v4298, %v4299
  %v4301 = vsel %vm2954, %v4184, 0.0
  %v4302 = vadd.f32 %v4300, %v4301
  %v4303 = vsel %vm2954, %v4185, 0.0
  %v4304 = vadd.f32 %v4302, %v4303
  %v4305 = vsel %vm2954, %v4186, 0.0
  %v4306 = vadd.f32 %v4304, %v4305
  %v4307 = vsel %vm2954, %v4187, 0.0
  %v4308 = vadd.f32 %v4306, %v4307
  %v4309 = vsel %vm2954, %v4188, 0.0
  %v4310 = vadd.f32 %v4308, %v4309
  %v4311 = vsel %vm2954, %v4189, 0.0
  %v4312 = vadd.f32 %v4310, %v4311
  %v4313 = vsel %vm2954, %v4190, 0.0
  %v4314 = vadd.f32 %v4312, %v4313
  %v4315 = vsel %vm2954, %v4191, 0.0
  %v4316 = vadd.f32 %v4314, %v4315
  %v4317 = vsel %vm2954, %v4192, 0.0
  %v4318 = vadd.f32 %v4316, %v4317
  %v4319 = vsel %vm2954, %v4193, 0.0
  %v4320 = vadd.f32 %v4318, %v4319
  %v4321 = vrot.slane %v4320, 4
  %v4322 = vadd.f32 %v4320, %v4321
  %v4323 = vrot.slane %v4322, 2
  %v4324 = vadd.f32 %v4322, %v4323
  %v4325 = vrot.slane %v4324, 1
  %v4326 = vadd.f32 %v4324, %v4325
  %v4327 = vmul.f32 %v4326, 0.001953125
  %v4328 = vmul.f32 %v4129, %v4129
  %v4329 = vsub.f32 %v4327, %v4328
  %v4330 = vld [vmem:[%s2] sm:$0x1]
  %v4331 = vadd.f32 %v4329, 1e-05
  %v4332 = vrsqrt.pop %v4331
  %v4333 = vmul.f32 %v4330, %v4332
  %v4334 = vld [vmem:[%s3] sm:$0x1]
  %v4335 = vmul.f32 %v4129, %v4333
  %v4336 = vsub.f32 %v4334, %v4335
  %v4338 = vlaneseq
  %v4339 = vshrl.u32 %v4338, 7
  %v4340 = vsub.s32 0, %v4339
  %v4341 = vrot.slane %v4333, %v4340
  %v4343 = vmul.f32 %v3678, %v4341
  %v4344 = vmul.f32 %v3683, %v4341
  %v4345 = vmul.f32 %v3688, %v4341
  %v4346 = vmul.f32 %v3693, %v4341
  %v4347 = vmul.f32 %v3698, %v4341
  %v4348 = vmul.f32 %v3703, %v4341
  %v4349 = vmul.f32 %v3708, %v4341
  %v4350 = vmul.f32 %v3713, %v4341
  %v4351 = vmul.f32 %v3718, %v4341
  %v4352 = vmul.f32 %v3723, %v4341
  %v4353 = vmul.f32 %v3728, %v4341
  %v4354 = vmul.f32 %v3733, %v4341
  %v4355 = vmul.f32 %v3738, %v4341
  %v4356 = vmul.f32 %v3743, %v4341
  %v4357 = vmul.f32 %v3748, %v4341
  %v4358 = vmul.f32 %v3753, %v4341
  %v4359 = vmul.f32 %v3758, %v4341
  %v4360 = vmul.f32 %v3763, %v4341
  %v4361 = vmul.f32 %v3768, %v4341
  %v4362 = vmul.f32 %v3773, %v4341
  %v4363 = vmul.f32 %v3778, %v4341
  %v4364 = vmul.f32 %v3783, %v4341
  %v4365 = vmul.f32 %v3788, %v4341
  %v4366 = vmul.f32 %v3793, %v4341
  %v4367 = vmul.f32 %v3798, %v4341
  %v4368 = vmul.f32 %v3803, %v4341
  %v4369 = vmul.f32 %v3808, %v4341
  %v4370 = vmul.f32 %v3813, %v4341
  %v4371 = vmul.f32 %v3818, %v4341
  %v4372 = vmul.f32 %v3823, %v4341
  %v4373 = vmul.f32 %v3828, %v4341
  %v4374 = vmul.f32 %v3833, %v4341
  %v4375 = vmul.f32 %v3838, %v4341
  %v4376 = vmul.f32 %v3843, %v4341
  %v4377 = vmul.f32 %v3848, %v4341
  %v4378 = vmul.f32 %v3853, %v4341
  %v4379 = vmul.f32 %v3858, %v4341
  %v4380 = vmul.f32 %v3863, %v4341
  %v4381 = vmul.f32 %v3868, %v4341
  %v4382 = vmul.f32 %v3873, %v4341
  %v4383 = vmul.f32 %v3878, %v4341
  %v4384 = vmul.f32 %v3883, %v4341
  %v4385 = vmul.f32 %v3888, %v4341
  %v4386 = vmul.f32 %v3893, %v4341
  %v4387 = vmul.f32 %v3898, %v4341
  %v4388 = vmul.f32 %v3903, %v4341
  %v4389 = vmul.f32 %v3908, %v4341
  %v4390 = vmul.f32 %v3913, %v4341
  %v4391 = vmul.f32 %v3918, %v4341
  %v4392 = vmul.f32 %v3923, %v4341
  %v4393 = vmul.f32 %v3928, %v4341
  %v4394 = vmul.f32 %v3933, %v4341
  %v4395 = vmul.f32 %v3938, %v4341
  %v4396 = vmul.f32 %v3943, %v4341
  %v4397 = vmul.f32 %v3948, %v4341
  %v4398 = vmul.f32 %v3953, %v4341
  %v4399 = vmul.f32 %v3958, %v4341
  %v4400 = vmul.f32 %v3963, %v4341
  %v4401 = vmul.f32 %v3968, %v4341
  %v4402 = vmul.f32 %v3973, %v4341
  %v4403 = vmul.f32 %v3978, %v4341
  %v4404 = vmul.f32 %v3983, %v4341
  %v4405 = vmul.f32 %v3988, %v4341
  %v4406 = vmul.f32 %v3993, %v4341
  %v4408 = vlaneseq
  %v4409 = vshrl.u32 %v4408, 7
  %v4410 = vsub.s32 0, %v4409
  %v4411 = vrot.slane %v4336, %v4410
  %v4413 = vadd.f32 %v4343, %v4411
  %v4414 = vadd.f32 %v4344, %v4411
  %v4415 = vadd.f32 %v4345, %v4411
  %v4416 = vadd.f32 %v4346, %v4411
  %v4417 = vadd.f32 %v4347, %v4411
  %v4418 = vadd.f32 %v4348, %v4411
  %v4419 = vadd.f32 %v4349, %v4411
  %v4420 = vadd.f32 %v4350, %v4411
  %v4421 = vadd.f32 %v4351, %v4411
  %v4422 = vadd.f32 %v4352, %v4411
  %v4423 = vadd.f32 %v4353, %v4411
  %v4424 = vadd.f32 %v4354, %v4411
  %v4425 = vadd.f32 %v4355, %v4411
  %v4426 = vadd.f32 %v4356, %v4411
  %v4427 = vadd.f32 %v4357, %v4411
  %v4428 = vadd.f32 %v4358, %v4411
  %v4429 = vadd.f32 %v4359, %v4411
  %v4430 = vadd.f32 %v4360, %v4411
  %v4431 = vadd.f32 %v4361, %v4411
  %v4432 = vadd.f32 %v4362, %v4411
  %v4433 = vadd.f32 %v4363, %v4411
  %v4434 = vadd.f32 %v4364, %v4411
  %v4435 = vadd.f32 %v4365, %v4411
  %v4436 = vadd.f32 %v4366, %v4411
  %v4437 = vadd.f32 %v4367, %v4411
  %v4438 = vadd.f32 %v4368, %v4411
  %v4439 = vadd.f32 %v4369, %v4411
  %v4440 = vadd.f32 %v4370, %v4411
  %v4441 = vadd.f32 %v4371, %v4411
  %v4442 = vadd.f32 %v4372, %v4411
  %v4443 = vadd.f32 %v4373, %v4411
  %v4444 = vadd.f32 %v4374, %v4411
  %v4445 = vadd.f32 %v4375, %v4411
  %v4446 = vadd.f32 %v4376, %v4411
  %v4447 = vadd.f32 %v4377, %v4411
  %v4448 = vadd.f32 %v4378, %v4411
  %v4449 = vadd.f32 %v4379, %v4411
  %v4450 = vadd.f32 %v4380, %v4411
  %v4451 = vadd.f32 %v4381, %v4411
  %v4452 = vadd.f32 %v4382, %v4411
  %v4453 = vadd.f32 %v4383, %v4411
  %v4454 = vadd.f32 %v4384, %v4411
  %v4455 = vadd.f32 %v4385, %v4411
  %v4456 = vadd.f32 %v4386, %v4411
  %v4457 = vadd.f32 %v4387, %v4411
  %v4458 = vadd.f32 %v4388, %v4411
  %v4459 = vadd.f32 %v4389, %v4411
  %v4460 = vadd.f32 %v4390, %v4411
  %v4461 = vadd.f32 %v4391, %v4411
  %v4462 = vadd.f32 %v4392, %v4411
  %v4463 = vadd.f32 %v4393, %v4411
  %v4464 = vadd.f32 %v4394, %v4411
  %v4465 = vadd.f32 %v4395, %v4411
  %v4466 = vadd.f32 %v4396, %v4411
  %v4467 = vadd.f32 %v4397, %v4411
  %v4468 = vadd.f32 %v4398, %v4411
  %v4469 = vadd.f32 %v4399, %v4411
  %v4470 = vadd.f32 %v4400, %v4411
  %v4471 = vadd.f32 %v4401, %v4411
  %v4472 = vadd.f32 %v4402, %v4411
  %v4473 = vadd.f32 %v4403, %v4411
  %v4474 = vadd.f32 %v4404, %v4411
  %v4475 = vadd.f32 %v4405, %v4411
  %v4476 = vadd.f32 %v4406, %v4411
  %v4477 = vmax.f32 %v4413, 0.0
  %v4478 = vmax.f32 %v4414, 0.0
  %v4479 = vmax.f32 %v4415, 0.0
  %v4480 = vmax.f32 %v4416, 0.0
  %v4481 = vmax.f32 %v4417, 0.0
  %v4482 = vmax.f32 %v4418, 0.0
  %v4483 = vmax.f32 %v4419, 0.0
  %v4484 = vmax.f32 %v4420, 0.0
  %v4485 = vmax.f32 %v4421, 0.0
  %v4486 = vmax.f32 %v4422, 0.0
  %v4487 = vmax.f32 %v4423, 0.0
  %v4488 = vmax.f32 %v4424, 0.0
  %v4489 = vmax.f32 %v4425, 0.0
  %v4490 = vmax.f32 %v4426, 0.0
  %v4491 = vmax.f32 %v4427, 0.0
  %v4492 = vmax.f32 %v4428, 0.0
  %v4493 = vmax.f32 %v4429, 0.0
  %v4494 = vmax.f32 %v4430, 0.0
  %v4495 = vmax.f32 %v4431, 0.0
  %v4496 = vmax.f32 %v4432, 0.0
  %v4497 = vmax.f32 %v4433, 0.0
  %v4498 = vmax.f32 %v4434, 0.0
  %v4499 = vmax.f32 %v4435, 0.0
  %v4500 = vmax.f32 %v4436, 0.0
  %v4501 = vmax.f32 %v4437, 0.0
  %v4502 = vmax.f32 %v4438, 0.0
  %v4503 = vmax.f32 %v4439, 0.0
  %v4504 = vmax.f32 %v4440, 0.0
  %v4505 = vmax.f32 %v4441, 0.0
  %v4506 = vmax.f32 %v4442, 0.0
  %v4507 = vmax.f32 %v4443, 0.0
  %v4508 = vmax.f32 %v4444, 0.0
  %v4509 = vmax.f32 %v4445, 0.0
  %v4510 = vmax.f32 %v4446, 0.0
  %v4511 = vmax.f32 %v4447, 0.0
  %v4512 = vmax.f32 %v4448, 0.0
  %v4513 = vmax.f32 %v4449, 0.0
  %v4514 = vmax.f32 %v4450, 0.0
  %v4515 = vmax.f32 %v4451, 0.0
  %v4516 = vmax.f32 %v4452, 0.0
  %v4517 = vmax.f32 %v4453, 0.0
  %v4518 = vmax.f32 %v4454, 0.0
  %v4519 = vmax.f32 %v4455, 0.0
  %v4520 = vmax.f32 %v4456, 0.0
  %v4521 = vmax.f32 %v4457, 0.0
  %v4522 = vmax.f32 %v4458, 0.0
  %v4523 = vmax.f32 %v4459, 0.0
  %v4524 = vmax.f32 %v4460, 0.0
  %v4525 = vmax.f32 %v4461, 0.0
  %v4526 = vmax.f32 %v4462, 0.0
  %v4527 = vmax.f32 %v4463, 0.0
  %v4528 = vmax.f32 %v4464, 0.0
  %v4529 = vmax.f32 %v4465, 0.0
  %v4530 = vmax.f32 %v4466, 0.0
  %v4531 = vmax.f32 %v4467, 0.0
  %v4532 = vmax.f32 %v4468, 0.0
  %v4533 = vmax.f32 %v4469, 0.0
  %v4534 = vmax.f32 %v4470, 0.0
  %v4535 = vmax.f32 %v4471, 0.0
  %v4536 = vmax.f32 %v4472, 0.0
  %v4537 = vmax.f32 %v4473, 0.0
  %v4538 = vmax.f32 %v4474, 0.0
  %v4539 = vmax.f32 %v4475, 0.0
  %v4540 = vmax.f32 %v4476, 0.0
  %4541 = vst.msk [vmem:[#allocation3] sm:$0xff] %vm2954, 0.0
  %4542 = vst.msk [vmem:[#allocation3 + $0x8] sm:$0xff] %vm2954, 0.0
  %vm4543 = vcmask 58368
  %4544 = vst.msk [vmem:[#allocation3 + $0x10] sm:$0x3] %vm4543, 0.0
  %4545 = vst.msk [vmem:[#allocation3 + $0x18] sm:$0xff] %vm2954, 0.0
  %4546 = vst.msk [vmem:[#allocation3 + $0x20] sm:$0xff] %vm2954, 0.0
  %4547 = vst.msk [vmem:[#allocation3 + $0x28] sm:$0x3] %vm4543, 0.0
  %4548 = vst.msk [vmem:[#allocation3 + $0x30] sm:$0xff] %vm2954, 0.0
  %4549 = vst.msk [vmem:[#allocation3 + $0x38] sm:$0xff] %vm2954, 0.0
  %4550 = vst.msk [vmem:[#allocation3 + $0x40] sm:$0x3] %vm4543, 0.0
  %4551 = vst.msk [vmem:[#allocation3 + $0x48] sm:$0xff] %vm2954, 0.0
  %4552 = vst.msk [vmem:[#allocation3 + $0x50] sm:$0xff] %vm2954, 0.0
  %4553 = vst.msk [vmem:[#allocation3 + $0x58] sm:$0x3] %vm4543, 0.0
  %4554 = vst.msk [vmem:[#allocation3 + $0x60] sm:$0xff] %vm2954, 0.0
  %4555 = vst.msk [vmem:[#allocation3 + $0x68] sm:$0xff] %vm2954, 0.0
  %4556 = vst.msk [vmem:[#allocation3 + $0x70] sm:$0x3] %vm4543, 0.0
  %4557 = vst.msk [vmem:[#allocation3 + $0x78] sm:$0xff] %vm2954, 0.0
  %4558 = vst.msk [vmem:[#allocation3 + $0x80] sm:$0xff] %vm2954, 0.0
  %4559 = vst.msk [vmem:[#allocation3 + $0x88] sm:$0x3] %vm4543, 0.0
  %4560 = vst.msk [vmem:[#allocation3 + $0x90] sm:$0xff] %vm2954, 0.0
  %4561 = vst.msk [vmem:[#allocation3 + $0x98] sm:$0xff] %vm2954, 0.0
  %4562 = vst.msk [vmem:[#allocation3 + $0xa0] sm:$0x3] %vm4543, 0.0
  %4563 = vst.msk [vmem:[#allocation3 + $0xa8] sm:$0xff] %vm2954, 0.0
  %4564 = vst.msk [vmem:[#allocation3 + $0xb0] sm:$0xff] %vm2954, 0.0
  %4565 = vst.msk [vmem:[#allocation3 + $0xb8] sm:$0x3] %vm4543, 0.0
  %4566 = vst.msk [vmem:[#allocation3 + $0xc0] sm:$0xff] %vm2954, 0.0
  %4567 = vst.msk [vmem:[#allocation3 + $0xc8] sm:$0xff] %vm2954, 0.0
  %4568 = vst.msk [vmem:[#allocation3 + $0xd0] sm:$0x3] %vm4543, 0.0
  %4569 = vst.msk [vmem:[#allocation3 + $0xd8] sm:$0xff] %vm2954, 0.0
  %4570 = vst.msk [vmem:[#allocation3 + $0xe0] sm:$0xff] %vm2954, 0.0
  %4571 = vst.msk [vmem:[#allocation3 + $0xe8] sm:$0x3] %vm4543, 0.0
  %4572 = vst.msk [vmem:[#allocation3 + $0xf0] sm:$0xff] %vm2954, 0.0
  %4573 = vst.msk [vmem:[#allocation3 + $0xf8] sm:$0xff] %vm2954, 0.0
  %4574 = vst.msk [vmem:[#allocation3 + $0x100] sm:$0x3] %vm4543, 0.0
  %4575 = vst.msk [vmem:[#allocation3 + $0x108] sm:$0xff] %vm2954, 0.0
  %4576 = vst.msk [vmem:[#allocation3 + $0x110] sm:$0xff] %vm2954, 0.0
  %4577 = vst.msk [vmem:[#allocation3 + $0x118] sm:$0x3] %vm4543, 0.0
  %4578 = vst.msk [vmem:[#allocation3 + $0x120] sm:$0xff] %vm2954, 0.0
  %4579 = vst.msk [vmem:[#allocation3 + $0x128] sm:$0xff] %vm2954, 0.0
  %4580 = vst.msk [vmem:[#allocation3 + $0x130] sm:$0x3] %vm4543, 0.0
  %4581 = vst.msk [vmem:[#allocation3 + $0x138] sm:$0xff] %vm2954, 0.0
  %4582 = vst.msk [vmem:[#allocation3 + $0x140] sm:$0xff] %vm2954, 0.0
  %4583 = vst.msk [vmem:[#allocation3 + $0x148] sm:$0x3] %vm4543, 0.0
  %4584 = vst.msk [vmem:[#allocation3 + $0x150] sm:$0xff] %vm2954, 0.0
  %4585 = vst.msk [vmem:[#allocation3 + $0x158] sm:$0xff] %vm2954, 0.0
  %4586 = vst.msk [vmem:[#allocation3 + $0x160] sm:$0x3] %vm4543, 0.0
  %4587 = vst.msk [vmem:[#allocation3 + $0x168] sm:$0xff] %vm2954, 0.0
  %4588 = vst.msk [vmem:[#allocation3 + $0x170] sm:$0xff] %vm2954, 0.0
  %4589 = vst.msk [vmem:[#allocation3 + $0x178] sm:$0x3] %vm4543, 0.0
  %4590 = vst.msk [vmem:[#allocation3 + $0x180] sm:$0xff] %vm2954, 0.0
  %4591 = vst.msk [vmem:[#allocation3 + $0x188] sm:$0xff] %vm2954, 0.0
  %4592 = vst.msk [vmem:[#allocation3 + $0x190] sm:$0x3] %vm4543, 0.0
  %4593 = vst.msk [vmem:[#allocation3 + $0x198] sm:$0xff] %vm2954, 0.0
  %4594 = vst.msk [vmem:[#allocation3 + $0x1a0] sm:$0xff] %vm2954, 0.0
  %4595 = vst.msk [vmem:[#allocation3 + $0x1a8] sm:$0x3] %vm4543, 0.0
  %4596 = vst.msk [vmem:[#allocation3 + $0x1b0] sm:$0xff] %vm2954, 0.0
  %4597 = vst.msk [vmem:[#allocation3 + $0x1b8] sm:$0xff] %vm2954, 0.0
  %4598 = vst.msk [vmem:[#allocation3 + $0x1c0] sm:$0x3] %vm4543, 0.0
  %4599 = vst.msk [vmem:[#allocation3 + $0x1c8] sm:$0xff] %vm2954, 0.0
  %4600 = vst.msk [vmem:[#allocation3 + $0x1d0] sm:$0xff] %vm2954, 0.0
  %4601 = vst.msk [vmem:[#allocation3 + $0x1d8] sm:$0x3] %vm4543, 0.0
  %4602 = vst.msk [vmem:[#allocation3 + $0x1e0] sm:$0xff] %vm2954, 0.0
  %4603 = vst.msk [vmem:[#allocation3 + $0x1e8] sm:$0xff] %vm2954, 0.0
  %4604 = vst.msk [vmem:[#allocation3 + $0x1f0] sm:$0x3] %vm4543, 0.0
  %4605 = vst.msk [vmem:[#allocation3 + $0x1f8] sm:$0xff] %vm2954, 0.0
  %4606 = vst.msk [vmem:[#allocation3 + $0x200] sm:$0xff] %vm2954, 0.0
  %4607 = vst.msk [vmem:[#allocation3 + $0x208] sm:$0x3] %vm4543, 0.0
  %4608 = vst.msk [vmem:[#allocation3 + $0x210] sm:$0xff] %vm2954, 0.0
  %4609 = vst.msk [vmem:[#allocation3 + $0x218] sm:$0xff] %vm2954, 0.0
  %4610 = vst.msk [vmem:[#allocation3 + $0x220] sm:$0x3] %vm4543, 0.0
  %4611 = vst.msk [vmem:[#allocation3 + $0x228] sm:$0xff] %vm2954, 0.0
  %4612 = vst.msk [vmem:[#allocation3 + $0x230] sm:$0xff] %vm2954, 0.0
  %4613 = vst.msk [vmem:[#allocation3 + $0x238] sm:$0x3] %vm4543, 0.0
  %4614 = vst.msk [vmem:[#allocation3 + $0x240] sm:$0xff] %vm2954, 0.0
  %4615 = vst.msk [vmem:[#allocation3 + $0x248] sm:$0xff] %vm2954, 0.0
  %4616 = vst.msk [vmem:[#allocation3 + $0x250] sm:$0x3] %vm4543, 0.0
  %4617 = vst.msk [vmem:[#allocation3 + $0x258] sm:$0xff] %vm2954, 0.0
  %4618 = vst.msk [vmem:[#allocation3 + $0x260] sm:$0xff] %vm2954, 0.0
  %4619 = vst.msk [vmem:[#allocation3 + $0x268] sm:$0x3] %vm4543, 0.0
  %4620 = vst.msk [vmem:[#allocation3 + $0x270] sm:$0xff] %vm2954, 0.0
  %4621 = vst.msk [vmem:[#allocation3 + $0x278] sm:$0xff] %vm2954, 0.0
  %4622 = vst.msk [vmem:[#allocation3 + $0x280] sm:$0x3] %vm4543, 0.0
  %4623 = vst.msk [vmem:[#allocation3 + $0x288] sm:$0xff] %vm2954, 0.0
  %4624 = vst.msk [vmem:[#allocation3 + $0x290] sm:$0xff] %vm2954, 0.0
  %4625 = vst.msk [vmem:[#allocation3 + $0x298] sm:$0x3] %vm4543, 0.0
  %4626 = vst.msk [vmem:[#allocation3 + $0x2a0] sm:$0xff] %vm2954, 0.0
  %4627 = vst.msk [vmem:[#allocation3 + $0x2a8] sm:$0xff] %vm2954, 0.0
  %4628 = vst.msk [vmem:[#allocation3 + $0x2b0] sm:$0x3] %vm4543, 0.0
  %4629 = vst.msk [vmem:[#allocation3 + $0x2b8] sm:$0xff] %vm2954, 0.0
  %4630 = vst.msk [vmem:[#allocation3 + $0x2c0] sm:$0xff] %vm2954, 0.0
  %4631 = vst.msk [vmem:[#allocation3 + $0x2c8] sm:$0x3] %vm4543, 0.0
  %4632 = vst.msk [vmem:[#allocation3 + $0x2d0] sm:$0xff] %vm2954, 0.0
  %4633 = vst.msk [vmem:[#allocation3 + $0x2d8] sm:$0xff] %vm2954, 0.0
  %4634 = vst.msk [vmem:[#allocation3 + $0x2e0] sm:$0x3] %vm4543, 0.0
  %4635 = vst.msk [vmem:[#allocation3 + $0x2e8] sm:$0xff] %vm2954, 0.0
  %4636 = vst.msk [vmem:[#allocation3 + $0x2f0] sm:$0xff] %vm2954, 0.0
  %4637 = vst.msk [vmem:[#allocation3 + $0x2f8] sm:$0x3] %vm4543, 0.0
  %4638 = vst.msk [vmem:[#allocation3 + $0x300] sm:$0xff] %vm2954, 0.0
  %4639 = vst.msk [vmem:[#allocation3 + $0x308] sm:$0xff] %vm2954, 0.0
  %4640 = vst.msk [vmem:[#allocation3 + $0x310] sm:$0x3] %vm4543, 0.0
  %4641 = vst.msk [vmem:[#allocation3 + $0x318] sm:$0xff] %vm2954, 0.0
  %4642 = vst.msk [vmem:[#allocation3 + $0x320] sm:$0xff] %vm2954, 0.0
  %4643 = vst.msk [vmem:[#allocation3 + $0x328] sm:$0x3] %vm4543, 0.0
  %4644 = vst.msk [vmem:[#allocation3 + $0x330] sm:$0xff] %vm2954, 0.0
  %4645 = vst.msk [vmem:[#allocation3 + $0x338] sm:$0xff] %vm2954, 0.0
  %4646 = vst.msk [vmem:[#allocation3 + $0x340] sm:$0x3] %vm4543, 0.0
  %4647 = vst.msk [vmem:[#allocation3 + $0x348] sm:$0xff] %vm2954, 0.0
  %4648 = vst.msk [vmem:[#allocation3 + $0x350] sm:$0xff] %vm2954, 0.0
  %4649 = vst.msk [vmem:[#allocation3 + $0x358] sm:$0x3] %vm4543, 0.0
  %s4650 = scalar_lea.vmem [#allocation3], 24
  %4651 = vst.msk [vmem:[%s4650 + $0x1] sm:$0xff] %vm2954, %v4477
  %4652 = vst.msk [vmem:[%s4650 + $0x9] sm:$0xff] %vm2954, %v4478
  %4653 = vst.msk [vmem:[%s4650 + $0x19] sm:$0xff] %vm2954, %v4479
  %4654 = vst.msk [vmem:[%s4650 + $0x21] sm:$0xff] %vm2954, %v4480
  %4655 = vst.msk [vmem:[%s4650 + $0x31] sm:$0xff] %vm2954, %v4481
  %4656 = vst.msk [vmem:[%s4650 + $0x39] sm:$0xff] %vm2954, %v4482
  %4657 = vst.msk [vmem:[%s4650 + $0x49] sm:$0xff] %vm2954, %v4483
  %4658 = vst.msk [vmem:[%s4650 + $0x51] sm:$0xff] %vm2954, %v4484
  %4659 = vst.msk [vmem:[%s4650 + $0x61] sm:$0xff] %vm2954, %v4485
  %4660 = vst.msk [vmem:[%s4650 + $0x69] sm:$0xff] %vm2954, %v4486
  %4661 = vst.msk [vmem:[%s4650 + $0x79] sm:$0xff] %vm2954, %v4487
  %4662 = vst.msk [vmem:[%s4650 + $0x81] sm:$0xff] %vm2954, %v4488
  %4663 = vst.msk [vmem:[%s4650 + $0x91] sm:$0xff] %vm2954, %v4489
  %4664 = vst.msk [vmem:[%s4650 + $0x99] sm:$0xff] %vm2954, %v4490
  %4665 = vst.msk [vmem:[%s4650 + $0xa9] sm:$0xff] %vm2954, %v4491
  %4666 = vst.msk [vmem:[%s4650 + $0xb1] sm:$0xff] %vm2954, %v4492
  %4667 = vst.msk [vmem:[%s4650 + $0xc1] sm:$0xff] %vm2954, %v4493
  %4668 = vst.msk [vmem:[%s4650 + $0xc9] sm:$0xff] %vm2954, %v4494
  %4669 = vst.msk [vmem:[%s4650 + $0xd9] sm:$0xff] %vm2954, %v4495
  %4670 = vst.msk [vmem:[%s4650 + $0xe1] sm:$0xff] %vm2954, %v4496
  %4671 = vst.msk [vmem:[%s4650 + $0xf1] sm:$0xff] %vm2954, %v4497
  %4672 = vst.msk [vmem:[%s4650 + $0xf9] sm:$0xff] %vm2954, %v4498
  %4673 = vst.msk [vmem:[%s4650 + $0x109] sm:$0xff] %vm2954, %v4499
  %4674 = vst.msk [vmem:[%s4650 + $0x111] sm:$0xff] %vm2954, %v4500
  %4675 = vst.msk [vmem:[%s4650 + $0x121] sm:$0xff] %vm2954, %v4501
  %4676 = vst.msk [vmem:[%s4650 + $0x129] sm:$0xff] %vm2954, %v4502
  %4677 = vst.msk [vmem:[%s4650 + $0x139] sm:$0xff] %vm2954, %v4503
  %4678 = vst.msk [vmem:[%s4650 + $0x141] sm:$0xff] %vm2954, %v4504
  %4679 = vst.msk [vmem:[%s4650 + $0x151] sm:$0xff] %vm2954, %v4505
  %4680 = vst.msk [vmem:[%s4650 + $0x159] sm:$0xff] %vm2954, %v4506
  %4681 = vst.msk [vmem:[%s4650 + $0x169] sm:$0xff] %vm2954, %v4507
  %4682 = vst.msk [vmem:[%s4650 + $0x171] sm:$0xff] %vm2954, %v4508
  %4683 = vst.msk [vmem:[%s4650 + $0x1b1] sm:$0xff] %vm2954, %v4509
  %4684 = vst.msk [vmem:[%s4650 + $0x1b9] sm:$0xff] %vm2954, %v4510
  %4685 = vst.msk [vmem:[%s4650 + $0x1c9] sm:$0xff] %vm2954, %v4511
  %4686 = vst.msk [vmem:[%s4650 + $0x1d1] sm:$0xff] %vm2954, %v4512
  %4687 = vst.msk [vmem:[%s4650 + $0x1e1] sm:$0xff] %vm2954, %v4513
  %4688 = vst.msk [vmem:[%s4650 + $0x1e9] sm:$0xff] %vm2954, %v4514
  %4689 = vst.msk [vmem:[%s4650 + $0x1f9] sm:$0xff] %vm2954, %v4515
  %4690 = vst.msk [vmem:[%s4650 + $0x201] sm:$0xff] %vm2954, %v4516
  %4691 = vst.msk [vmem:[%s4650 + $0x211] sm:$0xff] %vm2954, %v4517
  %4692 = vst.msk [vmem:[%s4650 + $0x219] sm:$0xff] %vm2954, %v4518
  %4693 = vst.msk [vmem:[%s4650 + $0x229] sm:$0xff] %vm2954, %v4519
  %4694 = vst.msk [vmem:[%s4650 + $0x231] sm:$0xff] %vm2954, %v4520
  %4695 = vst.msk [vmem:[%s4650 + $0x241] sm:$0xff] %vm2954, %v4521
  %4696 = vst.msk [vmem:[%s4650 + $0x249] sm:$0xff] %vm2954, %v4522
  %4697 = vst.msk [vmem:[%s4650 + $0x259] sm:$0xff] %vm2954, %v4523
  %4698 = vst.msk [vmem:[%s4650 + $0x261] sm:$0xff] %vm2954, %v4524
  %4699 = vst.msk [vmem:[%s4650 + $0x271] sm:$0xff] %vm2954, %v4525
  %4700 = vst.msk [vmem:[%s4650 + $0x279] sm:$0xff] %vm2954, %v4526
  %4701 = vst.msk [vmem:[%s4650 + $0x289] sm:$0xff] %vm2954, %v4527
  %4702 = vst.msk [vmem:[%s4650 + $0x291] sm:$0xff] %vm2954, %v4528
  %4703 = vst.msk [vmem:[%s4650 + $0x2a1] sm:$0xff] %vm2954, %v4529
  %4704 = vst.msk [vmem:[%s4650 + $0x2a9] sm:$0xff] %vm2954, %v4530
  %4705 = vst.msk [vmem:[%s4650 + $0x2b9] sm:$0xff] %vm2954, %v4531
  %4706 = vst.msk [vmem:[%s4650 + $0x2c1] sm:$0xff] %vm2954, %v4532
  %4707 = vst.msk [vmem:[%s4650 + $0x2d1] sm:$0xff] %vm2954, %v4533
  %4708 = vst.msk [vmem:[%s4650 + $0x2d9] sm:$0xff] %vm2954, %v4534
  %4709 = vst.msk [vmem:[%s4650 + $0x2e9] sm:$0xff] %vm2954, %v4535
  %4710 = vst.msk [vmem:[%s4650 + $0x2f1] sm:$0xff] %vm2954, %v4536
  %4711 = vst.msk [vmem:[%s4650 + $0x301] sm:$0xff] %vm2954, %v4537
  %4712 = vst.msk [vmem:[%s4650 + $0x309] sm:$0xff] %vm2954, %v4538
  %4713 = vst.msk [vmem:[%s4650 + $0x319] sm:$0xff] %vm2954, %v4539
  %4714 = vst.msk [vmem:[%s4650 + $0x321] sm:$0xff] %vm2954, %v4540
  %v4715 = vld [vmem:[#allocation3] sm:$0xff]
  %v4716 = vld [vmem:[#allocation3 + $0x8] sm:$0xff]
  %v4717 = vld [vmem:[#allocation3 + $0x18] sm:$0xff]
  %v4718 = vld [vmem:[#allocation3 + $0x20] sm:$0xff]
  %v4719 = vld [vmem:[#allocation3 + $0x30] sm:$0xff]
  %v4720 = vld [vmem:[#allocation3 + $0x38] sm:$0xff]
  %v4721 = vld [vmem:[#allocation3 + $0x48] sm:$0xff]
  %v4722 = vld [vmem:[#allocation3 + $0x50] sm:$0xff]
  %v4723 = vld [vmem:[#allocation3 + $0x60] sm:$0xff]
  %v4724 = vld [vmem:[#allocation3 + $0x68] sm:$0xff]
  %v4725 = vld [vmem:[#allocation3 + $0x78] sm:$0xff]
  %v4726 = vld [vmem:[#allocation3 + $0x80] sm:$0xff]
  %v4727 = vld [vmem:[#allocation3 + $0x90] sm:$0xff]
  %v4728 = vld [vmem:[#allocation3 + $0x98] sm:$0xff]
  %v4729 = vld [vmem:[#allocation3 + $0xa8] sm:$0xff]
  %v4730 = vld [vmem:[#allocation3 + $0xb0] sm:$0xff]
  %v4731 = vld [vmem:[#allocation3 + $0xc0] sm:$0xff]
  %v4732 = vld [vmem:[#allocation3 + $0xc8] sm:$0xff]
  %v4733 = vld [vmem:[#allocation3 + $0xd8] sm:$0xff]
  %v4734 = vld [vmem:[#allocation3 + $0xe0] sm:$0xff]
  %v4735 = vld [vmem:[#allocation3 + $0xf0] sm:$0xff]
  %v4736 = vld [vmem:[#allocation3 + $0xf8] sm:$0xff]
  %v4737 = vld [vmem:[#allocation3 + $0x108] sm:$0xff]
  %v4738 = vld [vmem:[#allocation3 + $0x110] sm:$0xff]
  %v4739 = vld [vmem:[#allocation3 + $0x120] sm:$0xff]
  %v4740 = vld [vmem:[#allocation3 + $0x128] sm:$0xff]
  %v4741 = vld [vmem:[#allocation3 + $0x138] sm:$0xff]
  %v4742 = vld [vmem:[#allocation3 + $0x140] sm:$0xff]
  %v4743 = vld [vmem:[#allocation3 + $0x150] sm:$0xff]
  %v4744 = vld [vmem:[#allocation3 + $0x158] sm:$0xff]
  %v4745 = vld [vmem:[#allocation3 + $0x168] sm:$0xff]
  %v4746 = vld [vmem:[#allocation3 + $0x170] sm:$0xff]
  %v4747 = vld [vmem:[#allocation3 + $0x1b0] sm:$0xff]
  %v4748 = vld [vmem:[#allocation3 + $0x1b8] sm:$0xff]
  %v4749 = vld [vmem:[#allocation3 + $0x1c8] sm:$0xff]
  %v4750 = vld [vmem:[#allocation3 + $0x1d0] sm:$0xff]
  %v4751 = vld [vmem:[#allocation3 + $0x1e0] sm:$0xff]
  %v4752 = vld [vmem:[#allocation3 + $0x1e8] sm:$0xff]
  %v4753 = vld [vmem:[#allocation3 + $0x1f8] sm:$0xff]
  %v4754 = vld [vmem:[#allocation3 + $0x200] sm:$0xff]
  %v4755 = vld [vmem:[#allocation3 + $0x210] sm:$0xff]
  %v4756 = vld [vmem:[#allocation3 + $0x218] sm:$0xff]
  %v4757 = vld [vmem:[#allocation3 + $0x228] sm:$0xff]
  %v4758 = vld [vmem:[#allocation3 + $0x230] sm:$0xff]
  %v4759 = vld [vmem:[#allocation3 + $0x240] sm:$0xff]
  %v4760 = vld [vmem:[#allocation3 + $0x248] sm:$0xff]
  %v4761 = vld [vmem:[#allocation3 + $0x258] sm:$0xff]
  %v4762 = vld [vmem:[#allocation3 + $0x260] sm:$0xff]
  %v4763 = vld [vmem:[#allocation3 + $0x270] sm:$0xff]
  %v4764 = vld [vmem:[#allocation3 + $0x278] sm:$0xff]
  %v4765 = vld [vmem:[#allocation3 + $0x288] sm:$0xff]
  %v4766 = vld [vmem:[#allocation3 + $0x290] sm:$0xff]
  %v4767 = vld [vmem:[#allocation3 + $0x2a0] sm:$0xff]
  %v4768 = vld [vmem:[#allocation3 + $0x2a8] sm:$0xff]
  %v4769 = vld [vmem:[#allocation3 + $0x2b8] sm:$0xff]
  %v4770 = vld [vmem:[#allocation3 + $0x2c0] sm:$0xff]
  %v4771 = vld [vmem:[#allocation3 + $0x2d0] sm:$0xff]
  %v4772 = vld [vmem:[#allocation3 + $0x2d8] sm:$0xff]
  %v4773 = vld [vmem:[#allocation3 + $0x2e8] sm:$0xff]
  %v4774 = vld [vmem:[#allocation3 + $0x2f0] sm:$0xff]
  %v4775 = vld [vmem:[#allocation3 + $0x300] sm:$0xff]
  %v4776 = vld [vmem:[#allocation3 + $0x308] sm:$0xff]
  %v4777 = vld [vmem:[#allocation3 + $0x318] sm:$0xff]
  %v4778 = vld [vmem:[#allocation3 + $0x320] sm:$0xff]
  %v4779 = vld [vmem:[#allocation3 + $0x1] sm:$0xff]
  %v4780 = vld [vmem:[#allocation3 + $0x9] sm:$0xff]
  %v4781 = vld [vmem:[#allocation3 + $0x19] sm:$0xff]
  %v4782 = vld [vmem:[#allocation3 + $0x21] sm:$0xff]
  %v4783 = vld [vmem:[#allocation3 + $0x31] sm:$0xff]
  %v4784 = vld [vmem:[#allocation3 + $0x39] sm:$0xff]
  %v4785 = vld [vmem:[#allocation3 + $0x49] sm:$0xff]
  %v4786 = vld [vmem:[#allocation3 + $0x51] sm:$0xff]
  %v4787 = vld [vmem:[#allocation3 + $0x61] sm:$0xff]
  %v4788 = vld [vmem:[#allocation3 + $0x69] sm:$0xff]
  %v4789 = vld [vmem:[#allocation3 + $0x79] sm:$0xff]
  %v4790 = vld [vmem:[#allocation3 + $0x81] sm:$0xff]
  %v4791 = vld [vmem:[#allocation3 + $0x91] sm:$0xff]
  %v4792 = vld [vmem:[#allocation3 + $0x99] sm:$0xff]
  %v4793 = vld [vmem:[#allocation3 + $0xa9] sm:$0xff]
  %v4794 = vld [vmem:[#allocation3 + $0xb1] sm:$0xff]
  %v4795 = vld [vmem:[#allocation3 + $0xc1] sm:$0xff]
  %v4796 = vld [vmem:[#allocation3 + $0xc9] sm:$0xff]
  %v4797 = vld [vmem:[#allocation3 + $0xd9] sm:$0xff]
  %v4798 = vld [vmem:[#allocation3 + $0xe1] sm:$0xff]
  %v4799 = vld [vmem:[#allocation3 + $0xf1] sm:$0xff]
  %v4800 = vld [vmem:[#allocation3 + $0xf9] sm:$0xff]
  %v4801 = vld [vmem:[#allocation3 + $0x109] sm:$0xff]
  %v4802 = vld [vmem:[#allocation3 + $0x111] sm:$0xff]
  %v4803 = vld [vmem:[#allocation3 + $0x121] sm:$0xff]
  %v4804 = vld [vmem:[#allocation3 + $0x129] sm:$0xff]
  %v4805 = vld [vmem:[#allocation3 + $0x139] sm:$0xff]
  %v4806 = vld [vmem:[#allocation3 + $0x141] sm:$0xff]
  %v4807 = vld [vmem:[#allocation3 + $0x151] sm:$0xff]
  %v4808 = vld [vmem:[#allocation3 + $0x159] sm:$0xff]
  %v4809 = vld [vmem:[#allocation3 + $0x169] sm:$0xff]
  %v4810 = vld [vmem:[#allocation3 + $0x171] sm:$0xff]
  %v4811 = vld [vmem:[#allocation3 + $0x1b1] sm:$0xff]
  %v4812 = vld [vmem:[#allocation3 + $0x1b9] sm:$0xff]
  %v4813 = vld [vmem:[#allocation3 + $0x1c9] sm:$0xff]
  %v4814 = vld [vmem:[#allocation3 + $0x1d1] sm:$0xff]
  %v4815 = vld [vmem:[#allocation3 + $0x1e1] sm:$0xff]
  %v4816 = vld [vmem:[#allocation3 + $0x1e9] sm:$0xff]
  %v4817 = vld [vmem:[#allocation3 + $0x1f9] sm:$0xff]
  %v4818 = vld [vmem:[#allocation3 + $0x201] sm:$0xff]
  %v4819 = vld [vmem:[#allocation3 + $0x211] sm:$0xff]
  %v4820 = vld [vmem:[#allocation3 + $0x219] sm:$0xff]
  %v4821 = vld [vmem:[#allocation3 + $0x229] sm:$0xff]
  %v4822 = vld [vmem:[#allocation3 + $0x231] sm:$0xff]
  %v4823 = vld [vmem:[#allocation3 + $0x241] sm:$0xff]
  %v4824 = vld [vmem:[#allocation3 + $0x249] sm:$0xff]
  %v4825 = vld [vmem:[#allocation3 + $0x259] sm:$0xff]
  %v4826 = vld [vmem:[#allocation3 + $0x261] sm:$0xff]
  %v4827 = vld [vmem:[#allocation3 + $0x271] sm:$0xff]
  %v4828 = vld [vmem:[#allocation3 + $0x279] sm:$0xff]
  %v4829 = vld [vmem:[#allocation3 + $0x289] sm:$0xff]
  %v4830 = vld [vmem:[#allocation3 + $0x291] sm:$0xff]
  %v4831 = vld [vmem:[#allocation3 + $0x2a1] sm:$0xff]
  %v4832 = vld [vmem:[#allocation3 + $0x2a9] sm:$0xff]
  %v4833 = vld [vmem:[#allocation3 + $0x2b9] sm:$0xff]
  %v4834 = vld [vmem:[#allocation3 + $0x2c1] sm:$0xff]
  %v4835 = vld [vmem:[#allocation3 + $0x2d1] sm:$0xff]
  %v4836 = vld [vmem:[#allocation3 + $0x2d9] sm:$0xff]
  %v4837 = vld [vmem:[#allocation3 + $0x2e9] sm:$0xff]
  %v4838 = vld [vmem:[#allocation3 + $0x2f1] sm:$0xff]
  %v4839 = vld [vmem:[#allocation3 + $0x301] sm:$0xff]
  %v4840 = vld [vmem:[#allocation3 + $0x309] sm:$0xff]
  %v4841 = vld [vmem:[#allocation3 + $0x319] sm:$0xff]
  %v4842 = vld [vmem:[#allocation3 + $0x321] sm:$0xff]
  %v4843 = vld [vmem:[#allocation3 + $0x2] sm:$0xff]
  %v4844 = vld [vmem:[#allocation3 + $0xa] sm:$0xff]
  %v4845 = vld [vmem:[#allocation3 + $0x1a] sm:$0xff]
  %v4846 = vld [vmem:[#allocation3 + $0x22] sm:$0xff]
  %v4847 = vld [vmem:[#allocation3 + $0x32] sm:$0xff]
  %v4848 = vld [vmem:[#allocation3 + $0x3a] sm:$0xff]
  %v4849 = vld [vmem:[#allocation3 + $0x4a] sm:$0xff]
  %v4850 = vld [vmem:[#allocation3 + $0x52] sm:$0xff]
  %v4851 = vld [vmem:[#allocation3 + $0x62] sm:$0xff]
  %v4852 = vld [vmem:[#allocation3 + $0x6a] sm:$0xff]
  %v4853 = vld [vmem:[#allocation3 + $0x7a] sm:$0xff]
  %v4854 = vld [vmem:[#allocation3 + $0x82] sm:$0xff]
  %v4855 = vld [vmem:[#allocation3 + $0x92] sm:$0xff]
  %v4856 = vld [vmem:[#allocation3 + $0x9a] sm:$0xff]
  %v4857 = vld [vmem:[#allocation3 + $0xaa] sm:$0xff]
  %v4858 = vld [vmem:[#allocation3 + $0xb2] sm:$0xff]
  %v4859 = vld [vmem:[#allocation3 + $0xc2] sm:$0xff]
  %v4860 = vld [vmem:[#allocation3 + $0xca] sm:$0xff]
  %v4861 = vld [vmem:[#allocation3 + $0xda] sm:$0xff]
  %v4862 = vld [vmem:[#allocation3 + $0xe2] sm:$0xff]
  %v4863 = vld [vmem:[#allocation3 + $0xf2] sm:$0xff]
  %v4864 = vld [vmem:[#allocation3 + $0xfa] sm:$0xff]
  %v4865 = vld [vmem:[#allocation3 + $0x10a] sm:$0xff]
  %v4866 = vld [vmem:[#allocation3 + $0x112] sm:$0xff]
  %v4867 = vld [vmem:[#allocation3 + $0x122] sm:$0xff]
  %v4868 = vld [vmem:[#allocation3 + $0x12a] sm:$0xff]
  %v4869 = vld [vmem:[#allocation3 + $0x13a] sm:$0xff]
  %v4870 = vld [vmem:[#allocation3 + $0x142] sm:$0xff]
  %v4871 = vld [vmem:[#allocation3 + $0x152] sm:$0xff]
  %v4872 = vld [vmem:[#allocation3 + $0x15a] sm:$0xff]
  %v4873 = vld [vmem:[#allocation3 + $0x16a] sm:$0xff]
  %v4874 = vld [vmem:[#allocation3 + $0x172] sm:$0xff]
  %v4875 = vld [vmem:[#allocation3 + $0x1b2] sm:$0xff]
  %v4876 = vld [vmem:[#allocation3 + $0x1ba] sm:$0xff]
  %v4877 = vld [vmem:[#allocation3 + $0x1ca] sm:$0xff]
  %v4878 = vld [vmem:[#allocation3 + $0x1d2] sm:$0xff]
  %v4879 = vld [vmem:[#allocation3 + $0x1e2] sm:$0xff]
  %v4880 = vld [vmem:[#allocation3 + $0x1ea] sm:$0xff]
  %v4881 = vld [vmem:[#allocation3 + $0x1fa] sm:$0xff]
  %v4882 = vld [vmem:[#allocation3 + $0x202] sm:$0xff]
  %v4883 = vld [vmem:[#allocation3 + $0x212] sm:$0xff]
  %v4884 = vld [vmem:[#allocation3 + $0x21a] sm:$0xff]
  %v4885 = vld [vmem:[#allocation3 + $0x22a] sm:$0xff]
  %v4886 = vld [vmem:[#allocation3 + $0x232] sm:$0xff]
  %v4887 = vld [vmem:[#allocation3 + $0x242] sm:$0xff]
  %v4888 = vld [vmem:[#allocation3 + $0x24a] sm:$0xff]
  %v4889 = vld [vmem:[#allocation3 + $0x25a] sm:$0xff]
  %v4890 = vld [vmem:[#allocation3 + $0x262] sm:$0xff]
  %v4891 = vld [vmem:[#allocation3 + $0x272] sm:$0xff]
  %v4892 = vld [vmem:[#allocation3 + $0x27a] sm:$0xff]
  %v4893 = vld [vmem:[#allocation3 + $0x28a] sm:$0xff]
  %v4894 = vld [vmem:[#allocation3 + $0x292] sm:$0xff]
  %v4895 = vld [vmem:[#allocation3 + $0x2a2] sm:$0xff]
  %v4896 = vld [vmem:[#allocation3 + $0x2aa] sm:$0xff]
  %v4897 = vld [vmem:[#allocation3 + $0x2ba] sm:$0xff]
  %v4898 = vld [vmem:[#allocation3 + $0x2c2] sm:$0xff]
  %v4899 = vld [vmem:[#allocation3 + $0x2d2] sm:$0xff]
  %v4900 = vld [vmem:[#allocation3 + $0x2da] sm:$0xff]
  %v4901 = vld [vmem:[#allocation3 + $0x2ea] sm:$0xff]
  %v4902 = vld [vmem:[#allocation3 + $0x2f2] sm:$0xff]
  %v4903 = vld [vmem:[#allocation3 + $0x302] sm:$0xff]
  %v4904 = vld [vmem:[#allocation3 + $0x30a] sm:$0xff]
  %v4905 = vld [vmem:[#allocation3 + $0x31a] sm:$0xff]
  %v4906 = vld [vmem:[#allocation3 + $0x322] sm:$0xff]
  %v4907 = vld [vmem:[%s4650] sm:$0xff]
  %v4908 = vld [vmem:[%s4650 + $0x8] sm:$0xff]
  %v4909 = vld [vmem:[%s4650 + $0x18] sm:$0xff]
  %v4910 = vld [vmem:[%s4650 + $0x20] sm:$0xff]
  %v4911 = vld [vmem:[%s4650 + $0x30] sm:$0xff]
  %v4912 = vld [vmem:[%s4650 + $0x38] sm:$0xff]
  %v4913 = vld [vmem:[%s4650 + $0x48] sm:$0xff]
  %v4914 = vld [vmem:[%s4650 + $0x50] sm:$0xff]
  %v4915 = vld [vmem:[%s4650 + $0x60] sm:$0xff]
  %v4916 = vld [vmem:[%s4650 + $0x68] sm:$0xff]
  %v4917 = vld [vmem:[%s4650 + $0x78] sm:$0xff]
  %v4918 = vld [vmem:[%s4650 + $0x80] sm:$0xff]
  %v4919 = vld [vmem:[%s4650 + $0x90] sm:$0xff]
  %v4920 = vld [vmem:[%s4650 + $0x98] sm:$0xff]
  %v4921 = vld [vmem:[%s4650 + $0xa8] sm:$0xff]
  %v4922 = vld [vmem:[%s4650 + $0xb0] sm:$0xff]
  %v4923 = vld [vmem:[%s4650 + $0xc0] sm:$0xff]
  %v4924 = vld [vmem:[%s4650 + $0xc8] sm:$0xff]
  %v4925 = vld [vmem:[%s4650 + $0xd8] sm:$0xff]
  %v4926 = vld [vmem:[%s4650 + $0xe0] sm:$0xff]
  %v4927 = vld [vmem:[%s4650 + $0xf0] sm:$0xff]
  %v4928 = vld [vmem:[%s4650 + $0xf8] sm:$0xff]
  %v4929 = vld [vmem:[%s4650 + $0x108] sm:$0xff]
  %v4930 = vld [vmem:[%s4650 + $0x110] sm:$0xff]
  %v4931 = vld [vmem:[%s4650 + $0x120] sm:$0xff]
  %v4932 = vld [vmem:[%s4650 + $0x128] sm:$0xff]
  %v4933 = vld [vmem:[%s4650 + $0x138] sm:$0xff]
  %v4934 = vld [vmem:[%s4650 + $0x140] sm:$0xff]
  %v4935 = vld [vmem:[%s4650 + $0x150] sm:$0xff]
  %v4936 = vld [vmem:[%s4650 + $0x158] sm:$0xff]
  %v4937 = vld [vmem:[%s4650 + $0x168] sm:$0xff]
  %v4938 = vld [vmem:[%s4650 + $0x170] sm:$0xff]
  %v4939 = vld [vmem:[%s4650 + $0x1b0] sm:$0xff]
  %v4940 = vld [vmem:[%s4650 + $0x1b8] sm:$0xff]
  %v4941 = vld [vmem:[%s4650 + $0x1c8] sm:$0xff]
  %v4942 = vld [vmem:[%s4650 + $0x1d0] sm:$0xff]
  %v4943 = vld [vmem:[%s4650 + $0x1e0] sm:$0xff]
  %v4944 = vld [vmem:[%s4650 + $0x1e8] sm:$0xff]
  %v4945 = vld [vmem:[%s4650 + $0x1f8] sm:$0xff]
  %v4946 = vld [vmem:[%s4650 + $0x200] sm:$0xff]
  %v4947 = vld [vmem:[%s4650 + $0x210] sm:$0xff]
  %v4948 = vld [vmem:[%s4650 + $0x218] sm:$0xff]
  %v4949 = vld [vmem:[%s4650 + $0x228] sm:$0xff]
  %v4950 = vld [vmem:[%s4650 + $0x230] sm:$0xff]
  %v4951 = vld [vmem:[%s4650 + $0x240] sm:$0xff]
  %v4952 = vld [vmem:[%s4650 + $0x248] sm:$0xff]
  %v4953 = vld [vmem:[%s4650 + $0x258] sm:$0xff]
  %v4954 = vld [vmem:[%s4650 + $0x260] sm:$0xff]
  %v4955 = vld [vmem:[%s4650 + $0x270] sm:$0xff]
  %v4956 = vld [vmem:[%s4650 + $0x278] sm:$0xff]
  %v4957 = vld [vmem:[%s4650 + $0x288] sm:$0xff]
  %v4958 = vld [vmem:[%s4650 + $0x290] sm:$0xff]
  %v4959 = vld [vmem:[%s4650 + $0x2a0] sm:$0xff]
  %v4960 = vld [vmem:[%s4650 + $0x2a8] sm:$0xff]
  %v4961 = vld [vmem:[%s4650 + $0x2b8] sm:$0xff]
  %v4962 = vld [vmem:[%s4650 + $0x2c0] sm:$0xff]
  %v4963 = vld [vmem:[%s4650 + $0x2d0] sm:$0xff]
  %v4964 = vld [vmem:[%s4650 + $0x2d8] sm:$0xff]
  %v4965 = vld [vmem:[%s4650 + $0x2e8] sm:$0xff]
  %v4966 = vld [vmem:[%s4650 + $0x2f0] sm:$0xff]
  %v4967 = vld [vmem:[%s4650 + $0x300] sm:$0xff]
  %v4968 = vld [vmem:[%s4650 + $0x308] sm:$0xff]
  %v4969 = vld [vmem:[%s4650 + $0x318] sm:$0xff]
  %v4970 = vld [vmem:[%s4650 + $0x320] sm:$0xff]
  %v4971 = vld [vmem:[%s4650 + $0x1] sm:$0xff]
  %v4972 = vld [vmem:[%s4650 + $0x9] sm:$0xff]
  %v4973 = vld [vmem:[%s4650 + $0x19] sm:$0xff]
  %v4974 = vld [vmem:[%s4650 + $0x21] sm:$0xff]
  %v4975 = vld [vmem:[%s4650 + $0x31] sm:$0xff]
  %v4976 = vld [vmem:[%s4650 + $0x39] sm:$0xff]
  %v4977 = vld [vmem:[%s4650 + $0x49] sm:$0xff]
  %v4978 = vld [vmem:[%s4650 + $0x51] sm:$0xff]
  %v4979 = vld [vmem:[%s4650 + $0x61] sm:$0xff]
  %v4980 = vld [vmem:[%s4650 + $0x69] sm:$0xff]
  %v4981 = vld [vmem:[%s4650 + $0x79] sm:$0xff]
  %v4982 = vld [vmem:[%s4650 + $0x81] sm:$0xff]
  %v4983 = vld [vmem:[%s4650 + $0x91] sm:$0xff]
  %v4984 = vld [vmem:[%s4650 + $0x99] sm:$0xff]
  %v4985 = vld [vmem:[%s4650 + $0xa9] sm:$0xff]
  %v4986 = vld [vmem:[%s4650 + $0xb1] sm:$0xff]
  %v4987 = vld [vmem:[%s4650 + $0xc1] sm:$0xff]
  %v4988 = vld [vmem:[%s4650 + $0xc9] sm:$0xff]
  %v4989 = vld [vmem:[%s4650 + $0xd9] sm:$0xff]
  %v4990 = vld [vmem:[%s4650 + $0xe1] sm:$0xff]
  %v4991 = vld [vmem:[%s4650 + $0xf1] sm:$0xff]
  %v4992 = vld [vmem:[%s4650 + $0xf9] sm:$0xff]
  %v4993 = vld [vmem:[%s4650 + $0x109] sm:$0xff]
  %v4994 = vld [vmem:[%s4650 + $0x111] sm:$0xff]
  %v4995 = vld [vmem:[%s4650 + $0x121] sm:$0xff]
  %v4996 = vld [vmem:[%s4650 + $0x129] sm:$0xff]
  %v4997 = vld [vmem:[%s4650 + $0x139] sm:$0xff]
  %v4998 = vld [vmem:[%s4650 + $0x141] sm:$0xff]
  %v4999 = vld [vmem:[%s4650 + $0x151] sm:$0xff]
  %v5000 = vld [vmem:[%s4650 + $0x159] sm:$0xff]
  %v5001 = vld [vmem:[%s4650 + $0x169] sm:$0xff]
  %v5002 = vld [vmem:[%s4650 + $0x171] sm:$0xff]
  %v5003 = vld [vmem:[%s4650 + $0x1b1] sm:$0xff]
  %v5004 = vld [vmem:[%s4650 + $0x1b9] sm:$0xff]
  %v5005 = vld [vmem:[%s4650 + $0x1c9] sm:$0xff]
  %v5006 = vld [vmem:[%s4650 + $0x1d1] sm:$0xff]
  %v5007 = vld [vmem:[%s4650 + $0x1e1] sm:$0xff]
  %v5008 = vld [vmem:[%s4650 + $0x1e9] sm:$0xff]
  %v5009 = vld [vmem:[%s4650 + $0x1f9] sm:$0xff]
  %v5010 = vld [vmem:[%s4650 + $0x201] sm:$0xff]
  %v5011 = vld [vmem:[%s4650 + $0x211] sm:$0xff]
  %v5012 = vld [vmem:[%s4650 + $0x219] sm:$0xff]
  %v5013 = vld [vmem:[%s4650 + $0x229] sm:$0xff]
  %v5014 = vld [vmem:[%s4650 + $0x231] sm:$0xff]
  %v5015 = vld [vmem:[%s4650 + $0x241] sm:$0xff]
  %v5016 = vld [vmem:[%s4650 + $0x249] sm:$0xff]
  %v5017 = vld [vmem:[%s4650 + $0x259] sm:$0xff]
  %v5018 = vld [vmem:[%s4650 + $0x261] sm:$0xff]
  %v5019 = vld [vmem:[%s4650 + $0x271] sm:$0xff]
  %v5020 = vld [vmem:[%s4650 + $0x279] sm:$0xff]
  %v5021 = vld [vmem:[%s4650 + $0x289] sm:$0xff]
  %v5022 = vld [vmem:[%s4650 + $0x291] sm:$0xff]
  %v5023 = vld [vmem:[%s4650 + $0x2a1] sm:$0xff]
  %v5024 = vld [vmem:[%s4650 + $0x2a9] sm:$0xff]
  %v5025 = vld [vmem:[%s4650 + $0x2b9] sm:$0xff]
  %v5026 = vld [vmem:[%s4650 + $0x2c1] sm:$0xff]
  %v5027 = vld [vmem:[%s4650 + $0x2d1] sm:$0xff]
  %v5028 = vld [vmem:[%s4650 + $0x2d9] sm:$0xff]
  %v5029 = vld [vmem:[%s4650 + $0x2e9] sm:$0xff]
  %v5030 = vld [vmem:[%s4650 + $0x2f1] sm:$0xff]
  %v5031 = vld [vmem:[%s4650 + $0x301] sm:$0xff]
  %v5032 = vld [vmem:[%s4650 + $0x309] sm:$0xff]
  %v5033 = vld [vmem:[%s4650 + $0x319] sm:$0xff]
  %v5034 = vld [vmem:[%s4650 + $0x321] sm:$0xff]
  %v5035 = vld [vmem:[%s4650 + $0x2] sm:$0xff]
  %v5036 = vld [vmem:[%s4650 + $0xa] sm:$0xff]
  %v5037 = vld [vmem:[%s4650 + $0x1a] sm:$0xff]
  %v5038 = vld [vmem:[%s4650 + $0x22] sm:$0xff]
  %v5039 = vld [vmem:[%s4650 + $0x32] sm:$0xff]
  %v5040 = vld [vmem:[%s4650 + $0x3a] sm:$0xff]
  %v5041 = vld [vmem:[%s4650 + $0x4a] sm:$0xff]
  %v5042 = vld [vmem:[%s4650 + $0x52] sm:$0xff]
  %v5043 = vld [vmem:[%s4650 + $0x62] sm:$0xff]
  %v5044 = vld [vmem:[%s4650 + $0x6a] sm:$0xff]
  %v5045 = vld [vmem:[%s4650 + $0x7a] sm:$0xff]
  %v5046 = vld [vmem:[%s4650 + $0x82] sm:$0xff]
  %v5047 = vld [vmem:[%s4650 + $0x92] sm:$0xff]
  %v5048 = vld [vmem:[%s4650 + $0x9a] sm:$0xff]
  %v5049 = vld [vmem:[%s4650 + $0xaa] sm:$0xff]
  %v5050 = vld [vmem:[%s4650 + $0xb2] sm:$0xff]
  %v5051 = vld [vmem:[%s4650 + $0xc2] sm:$0xff]
  %v5052 = vld [vmem:[%s4650 + $0xca] sm:$0xff]
  %v5053 = vld [vmem:[%s4650 + $0xda] sm:$0xff]
  %v5054 = vld [vmem:[%s4650 + $0xe2] sm:$0xff]
  %v5055 = vld [vmem:[%s4650 + $0xf2] sm:$0xff]
  %v5056 = vld [vmem:[%s4650 + $0xfa] sm:$0xff]
  %v5057 = vld [vmem:[%s4650 + $0x10a] sm:$0xff]
  %v5058 = vld [vmem:[%s4650 + $0x112] sm:$0xff]
  %v5059 = vld [vmem:[%s4650 + $0x122] sm:$0xff]
  %v5060 = vld [vmem:[%s4650 + $0x12a] sm:$0xff]
  %v5061 = vld [vmem:[%s4650 + $0x13a] sm:$0xff]
  %v5062 = vld [vmem:[%s4650 + $0x142] sm:$0xff]
  %v5063 = vld [vmem:[%s4650 + $0x152] sm:$0xff]
  %v5064 = vld [vmem:[%s4650 + $0x15a] sm:$0xff]
  %v5065 = vld [vmem:[%s4650 + $0x16a] sm:$0xff]
  %v5066 = vld [vmem:[%s4650 + $0x172] sm:$0xff]
  %v5067 = vld [vmem:[%s4650 + $0x1b2] sm:$0xff]
  %v5068 = vld [vmem:[%s4650 + $0x1ba] sm:$0xff]
  %v5069 = vld [vmem:[%s4650 + $0x1ca] sm:$0xff]
  %v5070 = vld [vmem:[%s4650 + $0x1d2] sm:$0xff]
  %v5071 = vld [vmem:[%s4650 + $0x1e2] sm:$0xff]
  %v5072 = vld [vmem:[%s4650 + $0x1ea] sm:$0xff]
  %v5073 = vld [vmem:[%s4650 + $0x1fa] sm:$0xff]
  %v5074 = vld [vmem:[%s4650 + $0x202] sm:$0xff]
  %v5075 = vld [vmem:[%s4650 + $0x212] sm:$0xff]
  %v5076 = vld [vmem:[%s4650 + $0x21a] sm:$0xff]
  %v5077 = vld [vmem:[%s4650 + $0x22a] sm:$0xff]
  %v5078 = vld [vmem:[%s4650 + $0x232] sm:$0xff]
  %v5079 = vld [vmem:[%s4650 + $0x242] sm:$0xff]
  %v5080 = vld [vmem:[%s4650 + $0x24a] sm:$0xff]
  %v5081 = vld [vmem:[%s4650 + $0x25a] sm:$0xff]
  %v5082 = vld [vmem:[%s4650 + $0x262] sm:$0xff]
  %v5083 = vld [vmem:[%s4650 + $0x272] sm:$0xff]
  %v5084 = vld [vmem:[%s4650 + $0x27a] sm:$0xff]
  %v5085 = vld [vmem:[%s4650 + $0x28a] sm:$0xff]
  %v5086 = vld [vmem:[%s4650 + $0x292] sm:$0xff]
  %v5087 = vld [vmem:[%s4650 + $0x2a2] sm:$0xff]
  %v5088 = vld [vmem:[%s4650 + $0x2aa] sm:$0xff]
  %v5089 = vld [vmem:[%s4650 + $0x2ba] sm:$0xff]
  %v5090 = vld [vmem:[%s4650 + $0x2c2] sm:$0xff]
  %v5091 = vld [vmem:[%s4650 + $0x2d2] sm:$0xff]
  %v5092 = vld [vmem:[%s4650 + $0x2da] sm:$0xff]
  %v5093 = vld [vmem:[%s4650 + $0x2ea] sm:$0xff]
  %v5094 = vld [vmem:[%s4650 + $0x2f2] sm:$0xff]
  %v5095 = vld [vmem:[%s4650 + $0x302] sm:$0xff]
  %v5096 = vld [vmem:[%s4650 + $0x30a] sm:$0xff]
  %v5097 = vld [vmem:[%s4650 + $0x31a] sm:$0xff]
  %v5098 = vld [vmem:[%s4650 + $0x322] sm:$0xff]
  %s5099 = scalar_lea.vmem [#allocation3], 48
  %v5100 = vld [vmem:[%s5099] sm:$0xff]
  %v5101 = vld [vmem:[%s5099 + $0x8] sm:$0xff]
  %v5102 = vld [vmem:[%s5099 + $0x18] sm:$0xff]
  %v5103 = vld [vmem:[%s5099 + $0x20] sm:$0xff]
  %v5104 = vld [vmem:[%s5099 + $0x30] sm:$0xff]
  %v5105 = vld [vmem:[%s5099 + $0x38] sm:$0xff]
  %v5106 = vld [vmem:[%s5099 + $0x48] sm:$0xff]
  %v5107 = vld [vmem:[%s5099 + $0x50] sm:$0xff]
  %v5108 = vld [vmem:[%s5099 + $0x60] sm:$0xff]
  %v5109 = vld [vmem:[%s5099 + $0x68] sm:$0xff]
  %v5110 = vld [vmem:[%s5099 + $0x78] sm:$0xff]
  %v5111 = vld [vmem:[%s5099 + $0x80] sm:$0xff]
  %v5112 = vld [vmem:[%s5099 + $0x90] sm:$0xff]
  %v5113 = vld [vmem:[%s5099 + $0x98] sm:$0xff]
  %v5114 = vld [vmem:[%s5099 + $0xa8] sm:$0xff]
  %v5115 = vld [vmem:[%s5099 + $0xb0] sm:$0xff]
  %v5116 = vld [vmem:[%s5099 + $0xc0] sm:$0xff]
  %v5117 = vld [vmem:[%s5099 + $0xc8] sm:$0xff]
  %v5118 = vld [vmem:[%s5099 + $0xd8] sm:$0xff]
  %v5119 = vld [vmem:[%s5099 + $0xe0] sm:$0xff]
  %v5120 = vld [vmem:[%s5099 + $0xf0] sm:$0xff]
  %v5121 = vld [vmem:[%s5099 + $0xf8] sm:$0xff]
  %v5122 = vld [vmem:[%s5099 + $0x108] sm:$0xff]
  %v5123 = vld [vmem:[%s5099 + $0x110] sm:$0xff]
  %v5124 = vld [vmem:[%s5099 + $0x120] sm:$0xff]
  %v5125 = vld [vmem:[%s5099 + $0x128] sm:$0xff]
  %v5126 = vld [vmem:[%s5099 + $0x138] sm:$0xff]
  %v5127 = vld [vmem:[%s5099 + $0x140] sm:$0xff]
  %v5128 = vld [vmem:[%s5099 + $0x150] sm:$0xff]
  %v5129 = vld [vmem:[%s5099 + $0x158] sm:$0xff]
  %v5130 = vld [vmem:[%s5099 + $0x168] sm:$0xff]
  %v5131 = vld [vmem:[%s5099 + $0x170] sm:$0xff]
  %v5132 = vld [vmem:[%s5099 + $0x1b0] sm:$0xff]
  %v5133 = vld [vmem:[%s5099 + $0x1b8] sm:$0xff]
  %v5134 = vld [vmem:[%s5099 + $0x1c8] sm:$0xff]
  %v5135 = vld [vmem:[%s5099 + $0x1d0] sm:$0xff]
  %v5136 = vld [vmem:[%s5099 + $0x1e0] sm:$0xff]
  %v5137 = vld [vmem:[%s5099 + $0x1e8] sm:$0xff]
  %v5138 = vld [vmem:[%s5099 + $0x1f8] sm:$0xff]
  %v5139 = vld [vmem:[%s5099 + $0x200] sm:$0xff]
  %v5140 = vld [vmem:[%s5099 + $0x210] sm:$0xff]
  %v5141 = vld [vmem:[%s5099 + $0x218] sm:$0xff]
  %v5142 = vld [vmem:[%s5099 + $0x228] sm:$0xff]
  %v5143 = vld [vmem:[%s5099 + $0x230] sm:$0xff]
  %v5144 = vld [vmem:[%s5099 + $0x240] sm:$0xff]
  %v5145 = vld [vmem:[%s5099 + $0x248] sm:$0xff]
  %v5146 = vld [vmem:[%s5099 + $0x258] sm:$0xff]
  %v5147 = vld [vmem:[%s5099 + $0x260] sm:$0xff]
  %v5148 = vld [vmem:[%s5099 + $0x270] sm:$0xff]
  %v5149 = vld [vmem:[%s5099 + $0x278] sm:$0xff]
  %v5150 = vld [vmem:[%s5099 + $0x288] sm:$0xff]
  %v5151 = vld [vmem:[%s5099 + $0x290] sm:$0xff]
  %v5152 = vld [vmem:[%s5099 + $0x2a0] sm:$0xff]
  %v5153 = vld [vmem:[%s5099 + $0x2a8] sm:$0xff]
  %v5154 = vld [vmem:[%s5099 + $0x2b8] sm:$0xff]
  %v5155 = vld [vmem:[%s5099 + $0x2c0] sm:$0xff]
  %v5156 = vld [vmem:[%s5099 + $0x2d0] sm:$0xff]
  %v5157 = vld [vmem:[%s5099 + $0x2d8] sm:$0xff]
  %v5158 = vld [vmem:[%s5099 + $0x2e8] sm:$0xff]
  %v5159 = vld [vmem:[%s5099 + $0x2f0] sm:$0xff]
  %v5160 = vld [vmem:[%s5099 + $0x300] sm:$0xff]
  %v5161 = vld [vmem:[%s5099 + $0x308] sm:$0xff]
  %v5162 = vld [vmem:[%s5099 + $0x318] sm:$0xff]
  %v5163 = vld [vmem:[%s5099 + $0x320] sm:$0xff]
  %v5164 = vld [vmem:[%s5099 + $0x1] sm:$0xff]
  %v5165 = vld [vmem:[%s5099 + $0x9] sm:$0xff]
  %v5166 = vld [vmem:[%s5099 + $0x19] sm:$0xff]
  %v5167 = vld [vmem:[%s5099 + $0x21] sm:$0xff]
  %v5168 = vld [vmem:[%s5099 + $0x31] sm:$0xff]
  %v5169 = vld [vmem:[%s5099 + $0x39] sm:$0xff]
  %v5170 = vld [vmem:[%s5099 + $0x49] sm:$0xff]
  %v5171 = vld [vmem:[%s5099 + $0x51] sm:$0xff]
  %v5172 = vld [vmem:[%s5099 + $0x61] sm:$0xff]
  %v5173 = vld [vmem:[%s5099 + $0x69] sm:$0xff]
  %v5174 = vld [vmem:[%s5099 + $0x79] sm:$0xff]
  %v5175 = vld [vmem:[%s5099 + $0x81] sm:$0xff]
  %v5176 = vld [vmem:[%s5099 + $0x91] sm:$0xff]
  %v5177 = vld [vmem:[%s5099 + $0x99] sm:$0xff]
  %v5178 = vld [vmem:[%s5099 + $0xa9] sm:$0xff]
  %v5179 = vld [vmem:[%s5099 + $0xb1] sm:$0xff]
  %v5180 = vld [vmem:[%s5099 + $0xc1] sm:$0xff]
  %v5181 = vld [vmem:[%s5099 + $0xc9] sm:$0xff]
  %v5182 = vld [vmem:[%s5099 + $0xd9] sm:$0xff]
  %v5183 = vld [vmem:[%s5099 + $0xe1] sm:$0xff]
  %v5184 = vld [vmem:[%s5099 + $0xf1] sm:$0xff]
  %v5185 = vld [vmem:[%s5099 + $0xf9] sm:$0xff]
  %v5186 = vld [vmem:[%s5099 + $0x109] sm:$0xff]
  %v5187 = vld [vmem:[%s5099 + $0x111] sm:$0xff]
  %v5188 = vld [vmem:[%s5099 + $0x121] sm:$0xff]
  %v5189 = vld [vmem:[%s5099 + $0x129] sm:$0xff]
  %v5190 = vld [vmem:[%s5099 + $0x139] sm:$0xff]
  %v5191 = vld [vmem:[%s5099 + $0x141] sm:$0xff]
  %v5192 = vld [vmem:[%s5099 + $0x151] sm:$0xff]
  %v5193 = vld [vmem:[%s5099 + $0x159] sm:$0xff]
  %v5194 = vld [vmem:[%s5099 + $0x169] sm:$0xff]
  %v5195 = vld [vmem:[%s5099 + $0x171] sm:$0xff]
  %v5196 = vld [vmem:[%s5099 + $0x1b1] sm:$0xff]
  %v5197 = vld [vmem:[%s5099 + $0x1b9] sm:$0xff]
  %v5198 = vld [vmem:[%s5099 + $0x1c9] sm:$0xff]
  %v5199 = vld [vmem:[%s5099 + $0x1d1] sm:$0xff]
  %v5200 = vld [vmem:[%s5099 + $0x1e1] sm:$0xff]
  %v5201 = vld [vmem:[%s5099 + $0x1e9] sm:$0xff]
  %v5202 = vld [vmem:[%s5099 + $0x1f9] sm:$0xff]
  %v5203 = vld [vmem:[%s5099 + $0x201] sm:$0xff]
  %v5204 = vld [vmem:[%s5099 + $0x211] sm:$0xff]
  %v5205 = vld [vmem:[%s5099 + $0x219] sm:$0xff]
  %v5206 = vld [vmem:[%s5099 + $0x229] sm:$0xff]
  %v5207 = vld [vmem:[%s5099 + $0x231] sm:$0xff]
  %v5208 = vld [vmem:[%s5099 + $0x241] sm:$0xff]
  %v5209 = vld [vmem:[%s5099 + $0x249] sm:$0xff]
  %v5210 = vld [vmem:[%s5099 + $0x259] sm:$0xff]
  %v5211 = vld [vmem:[%s5099 + $0x261] sm:$0xff]
  %v5212 = vld [vmem:[%s5099 + $0x271] sm:$0xff]
  %v5213 = vld [vmem:[%s5099 + $0x279] sm:$0xff]
  %v5214 = vld [vmem:[%s5099 + $0x289] sm:$0xff]
  %v5215 = vld [vmem:[%s5099 + $0x291] sm:$0xff]
  %v5216 = vld [vmem:[%s5099 + $0x2a1] sm:$0xff]
  %v5217 = vld [vmem:[%s5099 + $0x2a9] sm:$0xff]
  %v5218 = vld [vmem:[%s5099 + $0x2b9] sm:$0xff]
  %v5219 = vld [vmem:[%s5099 + $0x2c1] sm:$0xff]
  %v5220 = vld [vmem:[%s5099 + $0x2d1] sm:$0xff]
  %v5221 = vld [vmem:[%s5099 + $0x2d9] sm:$0xff]
  %v5222 = vld [vmem:[%s5099 + $0x2e9] sm:$0xff]
  %v5223 = vld [vmem:[%s5099 + $0x2f1] sm:$0xff]
  %v5224 = vld [vmem:[%s5099 + $0x301] sm:$0xff]
  %v5225 = vld [vmem:[%s5099 + $0x309] sm:$0xff]
  %v5226 = vld [vmem:[%s5099 + $0x319] sm:$0xff]
  %v5227 = vld [vmem:[%s5099 + $0x321] sm:$0xff]
  %v5228 = vld [vmem:[%s5099 + $0x2] sm:$0xff]
  %v5229 = vld [vmem:[%s5099 + $0xa] sm:$0xff]
  %v5230 = vld [vmem:[%s5099 + $0x1a] sm:$0xff]
  %v5231 = vld [vmem:[%s5099 + $0x22] sm:$0xff]
  %v5232 = vld [vmem:[%s5099 + $0x32] sm:$0xff]
  %v5233 = vld [vmem:[%s5099 + $0x3a] sm:$0xff]
  %v5234 = vld [vmem:[%s5099 + $0x4a] sm:$0xff]
  %v5235 = vld [vmem:[%s5099 + $0x52] sm:$0xff]
  %v5236 = vld [vmem:[%s5099 + $0x62] sm:$0xff]
  %v5237 = vld [vmem:[%s5099 + $0x6a] sm:$0xff]
  %v5238 = vld [vmem:[%s5099 + $0x7a] sm:$0xff]
  %v5239 = vld [vmem:[%s5099 + $0x82] sm:$0xff]
  %v5240 = vld [vmem:[%s5099 + $0x92] sm:$0xff]
  %v5241 = vld [vmem:[%s5099 + $0x9a] sm:$0xff]
  %v5242 = vld [vmem:[%s5099 + $0xaa] sm:$0xff]
  %v5243 = vld [vmem:[%s5099 + $0xb2] sm:$0xff]
  %v5244 = vld [vmem:[%s5099 + $0xc2] sm:$0xff]
  %v5245 = vld [vmem:[%s5099 + $0xca] sm:$0xff]
  %v5246 = vld [vmem:[%s5099 + $0xda] sm:$0xff]
  %v5247 = vld [vmem:[%s5099 + $0xe2] sm:$0xff]
  %v5248 = vld [vmem:[%s5099 + $0xf2] sm:$0xff]
  %v5249 = vld [vmem:[%s5099 + $0xfa] sm:$0xff]
  %v5250 = vld [vmem:[%s5099 + $0x10a] sm:$0xff]
  %v5251 = vld [vmem:[%s5099 + $0x112] sm:$0xff]
  %v5252 = vld [vmem:[%s5099 + $0x122] sm:$0xff]
  %v5253 = vld [vmem:[%s5099 + $0x12a] sm:$0xff]
  %v5254 = vld [vmem:[%s5099 + $0x13a] sm:$0xff]
  %v5255 = vld [vmem:[%s5099 + $0x142] sm:$0xff]
  %v5256 = vld [vmem:[%s5099 + $0x152] sm:$0xff]
  %v5257 = vld [vmem:[%s5099 + $0x15a] sm:$0xff]
  %v5258 = vld [vmem:[%s5099 + $0x16a] sm:$0xff]
  %v5259 = vld [vmem:[%s5099 + $0x172] sm:$0xff]
  %v5260 = vld [vmem:[%s5099 + $0x1b2] sm:$0xff]
  %v5261 = vld [vmem:[%s5099 + $0x1ba] sm:$0xff]
  %v5262 = vld [vmem:[%s5099 + $0x1ca] sm:$0xff]
  %v5263 = vld [vmem:[%s5099 + $0x1d2] sm:$0xff]
  %v5264 = vld [vmem:[%s5099 + $0x1e2] sm:$0xff]
  %v5265 = vld [vmem:[%s5099 + $0x1ea] sm:$0xff]
  %v5266 = vld [vmem:[%s5099 + $0x1fa] sm:$0xff]
  %v5267 = vld [vmem:[%s5099 + $0x202] sm:$0xff]
  %v5268 = vld [vmem:[%s5099 + $0x212] sm:$0xff]
  %v5269 = vld [vmem:[%s5099 + $0x21a] sm:$0xff]
  %v5270 = vld [vmem:[%s5099 + $0x22a] sm:$0xff]
  %v5271 = vld [vmem:[%s5099 + $0x232] sm:$0xff]
  %v5272 = vld [vmem:[%s5099 + $0x242] sm:$0xff]
  %v5273 = vld [vmem:[%s5099 + $0x24a] sm:$0xff]
  %v5274 = vld [vmem:[%s5099 + $0x25a] sm:$0xff]
  %v5275 = vld [vmem:[%s5099 + $0x262] sm:$0xff]
  %v5276 = vld [vmem:[%s5099 + $0x272] sm:$0xff]
  %v5277 = vld [vmem:[%s5099 + $0x27a] sm:$0xff]
  %v5278 = vld [vmem:[%s5099 + $0x28a] sm:$0xff]
  %v5279 = vld [vmem:[%s5099 + $0x292] sm:$0xff]
  %v5280 = vld [vmem:[%s5099 + $0x2a2] sm:$0xff]
  %v5281 = vld [vmem:[%s5099 + $0x2aa] sm:$0xff]
  %v5282 = vld [vmem:[%s5099 + $0x2ba] sm:$0xff]
  %v5283 = vld [vmem:[%s5099 + $0x2c2] sm:$0xff]
  %v5284 = vld [vmem:[%s5099 + $0x2d2] sm:$0xff]
  %v5285 = vld [vmem:[%s5099 + $0x2da] sm:$0xff]
  %v5286 = vld [vmem:[%s5099 + $0x2ea] sm:$0xff]
  %v5287 = vld [vmem:[%s5099 + $0x2f2] sm:$0xff]
  %v5288 = vld [vmem:[%s5099 + $0x302] sm:$0xff]
  %v5289 = vld [vmem:[%s5099 + $0x30a] sm:$0xff]
  %v5290 = vld [vmem:[%s5099 + $0x31a] sm:$0xff]
  %v5291 = vld [vmem:[%s5099 + $0x322] sm:$0xff]
  %5356 = vrot.lane.b32.xlu0 %v4779, 8
  %v5357 = vpop.permute.xlu0 %5356
  %5358 = vrot.lane.b32.xlu0 %v4780, 8
  %v5359 = vpop.permute.xlu0 %5358
  %5360 = vrot.lane.b32.xlu0 %v4781, 8
  %v5361 = vpop.permute.xlu0 %5360
  %5362 = vrot.lane.b32.xlu0 %v4782, 8
  %v5363 = vpop.permute.xlu0 %5362
  %5364 = vrot.lane.b32.xlu0 %v4783, 8
  %v5365 = vpop.permute.xlu0 %5364
  %5366 = vrot.lane.b32.xlu0 %v4784, 8
  %v5367 = vpop.permute.xlu0 %5366
  %5368 = vrot.lane.b32.xlu0 %v4785, 8
  %v5369 = vpop.permute.xlu0 %5368
  %5370 = vrot.lane.b32.xlu0 %v4786, 8
  %v5371 = vpop.permute.xlu0 %5370
  %5372 = vrot.lane.b32.xlu0 %v4787, 8
  %v5373 = vpop.permute.xlu0 %5372
  %5374 = vrot.lane.b32.xlu0 %v4788, 8
  %v5375 = vpop.permute.xlu0 %5374
  %5376 = vrot.lane.b32.xlu0 %v4789, 8
  %v5377 = vpop.permute.xlu0 %5376
  %5378 = vrot.lane.b32.xlu0 %v4790, 8
  %v5379 = vpop.permute.xlu0 %5378
  %5380 = vrot.lane.b32.xlu0 %v4791, 8
  %v5381 = vpop.permute.xlu0 %5380
  %5382 = vrot.lane.b32.xlu0 %v4792, 8
  %v5383 = vpop.permute.xlu0 %5382
  %5384 = vrot.lane.b32.xlu0 %v4793, 8
  %v5385 = vpop.permute.xlu0 %5384
  %5386 = vrot.lane.b32.xlu0 %v4794, 8
  %v5387 = vpop.permute.xlu0 %5386
  %5388 = vrot.lane.b32.xlu0 %v4795, 8
  %v5389 = vpop.permute.xlu0 %5388
  %5390 = vrot.lane.b32.xlu0 %v4796, 8
  %v5391 = vpop.permute.xlu0 %5390
  %5392 = vrot.lane.b32.xlu0 %v4797, 8
  %v5393 = vpop.permute.xlu0 %5392
  %5394 = vrot.lane.b32.xlu0 %v4798, 8
  %v5395 = vpop.permute.xlu0 %5394
  %5396 = vrot.lane.b32.xlu0 %v4799, 8
  %v5397 = vpop.permute.xlu0 %5396
  %5398 = vrot.lane.b32.xlu0 %v4800, 8
  %v5399 = vpop.permute.xlu0 %5398
  %5400 = vrot.lane.b32.xlu0 %v4801, 8
  %v5401 = vpop.permute.xlu0 %5400
  %5402 = vrot.lane.b32.xlu0 %v4802, 8
  %v5403 = vpop.permute.xlu0 %5402
  %5404 = vrot.lane.b32.xlu0 %v4803, 8
  %v5405 = vpop.permute.xlu0 %5404
  %5406 = vrot.lane.b32.xlu0 %v4804, 8
  %v5407 = vpop.permute.xlu0 %5406
  %5408 = vrot.lane.b32.xlu0 %v4805, 8
  %v5409 = vpop.permute.xlu0 %5408
  %5410 = vrot.lane.b32.xlu0 %v4806, 8
  %v5411 = vpop.permute.xlu0 %5410
  %5412 = vrot.lane.b32.xlu0 %v4807, 8
  %v5413 = vpop.permute.xlu0 %5412
  %5414 = vrot.lane.b32.xlu0 %v4808, 8
  %v5415 = vpop.permute.xlu0 %5414
  %5416 = vrot.lane.b32.xlu0 %v4809, 8
  %v5417 = vpop.permute.xlu0 %5416
  %5418 = vrot.lane.b32.xlu0 %v4810, 8
  %v5419 = vpop.permute.xlu0 %5418
  %5420 = vrot.lane.b32.xlu0 %v4811, 8
  %v5421 = vpop.permute.xlu0 %5420
  %5422 = vrot.lane.b32.xlu0 %v4812, 8
  %v5423 = vpop.permute.xlu0 %5422
  %5424 = vrot.lane.b32.xlu0 %v4813, 8
  %v5425 = vpop.permute.xlu0 %5424
  %5426 = vrot.lane.b32.xlu0 %v4814, 8
  %v5427 = vpop.permute.xlu0 %5426
  %5428 = vrot.lane.b32.xlu0 %v4815, 8
  %v5429 = vpop.permute.xlu0 %5428
  %5430 = vrot.lane.b32.xlu0 %v4816, 8
  %v5431 = vpop.permute.xlu0 %5430
  %5432 = vrot.lane.b32.xlu0 %v4817, 8
  %v5433 = vpop.permute.xlu0 %5432
  %5434 = vrot.lane.b32.xlu0 %v4818, 8
  %v5435 = vpop.permute.xlu0 %5434
  %5436 = vrot.lane.b32.xlu0 %v4819, 8
  %v5437 = vpop.permute.xlu0 %5436
  %5438 = vrot.lane.b32.xlu0 %v4820, 8
  %v5439 = vpop.permute.xlu0 %5438
  %5440 = vrot.lane.b32.xlu0 %v4821, 8
  %v5441 = vpop.permute.xlu0 %5440
  %5442 = vrot.lane.b32.xlu0 %v4822, 8
  %v5443 = vpop.permute.xlu0 %5442
  %5444 = vrot.lane.b32.xlu0 %v4823, 8
  %v5445 = vpop.permute.xlu0 %5444
  %5446 = vrot.lane.b32.xlu0 %v4824, 8
  %v5447 = vpop.permute.xlu0 %5446
  %5448 = vrot.lane.b32.xlu0 %v4825, 8
  %v5449 = vpop.permute.xlu0 %5448
  %5450 = vrot.lane.b32.xlu0 %v4826, 8
  %v5451 = vpop.permute.xlu0 %5450
  %5452 = vrot.lane.b32.xlu0 %v4827, 8
  %v5453 = vpop.permute.xlu0 %5452
  %5454 = vrot.lane.b32.xlu0 %v4828, 8
  %v5455 = vpop.permute.xlu0 %5454
  %5456 = vrot.lane.b32.xlu0 %v4829, 8
  %v5457 = vpop.permute.xlu0 %5456
  %5458 = vrot.lane.b32.xlu0 %v4830, 8
  %v5459 = vpop.permute.xlu0 %5458
  %5460 = vrot.lane.b32.xlu0 %v4831, 8
  %v5461 = vpop.permute.xlu0 %5460
  %5462 = vrot.lane.b32.xlu0 %v4832, 8
  %v5463 = vpop.permute.xlu0 %5462
  %5464 = vrot.lane.b32.xlu0 %v4833, 8
  %v5465 = vpop.permute.xlu0 %5464
  %5466 = vrot.lane.b32.xlu0 %v4834, 8
  %v5467 = vpop.permute.xlu0 %5466
  %5468 = vrot.lane.b32.xlu0 %v4835, 8
  %v5469 = vpop.permute.xlu0 %5468
  %5470 = vrot.lane.b32.xlu0 %v4836, 8
  %v5471 = vpop.permute.xlu0 %5470
  %5472 = vrot.lane.b32.xlu0 %v4837, 8
  %v5473 = vpop.permute.xlu0 %5472
  %5474 = vrot.lane.b32.xlu0 %v4838, 8
  %v5475 = vpop.permute.xlu0 %5474
  %5476 = vrot.lane.b32.xlu0 %v4839, 8
  %v5477 = vpop.permute.xlu0 %5476
  %5478 = vrot.lane.b32.xlu0 %v4840, 8
  %v5479 = vpop.permute.xlu0 %5478
  %5480 = vrot.lane.b32.xlu0 %v4841, 8
  %v5481 = vpop.permute.xlu0 %5480
  %5482 = vrot.lane.b32.xlu0 %v4842, 8
  %v5483 = vpop.permute.xlu0 %5482
  %5612 = vrot.lane.b32.xlu0 %v4843, 16
  %v5613 = vpop.permute.xlu0 %5612
  %5614 = vrot.lane.b32.xlu0 %v4844, 16
  %v5615 = vpop.permute.xlu0 %5614
  %5616 = vrot.lane.b32.xlu0 %v4845, 16
  %v5617 = vpop.permute.xlu0 %5616
  %5618 = vrot.lane.b32.xlu0 %v4846, 16
  %v5619 = vpop.permute.xlu0 %5618
  %5620 = vrot.lane.b32.xlu0 %v4847, 16
  %v5621 = vpop.permute.xlu0 %5620
  %5622 = vrot.lane.b32.xlu0 %v4848, 16
  %v5623 = vpop.permute.xlu0 %5622
  %5624 = vrot.lane.b32.xlu0 %v4849, 16
  %v5625 = vpop.permute.xlu0 %5624
  %5626 = vrot.lane.b32.xlu0 %v4850, 16
  %v5627 = vpop.permute.xlu0 %5626
  %5628 = vrot.lane.b32.xlu0 %v4851, 16
  %v5629 = vpop.permute.xlu0 %5628
  %5630 = vrot.lane.b32.xlu0 %v4852, 16
  %v5631 = vpop.permute.xlu0 %5630
  %5632 = vrot.lane.b32.xlu0 %v4853, 16
  %v5633 = vpop.permute.xlu0 %5632
  %5634 = vrot.lane.b32.xlu0 %v4854, 16
  %v5635 = vpop.permute.xlu0 %5634
  %5636 = vrot.lane.b32.xlu0 %v4855, 16
  %v5637 = vpop.permute.xlu0 %5636
  %5638 = vrot.lane.b32.xlu0 %v4856, 16
  %v5639 = vpop.permute.xlu0 %5638
  %5640 = vrot.lane.b32.xlu0 %v4857, 16
  %v5641 = vpop.permute.xlu0 %5640
  %5642 = vrot.lane.b32.xlu0 %v4858, 16
  %v5643 = vpop.permute.xlu0 %5642
  %5644 = vrot.lane.b32.xlu0 %v4859, 16
  %v5645 = vpop.permute.xlu0 %5644
  %5646 = vrot.lane.b32.xlu0 %v4860, 16
  %v5647 = vpop.permute.xlu0 %5646
  %5648 = vrot.lane.b32.xlu0 %v4861, 16
  %v5649 = vpop.permute.xlu0 %5648
  %5650 = vrot.lane.b32.xlu0 %v4862, 16
  %v5651 = vpop.permute.xlu0 %5650
  %5652 = vrot.lane.b32.xlu0 %v4863, 16
  %v5653 = vpop.permute.xlu0 %5652
  %5654 = vrot.lane.b32.xlu0 %v4864, 16
  %v5655 = vpop.permute.xlu0 %5654
  %5656 = vrot.lane.b32.xlu0 %v4865, 16
  %v5657 = vpop.permute.xlu0 %5656
  %5658 = vrot.lane.b32.xlu0 %v4866, 16
  %v5659 = vpop.permute.xlu0 %5658
  %5660 = vrot.lane.b32.xlu0 %v4867, 16
  %v5661 = vpop.permute.xlu0 %5660
  %5662 = vrot.lane.b32.xlu0 %v4868, 16
  %v5663 = vpop.permute.xlu0 %5662
  %5664 = vrot.lane.b32.xlu0 %v4869, 16
  %v5665 = vpop.permute.xlu0 %5664
  %5666 = vrot.lane.b32.xlu0 %v4870, 16
  %v5667 = vpop.permute.xlu0 %5666
  %5668 = vrot.lane.b32.xlu0 %v4871, 16
  %v5669 = vpop.permute.xlu0 %5668
  %5670 = vrot.lane.b32.xlu0 %v4872, 16
  %v5671 = vpop.permute.xlu0 %5670
  %5672 = vrot.lane.b32.xlu0 %v4873, 16
  %v5673 = vpop.permute.xlu0 %5672
  %5674 = vrot.lane.b32.xlu0 %v4874, 16
  %v5675 = vpop.permute.xlu0 %5674
  %5676 = vrot.lane.b32.xlu0 %v4875, 16
  %v5677 = vpop.permute.xlu0 %5676
  %5678 = vrot.lane.b32.xlu0 %v4876, 16
  %v5679 = vpop.permute.xlu0 %5678
  %5680 = vrot.lane.b32.xlu0 %v4877, 16
  %v5681 = vpop.permute.xlu0 %5680
  %5682 = vrot.lane.b32.xlu0 %v4878, 16
  %v5683 = vpop.permute.xlu0 %5682
  %5684 = vrot.lane.b32.xlu0 %v4879, 16
  %v5685 = vpop.permute.xlu0 %5684
  %5686 = vrot.lane.b32.xlu0 %v4880, 16
  %v5687 = vpop.permute.xlu0 %5686
  %5688 = vrot.lane.b32.xlu0 %v4881, 16
  %v5689 = vpop.permute.xlu0 %5688
  %5690 = vrot.lane.b32.xlu0 %v4882, 16
  %v5691 = vpop.permute.xlu0 %5690
  %5692 = vrot.lane.b32.xlu0 %v4883, 16
  %v5693 = vpop.permute.xlu0 %5692
  %5694 = vrot.lane.b32.xlu0 %v4884, 16
  %v5695 = vpop.permute.xlu0 %5694
  %5696 = vrot.lane.b32.xlu0 %v4885, 16
  %v5697 = vpop.permute.xlu0 %5696
  %5698 = vrot.lane.b32.xlu0 %v4886, 16
  %v5699 = vpop.permute.xlu0 %5698
  %5700 = vrot.lane.b32.xlu0 %v4887, 16
  %v5701 = vpop.permute.xlu0 %5700
  %5702 = vrot.lane.b32.xlu0 %v4888, 16
  %v5703 = vpop.permute.xlu0 %5702
  %5704 = vrot.lane.b32.xlu0 %v4889, 16
  %v5705 = vpop.permute.xlu0 %5704
  %5706 = vrot.lane.b32.xlu0 %v4890, 16
  %v5707 = vpop.permute.xlu0 %5706
  %5708 = vrot.lane.b32.xlu0 %v4891, 16
  %v5709 = vpop.permute.xlu0 %5708
  %5710 = vrot.lane.b32.xlu0 %v4892, 16
  %v5711 = vpop.permute.xlu0 %5710
  %5712 = vrot.lane.b32.xlu0 %v4893, 16
  %v5713 = vpop.permute.xlu0 %5712
  %5714 = vrot.lane.b32.xlu0 %v4894, 16
  %v5715 = vpop.permute.xlu0 %5714
  %5716 = vrot.lane.b32.xlu0 %v4895, 16
  %v5717 = vpop.permute.xlu0 %5716
  %5718 = vrot.lane.b32.xlu0 %v4896, 16
  %v5719 = vpop.permute.xlu0 %5718
  %5720 = vrot.lane.b32.xlu0 %v4897, 16
  %v5721 = vpop.permute.xlu0 %5720
  %5722 = vrot.lane.b32.xlu0 %v4898, 16
  %v5723 = vpop.permute.xlu0 %5722
  %5724 = vrot.lane.b32.xlu0 %v4899, 16
  %v5725 = vpop.permute.xlu0 %5724
  %5726 = vrot.lane.b32.xlu0 %v4900, 16
  %v5727 = vpop.permute.xlu0 %5726
  %5728 = vrot.lane.b32.xlu0 %v4901, 16
  %v5729 = vpop.permute.xlu0 %5728
  %5730 = vrot.lane.b32.xlu0 %v4902, 16
  %v5731 = vpop.permute.xlu0 %5730
  %5732 = vrot.lane.b32.xlu0 %v4903, 16
  %v5733 = vpop.permute.xlu0 %5732
  %5734 = vrot.lane.b32.xlu0 %v4904, 16
  %v5735 = vpop.permute.xlu0 %5734
  %5736 = vrot.lane.b32.xlu0 %v4905, 16
  %v5737 = vpop.permute.xlu0 %5736
  %5738 = vrot.lane.b32.xlu0 %v4906, 16
  %v5739 = vpop.permute.xlu0 %5738
  %5868 = vrot.lane.b32.xlu0 %v4907, 24
  %v5869 = vpop.permute.xlu0 %5868
  %5870 = vrot.lane.b32.xlu0 %v4908, 24
  %v5871 = vpop.permute.xlu0 %5870
  %5872 = vrot.lane.b32.xlu0 %v4909, 24
  %v5873 = vpop.permute.xlu0 %5872
  %5874 = vrot.lane.b32.xlu0 %v4910, 24
  %v5875 = vpop.permute.xlu0 %5874
  %5876 = vrot.lane.b32.xlu0 %v4911, 24
  %v5877 = vpop.permute.xlu0 %5876
  %5878 = vrot.lane.b32.xlu0 %v4912, 24
  %v5879 = vpop.permute.xlu0 %5878
  %5880 = vrot.lane.b32.xlu0 %v4913, 24
  %v5881 = vpop.permute.xlu0 %5880
  %5882 = vrot.lane.b32.xlu0 %v4914, 24
  %v5883 = vpop.permute.xlu0 %5882
  %5884 = vrot.lane.b32.xlu0 %v4915, 24
  %v5885 = vpop.permute.xlu0 %5884
  %5886 = vrot.lane.b32.xlu0 %v4916, 24
  %v5887 = vpop.permute.xlu0 %5886
  %5888 = vrot.lane.b32.xlu0 %v4917, 24
  %v5889 = vpop.permute.xlu0 %5888
  %5890 = vrot.lane.b32.xlu0 %v4918, 24
  %v5891 = vpop.permute.xlu0 %5890
  %5892 = vrot.lane.b32.xlu0 %v4919, 24
  %v5893 = vpop.permute.xlu0 %5892
  %5894 = vrot.lane.b32.xlu0 %v4920, 24
  %v5895 = vpop.permute.xlu0 %5894
  %5896 = vrot.lane.b32.xlu0 %v4921, 24
  %v5897 = vpop.permute.xlu0 %5896
  %5898 = vrot.lane.b32.xlu0 %v4922, 24
  %v5899 = vpop.permute.xlu0 %5898
  %5900 = vrot.lane.b32.xlu0 %v4923, 24
  %v5901 = vpop.permute.xlu0 %5900
  %5902 = vrot.lane.b32.xlu0 %v4924, 24
  %v5903 = vpop.permute.xlu0 %5902
  %5904 = vrot.lane.b32.xlu0 %v4925, 24
  %v5905 = vpop.permute.xlu0 %5904
  %5906 = vrot.lane.b32.xlu0 %v4926, 24
  %v5907 = vpop.permute.xlu0 %5906
  %5908 = vrot.lane.b32.xlu0 %v4927, 24
  %v5909 = vpop.permute.xlu0 %5908
  %5910 = vrot.lane.b32.xlu0 %v4928, 24
  %v5911 = vpop.permute.xlu0 %5910
  %5912 = vrot.lane.b32.xlu0 %v4929, 24
  %v5913 = vpop.permute.xlu0 %5912
  %5914 = vrot.lane.b32.xlu0 %v4930, 24
  %v5915 = vpop.permute.xlu0 %5914
  %5916 = vrot.lane.b32.xlu0 %v4931, 24
  %v5917 = vpop.permute.xlu0 %5916
  %5918 = vrot.lane.b32.xlu0 %v4932, 24
  %v5919 = vpop.permute.xlu0 %5918
  %5920 = vrot.lane.b32.xlu0 %v4933, 24
  %v5921 = vpop.permute.xlu0 %5920
  %5922 = vrot.lane.b32.xlu0 %v4934, 24
  %v5923 = vpop.permute.xlu0 %5922
  %5924 = vrot.lane.b32.xlu0 %v4935, 24
  %v5925 = vpop.permute.xlu0 %5924
  %5926 = vrot.lane.b32.xlu0 %v4936, 24
  %v5927 = vpop.permute.xlu0 %5926
  %5928 = vrot.lane.b32.xlu0 %v4937, 24
  %v5929 = vpop.permute.xlu0 %5928
  %5930 = vrot.lane.b32.xlu0 %v4938, 24
  %v5931 = vpop.permute.xlu0 %5930
  %5932 = vrot.lane.b32.xlu0 %v4939, 24
  %v5933 = vpop.permute.xlu0 %5932
  %5934 = vrot.lane.b32.xlu0 %v4940, 24
  %v5935 = vpop.permute.xlu0 %5934
  %5936 = vrot.lane.b32.xlu0 %v4941, 24
  %v5937 = vpop.permute.xlu0 %5936
  %5938 = vrot.lane.b32.xlu0 %v4942, 24
  %v5939 = vpop.permute.xlu0 %5938
  %5940 = vrot.lane.b32.xlu0 %v4943, 24
  %v5941 = vpop.permute.xlu0 %5940
  %5942 = vrot.lane.b32.xlu0 %v4944, 24
  %v5943 = vpop.permute.xlu0 %5942
  %5944 = vrot.lane.b32.xlu0 %v4945, 24
  %v5945 = vpop.permute.xlu0 %5944
  %5946 = vrot.lane.b32.xlu0 %v4946, 24
  %v5947 = vpop.permute.xlu0 %5946
  %5948 = vrot.lane.b32.xlu0 %v4947, 24
  %v5949 = vpop.permute.xlu0 %5948
  %5950 = vrot.lane.b32.xlu0 %v4948, 24
  %v5951 = vpop.permute.xlu0 %5950
  %5952 = vrot.lane.b32.xlu0 %v4949, 24
  %v5953 = vpop.permute.xlu0 %5952
  %5954 = vrot.lane.b32.xlu0 %v4950, 24
  %v5955 = vpop.permute.xlu0 %5954
  %5956 = vrot.lane.b32.xlu0 %v4951, 24
  %v5957 = vpop.permute.xlu0 %5956
  %5958 = vrot.lane.b32.xlu0 %v4952, 24
  %v5959 = vpop.permute.xlu0 %5958
  %5960 = vrot.lane.b32.xlu0 %v4953, 24
  %v5961 = vpop.permute.xlu0 %5960
  %5962 = vrot.lane.b32.xlu0 %v4954, 24
  %v5963 = vpop.permute.xlu0 %5962
  %5964 = vrot.lane.b32.xlu0 %v4955, 24
  %v5965 = vpop.permute.xlu0 %5964
  %5966 = vrot.lane.b32.xlu0 %v4956, 24
  %v5967 = vpop.permute.xlu0 %5966
  %5968 = vrot.lane.b32.xlu0 %v4957, 24
  %v5969 = vpop.permute.xlu0 %5968
  %5970 = vrot.lane.b32.xlu0 %v4958, 24
  %v5971 = vpop.permute.xlu0 %5970
  %5972 = vrot.lane.b32.xlu0 %v4959, 24
  %v5973 = vpop.permute.xlu0 %5972
  %5974 = vrot.lane.b32.xlu0 %v4960, 24
  %v5975 = vpop.permute.xlu0 %5974
  %5976 = vrot.lane.b32.xlu0 %v4961, 24
  %v5977 = vpop.permute.xlu0 %5976
  %5978 = vrot.lane.b32.xlu0 %v4962, 24
  %v5979 = vpop.permute.xlu0 %5978
  %5980 = vrot.lane.b32.xlu0 %v4963, 24
  %v5981 = vpop.permute.xlu0 %5980
  %5982 = vrot.lane.b32.xlu0 %v4964, 24
  %v5983 = vpop.permute.xlu0 %5982
  %5984 = vrot.lane.b32.xlu0 %v4965, 24
  %v5985 = vpop.permute.xlu0 %5984
  %5986 = vrot.lane.b32.xlu0 %v4966, 24
  %v5987 = vpop.permute.xlu0 %5986
  %5988 = vrot.lane.b32.xlu0 %v4967, 24
  %v5989 = vpop.permute.xlu0 %5988
  %5990 = vrot.lane.b32.xlu0 %v4968, 24
  %v5991 = vpop.permute.xlu0 %5990
  %5992 = vrot.lane.b32.xlu0 %v4969, 24
  %v5993 = vpop.permute.xlu0 %5992
  %5994 = vrot.lane.b32.xlu0 %v4970, 24
  %v5995 = vpop.permute.xlu0 %5994
  %6124 = vrot.lane.b32.xlu0 %v4971, 32
  %v6125 = vpop.permute.xlu0 %6124
  %6126 = vrot.lane.b32.xlu0 %v4972, 32
  %v6127 = vpop.permute.xlu0 %6126
  %6128 = vrot.lane.b32.xlu0 %v4973, 32
  %v6129 = vpop.permute.xlu0 %6128
  %6130 = vrot.lane.b32.xlu0 %v4974, 32
  %v6131 = vpop.permute.xlu0 %6130
  %6132 = vrot.lane.b32.xlu0 %v4975, 32
  %v6133 = vpop.permute.xlu0 %6132
  %6134 = vrot.lane.b32.xlu0 %v4976, 32
  %v6135 = vpop.permute.xlu0 %6134
  %6136 = vrot.lane.b32.xlu0 %v4977, 32
  %v6137 = vpop.permute.xlu0 %6136
  %6138 = vrot.lane.b32.xlu0 %v4978, 32
  %v6139 = vpop.permute.xlu0 %6138
  %6140 = vrot.lane.b32.xlu0 %v4979, 32
  %v6141 = vpop.permute.xlu0 %6140
  %6142 = vrot.lane.b32.xlu0 %v4980, 32
  %v6143 = vpop.permute.xlu0 %6142
  %6144 = vrot.lane.b32.xlu0 %v4981, 32
  %v6145 = vpop.permute.xlu0 %6144
  %6146 = vrot.lane.b32.xlu0 %v4982, 32
  %v6147 = vpop.permute.xlu0 %6146
  %6148 = vrot.lane.b32.xlu0 %v4983, 32
  %v6149 = vpop.permute.xlu0 %6148
  %6150 = vrot.lane.b32.xlu0 %v4984, 32
  %v6151 = vpop.permute.xlu0 %6150
  %6152 = vrot.lane.b32.xlu0 %v4985, 32
  %v6153 = vpop.permute.xlu0 %6152
  %6154 = vrot.lane.b32.xlu0 %v4986, 32
  %v6155 = vpop.permute.xlu0 %6154
  %6156 = vrot.lane.b32.xlu0 %v4987, 32
  %v6157 = vpop.permute.xlu0 %6156
  %6158 = vrot.lane.b32.xlu0 %v4988, 32
  %v6159 = vpop.permute.xlu0 %6158
  %6160 = vrot.lane.b32.xlu0 %v4989, 32
  %v6161 = vpop.permute.xlu0 %6160
  %6162 = vrot.lane.b32.xlu0 %v4990, 32
  %v6163 = vpop.permute.xlu0 %6162
  %6164 = vrot.lane.b32.xlu0 %v4991, 32
  %v6165 = vpop.permute.xlu0 %6164
  %6166 = vrot.lane.b32.xlu0 %v4992, 32
  %v6167 = vpop.permute.xlu0 %6166
  %6168 = vrot.lane.b32.xlu0 %v4993, 32
  %v6169 = vpop.permute.xlu0 %6168
  %6170 = vrot.lane.b32.xlu0 %v4994, 32
  %v6171 = vpop.permute.xlu0 %6170
  %6172 = vrot.lane.b32.xlu0 %v4995, 32
  %v6173 = vpop.permute.xlu0 %6172
  %6174 = vrot.lane.b32.xlu0 %v4996, 32
  %v6175 = vpop.permute.xlu0 %6174
  %6176 = vrot.lane.b32.xlu0 %v4997, 32
  %v6177 = vpop.permute.xlu0 %6176
  %6178 = vrot.lane.b32.xlu0 %v4998, 32
  %v6179 = vpop.permute.xlu0 %6178
  %6180 = vrot.lane.b32.xlu0 %v4999, 32
  %v6181 = vpop.permute.xlu0 %6180
  %6182 = vrot.lane.b32.xlu0 %v5000, 32
  %v6183 = vpop.permute.xlu0 %6182
  %6184 = vrot.lane.b32.xlu0 %v5001, 32
  %v6185 = vpop.permute.xlu0 %6184
  %6186 = vrot.lane.b32.xlu0 %v5002, 32
  %v6187 = vpop.permute.xlu0 %6186
  %6188 = vrot.lane.b32.xlu0 %v5003, 32
  %v6189 = vpop.permute.xlu0 %6188
  %6190 = vrot.lane.b32.xlu0 %v5004, 32
  %v6191 = vpop.permute.xlu0 %6190
  %6192 = vrot.lane.b32.xlu0 %v5005, 32
  %v6193 = vpop.permute.xlu0 %6192
  %6194 = vrot.lane.b32.xlu0 %v5006, 32
  %v6195 = vpop.permute.xlu0 %6194
  %6196 = vrot.lane.b32.xlu0 %v5007, 32
  %v6197 = vpop.permute.xlu0 %6196
  %6198 = vrot.lane.b32.xlu0 %v5008, 32
  %v6199 = vpop.permute.xlu0 %6198
  %6200 = vrot.lane.b32.xlu0 %v5009, 32
  %v6201 = vpop.permute.xlu0 %6200
  %6202 = vrot.lane.b32.xlu0 %v5010, 32
  %v6203 = vpop.permute.xlu0 %6202
  %6204 = vrot.lane.b32.xlu0 %v5011, 32
  %v6205 = vpop.permute.xlu0 %6204
  %6206 = vrot.lane.b32.xlu0 %v5012, 32
  %v6207 = vpop.permute.xlu0 %6206
  %6208 = vrot.lane.b32.xlu0 %v5013, 32
  %v6209 = vpop.permute.xlu0 %6208
  %6210 = vrot.lane.b32.xlu0 %v5014, 32
  %v6211 = vpop.permute.xlu0 %6210
  %6212 = vrot.lane.b32.xlu0 %v5015, 32
  %v6213 = vpop.permute.xlu0 %6212
  %6214 = vrot.lane.b32.xlu0 %v5016, 32
  %v6215 = vpop.permute.xlu0 %6214
  %6216 = vrot.lane.b32.xlu0 %v5017, 32
  %v6217 = vpop.permute.xlu0 %6216
  %6218 = vrot.lane.b32.xlu0 %v5018, 32
  %v6219 = vpop.permute.xlu0 %6218
  %6220 = vrot.lane.b32.xlu0 %v5019, 32
  %v6221 = vpop.permute.xlu0 %6220
  %6222 = vrot.lane.b32.xlu0 %v5020, 32
  %v6223 = vpop.permute.xlu0 %6222
  %6224 = vrot.lane.b32.xlu0 %v5021, 32
  %v6225 = vpop.permute.xlu0 %6224
  %6226 = vrot.lane.b32.xlu0 %v5022, 32
  %v6227 = vpop.permute.xlu0 %6226
  %6228 = vrot.lane.b32.xlu0 %v5023, 32
  %v6229 = vpop.permute.xlu0 %6228
  %6230 = vrot.lane.b32.xlu0 %v5024, 32
  %v6231 = vpop.permute.xlu0 %6230
  %6232 = vrot.lane.b32.xlu0 %v5025, 32
  %v6233 = vpop.permute.xlu0 %6232
  %6234 = vrot.lane.b32.xlu0 %v5026, 32
  %v6235 = vpop.permute.xlu0 %6234
  %6236 = vrot.lane.b32.xlu0 %v5027, 32
  %v6237 = vpop.permute.xlu0 %6236
  %6238 = vrot.lane.b32.xlu0 %v5028, 32
  %v6239 = vpop.permute.xlu0 %6238
  %6240 = vrot.lane.b32.xlu0 %v5029, 32
  %v6241 = vpop.permute.xlu0 %6240
  %6242 = vrot.lane.b32.xlu0 %v5030, 32
  %v6243 = vpop.permute.xlu0 %6242
  %6244 = vrot.lane.b32.xlu0 %v5031, 32
  %v6245 = vpop.permute.xlu0 %6244
  %6246 = vrot.lane.b32.xlu0 %v5032, 32
  %v6247 = vpop.permute.xlu0 %6246
  %6248 = vrot.lane.b32.xlu0 %v5033, 32
  %v6249 = vpop.permute.xlu0 %6248
  %6250 = vrot.lane.b32.xlu0 %v5034, 32
  %v6251 = vpop.permute.xlu0 %6250
  %6380 = vrot.lane.b32.xlu0 %v5035, 40
  %v6381 = vpop.permute.xlu0 %6380
  %6382 = vrot.lane.b32.xlu0 %v5036, 40
  %v6383 = vpop.permute.xlu0 %6382
  %6384 = vrot.lane.b32.xlu0 %v5037, 40
  %v6385 = vpop.permute.xlu0 %6384
  %6386 = vrot.lane.b32.xlu0 %v5038, 40
  %v6387 = vpop.permute.xlu0 %6386
  %6388 = vrot.lane.b32.xlu0 %v5039, 40
  %v6389 = vpop.permute.xlu0 %6388
  %6390 = vrot.lane.b32.xlu0 %v5040, 40
  %v6391 = vpop.permute.xlu0 %6390
  %6392 = vrot.lane.b32.xlu0 %v5041, 40
  %v6393 = vpop.permute.xlu0 %6392
  %6394 = vrot.lane.b32.xlu0 %v5042, 40
  %v6395 = vpop.permute.xlu0 %6394
  %6396 = vrot.lane.b32.xlu0 %v5043, 40
  %v6397 = vpop.permute.xlu0 %6396
  %6398 = vrot.lane.b32.xlu0 %v5044, 40
  %v6399 = vpop.permute.xlu0 %6398
  %6400 = vrot.lane.b32.xlu0 %v5045, 40
  %v6401 = vpop.permute.xlu0 %6400
  %6402 = vrot.lane.b32.xlu0 %v5046, 40
  %v6403 = vpop.permute.xlu0 %6402
  %6404 = vrot.lane.b32.xlu0 %v5047, 40
  %v6405 = vpop.permute.xlu0 %6404
  %6406 = vrot.lane.b32.xlu0 %v5048, 40
  %v6407 = vpop.permute.xlu0 %6406
  %6408 = vrot.lane.b32.xlu0 %v5049, 40
  %v6409 = vpop.permute.xlu0 %6408
  %6410 = vrot.lane.b32.xlu0 %v5050, 40
  %v6411 = vpop.permute.xlu0 %6410
  %6412 = vrot.lane.b32.xlu0 %v5051, 40
  %v6413 = vpop.permute.xlu0 %6412
  %6414 = vrot.lane.b32.xlu0 %v5052, 40
  %v6415 = vpop.permute.xlu0 %6414
  %6416 = vrot.lane.b32.xlu0 %v5053, 40
  %v6417 = vpop.permute.xlu0 %6416
  %6418 = vrot.lane.b32.xlu0 %v5054, 40
  %v6419 = vpop.permute.xlu0 %6418
  %6420 = vrot.lane.b32.xlu0 %v5055, 40
  %v6421 = vpop.permute.xlu0 %6420
  %6422 = vrot.lane.b32.xlu0 %v5056, 40
  %v6423 = vpop.permute.xlu0 %6422
  %6424 = vrot.lane.b32.xlu0 %v5057, 40
  %v6425 = vpop.permute.xlu0 %6424
  %6426 = vrot.lane.b32.xlu0 %v5058, 40
  %v6427 = vpop.permute.xlu0 %6426
  %6428 = vrot.lane.b32.xlu0 %v5059, 40
  %v6429 = vpop.permute.xlu0 %6428
  %6430 = vrot.lane.b32.xlu0 %v5060, 40
  %v6431 = vpop.permute.xlu0 %6430
  %6432 = vrot.lane.b32.xlu0 %v5061, 40
  %v6433 = vpop.permute.xlu0 %6432
  %6434 = vrot.lane.b32.xlu0 %v5062, 40
  %v6435 = vpop.permute.xlu0 %6434
  %6436 = vrot.lane.b32.xlu0 %v5063, 40
  %v6437 = vpop.permute.xlu0 %6436
  %6438 = vrot.lane.b32.xlu0 %v5064, 40
  %v6439 = vpop.permute.xlu0 %6438
  %6440 = vrot.lane.b32.xlu0 %v5065, 40
  %v6441 = vpop.permute.xlu0 %6440
  %6442 = vrot.lane.b32.xlu0 %v5066, 40
  %v6443 = vpop.permute.xlu0 %6442
  %6444 = vrot.lane.b32.xlu0 %v5067, 40
  %v6445 = vpop.permute.xlu0 %6444
  %6446 = vrot.lane.b32.xlu0 %v5068, 40
  %v6447 = vpop.permute.xlu0 %6446
  %6448 = vrot.lane.b32.xlu0 %v5069, 40
  %v6449 = vpop.permute.xlu0 %6448
  %6450 = vrot.lane.b32.xlu0 %v5070, 40
  %v6451 = vpop.permute.xlu0 %6450
  %6452 = vrot.lane.b32.xlu0 %v5071, 40
  %v6453 = vpop.permute.xlu0 %6452
  %6454 = vrot.lane.b32.xlu0 %v5072, 40
  %v6455 = vpop.permute.xlu0 %6454
  %6456 = vrot.lane.b32.xlu0 %v5073, 40
  %v6457 = vpop.permute.xlu0 %6456
  %6458 = vrot.lane.b32.xlu0 %v5074, 40
  %v6459 = vpop.permute.xlu0 %6458
  %6460 = vrot.lane.b32.xlu0 %v5075, 40
  %v6461 = vpop.permute.xlu0 %6460
  %6462 = vrot.lane.b32.xlu0 %v5076, 40
  %v6463 = vpop.permute.xlu0 %6462
  %6464 = vrot.lane.b32.xlu0 %v5077, 40
  %v6465 = vpop.permute.xlu0 %6464
  %6466 = vrot.lane.b32.xlu0 %v5078, 40
  %v6467 = vpop.permute.xlu0 %6466
  %6468 = vrot.lane.b32.xlu0 %v5079, 40
  %v6469 = vpop.permute.xlu0 %6468
  %6470 = vrot.lane.b32.xlu0 %v5080, 40
  %v6471 = vpop.permute.xlu0 %6470
  %6472 = vrot.lane.b32.xlu0 %v5081, 40
  %v6473 = vpop.permute.xlu0 %6472
  %6474 = vrot.lane.b32.xlu0 %v5082, 40
  %v6475 = vpop.permute.xlu0 %6474
  %6476 = vrot.lane.b32.xlu0 %v5083, 40
  %v6477 = vpop.permute.xlu0 %6476
  %6478 = vrot.lane.b32.xlu0 %v5084, 40
  %v6479 = vpop.permute.xlu0 %6478
  %6480 = vrot.lane.b32.xlu0 %v5085, 40
  %v6481 = vpop.permute.xlu0 %6480
  %6482 = vrot.lane.b32.xlu0 %v5086, 40
  %v6483 = vpop.permute.xlu0 %6482
  %6484 = vrot.lane.b32.xlu0 %v5087, 40
  %v6485 = vpop.permute.xlu0 %6484
  %6486 = vrot.lane.b32.xlu0 %v5088, 40
  %v6487 = vpop.permute.xlu0 %6486
  %6488 = vrot.lane.b32.xlu0 %v5089, 40
  %v6489 = vpop.permute.xlu0 %6488
  %6490 = vrot.lane.b32.xlu0 %v5090, 40
  %v6491 = vpop.permute.xlu0 %6490
  %6492 = vrot.lane.b32.xlu0 %v5091, 40
  %v6493 = vpop.permute.xlu0 %6492
  %6494 = vrot.lane.b32.xlu0 %v5092, 40
  %v6495 = vpop.permute.xlu0 %6494
  %6496 = vrot.lane.b32.xlu0 %v5093, 40
  %v6497 = vpop.permute.xlu0 %6496
  %6498 = vrot.lane.b32.xlu0 %v5094, 40
  %v6499 = vpop.permute.xlu0 %6498
  %6500 = vrot.lane.b32.xlu0 %v5095, 40
  %v6501 = vpop.permute.xlu0 %6500
  %6502 = vrot.lane.b32.xlu0 %v5096, 40
  %v6503 = vpop.permute.xlu0 %6502
  %6504 = vrot.lane.b32.xlu0 %v5097, 40
  %v6505 = vpop.permute.xlu0 %6504
  %6506 = vrot.lane.b32.xlu0 %v5098, 40
  %v6507 = vpop.permute.xlu0 %6506
  %6636 = vrot.lane.b32.xlu0 %v5100, 48
  %v6637 = vpop.permute.xlu0 %6636
  %6638 = vrot.lane.b32.xlu0 %v5101, 48
  %v6639 = vpop.permute.xlu0 %6638
  %6640 = vrot.lane.b32.xlu0 %v5102, 48
  %v6641 = vpop.permute.xlu0 %6640
  %6642 = vrot.lane.b32.xlu0 %v5103, 48
  %v6643 = vpop.permute.xlu0 %6642
  %6644 = vrot.lane.b32.xlu0 %v5104, 48
  %v6645 = vpop.permute.xlu0 %6644
  %6646 = vrot.lane.b32.xlu0 %v5105, 48
  %v6647 = vpop.permute.xlu0 %6646
  %6648 = vrot.lane.b32.xlu0 %v5106, 48
  %v6649 = vpop.permute.xlu0 %6648
  %6650 = vrot.lane.b32.xlu0 %v5107, 48
  %v6651 = vpop.permute.xlu0 %6650
  %6652 = vrot.lane.b32.xlu0 %v5108, 48
  %v6653 = vpop.permute.xlu0 %6652
  %6654 = vrot.lane.b32.xlu0 %v5109, 48
  %v6655 = vpop.permute.xlu0 %6654
  %6656 = vrot.lane.b32.xlu0 %v5110, 48
  %v6657 = vpop.permute.xlu0 %6656
  %6658 = vrot.lane.b32.xlu0 %v5111, 48
  %v6659 = vpop.permute.xlu0 %6658
  %6660 = vrot.lane.b32.xlu0 %v5112, 48
  %v6661 = vpop.permute.xlu0 %6660
  %6662 = vrot.lane.b32.xlu0 %v5113, 48
  %v6663 = vpop.permute.xlu0 %6662
  %6664 = vrot.lane.b32.xlu0 %v5114, 48
  %v6665 = vpop.permute.xlu0 %6664
  %6666 = vrot.lane.b32.xlu0 %v5115, 48
  %v6667 = vpop.permute.xlu0 %6666
  %6668 = vrot.lane.b32.xlu0 %v5116, 48
  %v6669 = vpop.permute.xlu0 %6668
  %6670 = vrot.lane.b32.xlu0 %v5117, 48
  %v6671 = vpop.permute.xlu0 %6670
  %6672 = vrot.lane.b32.xlu0 %v5118, 48
  %v6673 = vpop.permute.xlu0 %6672
  %6674 = vrot.lane.b32.xlu0 %v5119, 48
  %v6675 = vpop.permute.xlu0 %6674
  %6676 = vrot.lane.b32.xlu0 %v5120, 48
  %v6677 = vpop.permute.xlu0 %6676
  %6678 = vrot.lane.b32.xlu0 %v5121, 48
  %v6679 = vpop.permute.xlu0 %6678
  %6680 = vrot.lane.b32.xlu0 %v5122, 48
  %v6681 = vpop.permute.xlu0 %6680
  %6682 = vrot.lane.b32.xlu0 %v5123, 48
  %v6683 = vpop.permute.xlu0 %6682
  %6684 = vrot.lane.b32.xlu0 %v5124, 48
  %v6685 = vpop.permute.xlu0 %6684
  %6686 = vrot.lane.b32.xlu0 %v5125, 48
  %v6687 = vpop.permute.xlu0 %6686
  %6688 = vrot.lane.b32.xlu0 %v5126, 48
  %v6689 = vpop.permute.xlu0 %6688
  %6690 = vrot.lane.b32.xlu0 %v5127, 48
  %v6691 = vpop.permute.xlu0 %6690
  %6692 = vrot.lane.b32.xlu0 %v5128, 48
  %v6693 = vpop.permute.xlu0 %6692
  %6694 = vrot.lane.b32.xlu0 %v5129, 48
  %v6695 = vpop.permute.xlu0 %6694
  %6696 = vrot.lane.b32.xlu0 %v5130, 48
  %v6697 = vpop.permute.xlu0 %6696
  %6698 = vrot.lane.b32.xlu0 %v5131, 48
  %v6699 = vpop.permute.xlu0 %6698
  %6700 = vrot.lane.b32.xlu0 %v5132, 48
  %v6701 = vpop.permute.xlu0 %6700
  %6702 = vrot.lane.b32.xlu0 %v5133, 48
  %v6703 = vpop.permute.xlu0 %6702
  %6704 = vrot.lane.b32.xlu0 %v5134, 48
  %v6705 = vpop.permute.xlu0 %6704
  %6706 = vrot.lane.b32.xlu0 %v5135, 48
  %v6707 = vpop.permute.xlu0 %6706
  %6708 = vrot.lane.b32.xlu0 %v5136, 48
  %v6709 = vpop.permute.xlu0 %6708
  %6710 = vrot.lane.b32.xlu0 %v5137, 48
  %v6711 = vpop.permute.xlu0 %6710
  %6712 = vrot.lane.b32.xlu0 %v5138, 48
  %v6713 = vpop.permute.xlu0 %6712
  %6714 = vrot.lane.b32.xlu0 %v5139, 48
  %v6715 = vpop.permute.xlu0 %6714
  %6716 = vrot.lane.b32.xlu0 %v5140, 48
  %v6717 = vpop.permute.xlu0 %6716
  %6718 = vrot.lane.b32.xlu0 %v5141, 48
  %v6719 = vpop.permute.xlu0 %6718
  %6720 = vrot.lane.b32.xlu0 %v5142, 48
  %v6721 = vpop.permute.xlu0 %6720
  %6722 = vrot.lane.b32.xlu0 %v5143, 48
  %v6723 = vpop.permute.xlu0 %6722
  %6724 = vrot.lane.b32.xlu0 %v5144, 48
  %v6725 = vpop.permute.xlu0 %6724
  %6726 = vrot.lane.b32.xlu0 %v5145, 48
  %v6727 = vpop.permute.xlu0 %6726
  %6728 = vrot.lane.b32.xlu0 %v5146, 48
  %v6729 = vpop.permute.xlu0 %6728
  %6730 = vrot.lane.b32.xlu0 %v5147, 48
  %v6731 = vpop.permute.xlu0 %6730
  %6732 = vrot.lane.b32.xlu0 %v5148, 48
  %v6733 = vpop.permute.xlu0 %6732
  %6734 = vrot.lane.b32.xlu0 %v5149, 48
  %v6735 = vpop.permute.xlu0 %6734
  %6736 = vrot.lane.b32.xlu0 %v5150, 48
  %v6737 = vpop.permute.xlu0 %6736
  %6738 = vrot.lane.b32.xlu0 %v5151, 48
  %v6739 = vpop.permute.xlu0 %6738
  %6740 = vrot.lane.b32.xlu0 %v5152, 48
  %v6741 = vpop.permute.xlu0 %6740
  %6742 = vrot.lane.b32.xlu0 %v5153, 48
  %v6743 = vpop.permute.xlu0 %6742
  %6744 = vrot.lane.b32.xlu0 %v5154, 48
  %v6745 = vpop.permute.xlu0 %6744
  %6746 = vrot.lane.b32.xlu0 %v5155, 48
  %v6747 = vpop.permute.xlu0 %6746
  %6748 = vrot.lane.b32.xlu0 %v5156, 48
  %v6749 = vpop.permute.xlu0 %6748
  %6750 = vrot.lane.b32.xlu0 %v5157, 48
  %v6751 = vpop.permute.xlu0 %6750
  %6752 = vrot.lane.b32.xlu0 %v5158, 48
  %v6753 = vpop.permute.xlu0 %6752
  %6754 = vrot.lane.b32.xlu0 %v5159, 48
  %v6755 = vpop.permute.xlu0 %6754
  %6756 = vrot.lane.b32.xlu0 %v5160, 48
  %v6757 = vpop.permute.xlu0 %6756
  %6758 = vrot.lane.b32.xlu0 %v5161, 48
  %v6759 = vpop.permute.xlu0 %6758
  %6760 = vrot.lane.b32.xlu0 %v5162, 48
  %v6761 = vpop.permute.xlu0 %6760
  %6762 = vrot.lane.b32.xlu0 %v5163, 48
  %v6763 = vpop.permute.xlu0 %6762
  %6892 = vrot.lane.b32.xlu0 %v5164, 56
  %v6893 = vpop.permute.xlu0 %6892
  %6894 = vrot.lane.b32.xlu0 %v5165, 56
  %v6895 = vpop.permute.xlu0 %6894
  %6896 = vrot.lane.b32.xlu0 %v5166, 56
  %v6897 = vpop.permute.xlu0 %6896
  %6898 = vrot.lane.b32.xlu0 %v5167, 56
  %v6899 = vpop.permute.xlu0 %6898
  %6900 = vrot.lane.b32.xlu0 %v5168, 56
  %v6901 = vpop.permute.xlu0 %6900
  %6902 = vrot.lane.b32.xlu0 %v5169, 56
  %v6903 = vpop.permute.xlu0 %6902
  %6904 = vrot.lane.b32.xlu0 %v5170, 56
  %v6905 = vpop.permute.xlu0 %6904
  %6906 = vrot.lane.b32.xlu0 %v5171, 56
  %v6907 = vpop.permute.xlu0 %6906
  %6908 = vrot.lane.b32.xlu0 %v5172, 56
  %v6909 = vpop.permute.xlu0 %6908
  %6910 = vrot.lane.b32.xlu0 %v5173, 56
  %v6911 = vpop.permute.xlu0 %6910
  %6912 = vrot.lane.b32.xlu0 %v5174, 56
  %v6913 = vpop.permute.xlu0 %6912
  %6914 = vrot.lane.b32.xlu0 %v5175, 56
  %v6915 = vpop.permute.xlu0 %6914
  %6916 = vrot.lane.b32.xlu0 %v5176, 56
  %v6917 = vpop.permute.xlu0 %6916
  %6918 = vrot.lane.b32.xlu0 %v5177, 56
  %v6919 = vpop.permute.xlu0 %6918
  %6920 = vrot.lane.b32.xlu0 %v5178, 56
  %v6921 = vpop.permute.xlu0 %6920
  %6922 = vrot.lane.b32.xlu0 %v5179, 56
  %v6923 = vpop.permute.xlu0 %6922
  %6924 = vrot.lane.b32.xlu0 %v5180, 56
  %v6925 = vpop.permute.xlu0 %6924
  %6926 = vrot.lane.b32.xlu0 %v5181, 56
  %v6927 = vpop.permute.xlu0 %6926
  %6928 = vrot.lane.b32.xlu0 %v5182, 56
  %v6929 = vpop.permute.xlu0 %6928
  %6930 = vrot.lane.b32.xlu0 %v5183, 56
  %v6931 = vpop.permute.xlu0 %6930
  %6932 = vrot.lane.b32.xlu0 %v5184, 56
  %v6933 = vpop.permute.xlu0 %6932
  %6934 = vrot.lane.b32.xlu0 %v5185, 56
  %v6935 = vpop.permute.xlu0 %6934
  %6936 = vrot.lane.b32.xlu0 %v5186, 56
  %v6937 = vpop.permute.xlu0 %6936
  %6938 = vrot.lane.b32.xlu0 %v5187, 56
  %v6939 = vpop.permute.xlu0 %6938
  %6940 = vrot.lane.b32.xlu0 %v5188, 56
  %v6941 = vpop.permute.xlu0 %6940
  %6942 = vrot.lane.b32.xlu0 %v5189, 56
  %v6943 = vpop.permute.xlu0 %6942
  %6944 = vrot.lane.b32.xlu0 %v5190, 56
  %v6945 = vpop.permute.xlu0 %6944
  %6946 = vrot.lane.b32.xlu0 %v5191, 56
  %v6947 = vpop.permute.xlu0 %6946
  %6948 = vrot.lane.b32.xlu0 %v5192, 56
  %v6949 = vpop.permute.xlu0 %6948
  %6950 = vrot.lane.b32.xlu0 %v5193, 56
  %v6951 = vpop.permute.xlu0 %6950
  %6952 = vrot.lane.b32.xlu0 %v5194, 56
  %v6953 = vpop.permute.xlu0 %6952
  %6954 = vrot.lane.b32.xlu0 %v5195, 56
  %v6955 = vpop.permute.xlu0 %6954
  %6956 = vrot.lane.b32.xlu0 %v5196, 56
  %v6957 = vpop.permute.xlu0 %6956
  %6958 = vrot.lane.b32.xlu0 %v5197, 56
  %v6959 = vpop.permute.xlu0 %6958
  %6960 = vrot.lane.b32.xlu0 %v5198, 56
  %v6961 = vpop.permute.xlu0 %6960
  %6962 = vrot.lane.b32.xlu0 %v5199, 56
  %v6963 = vpop.permute.xlu0 %6962
  %6964 = vrot.lane.b32.xlu0 %v5200, 56
  %v6965 = vpop.permute.xlu0 %6964
  %6966 = vrot.lane.b32.xlu0 %v5201, 56
  %v6967 = vpop.permute.xlu0 %6966
  %6968 = vrot.lane.b32.xlu0 %v5202, 56
  %v6969 = vpop.permute.xlu0 %6968
  %6970 = vrot.lane.b32.xlu0 %v5203, 56
  %v6971 = vpop.permute.xlu0 %6970
  %6972 = vrot.lane.b32.xlu0 %v5204, 56
  %v6973 = vpop.permute.xlu0 %6972
  %6974 = vrot.lane.b32.xlu0 %v5205, 56
  %v6975 = vpop.permute.xlu0 %6974
  %6976 = vrot.lane.b32.xlu0 %v5206, 56
  %v6977 = vpop.permute.xlu0 %6976
  %6978 = vrot.lane.b32.xlu0 %v5207, 56
  %v6979 = vpop.permute.xlu0 %6978
  %6980 = vrot.lane.b32.xlu0 %v5208, 56
  %v6981 = vpop.permute.xlu0 %6980
  %6982 = vrot.lane.b32.xlu0 %v5209, 56
  %v6983 = vpop.permute.xlu0 %6982
  %6984 = vrot.lane.b32.xlu0 %v5210, 56
  %v6985 = vpop.permute.xlu0 %6984
  %6986 = vrot.lane.b32.xlu0 %v5211, 56
  %v6987 = vpop.permute.xlu0 %6986
  %6988 = vrot.lane.b32.xlu0 %v5212, 56
  %v6989 = vpop.permute.xlu0 %6988
  %6990 = vrot.lane.b32.xlu0 %v5213, 56
  %v6991 = vpop.permute.xlu0 %6990
  %6992 = vrot.lane.b32.xlu0 %v5214, 56
  %v6993 = vpop.permute.xlu0 %6992
  %6994 = vrot.lane.b32.xlu0 %v5215, 56
  %v6995 = vpop.permute.xlu0 %6994
  %6996 = vrot.lane.b32.xlu0 %v5216, 56
  %v6997 = vpop.permute.xlu0 %6996
  %6998 = vrot.lane.b32.xlu0 %v5217, 56
  %v6999 = vpop.permute.xlu0 %6998
  %7000 = vrot.lane.b32.xlu0 %v5218, 56
  %v7001 = vpop.permute.xlu0 %7000
  %7002 = vrot.lane.b32.xlu0 %v5219, 56
  %v7003 = vpop.permute.xlu0 %7002
  %7004 = vrot.lane.b32.xlu0 %v5220, 56
  %v7005 = vpop.permute.xlu0 %7004
  %7006 = vrot.lane.b32.xlu0 %v5221, 56
  %v7007 = vpop.permute.xlu0 %7006
  %7008 = vrot.lane.b32.xlu0 %v5222, 56
  %v7009 = vpop.permute.xlu0 %7008
  %7010 = vrot.lane.b32.xlu0 %v5223, 56
  %v7011 = vpop.permute.xlu0 %7010
  %7012 = vrot.lane.b32.xlu0 %v5224, 56
  %v7013 = vpop.permute.xlu0 %7012
  %7014 = vrot.lane.b32.xlu0 %v5225, 56
  %v7015 = vpop.permute.xlu0 %7014
  %7016 = vrot.lane.b32.xlu0 %v5226, 56
  %v7017 = vpop.permute.xlu0 %7016
  %7018 = vrot.lane.b32.xlu0 %v5227, 56
  %v7019 = vpop.permute.xlu0 %7018
  %7148 = vrot.lane.b32.xlu0 %v5228, 64
  %v7149 = vpop.permute.xlu0 %7148
  %7150 = vrot.lane.b32.xlu0 %v5229, 64
  %v7151 = vpop.permute.xlu0 %7150
  %7152 = vrot.lane.b32.xlu0 %v5230, 64
  %v7153 = vpop.permute.xlu0 %7152
  %7154 = vrot.lane.b32.xlu0 %v5231, 64
  %v7155 = vpop.permute.xlu0 %7154
  %7156 = vrot.lane.b32.xlu0 %v5232, 64
  %v7157 = vpop.permute.xlu0 %7156
  %7158 = vrot.lane.b32.xlu0 %v5233, 64
  %v7159 = vpop.permute.xlu0 %7158
  %7160 = vrot.lane.b32.xlu0 %v5234, 64
  %v7161 = vpop.permute.xlu0 %7160
  %7162 = vrot.lane.b32.xlu0 %v5235, 64
  %v7163 = vpop.permute.xlu0 %7162
  %7164 = vrot.lane.b32.xlu0 %v5236, 64
  %v7165 = vpop.permute.xlu0 %7164
  %7166 = vrot.lane.b32.xlu0 %v5237, 64
  %v7167 = vpop.permute.xlu0 %7166
  %7168 = vrot.lane.b32.xlu0 %v5238, 64
  %v7169 = vpop.permute.xlu0 %7168
  %7170 = vrot.lane.b32.xlu0 %v5239, 64
  %v7171 = vpop.permute.xlu0 %7170
  %7172 = vrot.lane.b32.xlu0 %v5240, 64
  %v7173 = vpop.permute.xlu0 %7172
  %7174 = vrot.lane.b32.xlu0 %v5241, 64
  %v7175 = vpop.permute.xlu0 %7174
  %7176 = vrot.lane.b32.xlu0 %v5242, 64
  %v7177 = vpop.permute.xlu0 %7176
  %7178 = vrot.lane.b32.xlu0 %v5243, 64
  %v7179 = vpop.permute.xlu0 %7178
  %7180 = vrot.lane.b32.xlu0 %v5244, 64
  %v7181 = vpop.permute.xlu0 %7180
  %7182 = vrot.lane.b32.xlu0 %v5245, 64
  %v7183 = vpop.permute.xlu0 %7182
  %7184 = vrot.lane.b32.xlu0 %v5246, 64
  %v7185 = vpop.permute.xlu0 %7184
  %7186 = vrot.lane.b32.xlu0 %v5247, 64
  %v7187 = vpop.permute.xlu0 %7186
  %7188 = vrot.lane.b32.xlu0 %v5248, 64
  %v7189 = vpop.permute.xlu0 %7188
  %7190 = vrot.lane.b32.xlu0 %v5249, 64
  %v7191 = vpop.permute.xlu0 %7190
  %7192 = vrot.lane.b32.xlu0 %v5250, 64
  %v7193 = vpop.permute.xlu0 %7192
  %7194 = vrot.lane.b32.xlu0 %v5251, 64
  %v7195 = vpop.permute.xlu0 %7194
  %7196 = vrot.lane.b32.xlu0 %v5252, 64
  %v7197 = vpop.permute.xlu0 %7196
  %7198 = vrot.lane.b32.xlu0 %v5253, 64
  %v7199 = vpop.permute.xlu0 %7198
  %7200 = vrot.lane.b32.xlu0 %v5254, 64
  %v7201 = vpop.permute.xlu0 %7200
  %7202 = vrot.lane.b32.xlu0 %v5255, 64
  %v7203 = vpop.permute.xlu0 %7202
  %7204 = vrot.lane.b32.xlu0 %v5256, 64
  %v7205 = vpop.permute.xlu0 %7204
  %7206 = vrot.lane.b32.xlu0 %v5257, 64
  %v7207 = vpop.permute.xlu0 %7206
  %7208 = vrot.lane.b32.xlu0 %v5258, 64
  %v7209 = vpop.permute.xlu0 %7208
  %7210 = vrot.lane.b32.xlu0 %v5259, 64
  %v7211 = vpop.permute.xlu0 %7210
  %7212 = vrot.lane.b32.xlu0 %v5260, 64
  %v7213 = vpop.permute.xlu0 %7212
  %7214 = vrot.lane.b32.xlu0 %v5261, 64
  %v7215 = vpop.permute.xlu0 %7214
  %7216 = vrot.lane.b32.xlu0 %v5262, 64
  %v7217 = vpop.permute.xlu0 %7216
  %7218 = vrot.lane.b32.xlu0 %v5263, 64
  %v7219 = vpop.permute.xlu0 %7218
  %7220 = vrot.lane.b32.xlu0 %v5264, 64
  %v7221 = vpop.permute.xlu0 %7220
  %7222 = vrot.lane.b32.xlu0 %v5265, 64
  %v7223 = vpop.permute.xlu0 %7222
  %7224 = vrot.lane.b32.xlu0 %v5266, 64
  %v7225 = vpop.permute.xlu0 %7224
  %7226 = vrot.lane.b32.xlu0 %v5267, 64
  %v7227 = vpop.permute.xlu0 %7226
  %7228 = vrot.lane.b32.xlu0 %v5268, 64
  %v7229 = vpop.permute.xlu0 %7228
  %7230 = vrot.lane.b32.xlu0 %v5269, 64
  %v7231 = vpop.permute.xlu0 %7230
  %7232 = vrot.lane.b32.xlu0 %v5270, 64
  %v7233 = vpop.permute.xlu0 %7232
  %7234 = vrot.lane.b32.xlu0 %v5271, 64
  %v7235 = vpop.permute.xlu0 %7234
  %7236 = vrot.lane.b32.xlu0 %v5272, 64
  %v7237 = vpop.permute.xlu0 %7236
  %7238 = vrot.lane.b32.xlu0 %v5273, 64
  %v7239 = vpop.permute.xlu0 %7238
  %7240 = vrot.lane.b32.xlu0 %v5274, 64
  %v7241 = vpop.permute.xlu0 %7240
  %7242 = vrot.lane.b32.xlu0 %v5275, 64
  %v7243 = vpop.permute.xlu0 %7242
  %7244 = vrot.lane.b32.xlu0 %v5276, 64
  %v7245 = vpop.permute.xlu0 %7244
  %7246 = vrot.lane.b32.xlu0 %v5277, 64
  %v7247 = vpop.permute.xlu0 %7246
  %7248 = vrot.lane.b32.xlu0 %v5278, 64
  %v7249 = vpop.permute.xlu0 %7248
  %7250 = vrot.lane.b32.xlu0 %v5279, 64
  %v7251 = vpop.permute.xlu0 %7250
  %7252 = vrot.lane.b32.xlu0 %v5280, 64
  %v7253 = vpop.permute.xlu0 %7252
  %7254 = vrot.lane.b32.xlu0 %v5281, 64
  %v7255 = vpop.permute.xlu0 %7254
  %7256 = vrot.lane.b32.xlu0 %v5282, 64
  %v7257 = vpop.permute.xlu0 %7256
  %7258 = vrot.lane.b32.xlu0 %v5283, 64
  %v7259 = vpop.permute.xlu0 %7258
  %7260 = vrot.lane.b32.xlu0 %v5284, 64
  %v7261 = vpop.permute.xlu0 %7260
  %7262 = vrot.lane.b32.xlu0 %v5285, 64
  %v7263 = vpop.permute.xlu0 %7262
  %7264 = vrot.lane.b32.xlu0 %v5286, 64
  %v7265 = vpop.permute.xlu0 %7264
  %7266 = vrot.lane.b32.xlu0 %v5287, 64
  %v7267 = vpop.permute.xlu0 %7266
  %7268 = vrot.lane.b32.xlu0 %v5288, 64
  %v7269 = vpop.permute.xlu0 %7268
  %7270 = vrot.lane.b32.xlu0 %v5289, 64
  %v7271 = vpop.permute.xlu0 %7270
  %7272 = vrot.lane.b32.xlu0 %v5290, 64
  %v7273 = vpop.permute.xlu0 %7272
  %7274 = vrot.lane.b32.xlu0 %v5291, 64
  %v7275 = vpop.permute.xlu0 %7274
  %v7340 = vsel %vm2954, %v4715, %v5357
  %v7341 = vsel %vm2954, %v4716, %v5359
  %v7342 = vsel %vm2954, %v4717, %v5361
  %v7343 = vsel %vm2954, %v4718, %v5363
  %v7344 = vsel %vm2954, %v4719, %v5365
  %v7345 = vsel %vm2954, %v4720, %v5367
  %v7346 = vsel %vm2954, %v4721, %v5369
  %v7347 = vsel %vm2954, %v4722, %v5371
  %v7348 = vsel %vm2954, %v4723, %v5373
  %v7349 = vsel %vm2954, %v4724, %v5375
  %v7350 = vsel %vm2954, %v4725, %v5377
  %v7351 = vsel %vm2954, %v4726, %v5379
  %v7352 = vsel %vm2954, %v4727, %v5381
  %v7353 = vsel %vm2954, %v4728, %v5383
  %v7354 = vsel %vm2954, %v4729, %v5385
  %v7355 = vsel %vm2954, %v4730, %v5387
  %v7356 = vsel %vm2954, %v4731, %v5389
  %v7357 = vsel %vm2954, %v4732, %v5391
  %v7358 = vsel %vm2954, %v4733, %v5393
  %v7359 = vsel %vm2954, %v4734, %v5395
  %v7360 = vsel %vm2954, %v4735, %v5397
  %v7361 = vsel %vm2954, %v4736, %v5399
  %v7362 = vsel %vm2954, %v4737, %v5401
  %v7363 = vsel %vm2954, %v4738, %v5403
  %v7364 = vsel %vm2954, %v4739, %v5405
  %v7365 = vsel %vm2954, %v4740, %v5407
  %v7366 = vsel %vm2954, %v4741, %v5409
  %v7367 = vsel %vm2954, %v4742, %v5411
  %v7368 = vsel %vm2954, %v4743, %v5413
  %v7369 = vsel %vm2954, %v4744, %v5415
  %v7370 = vsel %vm2954, %v4745, %v5417
  %v7371 = vsel %vm2954, %v4746, %v5419
  %v7372 = vsel %vm2954, %v4747, %v5421
  %v7373 = vsel %vm2954, %v4748, %v5423
  %v7374 = vsel %vm2954, %v4749, %v5425
  %v7375 = vsel %vm2954, %v4750, %v5427
  %v7376 = vsel %vm2954, %v4751, %v5429
  %v7377 = vsel %vm2954, %v4752, %v5431
  %v7378 = vsel %vm2954, %v4753, %v5433
  %v7379 = vsel %vm2954, %v4754, %v5435
  %v7380 = vsel %vm2954, %v4755, %v5437
  %v7381 = vsel %vm2954, %v4756, %v5439
  %v7382 = vsel %vm2954, %v4757, %v5441
  %v7383 = vsel %vm2954, %v4758, %v5443
  %v7384 = vsel %vm2954, %v4759, %v5445
  %v7385 = vsel %vm2954, %v4760, %v5447
  %v7386 = vsel %vm2954, %v4761, %v5449
  %v7387 = vsel %vm2954, %v4762, %v5451
  %v7388 = vsel %vm2954, %v4763, %v5453
  %v7389 = vsel %vm2954, %v4764, %v5455
  %v7390 = vsel %vm2954, %v4765, %v5457
  %v7391 = vsel %vm2954, %v4766, %v5459
  %v7392 = vsel %vm2954, %v4767, %v5461
  %v7393 = vsel %vm2954, %v4768, %v5463
  %v7394 = vsel %vm2954, %v4769, %v5465
  %v7395 = vsel %vm2954, %v4770, %v5467
  %v7396 = vsel %vm2954, %v4771, %v5469
  %v7397 = vsel %vm2954, %v4772, %v5471
  %v7398 = vsel %vm2954, %v4773, %v5473
  %v7399 = vsel %vm2954, %v4774, %v5475
  %v7400 = vsel %vm2954, %v4775, %v5477
  %v7401 = vsel %vm2954, %v4776, %v5479
  %v7402 = vsel %vm2954, %v4777, %v5481
  %v7403 = vsel %vm2954, %v4778, %v5483
  %v7404 = vsel %vm3084, %v7340, %v5613
  %v7405 = vsel %vm3084, %v7341, %v5615
  %v7406 = vsel %vm3084, %v7342, %v5617
  %v7407 = vsel %vm3084, %v7343, %v5619
  %v7408 = vsel %vm3084, %v7344, %v5621
  %v7409 = vsel %vm3084, %v7345, %v5623
  %v7410 = vsel %vm3084, %v7346, %v5625
  %v7411 = vsel %vm3084, %v7347, %v5627
  %v7412 = vsel %vm3084, %v7348, %v5629
  %v7413 = vsel %vm3084, %v7349, %v5631
  %v7414 = vsel %vm3084, %v7350, %v5633
  %v7415 = vsel %vm3084, %v7351, %v5635
  %v7416 = vsel %vm3084, %v7352, %v5637
  %v7417 = vsel %vm3084, %v7353, %v5639
  %v7418 = vsel %vm3084, %v7354, %v5641
  %v7419 = vsel %vm3084, %v7355, %v5643
  %v7420 = vsel %vm3084, %v7356, %v5645
  %v7421 = vsel %vm3084, %v7357, %v5647
  %v7422 = vsel %vm3084, %v7358, %v5649
  %v7423 = vsel %vm3084, %v7359, %v5651
  %v7424 = vsel %vm3084, %v7360, %v5653
  %v7425 = vsel %vm3084, %v7361, %v5655
  %v7426 = vsel %vm3084, %v7362, %v5657
  %v7427 = vsel %vm3084, %v7363, %v5659
  %v7428 = vsel %vm3084, %v7364, %v5661
  %v7429 = vsel %vm3084, %v7365, %v5663
  %v7430 = vsel %vm3084, %v7366, %v5665
  %v7431 = vsel %vm3084, %v7367, %v5667
  %v7432 = vsel %vm3084, %v7368, %v5669
  %v7433 = vsel %vm3084, %v7369, %v5671
  %v7434 = vsel %vm3084, %v7370, %v5673
  %v7435 = vsel %vm3084, %v7371, %v5675
  %v7436 = vsel %vm3084, %v7372, %v5677
  %v7437 = vsel %vm3084, %v7373, %v5679
  %v7438 = vsel %vm3084, %v7374, %v5681
  %v7439 = vsel %vm3084, %v7375, %v5683
  %v7440 = vsel %vm3084, %v7376, %v5685
  %v7441 = vsel %vm3084, %v7377, %v5687
  %v7442 = vsel %vm3084, %v7378, %v5689
  %v7443 = vsel %vm3084, %v7379, %v5691
  %v7444 = vsel %vm3084, %v7380, %v5693
  %v7445 = vsel %vm3084, %v7381, %v5695
  %v7446 = vsel %vm3084, %v7382, %v5697
  %v7447 = vsel %vm3084, %v7383, %v5699
  %v7448 = vsel %vm3084, %v7384, %v5701
  %v7449 = vsel %vm3084, %v7385, %v5703
  %v7450 = vsel %vm3084, %v7386, %v5705
  %v7451 = vsel %vm3084, %v7387, %v5707
  %v7452 = vsel %vm3084, %v7388, %v5709
  %v7453 = vsel %vm3084, %v7389, %v5711
  %v7454 = vsel %vm3084, %v7390, %v5713
  %v7455 = vsel %vm3084, %v7391, %v5715
  %v7456 = vsel %vm3084, %v7392, %v5717
  %v7457 = vsel %vm3084, %v7393, %v5719
  %v7458 = vsel %vm3084, %v7394, %v5721
  %v7459 = vsel %vm3084, %v7395, %v5723
  %v7460 = vsel %vm3084, %v7396, %v5725
  %v7461 = vsel %vm3084, %v7397, %v5727
  %v7462 = vsel %vm3084, %v7398, %v5729
  %v7463 = vsel %vm3084, %v7399, %v5731
  %v7464 = vsel %vm3084, %v7400, %v5733
  %v7465 = vsel %vm3084, %v7401, %v5735
  %v7466 = vsel %vm3084, %v7402, %v5737
  %v7467 = vsel %vm3084, %v7403, %v5739
  %v7468 = vsel %vm3214, %v7404, %v5869
  %v7469 = vsel %vm3214, %v7405, %v5871
  %v7470 = vsel %vm3214, %v7406, %v5873
  %v7471 = vsel %vm3214, %v7407, %v5875
  %v7472 = vsel %vm3214, %v7408, %v5877
  %v7473 = vsel %vm3214, %v7409, %v5879
  %v7474 = vsel %vm3214, %v7410, %v5881
  %v7475 = vsel %vm3214, %v7411, %v5883
  %v7476 = vsel %vm3214, %v7412, %v5885
  %v7477 = vsel %vm3214, %v7413, %v5887
  %v7478 = vsel %vm3214, %v7414, %v5889
  %v7479 = vsel %vm3214, %v7415, %v5891
  %v7480 = vsel %vm3214, %v7416, %v5893
  %v7481 = vsel %vm3214, %v7417, %v5895
  %v7482 = vsel %vm3214, %v7418, %v5897
  %v7483 = vsel %vm3214, %v7419, %v5899
  %v7484 = vsel %vm3214, %v7420, %v5901
  %v7485 = vsel %vm3214, %v7421, %v5903
  %v7486 = vsel %vm3214, %v7422, %v5905
  %v7487 = vsel %vm3214, %v7423, %v5907
  %v7488 = vsel %vm3214, %v7424, %v5909
  %v7489 = vsel %vm3214, %v7425, %v5911
  %v7490 = vsel %vm3214, %v7426, %v5913
  %v7491 = vsel %vm3214, %v7427, %v5915
  %v7492 = vsel %vm3214, %v7428, %v5917
  %v7493 = vsel %vm3214, %v7429, %v5919
  %v7494 = vsel %vm3214, %v7430, %v5921
  %v7495 = vsel %vm3214, %v7431, %v5923
  %v7496 = vsel %vm3214, %v7432, %v5925
  %v7497 = vsel %vm3214, %v7433, %v5927
  %v7498 = vsel %vm3214, %v7434, %v5929
  %v7499 = vsel %vm3214, %v7435, %v5931
  %v7500 = vsel %vm3214, %v7436, %v5933
  %v7501 = vsel %vm3214, %v7437, %v5935
  %v7502 = vsel %vm3214, %v7438, %v5937
  %v7503 = vsel %vm3214, %v7439, %v5939
  %v7504 = vsel %vm3214, %v7440, %v5941
  %v7505 = vsel %vm3214, %v7441, %v5943
  %v7506 = vsel %vm3214, %v7442, %v5945
  %v7507 = vsel %vm3214, %v7443, %v5947
  %v7508 = vsel %vm3214, %v7444, %v5949
  %v7509 = vsel %vm3214, %v7445, %v5951
  %v7510 = vsel %vm3214, %v7446, %v5953
  %v7511 = vsel %vm3214, %v7447, %v5955
  %v7512 = vsel %vm3214, %v7448, %v5957
  %v7513 = vsel %vm3214, %v7449, %v5959
  %v7514 = vsel %vm3214, %v7450, %v5961
  %v7515 = vsel %vm3214, %v7451, %v5963
  %v7516 = vsel %vm3214, %v7452, %v5965
  %v7517 = vsel %vm3214, %v7453, %v5967
  %v7518 = vsel %vm3214, %v7454, %v5969
  %v7519 = vsel %vm3214, %v7455, %v5971
  %v7520 = vsel %vm3214, %v7456, %v5973
  %v7521 = vsel %vm3214, %v7457, %v5975
  %v7522 = vsel %vm3214, %v7458, %v5977
  %v7523 = vsel %vm3214, %v7459, %v5979
  %v7524 = vsel %vm3214, %v7460, %v5981
  %v7525 = vsel %vm3214, %v7461, %v5983
  %v7526 = vsel %vm3214, %v7462, %v5985
  %v7527 = vsel %vm3214, %v7463, %v5987
  %v7528 = vsel %vm3214, %v7464, %v5989
  %v7529 = vsel %vm3214, %v7465, %v5991
  %v7530 = vsel %vm3214, %v7466, %v5993
  %v7531 = vsel %vm3214, %v7467, %v5995
  %v7532 = vsel %vm3344, %v7468, %v6125
  %v7533 = vsel %vm3344, %v7469, %v6127
  %v7534 = vsel %vm3344, %v7470, %v6129
  %v7535 = vsel %vm3344, %v7471, %v6131
  %v7536 = vsel %vm3344, %v7472, %v6133
  %v7537 = vsel %vm3344, %v7473, %v6135
  %v7538 = vsel %vm3344, %v7474, %v6137
  %v7539 = vsel %vm3344, %v7475, %v6139
  %v7540 = vsel %vm3344, %v7476, %v6141
  %v7541 = vsel %vm3344, %v7477, %v6143
  %v7542 = vsel %vm3344, %v7478, %v6145
  %v7543 = vsel %vm3344, %v7479, %v6147
  %v7544 = vsel %vm3344, %v7480, %v6149
  %v7545 = vsel %vm3344, %v7481, %v6151
  %v7546 = vsel %vm3344, %v7482, %v6153
  %v7547 = vsel %vm3344, %v7483, %v6155
  %v7548 = vsel %vm3344, %v7484, %v6157
  %v7549 = vsel %vm3344, %v7485, %v6159
  %v7550 = vsel %vm3344, %v7486, %v6161
  %v7551 = vsel %vm3344, %v7487, %v6163
  %v7552 = vsel %vm3344, %v7488, %v6165
  %v7553 = vsel %vm3344, %v7489, %v6167
  %v7554 = vsel %vm3344, %v7490, %v6169
  %v7555 = vsel %vm3344, %v7491, %v6171
  %v7556 = vsel %vm3344, %v7492, %v6173
  %v7557 = vsel %vm3344, %v7493, %v6175
  %v7558 = vsel %vm3344, %v7494, %v6177
  %v7559 = vsel %vm3344, %v7495, %v6179
  %v7560 = vsel %vm3344, %v7496, %v6181
  %v7561 = vsel %vm3344, %v7497, %v6183
  %v7562 = vsel %vm3344, %v7498, %v6185
  %v7563 = vsel %vm3344, %v7499, %v6187
  %v7564 = vsel %vm3344, %v7500, %v6189
  %v7565 = vsel %vm3344, %v7501, %v6191
  %v7566 = vsel %vm3344, %v7502, %v6193
  %v7567 = vsel %vm3344, %v7503, %v6195
  %v7568 = vsel %vm3344, %v7504, %v6197
  %v7569 = vsel %vm3344, %v7505, %v6199
  %v7570 = vsel %vm3344, %v7506, %v6201
  %v7571 = vsel %vm3344, %v7507, %v6203
  %v7572 = vsel %vm3344, %v7508, %v6205
  %v7573 = vsel %vm3344, %v7509, %v6207
  %v7574 = vsel %vm3344, %v7510, %v6209
  %v7575 = vsel %vm3344, %v7511, %v6211
  %v7576 = vsel %vm3344, %v7512, %v6213
  %v7577 = vsel %vm3344, %v7513, %v6215
  %v7578 = vsel %vm3344, %v7514, %v6217
  %v7579 = vsel %vm3344, %v7515, %v6219
  %v7580 = vsel %vm3344, %v7516, %v6221
  %v7581 = vsel %vm3344, %v7517, %v6223
  %v7582 = vsel %vm3344, %v7518, %v6225
  %v7583 = vsel %vm3344, %v7519, %v6227
  %v7584 = vsel %vm3344, %v7520, %v6229
  %v7585 = vsel %vm3344, %v7521, %v6231
  %v7586 = vsel %vm3344, %v7522, %v6233
  %v7587 = vsel %vm3344, %v7523, %v6235
  %v7588 = vsel %vm3344, %v7524, %v6237
  %v7589 = vsel %vm3344, %v7525, %v6239
  %v7590 = vsel %vm3344, %v7526, %v6241
  %v7591 = vsel %vm3344, %v7527, %v6243
  %v7592 = vsel %vm3344, %v7528, %v6245
  %v7593 = vsel %vm3344, %v7529, %v6247
  %v7594 = vsel %vm3344, %v7530, %v6249
  %v7595 = vsel %vm3344, %v7531, %v6251
  %vm7596 = vcmask 326656
  %v7597 = vsel %vm7596, %v7532, %v6381
  %v7598 = vsel %vm7596, %v7533, %v6383
  %v7599 = vsel %vm7596, %v7534, %v6385
  %v7600 = vsel %vm7596, %v7535, %v6387
  %v7601 = vsel %vm7596, %v7536, %v6389
  %v7602 = vsel %vm7596, %v7537, %v6391
  %v7603 = vsel %vm7596, %v7538, %v6393
  %v7604 = vsel %vm7596, %v7539, %v6395
  %v7605 = vsel %vm7596, %v7540, %v6397
  %v7606 = vsel %vm7596, %v7541, %v6399
  %v7607 = vsel %vm7596, %v7542, %v6401
  %v7608 = vsel %vm7596, %v7543, %v6403
  %v7609 = vsel %vm7596, %v7544, %v6405
  %v7610 = vsel %vm7596, %v7545, %v6407
  %v7611 = vsel %vm7596, %v7546, %v6409
  %v7612 = vsel %vm7596, %v7547, %v6411
  %v7613 = vsel %vm7596, %v7548, %v6413
  %v7614 = vsel %vm7596, %v7549, %v6415
  %v7615 = vsel %vm7596, %v7550, %v6417
  %v7616 = vsel %vm7596, %v7551, %v6419
  %v7617 = vsel %vm7596, %v7552, %v6421
  %v7618 = vsel %vm7596, %v7553, %v6423
  %v7619 = vsel %vm7596, %v7554, %v6425
  %v7620 = vsel %vm7596, %v7555, %v6427
  %v7621 = vsel %vm7596, %v7556, %v6429
  %v7622 = vsel %vm7596, %v7557, %v6431
  %v7623 = vsel %vm7596, %v7558, %v6433
  %v7624 = vsel %vm7596, %v7559, %v6435
  %v7625 = vsel %vm7596, %v7560, %v6437
  %v7626 = vsel %vm7596, %v7561, %v6439
  %v7627 = vsel %vm7596, %v7562, %v6441
  %v7628 = vsel %vm7596, %v7563, %v6443
  %v7629 = vsel %vm7596, %v7564, %v6445
  %v7630 = vsel %vm7596, %v7565, %v6447
  %v7631 = vsel %vm7596, %v7566, %v6449
  %v7632 = vsel %vm7596, %v7567, %v6451
  %v7633 = vsel %vm7596, %v7568, %v6453
  %v7634 = vsel %vm7596, %v7569, %v6455
  %v7635 = vsel %vm7596, %v7570, %v6457
  %v7636 = vsel %vm7596, %v7571, %v6459
  %v7637 = vsel %vm7596, %v7572, %v6461
  %v7638 = vsel %vm7596, %v7573, %v6463
  %v7639 = vsel %vm7596, %v7574, %v6465
  %v7640 = vsel %vm7596, %v7575, %v6467
  %v7641 = vsel %vm7596, %v7576, %v6469
  %v7642 = vsel %vm7596, %v7577, %v6471
  %v7643 = vsel %vm7596, %v7578, %v6473
  %v7644 = vsel %vm7596, %v7579, %v6475
  %v7645 = vsel %vm7596, %v7580, %v6477
  %v7646 = vsel %vm7596, %v7581, %v6479
  %v7647 = vsel %vm7596, %v7582, %v6481
  %v7648 = vsel %vm7596, %v7583, %v6483
  %v7649 = vsel %vm7596, %v7584, %v6485
  %v7650 = vsel %vm7596, %v7585, %v6487
  %v7651 = vsel %vm7596, %v7586, %v6489
  %v7652 = vsel %vm7596, %v7587, %v6491
  %v7653 = vsel %vm7596, %v7588, %v6493
  %v7654 = vsel %vm7596, %v7589, %v6495
  %v7655 = vsel %vm7596, %v7590, %v6497
  %v7656 = vsel %vm7596, %v7591, %v6499
  %v7657 = vsel %vm7596, %v7592, %v6501
  %v7658 = vsel %vm7596, %v7593, %v6503
  %v7659 = vsel %vm7596, %v7594, %v6505
  %v7660 = vsel %vm7596, %v7595, %v6507
  %vm7661 = vcmask 392192
  %v7662 = vsel %vm7661, %v7597, %v6637
  %v7663 = vsel %vm7661, %v7598, %v6639
  %v7664 = vsel %vm7661, %v7599, %v6641
  %v7665 = vsel %vm7661, %v7600, %v6643
  %v7666 = vsel %vm7661, %v7601, %v6645
  %v7667 = vsel %vm7661, %v7602, %v6647
  %v7668 = vsel %vm7661, %v7603, %v6649
  %v7669 = vsel %vm7661, %v7604, %v6651
  %v7670 = vsel %vm7661, %v7605, %v6653
  %v7671 = vsel %vm7661, %v7606, %v6655
  %v7672 = vsel %vm7661, %v7607, %v6657
  %v7673 = vsel %vm7661, %v7608, %v6659
  %v7674 = vsel %vm7661, %v7609, %v6661
  %v7675 = vsel %vm7661, %v7610, %v6663
  %v7676 = vsel %vm7661, %v7611, %v6665
  %v7677 = vsel %vm7661, %v7612, %v6667
  %v7678 = vsel %vm7661, %v7613, %v6669
  %v7679 = vsel %vm7661, %v7614, %v6671
  %v7680 = vsel %vm7661, %v7615, %v6673
  %v7681 = vsel %vm7661, %v7616, %v6675
  %v7682 = vsel %vm7661, %v7617, %v6677
  %v7683 = vsel %vm7661, %v7618, %v6679
  %v7684 = vsel %vm7661, %v7619, %v6681
  %v7685 = vsel %vm7661, %v7620, %v6683
  %v7686 = vsel %vm7661, %v7621, %v6685
  %v7687 = vsel %vm7661, %v7622, %v6687
  %v7688 = vsel %vm7661, %v7623, %v6689
  %v7689 = vsel %vm7661, %v7624, %v6691
  %v7690 = vsel %vm7661, %v7625, %v6693
  %v7691 = vsel %vm7661, %v7626, %v6695
  %v7692 = vsel %vm7661, %v7627, %v6697
  %v7693 = vsel %vm7661, %v7628, %v6699
  %v7694 = vsel %vm7661, %v7629, %v6701
  %v7695 = vsel %vm7661, %v7630, %v6703
  %v7696 = vsel %vm7661, %v7631, %v6705
  %v7697 = vsel %vm7661, %v7632, %v6707
  %v7698 = vsel %vm7661, %v7633, %v6709
  %v7699 = vsel %vm7661, %v7634, %v6711
  %v7700 = vsel %vm7661, %v7635, %v6713
  %v7701 = vsel %vm7661, %v7636, %v6715
  %v7702 = vsel %vm7661, %v7637, %v6717
  %v7703 = vsel %vm7661, %v7638, %v6719
  %v7704 = vsel %vm7661, %v7639, %v6721
  %v7705 = vsel %vm7661, %v7640, %v6723
  %v7706 = vsel %vm7661, %v7641, %v6725
  %v7707 = vsel %vm7661, %v7642, %v6727
  %v7708 = vsel %vm7661, %v7643, %v6729
  %v7709 = vsel %vm7661, %v7644, %v6731
  %v7710 = vsel %vm7661, %v7645, %v6733
  %v7711 = vsel %vm7661, %v7646, %v6735
  %v7712 = vsel %vm7661, %v7647, %v6737
  %v7713 = vsel %vm7661, %v7648, %v6739
  %v7714 = vsel %vm7661, %v7649, %v6741
  %v7715 = vsel %vm7661, %v7650, %v6743
  %v7716 = vsel %vm7661, %v7651, %v6745
  %v7717 = vsel %vm7661, %v7652, %v6747
  %v7718 = vsel %vm7661, %v7653, %v6749
  %v7719 = vsel %vm7661, %v7654, %v6751
  %v7720 = vsel %vm7661, %v7655, %v6753
  %v7721 = vsel %vm7661, %v7656, %v6755
  %v7722 = vsel %vm7661, %v7657, %v6757
  %v7723 = vsel %vm7661, %v7658, %v6759
  %v7724 = vsel %vm7661, %v7659, %v6761
  %v7725 = vsel %vm7661, %v7660, %v6763
  %vm7726 = vcmask 457728
  %v7727 = vsel %vm7726, %v7662, %v6893
  %v7728 = vsel %vm7726, %v7663, %v6895
  %v7729 = vsel %vm7726, %v7664, %v6897
  %v7730 = vsel %vm7726, %v7665, %v6899
  %v7731 = vsel %vm7726, %v7666, %v6901
  %v7732 = vsel %vm7726, %v7667, %v6903
  %v7733 = vsel %vm7726, %v7668, %v6905
  %v7734 = vsel %vm7726, %v7669, %v6907
  %v7735 = vsel %vm7726, %v7670, %v6909
  %v7736 = vsel %vm7726, %v7671, %v6911
  %v7737 = vsel %vm7726, %v7672, %v6913
  %v7738 = vsel %vm7726, %v7673, %v6915
  %v7739 = vsel %vm7726, %v7674, %v6917
  %v7740 = vsel %vm7726, %v7675, %v6919
  %v7741 = vsel %vm7726, %v7676, %v6921
  %v7742 = vsel %vm7726, %v7677, %v6923
  %v7743 = vsel %vm7726, %v7678, %v6925
  %v7744 = vsel %vm7726, %v7679, %v6927
  %v7745 = vsel %vm7726, %v7680, %v6929
  %v7746 = vsel %vm7726, %v7681, %v6931
  %v7747 = vsel %vm7726, %v7682, %v6933
  %v7748 = vsel %vm7726, %v7683, %v6935
  %v7749 = vsel %vm7726, %v7684, %v6937
  %v7750 = vsel %vm7726, %v7685, %v6939
  %v7751 = vsel %vm7726, %v7686, %v6941
  %v7752 = vsel %vm7726, %v7687, %v6943
  %v7753 = vsel %vm7726, %v7688, %v6945
  %v7754 = vsel %vm7726, %v7689, %v6947
  %v7755 = vsel %vm7726, %v7690, %v6949
  %v7756 = vsel %vm7726, %v7691, %v6951
  %v7757 = vsel %vm7726, %v7692, %v6953
  %v7758 = vsel %vm7726, %v7693, %v6955
  %v7759 = vsel %vm7726, %v7694, %v6957
  %v7760 = vsel %vm7726, %v7695, %v6959
  %v7761 = vsel %vm7726, %v7696, %v6961
  %v7762 = vsel %vm7726, %v7697, %v6963
  %v7763 = vsel %vm7726, %v7698, %v6965
  %v7764 = vsel %vm7726, %v7699, %v6967
  %v7765 = vsel %vm7726, %v7700, %v6969
  %v7766 = vsel %vm7726, %v7701, %v6971
  %v7767 = vsel %vm7726, %v7702, %v6973
  %v7768 = vsel %vm7726, %v7703, %v6975
  %v7769 = vsel %vm7726, %v7704, %v6977
  %v7770 = vsel %vm7726, %v7705, %v6979
  %v7771 = vsel %vm7726, %v7706, %v6981
  %v7772 = vsel %vm7726, %v7707, %v6983
  %v7773 = vsel %vm7726, %v7708, %v6985
  %v7774 = vsel %vm7726, %v7709, %v6987
  %v7775 = vsel %vm7726, %v7710, %v6989
  %v7776 = vsel %vm7726, %v7711, %v6991
  %v7777 = vsel %vm7726, %v7712, %v6993
  %v7778 = vsel %vm7726, %v7713, %v6995
  %v7779 = vsel %vm7726, %v7714, %v6997
  %v7780 = vsel %vm7726, %v7715, %v6999
  %v7781 = vsel %vm7726, %v7716, %v7001
  %v7782 = vsel %vm7726, %v7717, %v7003
  %v7783 = vsel %vm7726, %v7718, %v7005
  %v7784 = vsel %vm7726, %v7719, %v7007
  %v7785 = vsel %vm7726, %v7720, %v7009
  %v7786 = vsel %vm7726, %v7721, %v7011
  %v7787 = vsel %vm7726, %v7722, %v7013
  %v7788 = vsel %vm7726, %v7723, %v7015
  %v7789 = vsel %vm7726, %v7724, %v7017
  %v7790 = vsel %vm7726, %v7725, %v7019
  %vm7791 = vcmask 523264
  %v7792 = vsel %vm7791, %v7727, %v7149
  %v7793 = vsel %vm7791, %v7728, %v7151
  %v7794 = vsel %vm7791, %v7729, %v7153
  %v7795 = vsel %vm7791, %v7730, %v7155
  %v7796 = vsel %vm7791, %v7731, %v7157
  %v7797 = vsel %vm7791, %v7732, %v7159
  %v7798 = vsel %vm7791, %v7733, %v7161
  %v7799 = vsel %vm7791, %v7734, %v7163
  %v7800 = vsel %vm7791, %v7735, %v7165
  %v7801 = vsel %vm7791, %v7736, %v7167
  %v7802 = vsel %vm7791, %v7737, %v7169
  %v7803 = vsel %vm7791, %v7738, %v7171
  %v7804 = vsel %vm7791, %v7739, %v7173
  %v7805 = vsel %vm7791, %v7740, %v7175
  %v7806 = vsel %vm7791, %v7741, %v7177
  %v7807 = vsel %vm7791, %v7742, %v7179
  %v7808 = vsel %vm7791, %v7743, %v7181
  %v7809 = vsel %vm7791, %v7744, %v7183
  %v7810 = vsel %vm7791, %v7745, %v7185
  %v7811 = vsel %vm7791, %v7746, %v7187
  %v7812 = vsel %vm7791, %v7747, %v7189
  %v7813 = vsel %vm7791, %v7748, %v7191
  %v7814 = vsel %vm7791, %v7749, %v7193
  %v7815 = vsel %vm7791, %v7750, %v7195
  %v7816 = vsel %vm7791, %v7751, %v7197
  %v7817 = vsel %vm7791, %v7752, %v7199
  %v7818 = vsel %vm7791, %v7753, %v7201
  %v7819 = vsel %vm7791, %v7754, %v7203
  %v7820 = vsel %vm7791, %v7755, %v7205
  %v7821 = vsel %vm7791, %v7756, %v7207
  %v7822 = vsel %vm7791, %v7757, %v7209
  %v7823 = vsel %vm7791, %v7758, %v7211
  %v7824 = vsel %vm7791, %v7759, %v7213
  %v7825 = vsel %vm7791, %v7760, %v7215
  %v7826 = vsel %vm7791, %v7761, %v7217
  %v7827 = vsel %vm7791, %v7762, %v7219
  %v7828 = vsel %vm7791, %v7763, %v7221
  %v7829 = vsel %vm7791, %v7764, %v7223
  %v7830 = vsel %vm7791, %v7765, %v7225
  %v7831 = vsel %vm7791, %v7766, %v7227
  %v7832 = vsel %vm7791, %v7767, %v7229
  %v7833 = vsel %vm7791, %v7768, %v7231
  %v7834 = vsel %vm7791, %v7769, %v7233
  %v7835 = vsel %vm7791, %v7770, %v7235
  %v7836 = vsel %vm7791, %v7771, %v7237
  %v7837 = vsel %vm7791, %v7772, %v7239
  %v7838 = vsel %vm7791, %v7773, %v7241
  %v7839 = vsel %vm7791, %v7774, %v7243
  %v7840 = vsel %vm7791, %v7775, %v7245
  %v7841 = vsel %vm7791, %v7776, %v7247
  %v7842 = vsel %vm7791, %v7777, %v7249
  %v7843 = vsel %vm7791, %v7778, %v7251
  %v7844 = vsel %vm7791, %v7779, %v7253
  %v7845 = vsel %vm7791, %v7780, %v7255
  %v7846 = vsel %vm7791, %v7781, %v7257
  %v7847 = vsel %vm7791, %v7782, %v7259
  %v7848 = vsel %vm7791, %v7783, %v7261
  %v7849 = vsel %vm7791, %v7784, %v7263
  %v7850 = vsel %vm7791, %v7785, %v7265
  %v7851 = vsel %vm7791, %v7786, %v7267
  %v7852 = vsel %vm7791, %v7787, %v7269
  %v7853 = vsel %vm7791, %v7788, %v7271
  %v7854 = vsel %vm7791, %v7789, %v7273
  %v7855 = vsel %vm7791, %v7790, %v7275
  %v7856 = vld [vmem:[%s4] sm:$0xff]
  %v7857 = vld [vmem:[%s4 + $0x8] sm:$0xff]
  %v7858 = vld [vmem:[%s4 + $0x10] sm:$0xff]
  %v7859 = vld [vmem:[%s4 + $0x18] sm:$0xff]
  %v7860 = vld [vmem:[%s4 + $0x20] sm:$0xff]
  %v7861 = vld [vmem:[%s4 + $0x28] sm:$0xff]
  %v7862 = vld [vmem:[%s4 + $0x30] sm:$0xff]
  %v7863 = vld [vmem:[%s4 + $0x38] sm:$0xff]
  %v7864 = vld [vmem:[%s4 + $0x40] sm:$0xff]
  %vm7865 = vcmask 588800
  %v7867 = vsel %vm7865, %v7792, 0
  %v7870 = vsel %vm7865, %v7793, 0
  %v7873 = vsel %vm7865, %v7794, 0
  %v7876 = vsel %vm7865, %v7795, 0
  %v7879 = vsel %vm7865, %v7796, 0
  %v7882 = vsel %vm7865, %v7797, 0
  %v7885 = vsel %vm7865, %v7798, 0
  %v7888 = vsel %vm7865, %v7799, 0
  %v7891 = vsel %vm7865, %v7800, 0
  %v7894 = vsel %vm7865, %v7801, 0
  %v7897 = vsel %vm7865, %v7802, 0
  %v7900 = vsel %vm7865, %v7803, 0
  %v7903 = vsel %vm7865, %v7804, 0
  %v7906 = vsel %vm7865, %v7805, 0
  %v7909 = vsel %vm7865, %v7806, 0
  %v7912 = vsel %vm7865, %v7807, 0
  %v7915 = vsel %vm7865, %v7808, 0
  %v7918 = vsel %vm7865, %v7809, 0
  %v7921 = vsel %vm7865, %v7810, 0
  %v7924 = vsel %vm7865, %v7811, 0
  %v7927 = vsel %vm7865, %v7812, 0
  %v7930 = vsel %vm7865, %v7813, 0
  %v7933 = vsel %vm7865, %v7814, 0
  %v7936 = vsel %vm7865, %v7815, 0
  %v7939 = vsel %vm7865, %v7816, 0
  %v7942 = vsel %vm7865, %v7817, 0
  %v7945 = vsel %vm7865, %v7818, 0
  %v7948 = vsel %vm7865, %v7819, 0
  %v7951 = vsel %vm7865, %v7820, 0
  %v7954 = vsel %vm7865, %v7821, 0
  %v7957 = vsel %vm7865, %v7822, 0
  %v7960 = vsel %vm7865, %v7823, 0
  %v7963 = vsel %vm7865, %v7824, 0
  %v7966 = vsel %vm7865, %v7825, 0
  %v7969 = vsel %vm7865, %v7826, 0
  %v7972 = vsel %vm7865, %v7827, 0
  %v7975 = vsel %vm7865, %v7828, 0
  %v7978 = vsel %vm7865, %v7829, 0
  %v7981 = vsel %vm7865, %v7830, 0
  %v7984 = vsel %vm7865, %v7831, 0
  %v7987 = vsel %vm7865, %v7832, 0
  %v7990 = vsel %vm7865, %v7833, 0
  %v7993 = vsel %vm7865, %v7834, 0
  %v7996 = vsel %vm7865, %v7835, 0
  %v7999 = vsel %vm7865, %v7836, 0
  %v8002 = vsel %vm7865, %v7837, 0
  %v8005 = vsel %vm7865, %v7838, 0
  %v8008 = vsel %vm7865, %v7839, 0
  %v8011 = vsel %vm7865, %v7840, 0
  %v8014 = vsel %vm7865, %v7841, 0
  %v8017 = vsel %vm7865, %v7842, 0
  %v8020 = vsel %vm7865, %v7843, 0
  %v8023 = vsel %vm7865, %v7844, 0
  %v8026 = vsel %vm7865, %v7845, 0
  %v8029 = vsel %vm7865, %v7846, 0
  %v8032 = vsel %vm7865, %v7847, 0
  %v8035 = vsel %vm7865, %v7848, 0
  %v8038 = vsel %vm7865, %v7849, 0
  %v8041 = vsel %vm7865, %v7850, 0
  %v8044 = vsel %vm7865, %v7851, 0
  %v8047 = vsel %vm7865, %v7852, 0
  %v8050 = vsel %vm7865, %v7853, 0
  %v8053 = vsel %vm7865, %v7854, 0
  %v8056 = vsel %vm7865, %v7855, 0
  %8058 = vmatprep.subr.mxu0 0.0
  %8059 = vmatpush1.msra.mxu0 %v7856
  %8060 = vmatprep.subr.mxu0 0.0
  %8061 = vmatpush1.msra.mxu0 %v7857
  %8062 = vmatprep.subr.mxu0 0.0
  %8063 = vmatpush1.msra.mxu0 %v7858
  %8064 = vmatprep.subr.mxu0 0.0
  %8065 = vmatpush1.msra.mxu0 %v7859
  %8066 = vmatprep.subr.mxu0 0.0
  %8067 = vmatpush1.msra.mxu0 %v7860
  %8068 = vmatprep.subr.mxu0 0.0
  %8069 = vmatpush1.msra.mxu0 %v7861
  %8070 = vmatprep.subr.mxu0 0.0
  %8071 = vmatpush1.msra.mxu0 %v7862
  %8072 = vmatprep.subr.mxu0 0.0
  %8073 = vmatpush1.msra.mxu0 %v7863
  %8074 = vmatprep.subr.mxu0 0.0
  %8075 = vmatpush1.msra.mxu0 %v7864
  %8076 = vmatprep.subr.mxu0 0.0
  %8077 = vmatpush1.msra.mxu0 0.0
  %8078 = vmatprep.subr.mxu0 0.0
  %8079 = vmatpush1.msra.mxu0 0.0
  %8080 = vmatprep.subr.mxu0 0.0
  %8081 = vmatpush1.msra.mxu0 0.0
  %8082 = vmatprep.subr.mxu0 0.0
  %8083 = vmatpush1.msra.mxu0 0.0
  %8084 = vmatprep.subr.mxu0 0.0
  %8085 = vmatpush1.msra.mxu0 0.0
  %8086 = vmatprep.subr.mxu0 0.0
  %8087 = vmatpush1.msra.mxu0 0.0
  %8088 = vmatprep.subr.mxu0 0.0
  %8089 = vmatpush1.msra.mxu0 0.0
  %8090 = vmatprep.subr.mxu0 0.0
  %8091 = vmatpush1.msra.mxu0 0.0
  %8092 = vmatprep.subr.mxu0 0.0
  %8093 = vmatpush1.msra.mxu0 0.0
  %8094 = vmatprep.subr.mxu0 0.0
  %8095 = vmatpush1.msra.mxu0 0.0
  %8096 = vmatprep.subr.mxu0 0.0
  %8097 = vmatpush1.msra.mxu0 0.0
  %8098 = vmatprep.subr.mxu0 0.0
  %8099 = vmatpush1.msra.mxu0 0.0
  %8100 = vmatprep.subr.mxu0 0.0
  %8101 = vmatpush1.msra.mxu0 0.0
  %8102 = vmatprep.subr.mxu0 0.0
  %8103 = vmatpush1.msra.mxu0 0.0
  %8104 = vmatprep.subr.mxu0 0.0
  %8105 = vmatpush1.msra.mxu0 0.0
  %8106 = vmatprep.subr.mxu0 0.0
  %8107 = vmatpush1.msra.mxu0 0.0
  %8108 = vmatprep.subr.mxu0 0.0
  %8109 = vmatpush1.msra.mxu0 0.0
  %8110 = vmatprep.subr.mxu0 0.0
  %8111 = vmatpush1.msra.mxu0 0.0
  %8112 = vmatprep.subr.mxu0 0.0
  %8113 = vmatpush1.msra.mxu0 0.0
  %8114 = vmatprep.subr.mxu0 0.0
  %8115 = vmatpush1.msra.mxu0 0.0
  %8116 = vmatprep.subr.mxu0 0.0
  %8117 = vmatpush1.msra.mxu0 0.0
  %8118 = vmatprep.subr.mxu0 0.0
  %8119 = vmatpush1.msra.mxu0 0.0
  %8120 = vmatprep.subr.mxu0 0.0
  %8121 = vmatpush1.msra.mxu0 0.0
  %8122 = vmatprep.mubr.f32.mxu0 0.0
  %8123 = vmatmul.mubr.f32.gmra.mrb[0].mxu0 %v7867
  %v8124 = vpop.f32.mrb[0].mxu0
  %v8125 = vadd.f32 0.0, %v8124
  %v8126 = vpop.f32.mrb[0].mxu0
  %8127 = vmatprep.mubr.f32.mxu0 0.0
  %8128 = vmatmul.mubr.f32.gmra.mrb[0].mxu0 %v7870
  %v8129 = vpop.f32.mrb[0].mxu0
  %v8130 = vadd.f32 0.0, %v8129
  %v8131 = vpop.f32.mrb[0].mxu0
  %8132 = vmatprep.mubr.f32.mxu0 0.0
  %8133 = vmatmul.mubr.f32.gmra.mrb[0].mxu0 %v7873
  %v8134 = vpop.f32.mrb[0].mxu0
  %v8135 = vadd.f32 0.0, %v8134
  %v8136 = vpop.f32.mrb[0].mxu0
  %8137 = vmatprep.mubr.f32.mxu0 0.0
  %8138 = vmatmul.mubr.f32.gmra.mrb[0].mxu0 %v7876
  %v8139 = vpop.f32.mrb[0].mxu0
  %v8140 = vadd.f32 0.0, %v8139
  %v8141 = vpop.f32.mrb[0].mxu0
  %8142 = vmatprep.mubr.f32.mxu0 0.0
  %8143 = vmatmul.mubr.f32.gmra.mrb[0].mxu0 %v7879
  %v8144 = vpop.f32.mrb[0].mxu0
  %v8145 = vadd.f32 0.0, %v8144
  %v8146 = vpop.f32.mrb[0].mxu0
  %8147 = vmatprep.mubr.f32.mxu0 0.0
  %8148 = vmatmul.mubr.f32.gmra.mrb[0].mxu0 %v7882
  %v8149 = vpop.f32.mrb[0].mxu0
  %v8150 = vadd.f32 0.0, %v8149
  %v8151 = vpop.f32.mrb[0].mxu0
  %8152 = vmatprep.mubr.f32.mxu0 0.0
  %8153 = vmatmul.mubr.f32.gmra.mrb[0].mxu0 %v7885
  %v8154 = vpop.f32.mrb[0].mxu0
  %v8155 = vadd.f32 0.0, %v8154
  %v8156 = vpop.f32.mrb[0].mxu0
  %8157 = vmatprep.mubr.f32.mxu0 0.0
  %8158 = vmatmul.mubr.f32.gmra.mrb[0].mxu0 %v7888
  %v8159 = vpop.f32.mrb[0].mxu0
  %v8160 = vadd.f32 0.0, %v8159
  %v8161 = vpop.f32.mrb[0].mxu0
  %8162 = vmatprep.mubr.f32.mxu0 0.0
  %8163 = vmatmul.mubr.f32.gmra.mrb[0].mxu0 %v7891
  %v8164 = vpop.f32.mrb[0].mxu0
  %v8165 = vadd.f32 0.0, %v8164
  %v8166 = vpop.f32.mrb[0].mxu0
  %8167 = vmatprep.mubr.f32.mxu0 0.0
  %8168 = vmatmul.mubr.f32.gmra.mrb[0].mxu0 %v7894
  %v8169 = vpop.f32.mrb[0].mxu0
  %v8170 = vadd.f32 0.0, %v8169
  %v8171 = vpop.f32.mrb[0].mxu0
  %8172 = vmatprep.mubr.f32.mxu0 0.0
  %8173 = vmatmul.mubr.f32.gmra.mrb[0].mxu0 %v7897
  %v8174 = vpop.f32.mrb[0].mxu0
  %v8175 = vadd.f32 0.0, %v8174
  %v8176 = vpop.f32.mrb[0].mxu0
  %8177 = vmatprep.mubr.f32.mxu0 0.0
  %8178 = vmatmul.mubr.f32.gmra.mrb[0].mxu0 %v7900
  %v8179 = vpop.f32.mrb[0].mxu0
  %v8180 = vadd.f32 0.0, %v8179
  %v8181 = vpop.f32.mrb[0].mxu0
  %8182 = vmatprep.mubr.f32.mxu0 0.0
  %8183 = vmatmul.mubr.f32.gmra.mrb[0].mxu0 %v7903
  %v8184 = vpop.f32.mrb[0].mxu0
  %v8185 = vadd.f32 0.0, %v8184
  %v8186 = vpop.f32.mrb[0].mxu0
  %8187 = vmatprep.mubr.f32.mxu0 0.0
  %8188 = vmatmul.mubr.f32.gmra.mrb[0].mxu0 %v7906
  %v8189 = vpop.f32.mrb[0].mxu0
  %v8190 = vadd.f32 0.0, %v8189
  %v8191 = vpop.f32.mrb[0].mxu0
  %8192 = vmatprep.mubr.f32.mxu0 0.0
  %8193 = vmatmul.mubr.f32.gmra.mrb[0].mxu0 %v7909
  %v8194 = vpop.f32.mrb[0].mxu0
  %v8195 = vadd.f32 0.0, %v8194
  %v8196 = vpop.f32.mrb[0].mxu0
  %8197 = vmatprep.mubr.f32.mxu0 0.0
  %8198 = vmatmul.mubr.f32.gmra.mrb[0].mxu0 %v7912
  %v8199 = vpop.f32.mrb[0].mxu0
  %v8200 = vadd.f32 0.0, %v8199
  %v8201 = vpop.f32.mrb[0].mxu0
  %8202 = vmatprep.mubr.f32.mxu0 0.0
  %8203 = vmatmul.mubr.f32.gmra.mrb[0].mxu0 %v7915
  %v8204 = vpop.f32.mrb[0].mxu0
  %v8205 = vadd.f32 0.0, %v8204
  %v8206 = vpop.f32.mrb[0].mxu0
  %8207 = vmatprep.mubr.f32.mxu0 0.0
  %8208 = vmatmul.mubr.f32.gmra.mrb[0].mxu0 %v7918
  %v8209 = vpop.f32.mrb[0].mxu0
  %v8210 = vadd.f32 0.0, %v8209
  %v8211 = vpop.f32.mrb[0].mxu0
  %8212 = vmatprep.mubr.f32.mxu0 0.0
  %8213 = vmatmul.mubr.f32.gmra.mrb[0].mxu0 %v7921
  %v8214 = vpop.f32.mrb[0].mxu0
  %v8215 = vadd.f32 0.0, %v8214
  %v8216 = vpop.f32.mrb[0].mxu0
  %8217 = vmatprep.mubr.f32.mxu0 0.0
  %8218 = vmatmul.mubr.f32.gmra.mrb[0].mxu0 %v7924
  %v8219 = vpop.f32.mrb[0].mxu0
  %v8220 = vadd.f32 0.0, %v8219
  %v8221 = vpop.f32.mrb[0].mxu0
  %8222 = vmatprep.mubr.f32.mxu0 0.0
  %8223 = vmatmul.mubr.f32.gmra.mrb[0].mxu0 %v7927
  %v8224 = vpop.f32.mrb[0].mxu0
  %v8225 = vadd.f32 0.0, %v8224
  %v8226 = vpop.f32.mrb[0].mxu0
  %8227 = vmatprep.mubr.f32.mxu0 0.0
  %8228 = vmatmul.mubr.f32.gmra.mrb[0].mxu0 %v7930
  %v8229 = vpop.f32.mrb[0].mxu0
  %v8230 = vadd.f32 0.0, %v8229
  %v8231 = vpop.f32.mrb[0].mxu0
  %8232 = vmatprep.mubr.f32.mxu0 0.0
  %8233 = vmatmul.mubr.f32.gmra.mrb[0].mxu0 %v7933
  %v8234 = vpop.f32.mrb[0].mxu0
  %v8235 = vadd.f32 0.0, %v8234
  %v8236 = vpop.f32.mrb[0].mxu0
  %8237 = vmatprep.mubr.f32.mxu0 0.0
  %8238 = vmatmul.mubr.f32.gmra.mrb[0].mxu0 %v7936
  %v8239 = vpop.f32.mrb[0].mxu0
  %v8240 = vadd.f32 0.0, %v8239
  %v8241 = vpop.f32.mrb[0].mxu0
  %8242 = vmatprep.mubr.f32.mxu0 0.0
  %8243 = vmatmul.mubr.f32.gmra.mrb[0].mxu0 %v7939
  %v8244 = vpop.f32.mrb[0].mxu0
  %v8245 = vadd.f32 0.0, %v8244
  %v8246 = vpop.f32.mrb[0].mxu0
  %8247 = vmatprep.mubr.f32.mxu0 0.0
  %8248 = vmatmul.mubr.f32.gmra.mrb[0].mxu0 %v7942
  %v8249 = vpop.f32.mrb[0].mxu0
  %v8250 = vadd.f32 0.0, %v8249
  %v8251 = vpop.f32.mrb[0].mxu0
  %8252 = vmatprep.mubr.f32.mxu0 0.0
  %8253 = vmatmul.mubr.f32.gmra.mrb[0].mxu0 %v7945
  %v8254 = vpop.f32.mrb[0].mxu0
  %v8255 = vadd.f32 0.0, %v8254
  %v8256 = vpop.f32.mrb[0].mxu0
  %8257 = vmatprep.mubr.f32.mxu0 0.0
  %8258 = vmatmul.mubr.f32.gmra.mrb[0].mxu0 %v7948
  %v8259 = vpop.f32.mrb[0].mxu0
  %v8260 = vadd.f32 0.0, %v8259
  %v8261 = vpop.f32.mrb[0].mxu0
  %8262 = vmatprep.mubr.f32.mxu0 0.0
  %8263 = vmatmul.mubr.f32.gmra.mrb[0].mxu0 %v7951
  %v8264 = vpop.f32.mrb[0].mxu0
  %v8265 = vadd.f32 0.0, %v8264
  %v8266 = vpop.f32.mrb[0].mxu0
  %8267 = vmatprep.mubr.f32.mxu0 0.0
  %8268 = vmatmul.mubr.f32.gmra.mrb[0].mxu0 %v7954
  %v8269 = vpop.f32.mrb[0].mxu0
  %v8270 = vadd.f32 0.0, %v8269
  %v8271 = vpop.f32.mrb[0].mxu0
  %8272 = vmatprep.mubr.f32.mxu0 0.0
  %8273 = vmatmul.mubr.f32.gmra.mrb[0].mxu0 %v7957
  %v8274 = vpop.f32.mrb[0].mxu0
  %v8275 = vadd.f32 0.0, %v8274
  %v8276 = vpop.f32.mrb[0].mxu0
  %8277 = vmatprep.mubr.f32.mxu0 0.0
  %8278 = vmatmul.mubr.f32.gmra.mrb[0].mxu0 %v7960
  %v8279 = vpop.f32.mrb[0].mxu0
  %v8280 = vadd.f32 0.0, %v8279
  %v8281 = vpop.f32.mrb[0].mxu0
  %8282 = vmatprep.mubr.f32.mxu0 0.0
  %8283 = vmatmul.mubr.f32.gmra.mrb[0].mxu0 %v7963
  %v8284 = vpop.f32.mrb[0].mxu0
  %v8285 = vadd.f32 0.0, %v8284
  %v8286 = vpop.f32.mrb[0].mxu0
  %8287 = vmatprep.mubr.f32.mxu0 0.0
  %8288 = vmatmul.mubr.f32.gmra.mrb[0].mxu0 %v7966
  %v8289 = vpop.f32.mrb[0].mxu0
  %v8290 = vadd.f32 0.0, %v8289
  %v8291 = vpop.f32.mrb[0].mxu0
  %8292 = vmatprep.mubr.f32.mxu0 0.0
  %8293 = vmatmul.mubr.f32.gmra.mrb[0].mxu0 %v7969
  %v8294 = vpop.f32.mrb[0].mxu0
  %v8295 = vadd.f32 0.0, %v8294
  %v8296 = vpop.f32.mrb[0].mxu0
  %8297 = vmatprep.mubr.f32.mxu0 0.0
  %8298 = vmatmul.mubr.f32.gmra.mrb[0].mxu0 %v7972
  %v8299 = vpop.f32.mrb[0].mxu0
  %v8300 = vadd.f32 0.0, %v8299
  %v8301 = vpop.f32.mrb[0].mxu0
  %8302 = vmatprep.mubr.f32.mxu0 0.0
  %8303 = vmatmul.mubr.f32.gmra.mrb[0].mxu0 %v7975
  %v8304 = vpop.f32.mrb[0].mxu0
  %v8305 = vadd.f32 0.0, %v8304
  %v8306 = vpop.f32.mrb[0].mxu0
  %8307 = vmatprep.mubr.f32.mxu0 0.0
  %8308 = vmatmul.mubr.f32.gmra.mrb[0].mxu0 %v7978
  %v8309 = vpop.f32.mrb[0].mxu0
  %v8310 = vadd.f32 0.0, %v8309
  %v8311 = vpop.f32.mrb[0].mxu0
  %8312 = vmatprep.mubr.f32.mxu0 0.0
  %8313 = vmatmul.mubr.f32.gmra.mrb[0].mxu0 %v7981
  %v8314 = vpop.f32.mrb[0].mxu0
  %v8315 = vadd.f32 0.0, %v8314
  %v8316 = vpop.f32.mrb[0].mxu0
  %8317 = vmatprep.mubr.f32.mxu0 0.0
  %8318 = vmatmul.mubr.f32.gmra.mrb[0].mxu0 %v7984
  %v8319 = vpop.f32.mrb[0].mxu0
  %v8320 = vadd.f32 0.0, %v8319
  %v8321 = vpop.f32.mrb[0].mxu0
  %8322 = vmatprep.mubr.f32.mxu0 0.0
  %8323 = vmatmul.mubr.f32.gmra.mrb[0].mxu0 %v7987
  %v8324 = vpop.f32.mrb[0].mxu0
  %v8325 = vadd.f32 0.0, %v8324
  %v8326 = vpop.f32.mrb[0].mxu0
  %8327 = vmatprep.mubr.f32.mxu0 0.0
  %8328 = vmatmul.mubr.f32.gmra.mrb[0].mxu0 %v7990
  %v8329 = vpop.f32.mrb[0].mxu0
  %v8330 = vadd.f32 0.0, %v8329
  %v8331 = vpop.f32.mrb[0].mxu0
  %8332 = vmatprep.mubr.f32.mxu0 0.0
  %8333 = vmatmul.mubr.f32.gmra.mrb[0].mxu0 %v7993
  %v8334 = vpop.f32.mrb[0].mxu0
  %v8335 = vadd.f32 0.0, %v8334
  %v8336 = vpop.f32.mrb[0].mxu0
  %8337 = vmatprep.mubr.f32.mxu0 0.0
  %8338 = vmatmul.mubr.f32.gmra.mrb[0].mxu0 %v7996
  %v8339 = vpop.f32.mrb[0].mxu0
  %v8340 = vadd.f32 0.0, %v8339
  %v8341 = vpop.f32.mrb[0].mxu0
  %8342 = vmatprep.mubr.f32.mxu0 0.0
  %8343 = vmatmul.mubr.f32.gmra.mrb[0].mxu0 %v7999
  %v8344 = vpop.f32.mrb[0].mxu0
  %v8345 = vadd.f32 0.0, %v8344
  %v8346 = vpop.f32.mrb[0].mxu0
  %8347 = vmatprep.mubr.f32.mxu0 0.0
  %8348 = vmatmul.mubr.f32.gmra.mrb[0].mxu0 %v8002
  %v8349 = vpop.f32.mrb[0].mxu0
  %v8350 = vadd.f32 0.0, %v8349
  %v8351 = vpop.f32.mrb[0].mxu0
  %8352 = vmatprep.mubr.f32.mxu0 0.0
  %8353 = vmatmul.mubr.f32.gmra.mrb[0].mxu0 %v8005
  %v8354 = vpop.f32.mrb[0].mxu0
  %v8355 = vadd.f32 0.0, %v8354
  %v8356 = vpop.f32.mrb[0].mxu0
  %8357 = vmatprep.mubr.f32.mxu0 0.0
  %8358 = vmatmul.mubr.f32.gmra.mrb[0].mxu0 %v8008
  %v8359 = vpop.f32.mrb[0].mxu0
  %v8360 = vadd.f32 0.0, %v8359
  %v8361 = vpop.f32.mrb[0].mxu0
  %8362 = vmatprep.mubr.f32.mxu0 0.0
  %8363 = vmatmul.mubr.f32.gmra.mrb[0].mxu0 %v8011
  %v8364 = vpop.f32.mrb[0].mxu0
  %v8365 = vadd.f32 0.0, %v8364
  %v8366 = vpop.f32.mrb[0].mxu0
  %8367 = vmatprep.mubr.f32.mxu0 0.0
  %8368 = vmatmul.mubr.f32.gmra.mrb[0].mxu0 %v8014
  %v8369 = vpop.f32.mrb[0].mxu0
  %v8370 = vadd.f32 0.0, %v8369
  %v8371 = vpop.f32.mrb[0].mxu0
  %8372 = vmatprep.mubr.f32.mxu0 0.0
  %8373 = vmatmul.mubr.f32.gmra.mrb[0].mxu0 %v8017
  %v8374 = vpop.f32.mrb[0].mxu0
  %v8375 = vadd.f32 0.0, %v8374
  %v8376 = vpop.f32.mrb[0].mxu0
  %8377 = vmatprep.mubr.f32.mxu0 0.0
  %8378 = vmatmul.mubr.f32.gmra.mrb[0].mxu0 %v8020
  %v8379 = vpop.f32.mrb[0].mxu0
  %v8380 = vadd.f32 0.0, %v8379
  %v8381 = vpop.f32.mrb[0].mxu0
  %8382 = vmatprep.mubr.f32.mxu0 0.0
  %8383 = vmatmul.mubr.f32.gmra.mrb[0].mxu0 %v8023
  %v8384 = vpop.f32.mrb[0].mxu0
  %v8385 = vadd.f32 0.0, %v8384
  %v8386 = vpop.f32.mrb[0].mxu0
  %8387 = vmatprep.mubr.f32.mxu0 0.0
  %8388 = vmatmul.mubr.f32.gmra.mrb[0].mxu0 %v8026
  %v8389 = vpop.f32.mrb[0].mxu0
  %v8390 = vadd.f32 0.0, %v8389
  %v8391 = vpop.f32.mrb[0].mxu0
  %8392 = vmatprep.mubr.f32.mxu0 0.0
  %8393 = vmatmul.mubr.f32.gmra.mrb[0].mxu0 %v8029
  %v8394 = vpop.f32.mrb[0].mxu0
  %v8395 = vadd.f32 0.0, %v8394
  %v8396 = vpop.f32.mrb[0].mxu0
  %8397 = vmatprep.mubr.f32.mxu0 0.0
  %8398 = vmatmul.mubr.f32.gmra.mrb[0].mxu0 %v8032
  %v8399 = vpop.f32.mrb[0].mxu0
  %v8400 = vadd.f32 0.0, %v8399
  %v8401 = vpop.f32.mrb[0].mxu0
  %8402 = vmatprep.mubr.f32.mxu0 0.0
  %8403 = vmatmul.mubr.f32.gmra.mrb[0].mxu0 %v8035
  %v8404 = vpop.f32.mrb[0].mxu0
  %v8405 = vadd.f32 0.0, %v8404
  %v8406 = vpop.f32.mrb[0].mxu0
  %8407 = vmatprep.mubr.f32.mxu0 0.0
  %8408 = vmatmul.mubr.f32.gmra.mrb[0].mxu0 %v8038
  %v8409 = vpop.f32.mrb[0].mxu0
  %v8410 = vadd.f32 0.0, %v8409
  %v8411 = vpop.f32.mrb[0].mxu0
  %8412 = vmatprep.mubr.f32.mxu0 0.0
  %8413 = vmatmul.mubr.f32.gmra.mrb[0].mxu0 %v8041
  %v8414 = vpop.f32.mrb[0].mxu0
  %v8415 = vadd.f32 0.0, %v8414
  %v8416 = vpop.f32.mrb[0].mxu0
  %8417 = vmatprep.mubr.f32.mxu0 0.0
  %8418 = vmatmul.mubr.f32.gmra.mrb[0].mxu0 %v8044
  %v8419 = vpop.f32.mrb[0].mxu0
  %v8420 = vadd.f32 0.0, %v8419
  %v8421 = vpop.f32.mrb[0].mxu0
  %8422 = vmatprep.mubr.f32.mxu0 0.0
  %8423 = vmatmul.mubr.f32.gmra.mrb[0].mxu0 %v8047
  %v8424 = vpop.f32.mrb[0].mxu0
  %v8425 = vadd.f32 0.0, %v8424
  %v8426 = vpop.f32.mrb[0].mxu0
  %8427 = vmatprep.mubr.f32.mxu0 0.0
  %8428 = vmatmul.mubr.f32.gmra.mrb[0].mxu0 %v8050
  %v8429 = vpop.f32.mrb[0].mxu0
  %v8430 = vadd.f32 0.0, %v8429
  %v8431 = vpop.f32.mrb[0].mxu0
  %8432 = vmatprep.mubr.f32.mxu0 0.0
  %8433 = vmatmul.mubr.f32.gmra.mrb[0].mxu0 %v8053
  %v8434 = vpop.f32.mrb[0].mxu0
  %v8435 = vadd.f32 0.0, %v8434
  %v8436 = vpop.f32.mrb[0].mxu0
  %8437 = vmatprep.mubr.f32.mxu0 0.0
  %8438 = vmatmul.mubr.f32.gmra.mrb[0].mxu0 %v8056
  %v8439 = vpop.f32.mrb[0].mxu0
  %v8440 = vadd.f32 0.0, %v8439
  %v8441 = vpop.f32.mrb[0].mxu0
  %8442 = vdwg.mxu0
  %v8443 = vsel %vm2954, %v8125, 0.0
  %v8444 = vsel %vm2954, %v8130, 0.0
  %v8445 = vadd.f32 %v8443, %v8444
  %v8446 = vsel %vm2954, %v8135, 0.0
  %v8447 = vadd.f32 %v8445, %v8446
  %v8448 = vsel %vm2954, %v8140, 0.0
  %v8449 = vadd.f32 %v8447, %v8448
  %v8450 = vsel %vm2954, %v8145, 0.0
  %v8451 = vadd.f32 %v8449, %v8450
  %v8452 = vsel %vm2954, %v8150, 0.0
  %v8453 = vadd.f32 %v8451, %v8452
  %v8454 = vsel %vm2954, %v8155, 0.0
  %v8455 = vadd.f32 %v8453, %v8454
  %v8456 = vsel %vm2954, %v8160, 0.0
  %v8457 = vadd.f32 %v8455, %v8456
  %v8458 = vsel %vm2954, %v8165, 0.0
  %v8459 = vadd.f32 %v8457, %v8458
  %v8460 = vsel %vm2954, %v8170, 0.0
  %v8461 = vadd.f32 %v8459, %v8460
  %v8462 = vsel %vm2954, %v8175, 0.0
  %v8463 = vadd.f32 %v8461, %v8462
  %v8464 = vsel %vm2954, %v8180, 0.0
  %v8465 = vadd.f32 %v8463, %v8464
  %v8466 = vsel %vm2954, %v8185, 0.0
  %v8467 = vadd.f32 %v8465, %v8466
  %v8468 = vsel %vm2954, %v8190, 0.0
  %v8469 = vadd.f32 %v8467, %v8468
  %v8470 = vsel %vm2954, %v8195, 0.0
  %v8471 = vadd.f32 %v8469, %v8470
  %v8472 = vsel %vm2954, %v8200, 0.0
  %v8473 = vadd.f32 %v8471, %v8472
  %v8474 = vsel %vm2954, %v8205, 0.0
  %v8475 = vadd.f32 %v8473, %v8474
  %v8476 = vsel %vm2954, %v8210, 0.0
  %v8477 = vadd.f32 %v8475, %v8476
  %v8478 = vsel %vm2954, %v8215, 0.0
  %v8479 = vadd.f32 %v8477, %v8478
  %v8480 = vsel %vm2954, %v8220, 0.0
  %v8481 = vadd.f32 %v8479, %v8480
  %v8482 = vsel %vm2954, %v8225, 0.0
  %v8483 = vadd.f32 %v8481, %v8482
  %v8484 = vsel %vm2954, %v8230, 0.0
  %v8485 = vadd.f32 %v8483, %v8484
  %v8486 = vsel %vm2954, %v8235, 0.0
  %v8487 = vadd.f32 %v8485, %v8486
  %v8488 = vsel %vm2954, %v8240, 0.0
  %v8489 = vadd.f32 %v8487, %v8488
  %v8490 = vsel %vm2954, %v8245, 0.0
  %v8491 = vadd.f32 %v8489, %v8490
  %v8492 = vsel %vm2954, %v8250, 0.0
  %v8493 = vadd.f32 %v8491, %v8492
  %v8494 = vsel %vm2954, %v8255, 0.0
  %v8495 = vadd.f32 %v8493, %v8494
  %v8496 = vsel %vm2954, %v8260, 0.0
  %v8497 = vadd.f32 %v8495, %v8496
  %v8498 = vsel %vm2954, %v8265, 0.0
  %v8499 = vadd.f32 %v8497, %v8498
  %v8500 = vsel %vm2954, %v8270, 0.0
  %v8501 = vadd.f32 %v8499, %v8500
  %v8502 = vsel %vm2954, %v8275, 0.0
  %v8503 = vadd.f32 %v8501, %v8502
  %v8504 = vsel %vm2954, %v8280, 0.0
  %v8505 = vadd.f32 %v8503, %v8504
  %v8506 = vsel %vm2954, %v8285, 0.0
  %v8507 = vadd.f32 %v8505, %v8506
  %v8508 = vsel %vm2954, %v8290, 0.0
  %v8509 = vadd.f32 %v8507, %v8508
  %v8510 = vsel %vm2954, %v8295, 0.0
  %v8511 = vadd.f32 %v8509, %v8510
  %v8512 = vsel %vm2954, %v8300, 0.0
  %v8513 = vadd.f32 %v8511, %v8512
  %v8514 = vsel %vm2954, %v8305, 0.0
  %v8515 = vadd.f32 %v8513, %v8514
  %v8516 = vsel %vm2954, %v8310, 0.0
  %v8517 = vadd.f32 %v8515, %v8516
  %v8518 = vsel %vm2954, %v8315, 0.0
  %v8519 = vadd.f32 %v8517, %v8518
  %v8520 = vsel %vm2954, %v8320, 0.0
  %v8521 = vadd.f32 %v8519, %v8520
  %v8522 = vsel %vm2954, %v8325, 0.0
  %v8523 = vadd.f32 %v8521, %v8522
  %v8524 = vsel %vm2954, %v8330, 0.0
  %v8525 = vadd.f32 %v8523, %v8524
  %v8526 = vsel %vm2954, %v8335, 0.0
  %v8527 = vadd.f32 %v8525, %v8526
  %v8528 = vsel %vm2954, %v8340, 0.0
  %v8529 = vadd.f32 %v8527, %v8528
  %v8530 = vsel %vm2954, %v8345, 0.0
  %v8531 = vadd.f32 %v8529, %v8530
  %v8532 = vsel %vm2954, %v8350, 0.0
  %v8533 = vadd.f32 %v8531, %v8532
  %v8534 = vsel %vm2954, %v8355, 0.0
  %v8535 = vadd.f32 %v8533, %v8534
  %v8536 = vsel %vm2954, %v8360, 0.0
  %v8537 = vadd.f32 %v8535, %v8536
  %v8538 = vsel %vm2954, %v8365, 0.0
  %v8539 = vadd.f32 %v8537, %v8538
  %v8540 = vsel %vm2954, %v8370, 0.0
  %v8541 = vadd.f32 %v8539, %v8540
  %v8542 = vsel %vm2954, %v8375, 0.0
  %v8543 = vadd.f32 %v8541, %v8542
  %v8544 = vsel %vm2954, %v8380, 0.0
  %v8545 = vadd.f32 %v8543, %v8544
  %v8546 = vsel %vm2954, %v8385, 0.0
  %v8547 = vadd.f32 %v8545, %v8546
  %v8548 = vsel %vm2954, %v8390, 0.0
  %v8549 = vadd.f32 %v8547, %v8548
  %v8550 = vsel %vm2954, %v8395, 0.0
  %v8551 = vadd.f32 %v8549, %v8550
  %v8552 = vsel %vm2954, %v8400, 0.0
  %v8553 = vadd.f32 %v8551, %v8552
  %v8554 = vsel %vm2954, %v8405, 0.0
  %v8555 = vadd.f32 %v8553, %v8554
  %v8556 = vsel %vm2954, %v8410, 0.0
  %v8557 = vadd.f32 %v8555, %v8556
  %v8558 = vsel %vm2954, %v8415, 0.0
  %v8559 = vadd.f32 %v8557, %v8558
  %v8560 = vsel %vm2954, %v8420, 0.0
  %v8561 = vadd.f32 %v8559, %v8560
  %v8562 = vsel %vm2954, %v8425, 0.0
  %v8563 = vadd.f32 %v8561, %v8562
  %v8564 = vsel %vm2954, %v8430, 0.0
  %v8565 = vadd.f32 %v8563, %v8564
  %v8566 = vsel %vm2954, %v8435, 0.0
  %v8567 = vadd.f32 %v8565, %v8566
  %v8568 = vsel %vm2954, %v8440, 0.0
  %v8569 = vadd.f32 %v8567, %v8568
  %v8570 = vrot.slane %v8569, 4
  %v8571 = vadd.f32 %v8569, %v8570
  %v8572 = vrot.slane %v8571, 2
  %v8573 = vadd.f32 %v8571, %v8572
  %v8574 = vrot.slane %v8573, 1
  %v8575 = vadd.f32 %v8573, %v8574
  %v8576 = vmul.f32 %v8575, 0.001953125
  %v8577 = vmul.f32 %v8125, %v8125
  %v8578 = vmul.f32 %v8130, %v8130
  %v8579 = vmul.f32 %v8135, %v8135
  %v8580 = vmul.f32 %v8140, %v8140
  %v8581 = vmul.f32 %v8145, %v8145
  %v8582 = vmul.f32 %v8150, %v8150
  %v8583 = vmul.f32 %v8155, %v8155
  %v8584 = vmul.f32 %v8160, %v8160
  %v8585 = vmul.f32 %v8165, %v8165
  %v8586 = vmul.f32 %v8170, %v8170
  %v8587 = vmul.f32 %v8175, %v8175
  %v8588 = vmul.f32 %v8180, %v8180
  %v8589 = vmul.f32 %v8185, %v8185
  %v8590 = vmul.f32 %v8190, %v8190
  %v8591 = vmul.f32 %v8195, %v8195
  %v8592 = vmul.f32 %v8200, %v8200
  %v8593 = vmul.f32 %v8205, %v8205
  %v8594 = vmul.f32 %v8210, %v8210
  %v8595 = vmul.f32 %v8215, %v8215
  %v8596 = vmul.f32 %v8220, %v8220
  %v8597 = vmul.f32 %v8225, %v8225
  %v8598 = vmul.f32 %v8230, %v8230
  %v8599 = vmul.f32 %v8235, %v8235
  %v8600 = vmul.f32 %v8240, %v8240
  %v8601 = vmul.f32 %v8245, %v8245
  %v8602 = vmul.f32 %v8250, %v8250
  %v8603 = vmul.f32 %v8255, %v8255
  %v8604 = vmul.f32 %v8260, %v8260
  %v8605 = vmul.f32 %v8265, %v8265
  %v8606 = vmul.f32 %v8270, %v8270
  %v8607 = vmul.f32 %v8275, %v8275
  %v8608 = vmul.f32 %v8280, %v8280
  %v8609 = vmul.f32 %v8285, %v8285
  %v8610 = vmul.f32 %v8290, %v8290
  %v8611 = vmul.f32 %v8295, %v8295
  %v8612 = vmul.f32 %v8300, %v8300
  %v8613 = vmul.f32 %v8305, %v8305
  %v8614 = vmul.f32 %v8310, %v8310
  %v8615 = vmul.f32 %v8315, %v8315
  %v8616 = vmul.f32 %v8320, %v8320
  %v8617 = vmul.f32 %v8325, %v8325
  %v8618 = vmul.f32 %v8330, %v8330
  %v8619 = vmul.f32 %v8335, %v8335
  %v8620 = vmul.f32 %v8340, %v8340
  %v8621 = vmul.f32 %v8345, %v8345
  %v8622 = vmul.f32 %v8350, %v8350
  %v8623 = vmul.f32 %v8355, %v8355
  %v8624 = vmul.f32 %v8360, %v8360
  %v8625 = vmul.f32 %v8365, %v8365
  %v8626 = vmul.f32 %v8370, %v8370
  %v8627 = vmul.f32 %v8375, %v8375
  %v8628 = vmul.f32 %v8380, %v8380
  %v8629 = vmul.f32 %v8385, %v8385
  %v8630 = vmul.f32 %v8390, %v8390
  %v8631 = vmul.f32 %v8395, %v8395
  %v8632 = vmul.f32 %v8400, %v8400
  %v8633 = vmul.f32 %v8405, %v8405
  %v8634 = vmul.f32 %v8410, %v8410
  %v8635 = vmul.f32 %v8415, %v8415
  %v8636 = vmul.f32 %v8420, %v8420
  %v8637 = vmul.f32 %v8425, %v8425
  %v8638 = vmul.f32 %v8430, %v8430
  %v8639 = vmul.f32 %v8435, %v8435
  %v8640 = vmul.f32 %v8440, %v8440
  %v8641 = vsel %vm2954, %v8577, 0.0
  %v8642 = vsel %vm2954, %v8578, 0.0
  %v8643 = vadd.f32 %v8641, %v8642
  %v8644 = vsel %vm2954, %v8579, 0.0
  %v8645 = vadd.f32 %v8643, %v8644
  %v8646 = vsel %vm2954, %v8580, 0.0
  %v8647 = vadd.f32 %v8645, %v8646
  %v8648 = vsel %vm2954, %v8581, 0.0
  %v8649 = vadd.f32 %v8647, %v8648
  %v8650 = vsel %vm2954, %v8582, 0.0
  %v8651 = vadd.f32 %v8649, %v8650
  %v8652 = vsel %vm2954, %v8583, 0.0
  %v8653 = vadd.f32 %v8651, %v8652
  %v8654 = vsel %vm2954, %v8584, 0.0
  %v8655 = vadd.f32 %v8653, %v8654
  %v8656 = vsel %vm2954, %v8585, 0.0
  %v8657 = vadd.f32 %v8655, %v8656
  %v8658 = vsel %vm2954, %v8586, 0.0
  %v8659 = vadd.f32 %v8657, %v8658
  %v8660 = vsel %vm2954, %v8587, 0.0
  %v8661 = vadd.f32 %v8659, %v8660
  %v8662 = vsel %vm2954, %v8588, 0.0
  %v8663 = vadd.f32 %v8661, %v8662
  %v8664 = vsel %vm2954, %v8589, 0.0
  %v8665 = vadd.f32 %v8663, %v8664
  %v8666 = vsel %vm2954, %v8590, 0.0
  %v8667 = vadd.f32 %v8665, %v8666
  %v8668 = vsel %vm2954, %v8591, 0.0
  %v8669 = vadd.f32 %v8667, %v8668
  %v8670 = vsel %vm2954, %v8592, 0.0
  %v8671 = vadd.f32 %v8669, %v8670
  %v8672 = vsel %vm2954, %v8593, 0.0
  %v8673 = vadd.f32 %v8671, %v8672
  %v8674 = vsel %vm2954, %v8594, 0.0
  %v8675 = vadd.f32 %v8673, %v8674
  %v8676 = vsel %vm2954, %v8595, 0.0
  %v8677 = vadd.f32 %v8675, %v8676
  %v8678 = vsel %vm2954, %v8596, 0.0
  %v8679 = vadd.f32 %v8677, %v8678
  %v8680 = vsel %vm2954, %v8597, 0.0
  %v8681 = vadd.f32 %v8679, %v8680
  %v8682 = vsel %vm2954, %v8598, 0.0
  %v8683 = vadd.f32 %v8681, %v8682
  %v8684 = vsel %vm2954, %v8599, 0.0
  %v8685 = vadd.f32 %v8683, %v8684
  %v8686 = vsel %vm2954, %v8600, 0.0
  %v8687 = vadd.f32 %v8685, %v8686
  %v8688 = vsel %vm2954, %v8601, 0.0
  %v8689 = vadd.f32 %v8687, %v8688
  %v8690 = vsel %vm2954, %v8602, 0.0
  %v8691 = vadd.f32 %v8689, %v8690
  %v8692 = vsel %vm2954, %v8603, 0.0
  %v8693 = vadd.f32 %v8691, %v8692
  %v8694 = vsel %vm2954, %v8604, 0.0
  %v8695 = vadd.f32 %v8693, %v8694
  %v8696 = vsel %vm2954, %v8605, 0.0
  %v8697 = vadd.f32 %v8695, %v8696
  %v8698 = vsel %vm2954, %v8606, 0.0
  %v8699 = vadd.f32 %v8697, %v8698
  %v8700 = vsel %vm2954, %v8607, 0.0
  %v8701 = vadd.f32 %v8699, %v8700
  %v8702 = vsel %vm2954, %v8608, 0.0
  %v8703 = vadd.f32 %v8701, %v8702
  %v8704 = vsel %vm2954, %v8609, 0.0
  %v8705 = vadd.f32 %v8703, %v8704
  %v8706 = vsel %vm2954, %v8610, 0.0
  %v8707 = vadd.f32 %v8705, %v8706
  %v8708 = vsel %vm2954, %v8611, 0.0
  %v8709 = vadd.f32 %v8707, %v8708
  %v8710 = vsel %vm2954, %v8612, 0.0
  %v8711 = vadd.f32 %v8709, %v8710
  %v8712 = vsel %vm2954, %v8613, 0.0
  %v8713 = vadd.f32 %v8711, %v8712
  %v8714 = vsel %vm2954, %v8614, 0.0
  %v8715 = vadd.f32 %v8713, %v8714
  %v8716 = vsel %vm2954, %v8615, 0.0
  %v8717 = vadd.f32 %v8715, %v8716
  %v8718 = vsel %vm2954, %v8616, 0.0
  %v8719 = vadd.f32 %v8717, %v8718
  %v8720 = vsel %vm2954, %v8617, 0.0
  %v8721 = vadd.f32 %v8719, %v8720
  %v8722 = vsel %vm2954, %v8618, 0.0
  %v8723 = vadd.f32 %v8721, %v8722
  %v8724 = vsel %vm2954, %v8619, 0.0
  %v8725 = vadd.f32 %v8723, %v8724
  %v8726 = vsel %vm2954, %v8620, 0.0
  %v8727 = vadd.f32 %v8725, %v8726
  %v8728 = vsel %vm2954, %v8621, 0.0
  %v8729 = vadd.f32 %v8727, %v8728
  %v8730 = vsel %vm2954, %v8622, 0.0
  %v8731 = vadd.f32 %v8729, %v8730
  %v8732 = vsel %vm2954, %v8623, 0.0
  %v8733 = vadd.f32 %v8731, %v8732
  %v8734 = vsel %vm2954, %v8624, 0.0
  %v8735 = vadd.f32 %v8733, %v8734
  %v8736 = vsel %vm2954, %v8625, 0.0
  %v8737 = vadd.f32 %v8735, %v8736
  %v8738 = vsel %vm2954, %v8626, 0.0
  %v8739 = vadd.f32 %v8737, %v8738
  %v8740 = vsel %vm2954, %v8627, 0.0
  %v8741 = vadd.f32 %v8739, %v8740
  %v8742 = vsel %vm2954, %v8628, 0.0
  %v8743 = vadd.f32 %v8741, %v8742
  %v8744 = vsel %vm2954, %v8629, 0.0
  %v8745 = vadd.f32 %v8743, %v8744
  %v8746 = vsel %vm2954, %v8630, 0.0
  %v8747 = vadd.f32 %v8745, %v8746
  %v8748 = vsel %vm2954, %v8631, 0.0
  %v8749 = vadd.f32 %v8747, %v8748
  %v8750 = vsel %vm2954, %v8632, 0.0
  %v8751 = vadd.f32 %v8749, %v8750
  %v8752 = vsel %vm2954, %v8633, 0.0
  %v8753 = vadd.f32 %v8751, %v8752
  %v8754 = vsel %vm2954, %v8634, 0.0
  %v8755 = vadd.f32 %v8753, %v8754
  %v8756 = vsel %vm2954, %v8635, 0.0
  %v8757 = vadd.f32 %v8755, %v8756
  %v8758 = vsel %vm2954, %v8636, 0.0
  %v8759 = vadd.f32 %v8757, %v8758
  %v8760 = vsel %vm2954, %v8637, 0.0
  %v8761 = vadd.f32 %v8759, %v8760
  %v8762 = vsel %vm2954, %v8638, 0.0
  %v8763 = vadd.f32 %v8761, %v8762
  %v8764 = vsel %vm2954, %v8639, 0.0
  %v8765 = vadd.f32 %v8763, %v8764
  %v8766 = vsel %vm2954, %v8640, 0.0
  %v8767 = vadd.f32 %v8765, %v8766
  %v8768 = vrot.slane %v8767, 4
  %v8769 = vadd.f32 %v8767, %v8768
  %v8770 = vrot.slane %v8769, 2
  %v8771 = vadd.f32 %v8769, %v8770
  %v8772 = vrot.slane %v8771, 1
  %v8773 = vadd.f32 %v8771, %v8772
  %v8774 = vmul.f32 %v8773, 0.001953125
  %v8775 = vmul.f32 %v8576, %v8576
  %v8776 = vsub.f32 %v8774, %v8775
  %v8777 = vld [vmem:[%s5] sm:$0x1]
  %v8778 = vadd.f32 %v8776, 1e-05
  %v8779 = vrsqrt.pop %v8778
  %v8780 = vmul.f32 %v8777, %v8779
  %v8781 = vld [vmem:[%s6] sm:$0x1]
  %v8782 = vmul.f32 %v8576, %v8780
  %v8783 = vsub.f32 %v8781, %v8782
  %v8785 = vlaneseq
  %v8786 = vshrl.u32 %v8785, 7
  %v8787 = vsub.s32 0, %v8786
  %v8788 = vrot.slane %v8780, %v8787
  %v8790 = vmul.f32 %v8125, %v8788
  %v8791 = vmul.f32 %v8130, %v8788
  %v8792 = vmul.f32 %v8135, %v8788
  %v8793 = vmul.f32 %v8140, %v8788
  %v8794 = vmul.f32 %v8145, %v8788
  %v8795 = vmul.f32 %v8150, %v8788
  %v8796 = vmul.f32 %v8155, %v8788
  %v8797 = vmul.f32 %v8160, %v8788
  %v8798 = vmul.f32 %v8165, %v8788
  %v8799 = vmul.f32 %v8170, %v8788
  %v8800 = vmul.f32 %v8175, %v8788
  %v8801 = vmul.f32 %v8180, %v8788
  %v8802 = vmul.f32 %v8185, %v8788
  %v8803 = vmul.f32 %v8190, %v8788
  %v8804 = vmul.f32 %v8195, %v8788
  %v8805 = vmul.f32 %v8200, %v8788
  %v8806 = vmul.f32 %v8205, %v8788
  %v8807 = vmul.f32 %v8210, %v8788
  %v8808 = vmul.f32 %v8215, %v8788
  %v8809 = vmul.f32 %v8220, %v8788
  %v8810 = vmul.f32 %v8225, %v8788
  %v8811 = vmul.f32 %v8230, %v8788
  %v8812 = vmul.f32 %v8235, %v8788
  %v8813 = vmul.f32 %v8240, %v8788
  %v8814 = vmul.f32 %v8245, %v8788
  %v8815 = vmul.f32 %v8250, %v8788
  %v8816 = vmul.f32 %v8255, %v8788
  %v8817 = vmul.f32 %v8260, %v8788
  %v8818 = vmul.f32 %v8265, %v8788
  %v8819 = vmul.f32 %v8270, %v8788
  %v8820 = vmul.f32 %v8275, %v8788
  %v8821 = vmul.f32 %v8280, %v8788
  %v8822 = vmul.f32 %v8285, %v8788
  %v8823 = vmul.f32 %v8290, %v8788
  %v8824 = vmul.f32 %v8295, %v8788
  %v8825 = vmul.f32 %v8300, %v8788
  %v8826 = vmul.f32 %v8305, %v8788
  %v8827 = vmul.f32 %v8310, %v8788
  %v8828 = vmul.f32 %v8315, %v8788
  %v8829 = vmul.f32 %v8320, %v8788
  %v8830 = vmul.f32 %v8325, %v8788
  %v8831 = vmul.f32 %v8330, %v8788
  %v8832 = vmul.f32 %v8335, %v8788
  %v8833 = vmul.f32 %v8340, %v8788
  %v8834 = vmul.f32 %v8345, %v8788
  %v8835 = vmul.f32 %v8350, %v8788
  %v8836 = vmul.f32 %v8355, %v8788
  %v8837 = vmul.f32 %v8360, %v8788
  %v8838 = vmul.f32 %v8365, %v8788
  %v8839 = vmul.f32 %v8370, %v8788
  %v8840 = vmul.f32 %v8375, %v8788
  %v8841 = vmul.f32 %v8380, %v8788
  %v8842 = vmul.f32 %v8385, %v8788
  %v8843 = vmul.f32 %v8390, %v8788
  %v8844 = vmul.f32 %v8395, %v8788
  %v8845 = vmul.f32 %v8400, %v8788
  %v8846 = vmul.f32 %v8405, %v8788
  %v8847 = vmul.f32 %v8410, %v8788
  %v8848 = vmul.f32 %v8415, %v8788
  %v8849 = vmul.f32 %v8420, %v8788
  %v8850 = vmul.f32 %v8425, %v8788
  %v8851 = vmul.f32 %v8430, %v8788
  %v8852 = vmul.f32 %v8435, %v8788
  %v8853 = vmul.f32 %v8440, %v8788
  %v8855 = vlaneseq
  %v8856 = vshrl.u32 %v8855, 7
  %v8857 = vsub.s32 0, %v8856
  %v8858 = vrot.slane %v8783, %v8857
  %v8860 = vadd.f32 %v8790, %v8858
  %v8861 = vadd.f32 %v8791, %v8858
  %v8862 = vadd.f32 %v8792, %v8858
  %v8863 = vadd.f32 %v8793, %v8858
  %v8864 = vadd.f32 %v8794, %v8858
  %v8865 = vadd.f32 %v8795, %v8858
  %v8866 = vadd.f32 %v8796, %v8858
  %v8867 = vadd.f32 %v8797, %v8858
  %v8868 = vadd.f32 %v8798, %v8858
  %v8869 = vadd.f32 %v8799, %v8858
  %v8870 = vadd.f32 %v8800, %v8858
  %v8871 = vadd.f32 %v8801, %v8858
  %v8872 = vadd.f32 %v8802, %v8858
  %v8873 = vadd.f32 %v8803, %v8858
  %v8874 = vadd.f32 %v8804, %v8858
  %v8875 = vadd.f32 %v8805, %v8858
  %v8876 = vadd.f32 %v8806, %v8858
  %v8877 = vadd.f32 %v8807, %v8858
  %v8878 = vadd.f32 %v8808, %v8858
  %v8879 = vadd.f32 %v8809, %v8858
  %v8880 = vadd.f32 %v8810, %v8858
  %v8881 = vadd.f32 %v8811, %v8858
  %v8882 = vadd.f32 %v8812, %v8858
  %v8883 = vadd.f32 %v8813, %v8858
  %v8884 = vadd.f32 %v8814, %v8858
  %v8885 = vadd.f32 %v8815, %v8858
  %v8886 = vadd.f32 %v8816, %v8858
  %v8887 = vadd.f32 %v8817, %v8858
  %v8888 = vadd.f32 %v8818, %v8858
  %v8889 = vadd.f32 %v8819, %v8858
  %v8890 = vadd.f32 %v8820, %v8858
  %v8891 = vadd.f32 %v8821, %v8858
  %v8892 = vadd.f32 %v8822, %v8858
  %v8893 = vadd.f32 %v8823, %v8858
  %v8894 = vadd.f32 %v8824, %v8858
  %v8895 = vadd.f32 %v8825, %v8858
  %v8896 = vadd.f32 %v8826, %v8858
  %v8897 = vadd.f32 %v8827, %v8858
  %v8898 = vadd.f32 %v8828, %v8858
  %v8899 = vadd.f32 %v8829, %v8858
  %v8900 = vadd.f32 %v8830, %v8858
  %v8901 = vadd.f32 %v8831, %v8858
  %v8902 = vadd.f32 %v8832, %v8858
  %v8903 = vadd.f32 %v8833, %v8858
  %v8904 = vadd.f32 %v8834, %v8858
  %v8905 = vadd.f32 %v8835, %v8858
  %v8906 = vadd.f32 %v8836, %v8858
  %v8907 = vadd.f32 %v8837, %v8858
  %v8908 = vadd.f32 %v8838, %v8858
  %v8909 = vadd.f32 %v8839, %v8858
  %v8910 = vadd.f32 %v8840, %v8858
  %v8911 = vadd.f32 %v8841, %v8858
  %v8912 = vadd.f32 %v8842, %v8858
  %v8913 = vadd.f32 %v8843, %v8858
  %v8914 = vadd.f32 %v8844, %v8858
  %v8915 = vadd.f32 %v8845, %v8858
  %v8916 = vadd.f32 %v8846, %v8858
  %v8917 = vadd.f32 %v8847, %v8858
  %v8918 = vadd.f32 %v8848, %v8858
  %v8919 = vadd.f32 %v8849, %v8858
  %v8920 = vadd.f32 %v8850, %v8858
  %v8921 = vadd.f32 %v8851, %v8858
  %v8922 = vadd.f32 %v8852, %v8858
  %v8923 = vadd.f32 %v8853, %v8858
  %v8924 = vmax.f32 %v8860, 0.0
  %v8925 = vmax.f32 %v8861, 0.0
  %v8926 = vmax.f32 %v8862, 0.0
  %v8927 = vmax.f32 %v8863, 0.0
  %v8928 = vmax.f32 %v8864, 0.0
  %v8929 = vmax.f32 %v8865, 0.0
  %v8930 = vmax.f32 %v8866, 0.0
  %v8931 = vmax.f32 %v8867, 0.0
  %v8932 = vmax.f32 %v8868, 0.0
  %v8933 = vmax.f32 %v8869, 0.0
  %v8934 = vmax.f32 %v8870, 0.0
  %v8935 = vmax.f32 %v8871, 0.0
  %v8936 = vmax.f32 %v8872, 0.0
  %v8937 = vmax.f32 %v8873, 0.0
  %v8938 = vmax.f32 %v8874, 0.0
  %v8939 = vmax.f32 %v8875, 0.0
  %v8940 = vmax.f32 %v8876, 0.0
  %v8941 = vmax.f32 %v8877, 0.0
  %v8942 = vmax.f32 %v8878, 0.0
  %v8943 = vmax.f32 %v8879, 0.0
  %v8944 = vmax.f32 %v8880, 0.0
  %v8945 = vmax.f32 %v8881, 0.0
  %v8946 = vmax.f32 %v8882, 0.0
  %v8947 = vmax.f32 %v8883, 0.0
  %v8948 = vmax.f32 %v8884, 0.0
  %v8949 = vmax.f32 %v8885, 0.0
  %v8950 = vmax.f32 %v8886, 0.0
  %v8951 = vmax.f32 %v8887, 0.0
  %v8952 = vmax.f32 %v8888, 0.0
  %v8953 = vmax.f32 %v8889, 0.0
  %v8954 = vmax.f32 %v8890, 0.0
  %v8955 = vmax.f32 %v8891, 0.0
  %v8956 = vmax.f32 %v8892, 0.0
  %v8957 = vmax.f32 %v8893, 0.0
  %v8958 = vmax.f32 %v8894, 0.0
  %v8959 = vmax.f32 %v8895, 0.0
  %v8960 = vmax.f32 %v8896, 0.0
  %v8961 = vmax.f32 %v8897, 0.0
  %v8962 = vmax.f32 %v8898, 0.0
  %v8963 = vmax.f32 %v8899, 0.0
  %v8964 = vmax.f32 %v8900, 0.0
  %v8965 = vmax.f32 %v8901, 0.0
  %v8966 = vmax.f32 %v8902, 0.0
  %v8967 = vmax.f32 %v8903, 0.0
  %v8968 = vmax.f32 %v8904, 0.0
  %v8969 = vmax.f32 %v8905, 0.0
  %v8970 = vmax.f32 %v8906, 0.0
  %v8971 = vmax.f32 %v8907, 0.0
  %v8972 = vmax.f32 %v8908, 0.0
  %v8973 = vmax.f32 %v8909, 0.0
  %v8974 = vmax.f32 %v8910, 0.0
  %v8975 = vmax.f32 %v8911, 0.0
  %v8976 = vmax.f32 %v8912, 0.0
  %v8977 = vmax.f32 %v8913, 0.0
  %v8978 = vmax.f32 %v8914, 0.0
  %v8979 = vmax.f32 %v8915, 0.0
  %v8980 = vmax.f32 %v8916, 0.0
  %v8981 = vmax.f32 %v8917, 0.0
  %v8982 = vmax.f32 %v8918, 0.0
  %v8983 = vmax.f32 %v8919, 0.0
  %v8984 = vmax.f32 %v8920, 0.0
  %v8985 = vmax.f32 %v8921, 0.0
  %v8986 = vmax.f32 %v8922, 0.0
  %v8987 = vmax.f32 %v8923, 0.0
  %v9020 = vrot.slane %v8926, 7
  %vm9021 = vcmask 1041409
  %v9022 = vsel %vm9021, %v9020, %v8924
  %v9023 = vrot.slane %v8928, 6
  %vm9024 = vcmask 1042434
  %v9025 = vsel %vm9024, %v9023, %v9022
  %v9026 = vrot.slane %v8930, 5
  %vm9027 = vcmask 1043459
  %v9028 = vsel %vm9027, %v9026, %v9025
  %v9029 = vrot.slane %v8932, 4
  %vm9030 = vcmask 1044484
  %v9031 = vsel %vm9030, %v9029, %v9028
  %v9032 = vrot.slane %v8934, 3
  %vm9033 = vcmask 1045509
  %v9034 = vsel %vm9033, %v9032, %v9031
  %v9035 = vrot.slane %v8936, 2
  %vm9036 = vcmask 1046534
  %v9037 = vsel %vm9036, %v9035, %v9034
  %v9038 = vrot.slane %v8938, 1
  %vm9039 = vcmask 1047559
  %v9040 = vsel %vm9039, %v9038, %v9037
  %v9041 = vrot.slane %v8942, 7
  %v9042 = vsel %vm9021, %v9041, %v8940
  %v9043 = vrot.slane %v8944, 6
  %v9044 = vsel %vm9024, %v9043, %v9042
  %v9045 = vrot.slane %v8946, 5
  %v9046 = vsel %vm9027, %v9045, %v9044
  %v9047 = vrot.slane %v8948, 4
  %v9048 = vsel %vm9030, %v9047, %v9046
  %v9049 = vrot.slane %v8950, 3
  %v9050 = vsel %vm9033, %v9049, %v9048
  %v9051 = vrot.slane %v8952, 2
  %v9052 = vsel %vm9036, %v9051, %v9050
  %v9053 = vrot.slane %v8954, 1
  %v9054 = vsel %vm9039, %v9053, %v9052
  %v9055 = vrot.slane %v8958, 7
  %v9056 = vsel %vm9021, %v9055, %v8956
  %v9057 = vrot.slane %v8960, 6
  %v9058 = vsel %vm9024, %v9057, %v9056
  %v9059 = vrot.slane %v8962, 5
  %v9060 = vsel %vm9027, %v9059, %v9058
  %v9061 = vrot.slane %v8964, 4
  %v9062 = vsel %vm9030, %v9061, %v9060
  %v9063 = vrot.slane %v8966, 3
  %v9064 = vsel %vm9033, %v9063, %v9062
  %v9065 = vrot.slane %v8968, 2
  %v9066 = vsel %vm9036, %v9065, %v9064
  %v9067 = vrot.slane %v8970, 1
  %v9068 = vsel %vm9039, %v9067, %v9066
  %v9069 = vrot.slane %v8974, 7
  %v9070 = vsel %vm9021, %v9069, %v8972
  %v9071 = vrot.slane %v8976, 6
  %v9072 = vsel %vm9024, %v9071, %v9070
  %v9073 = vrot.slane %v8978, 5
  %v9074 = vsel %vm9027, %v9073, %v9072
  %v9075 = vrot.slane %v8980, 4
  %v9076 = vsel %vm9030, %v9075, %v9074
  %v9077 = vrot.slane %v8982, 3
  %v9078 = vsel %vm9033, %v9077, %v9076
  %v9079 = vrot.slane %v8984, 2
  %v9080 = vsel %vm9036, %v9079, %v9078
  %v9081 = vrot.slane %v8986, 1
  %v9082 = vsel %vm9039, %v9081, %v9080
  %v9087 = vrot.slane %v8924, 1
  %v9088 = vsel %vm9021, %v8926, %v9087
  %v9089 = vrot.slane %v8928, 7
  %v9090 = vsel %vm9024, %v9089, %v9088
  %v9091 = vrot.slane %v8930, 6
  %v9092 = vsel %vm9027, %v9091, %v9090
  %v9093 = vrot.slane %v8932, 5
  %v9094 = vsel %vm9030, %v9093, %v9092
  %v9095 = vrot.slane %v8934, 4
  %v9096 = vsel %vm9033, %v9095, %v9094
  %v9097 = vrot.slane %v8936, 3
  %v9098 = vsel %vm9036, %v9097, %v9096
  %v9099 = vrot.slane %v8938, 2
  %v9100 = vsel %vm9039, %v9099, %v9098
  %v9101 = vrot.slane %v8940, 1
  %v9102 = vsel %vm9021, %v8942, %v9101
  %v9103 = vrot.slane %v8944, 7
  %v9104 = vsel %vm9024, %v9103, %v9102
  %v9105 = vrot.slane %v8946, 6
  %v9106 = vsel %vm9027, %v9105, %v9104
  %v9107 = vrot.slane %v8948, 5
  %v9108 = vsel %vm9030, %v9107, %v9106
  %v9109 = vrot.slane %v8950, 4
  %v9110 = vsel %vm9033, %v9109, %v9108
  %v9111 = vrot.slane %v8952, 3
  %v9112 = vsel %vm9036, %v9111, %v9110
  %v9113 = vrot.slane %v8954, 2
  %v9114 = vsel %vm9039, %v9113, %v9112
  %v9115 = vrot.slane %v8956, 1
  %v9116 = vsel %vm9021, %v8958, %v9115
  %v9117 = vrot.slane %v8960, 7
  %v9118 = vsel %vm9024, %v9117, %v9116
  %v9119 = vrot.slane %v8962, 6
  %v9120 = vsel %vm9027, %v9119, %v9118
  %v9121 = vrot.slane %v8964, 5
  %v9122 = vsel %vm9030, %v9121, %v9120
  %v9123 = vrot.slane %v8966, 4
  %v9124 = vsel %vm9033, %v9123, %v9122
  %v9125 = vrot.slane %v8968, 3
  %v9126 = vsel %vm9036, %v9125, %v9124
  %v9127 = vrot.slane %v8970, 2
  %v9128 = vsel %vm9039, %v9127, %v9126
  %v9129 = vrot.slane %v8972, 1
  %v9130 = vsel %vm9021, %v8974, %v9129
  %v9131 = vrot.slane %v8976, 7
  %v9132 = vsel %vm9024, %v9131, %v9130
  %v9133 = vrot.slane %v8978, 6
  %v9134 = vsel %vm9027, %v9133, %v9132
  %v9135 = vrot.slane %v8980, 5
  %v9136 = vsel %vm9030, %v9135, %v9134
  %v9137 = vrot.slane %v8982, 4
  %v9138 = vsel %vm9033, %v9137, %v9136
  %v9139 = vrot.slane %v8984, 3
  %v9140 = vsel %vm9036, %v9139, %v9138
  %v9141 = vrot.slane %v8986, 2
  %v9142 = vsel %vm9039, %v9141, %v9140
  %9143 = vrot.lane.b32.xlu0 %v9100, 8
  %v9144 = vpop.permute.xlu0 %9143
  %9145 = vrot.lane.b32.xlu0 %v9114, 8
  %v9146 = vpop.permute.xlu0 %9145
  %9147 = vrot.lane.b32.xlu0 %v9128, 8
  %v9148 = vpop.permute.xlu0 %9147
  %9149 = vrot.lane.b32.xlu0 %v9142, 8
  %v9150 = vpop.permute.xlu0 %9149
  %v9155 = vrot.slane %v8924, 2
  %v9156 = vrot.slane %v8926, 1
  %v9157 = vsel %vm9021, %v9156, %v9155
  %v9158 = vsel %vm9024, %v8928, %v9157
  %v9159 = vrot.slane %v8930, 7
  %v9160 = vsel %vm9027, %v9159, %v9158
  %v9161 = vrot.slane %v8932, 6
  %v9162 = vsel %vm9030, %v9161, %v9160
  %v9163 = vrot.slane %v8934, 5
  %v9164 = vsel %vm9033, %v9163, %v9162
  %v9165 = vrot.slane %v8936, 4
  %v9166 = vsel %vm9036, %v9165, %v9164
  %v9167 = vrot.slane %v8938, 3
  %v9168 = vsel %vm9039, %v9167, %v9166
  %v9169 = vrot.slane %v8940, 2
  %v9170 = vrot.slane %v8942, 1
  %v9171 = vsel %vm9021, %v9170, %v9169
  %v9172 = vsel %vm9024, %v8944, %v9171
  %v9173 = vrot.slane %v8946, 7
  %v9174 = vsel %vm9027, %v9173, %v9172
  %v9175 = vrot.slane %v8948, 6
  %v9176 = vsel %vm9030, %v9175, %v9174
  %v9177 = vrot.slane %v8950, 5
  %v9178 = vsel %vm9033, %v9177, %v9176
  %v9179 = vrot.slane %v8952, 4
  %v9180 = vsel %vm9036, %v9179, %v9178
  %v9181 = vrot.slane %v8954, 3
  %v9182 = vsel %vm9039, %v9181, %v9180
  %v9183 = vrot.slane %v8956, 2
  %v9184 = vrot.slane %v8958, 1
  %v9185 = vsel %vm9021, %v9184, %v9183
  %v9186 = vsel %vm9024, %v8960, %v9185
  %v9187 = vrot.slane %v8962, 7
  %v9188 = vsel %vm9027, %v9187, %v9186
  %v9189 = vrot.slane %v8964, 6
  %v9190 = vsel %vm9030, %v9189, %v9188
  %v9191 = vrot.slane %v8966, 5
  %v9192 = vsel %vm9033, %v9191, %v9190
  %v9193 = vrot.slane %v8968, 4
  %v9194 = vsel %vm9036, %v9193, %v9192
  %v9195 = vrot.slane %v8970, 3
  %v9196 = vsel %vm9039, %v9195, %v9194
  %v9197 = vrot.slane %v8972, 2
  %v9198 = vrot.slane %v8974, 1
  %v9199 = vsel %vm9021, %v9198, %v9197
  %v9200 = vsel %vm9024, %v8976, %v9199
  %v9201 = vrot.slane %v8978, 7
  %v9202 = vsel %vm9027, %v9201, %v9200
  %v9203 = vrot.slane %v8980, 6
  %v9204 = vsel %vm9030, %v9203, %v9202
  %v9205 = vrot.slane %v8982, 5
  %v9206 = vsel %vm9033, %v9205, %v9204
  %v9207 = vrot.slane %v8984, 4
  %v9208 = vsel %vm9036, %v9207, %v9206
  %v9209 = vrot.slane %v8986, 3
  %v9210 = vsel %vm9039, %v9209, %v9208
  %9211 = vrot.lane.b32.xlu0 %v9168, 16
  %v9212 = vpop.permute.xlu0 %9211
  %9213 = vrot.lane.b32.xlu0 %v9182, 16
  %v9214 = vpop.permute.xlu0 %9213
  %9215 = vrot.lane.b32.xlu0 %v9196, 16
  %v9216 = vpop.permute.xlu0 %9215
  %9217 = vrot.lane.b32.xlu0 %v9210, 16
  %v9218 = vpop.permute.xlu0 %9217
  %v9223 = vrot.slane %v8924, 3
  %v9224 = vrot.slane %v8926, 2
  %v9225 = vsel %vm9021, %v9224, %v9223
  %v9226 = vrot.slane %v8928, 1
  %v9227 = vsel %vm9024, %v9226, %v9225
  %v9228 = vsel %vm9027, %v8930, %v9227
  %v9229 = vrot.slane %v8932, 7
  %v9230 = vsel %vm9030, %v9229, %v9228
  %v9231 = vrot.slane %v8934, 6
  %v9232 = vsel %vm9033, %v9231, %v9230
  %v9233 = vrot.slane %v8936, 5
  %v9234 = vsel %vm9036, %v9233, %v9232
  %v9235 = vrot.slane %v8938, 4
  %v9236 = vsel %vm9039, %v9235, %v9234
  %v9237 = vrot.slane %v8940, 3
  %v9238 = vrot.slane %v8942, 2
  %v9239 = vsel %vm9021, %v9238, %v9237
  %v9240 = vrot.slane %v8944, 1
  %v9241 = vsel %vm9024, %v9240, %v9239
  %v9242 = vsel %vm9027, %v8946, %v9241
  %v9243 = vrot.slane %v8948, 7
  %v9244 = vsel %vm9030, %v9243, %v9242
  %v9245 = vrot.slane %v8950, 6
  %v9246 = vsel %vm9033, %v9245, %v9244
  %v9247 = vrot.slane %v8952, 5
  %v9248 = vsel %vm9036, %v9247, %v9246
  %v9249 = vrot.slane %v8954, 4
  %v9250 = vsel %vm9039, %v9249, %v9248
  %v9251 = vrot.slane %v8956, 3
  %v9252 = vrot.slane %v8958, 2
  %v9253 = vsel %vm9021, %v9252, %v9251
  %v9254 = vrot.slane %v8960, 1
  %v9255 = vsel %vm9024, %v9254, %v9253
  %v9256 = vsel %vm9027, %v8962, %v9255
  %v9257 = vrot.slane %v8964, 7
  %v9258 = vsel %vm9030, %v9257, %v9256
  %v9259 = vrot.slane %v8966, 6
  %v9260 = vsel %vm9033, %v9259, %v9258
  %v9261 = vrot.slane %v8968, 5
  %v9262 = vsel %vm9036, %v9261, %v9260
  %v9263 = vrot.slane %v8970, 4
  %v9264 = vsel %vm9039, %v9263, %v9262
  %v9265 = vrot.slane %v8972, 3
  %v9266 = vrot.slane %v8974, 2
  %v9267 = vsel %vm9021, %v9266, %v9265
  %v9268 = vrot.slane %v8976, 1
  %v9269 = vsel %vm9024, %v9268, %v9267
  %v9270 = vsel %vm9027, %v8978, %v9269
  %v9271 = vrot.slane %v8980, 7
  %v9272 = vsel %vm9030, %v9271, %v9270
  %v9273 = vrot.slane %v8982, 6
  %v9274 = vsel %vm9033, %v9273, %v9272
  %v9275 = vrot.slane %v8984, 5
  %v9276 = vsel %vm9036, %v9275, %v9274
  %v9277 = vrot.slane %v8986, 4
  %v9278 = vsel %vm9039, %v9277, %v9276
  %9279 = vrot.lane.b32.xlu0 %v9236, 24
  %v9280 = vpop.permute.xlu0 %9279
  %9281 = vrot.lane.b32.xlu0 %v9250, 24
  %v9282 = vpop.permute.xlu0 %9281
  %9283 = vrot.lane.b32.xlu0 %v9264, 24
  %v9284 = vpop.permute.xlu0 %9283
  %9285 = vrot.lane.b32.xlu0 %v9278, 24
  %v9286 = vpop.permute.xlu0 %9285
  %v9291 = vrot.slane %v8924, 4
  %v9292 = vrot.slane %v8926, 3
  %v9293 = vsel %vm9021, %v9292, %v9291
  %v9294 = vrot.slane %v8928, 2
  %v9295 = vsel %vm9024, %v9294, %v9293
  %v9296 = vrot.slane %v8930, 1
  %v9297 = vsel %vm9027, %v9296, %v9295
  %v9298 = vsel %vm9030, %v8932, %v9297
  %v9299 = vrot.slane %v8934, 7
  %v9300 = vsel %vm9033, %v9299, %v9298
  %v9301 = vrot.slane %v8936, 6
  %v9302 = vsel %vm9036, %v9301, %v9300
  %v9303 = vrot.slane %v8938, 5
  %v9304 = vsel %vm9039, %v9303, %v9302
  %v9305 = vrot.slane %v8940, 4
  %v9306 = vrot.slane %v8942, 3
  %v9307 = vsel %vm9021, %v9306, %v9305
  %v9308 = vrot.slane %v8944, 2
  %v9309 = vsel %vm9024, %v9308, %v9307
  %v9310 = vrot.slane %v8946, 1
  %v9311 = vsel %vm9027, %v9310, %v9309
  %v9312 = vsel %vm9030, %v8948, %v9311
  %v9313 = vrot.slane %v8950, 7
  %v9314 = vsel %vm9033, %v9313, %v9312
  %v9315 = vrot.slane %v8952, 6
  %v9316 = vsel %vm9036, %v9315, %v9314
  %v9317 = vrot.slane %v8954, 5
  %v9318 = vsel %vm9039, %v9317, %v9316
  %v9319 = vrot.slane %v8956, 4
  %v9320 = vrot.slane %v8958, 3
  %v9321 = vsel %vm9021, %v9320, %v9319
  %v9322 = vrot.slane %v8960, 2
  %v9323 = vsel %vm9024, %v9322, %v9321
  %v9324 = vrot.slane %v8962, 1
  %v9325 = vsel %vm9027, %v9324, %v9323
  %v9326 = vsel %vm9030, %v8964, %v9325
  %v9327 = vrot.slane %v8966, 7
  %v9328 = vsel %vm9033, %v9327, %v9326
  %v9329 = vrot.slane %v8968, 6
  %v9330 = vsel %vm9036, %v9329, %v9328
  %v9331 = vrot.slane %v8970, 5
  %v9332 = vsel %vm9039, %v9331, %v9330
  %v9333 = vrot.slane %v8972, 4
  %v9334 = vrot.slane %v8974, 3
  %v9335 = vsel %vm9021, %v9334, %v9333
  %v9336 = vrot.slane %v8976, 2
  %v9337 = vsel %vm9024, %v9336, %v9335
  %v9338 = vrot.slane %v8978, 1
  %v9339 = vsel %vm9027, %v9338, %v9337
  %v9340 = vsel %vm9030, %v8980, %v9339
  %v9341 = vrot.slane %v8982, 7
  %v9342 = vsel %vm9033, %v9341, %v9340
  %v9343 = vrot.slane %v8984, 6
  %v9344 = vsel %vm9036, %v9343, %v9342
  %v9345 = vrot.slane %v8986, 5
  %v9346 = vsel %vm9039, %v9345, %v9344
  %9347 = vrot.lane.b32.xlu0 %v9304, 32
  %v9348 = vpop.permute.xlu0 %9347
  %9349 = vrot.lane.b32.xlu0 %v9318, 32
  %v9350 = vpop.permute.xlu0 %9349
  %9351 = vrot.lane.b32.xlu0 %v9332, 32
  %v9352 = vpop.permute.xlu0 %9351
  %9353 = vrot.lane.b32.xlu0 %v9346, 32
  %v9354 = vpop.permute.xlu0 %9353
  %v9359 = vrot.slane %v8924, 5
  %v9360 = vrot.slane %v8926, 4
  %v9361 = vsel %vm9021, %v9360, %v9359
  %v9362 = vrot.slane %v8928, 3
  %v9363 = vsel %vm9024, %v9362, %v9361
  %v9364 = vrot.slane %v8930, 2
  %v9365 = vsel %vm9027, %v9364, %v9363
  %v9366 = vrot.slane %v8932, 1
  %v9367 = vsel %vm9030, %v9366, %v9365
  %v9368 = vsel %vm9033, %v8934, %v9367
  %v9369 = vrot.slane %v8936, 7
  %v9370 = vsel %vm9036, %v9369, %v9368
  %v9371 = vrot.slane %v8938, 6
  %v9372 = vsel %vm9039, %v9371, %v9370
  %v9373 = vrot.slane %v8940, 5
  %v9374 = vrot.slane %v8942, 4
  %v9375 = vsel %vm9021, %v9374, %v9373
  %v9376 = vrot.slane %v8944, 3
  %v9377 = vsel %vm9024, %v9376, %v9375
  %v9378 = vrot.slane %v8946, 2
  %v9379 = vsel %vm9027, %v9378, %v9377
  %v9380 = vrot.slane %v8948, 1
  %v9381 = vsel %vm9030, %v9380, %v9379
  %v9382 = vsel %vm9033, %v8950, %v9381
  %v9383 = vrot.slane %v8952, 7
  %v9384 = vsel %vm9036, %v9383, %v9382
  %v9385 = vrot.slane %v8954, 6
  %v9386 = vsel %vm9039, %v9385, %v9384
  %v9387 = vrot.slane %v8956, 5
  %v9388 = vrot.slane %v8958, 4
  %v9389 = vsel %vm9021, %v9388, %v9387
  %v9390 = vrot.slane %v8960, 3
  %v9391 = vsel %vm9024, %v9390, %v9389
  %v9392 = vrot.slane %v8962, 2
  %v9393 = vsel %vm9027, %v9392, %v9391
  %v9394 = vrot.slane %v8964, 1
  %v9395 = vsel %vm9030, %v9394, %v9393
  %v9396 = vsel %vm9033, %v8966, %v9395
  %v9397 = vrot.slane %v8968, 7
  %v9398 = vsel %vm9036, %v9397, %v9396
  %v9399 = vrot.slane %v8970, 6
  %v9400 = vsel %vm9039, %v9399, %v9398
  %v9401 = vrot.slane %v8972, 5
  %v9402 = vrot.slane %v8974, 4
  %v9403 = vsel %vm9021, %v9402, %v9401
  %v9404 = vrot.slane %v8976, 3
  %v9405 = vsel %vm9024, %v9404, %v9403
  %v9406 = vrot.slane %v8978, 2
  %v9407 = vsel %vm9027, %v9406, %v9405
  %v9408 = vrot.slane %v8980, 1
  %v9409 = vsel %vm9030, %v9408, %v9407
  %v9410 = vsel %vm9033, %v8982, %v9409
  %v9411 = vrot.slane %v8984, 7
  %v9412 = vsel %vm9036, %v9411, %v9410
  %v9413 = vrot.slane %v8986, 6
  %v9414 = vsel %vm9039, %v9413, %v9412
  %9415 = vrot.lane.b32.xlu0 %v9372, 40
  %v9416 = vpop.permute.xlu0 %9415
  %9417 = vrot.lane.b32.xlu0 %v9386, 40
  %v9418 = vpop.permute.xlu0 %9417
  %9419 = vrot.lane.b32.xlu0 %v9400, 40
  %v9420 = vpop.permute.xlu0 %9419
  %9421 = vrot.lane.b32.xlu0 %v9414, 40
  %v9422 = vpop.permute.xlu0 %9421
  %v9427 = vrot.slane %v8924, 6
  %v9428 = vrot.slane %v8926, 5
  %v9429 = vsel %vm9021, %v9428, %v9427
  %v9430 = vrot.slane %v8928, 4
  %v9431 = vsel %vm9024, %v9430, %v9429
  %v9432 = vrot.slane %v8930, 3
  %v9433 = vsel %vm9027, %v9432, %v9431
  %v9434 = vrot.slane %v8932, 2
  %v9435 = vsel %vm9030, %v9434, %v9433
  %v9436 = vrot.slane %v8934, 1
  %v9437 = vsel %vm9033, %v9436, %v9435
  %v9438 = vsel %vm9036, %v8936, %v9437
  %v9439 = vrot.slane %v8938, 7
  %v9440 = vsel %vm9039, %v9439, %v9438
  %v9441 = vrot.slane %v8940, 6
  %v9442 = vrot.slane %v8942, 5
  %v9443 = vsel %vm9021, %v9442, %v9441
  %v9444 = vrot.slane %v8944, 4
  %v9445 = vsel %vm9024, %v9444, %v9443
  %v9446 = vrot.slane %v8946, 3
  %v9447 = vsel %vm9027, %v9446, %v9445
  %v9448 = vrot.slane %v8948, 2
  %v9449 = vsel %vm9030, %v9448, %v9447
  %v9450 = vrot.slane %v8950, 1
  %v9451 = vsel %vm9033, %v9450, %v9449
  %v9452 = vsel %vm9036, %v8952, %v9451
  %v9453 = vrot.slane %v8954, 7
  %v9454 = vsel %vm9039, %v9453, %v9452
  %v9455 = vrot.slane %v8956, 6
  %v9456 = vrot.slane %v8958, 5
  %v9457 = vsel %vm9021, %v9456, %v9455
  %v9458 = vrot.slane %v8960, 4
  %v9459 = vsel %vm9024, %v9458, %v9457
  %v9460 = vrot.slane %v8962, 3
  %v9461 = vsel %vm9027, %v9460, %v9459
  %v9462 = vrot.slane %v8964, 2
  %v9463 = vsel %vm9030, %v9462, %v9461
  %v9464 = vrot.slane %v8966, 1
  %v9465 = vsel %vm9033, %v9464, %v9463
  %v9466 = vsel %vm9036, %v8968, %v9465
  %v9467 = vrot.slane %v8970, 7
  %v9468 = vsel %vm9039, %v9467, %v9466
  %v9469 = vrot.slane %v8972, 6
  %v9470 = vrot.slane %v8974, 5
  %v9471 = vsel %vm9021, %v9470, %v9469
  %v9472 = vrot.slane %v8976, 4
  %v9473 = vsel %vm9024, %v9472, %v9471
  %v9474 = vrot.slane %v8978, 3
  %v9475 = vsel %vm9027, %v9474, %v9473
  %v9476 = vrot.slane %v8980, 2
  %v9477 = vsel %vm9030, %v9476, %v9475
  %v9478 = vrot.slane %v8982, 1
  %v9479 = vsel %vm9033, %v9478, %v9477
  %v9480 = vsel %vm9036, %v8984, %v9479
  %v9481 = vrot.slane %v8986, 7
  %v9482 = vsel %vm9039, %v9481, %v9480
  %9483 = vrot.lane.b32.xlu0 %v9440, 48
  %v9484 = vpop.permute.xlu0 %9483
  %9485 = vrot.lane.b32.xlu0 %v9454, 48
  %v9486 = vpop.permute.xlu0 %9485
  %9487 = vrot.lane.b32.xlu0 %v9468, 48
  %v9488 = vpop.permute.xlu0 %9487
  %9489 = vrot.lane.b32.xlu0 %v9482, 48
  %v9490 = vpop.permute.xlu0 %9489
  %v9495 = vrot.slane %v8924, 7
  %v9496 = vrot.slane %v8926, 6
  %v9497 = vsel %vm9021, %v9496, %v9495
  %v9498 = vrot.slane %v8928, 5
  %v9499 = vsel %vm9024, %v9498, %v9497
  %v9500 = vrot.slane %v8930, 4
  %v9501 = vsel %vm9027, %v9500, %v9499
  %v9502 = vrot.slane %v8932, 3
  %v9503 = vsel %vm9030, %v9502, %v9501
  %v9504 = vrot.slane %v8934, 2
  %v9505 = vsel %vm9033, %v9504, %v9503
  %v9506 = vrot.slane %v8936, 1
  %v9507 = vsel %vm9036, %v9506, %v9505
  %v9508 = vsel %vm9039, %v8938, %v9507
  %v9509 = vrot.slane %v8940, 7
  %v9510 = vrot.slane %v8942, 6
  %v9511 = vsel %vm9021, %v9510, %v9509
  %v9512 = vrot.slane %v8944, 5
  %v9513 = vsel %vm9024, %v9512, %v9511
  %v9514 = vrot.slane %v8946, 4
  %v9515 = vsel %vm9027, %v9514, %v9513
  %v9516 = vrot.slane %v8948, 3
  %v9517 = vsel %vm9030, %v9516, %v9515
  %v9518 = vrot.slane %v8950, 2
  %v9519 = vsel %vm9033, %v9518, %v9517
  %v9520 = vrot.slane %v8952, 1
  %v9521 = vsel %vm9036, %v9520, %v9519
  %v9522 = vsel %vm9039, %v8954, %v9521
  %v9523 = vrot.slane %v8956, 7
  %v9524 = vrot.slane %v8958, 6
  %v9525 = vsel %vm9021, %v9524, %v9523
  %v9526 = vrot.slane %v8960, 5
  %v9527 = vsel %vm9024, %v9526, %v9525
  %v9528 = vrot.slane %v8962, 4
  %v9529 = vsel %vm9027, %v9528, %v9527
  %v9530 = vrot.slane %v8964, 3
  %v9531 = vsel %vm9030, %v9530, %v9529
  %v9532 = vrot.slane %v8966, 2
  %v9533 = vsel %vm9033, %v9532, %v9531
  %v9534 = vrot.slane %v8968, 1
  %v9535 = vsel %vm9036, %v9534, %v9533
  %v9536 = vsel %vm9039, %v8970, %v9535
  %v9537 = vrot.slane %v8972, 7
  %v9538 = vrot.slane %v8974, 6
  %v9539 = vsel %vm9021, %v9538, %v9537
  %v9540 = vrot.slane %v8976, 5
  %v9541 = vsel %vm9024, %v9540, %v9539
  %v9542 = vrot.slane %v8978, 4
  %v9543 = vsel %vm9027, %v9542, %v9541
  %v9544 = vrot.slane %v8980, 3
  %v9545 = vsel %vm9030, %v9544, %v9543
  %v9546 = vrot.slane %v8982, 2
  %v9547 = vsel %vm9033, %v9546, %v9545
  %v9548 = vrot.slane %v8984, 1
  %v9549 = vsel %vm9036, %v9548, %v9547
  %v9550 = vsel %vm9039, %v8986, %v9549
  %9551 = vrot.lane.b32.xlu0 %v9508, 56
  %v9552 = vpop.permute.xlu0 %9551
  %9553 = vrot.lane.b32.xlu0 %v9522, 56
  %v9554 = vpop.permute.xlu0 %9553
  %9555 = vrot.lane.b32.xlu0 %v9536, 56
  %v9556 = vpop.permute.xlu0 %9555
  %9557 = vrot.lane.b32.xlu0 %v9550, 56
  %v9558 = vpop.permute.xlu0 %9557
  %v9595 = vrot.slane %v8927, 7
  %v9596 = vsel %vm9021, %v9595, %v8925
  %v9597 = vrot.slane %v8929, 6
  %v9598 = vsel %vm9024, %v9597, %v9596
  %v9599 = vrot.slane %v8931, 5
  %v9600 = vsel %vm9027, %v9599, %v9598
  %v9601 = vrot.slane %v8933, 4
  %v9602 = vsel %vm9030, %v9601, %v9600
  %v9603 = vrot.slane %v8935, 3
  %v9604 = vsel %vm9033, %v9603, %v9602
  %v9605 = vrot.slane %v8937, 2
  %v9606 = vsel %vm9036, %v9605, %v9604
  %v9607 = vrot.slane %v8939, 1
  %v9608 = vsel %vm9039, %v9607, %v9606
  %v9609 = vrot.slane %v8943, 7
  %v9610 = vsel %vm9021, %v9609, %v8941
  %v9611 = vrot.slane %v8945, 6
  %v9612 = vsel %vm9024, %v9611, %v9610
  %v9613 = vrot.slane %v8947, 5
  %v9614 = vsel %vm9027, %v9613, %v9612
  %v9615 = vrot.slane %v8949, 4
  %v9616 = vsel %vm9030, %v9615, %v9614
  %v9617 = vrot.slane %v8951, 3
  %v9618 = vsel %vm9033, %v9617, %v9616
  %v9619 = vrot.slane %v8953, 2
  %v9620 = vsel %vm9036, %v9619, %v9618
  %v9621 = vrot.slane %v8955, 1
  %v9622 = vsel %vm9039, %v9621, %v9620
  %v9623 = vrot.slane %v8959, 7
  %v9624 = vsel %vm9021, %v9623, %v8957
  %v9625 = vrot.slane %v8961, 6
  %v9626 = vsel %vm9024, %v9625, %v9624
  %v9627 = vrot.slane %v8963, 5
  %v9628 = vsel %vm9027, %v9627, %v9626
  %v9629 = vrot.slane %v8965, 4
  %v9630 = vsel %vm9030, %v9629, %v9628
  %v9631 = vrot.slane %v8967, 3
  %v9632 = vsel %vm9033, %v9631, %v9630
  %v9633 = vrot.slane %v8969, 2
  %v9634 = vsel %vm9036, %v9633, %v9632
  %v9635 = vrot.slane %v8971, 1
  %v9636 = vsel %vm9039, %v9635, %v9634
  %v9637 = vrot.slane %v8975, 7
  %v9638 = vsel %vm9021, %v9637, %v8973
  %v9639 = vrot.slane %v8977, 6
  %v9640 = vsel %vm9024, %v9639, %v9638
  %v9641 = vrot.slane %v8979, 5
  %v9642 = vsel %vm9027, %v9641, %v9640
  %v9643 = vrot.slane %v8981, 4
  %v9644 = vsel %vm9030, %v9643, %v9642
  %v9645 = vrot.slane %v8983, 3
  %v9646 = vsel %vm9033, %v9645, %v9644
  %v9647 = vrot.slane %v8985, 2
  %v9648 = vsel %vm9036, %v9647, %v9646
  %v9649 = vrot.slane %v8987, 1
  %v9650 = vsel %vm9039, %v9649, %v9648
  %9651 = vrot.lane.b32.xlu0 %v9608, 64
  %v9652 = vpop.permute.xlu0 %9651
  %9653 = vrot.lane.b32.xlu0 %v9622, 64
  %v9654 = vpop.permute.xlu0 %9653
  %9655 = vrot.lane.b32.xlu0 %v9636, 64
  %v9656 = vpop.permute.xlu0 %9655
  %9657 = vrot.lane.b32.xlu0 %v9650, 64
  %v9658 = vpop.permute.xlu0 %9657
  %v9663 = vrot.slane %v8925, 1
  %v9664 = vsel %vm9021, %v8927, %v9663
  %v9665 = vrot.slane %v8929, 7
  %v9666 = vsel %vm9024, %v9665, %v9664
  %v9667 = vrot.slane %v8931, 6
  %v9668 = vsel %vm9027, %v9667, %v9666
  %v9669 = vrot.slane %v8933, 5
  %v9670 = vsel %vm9030, %v9669, %v9668
  %v9671 = vrot.slane %v8935, 4
  %v9672 = vsel %vm9033, %v9671, %v9670
  %v9673 = vrot.slane %v8937, 3
  %v9674 = vsel %vm9036, %v9673, %v9672
  %v9675 = vrot.slane %v8939, 2
  %v9676 = vsel %vm9039, %v9675, %v9674
  %v9677 = vrot.slane %v8941, 1
  %v9678 = vsel %vm9021, %v8943, %v9677
  %v9679 = vrot.slane %v8945, 7
  %v9680 = vsel %vm9024, %v9679, %v9678
  %v9681 = vrot.slane %v8947, 6
  %v9682 = vsel %vm9027, %v9681, %v9680
  %v9683 = vrot.slane %v8949, 5
  %v9684 = vsel %vm9030, %v9683, %v9682
  %v9685 = vrot.slane %v8951, 4
  %v9686 = vsel %vm9033, %v9685, %v9684
  %v9687 = vrot.slane %v8953, 3
  %v9688 = vsel %vm9036, %v9687, %v9686
  %v9689 = vrot.slane %v8955, 2
  %v9690 = vsel %vm9039, %v9689, %v9688
  %v9691 = vrot.slane %v8957, 1
  %v9692 = vsel %vm9021, %v8959, %v9691
  %v9693 = vrot.slane %v8961, 7
  %v9694 = vsel %vm9024, %v9693, %v9692
  %v9695 = vrot.slane %v8963, 6
  %v9696 = vsel %vm9027, %v9695, %v9694
  %v9697 = vrot.slane %v8965, 5
  %v9698 = vsel %vm9030, %v9697, %v9696
  %v9699 = vrot.slane %v8967, 4
  %v9700 = vsel %vm9033, %v9699, %v9698
  %v9701 = vrot.slane %v8969, 3
  %v9702 = vsel %vm9036, %v9701, %v9700
  %v9703 = vrot.slane %v8971, 2
  %v9704 = vsel %vm9039, %v9703, %v9702
  %v9705 = vrot.slane %v8973, 1
  %v9706 = vsel %vm9021, %v8975, %v9705
  %v9707 = vrot.slane %v8977, 7
  %v9708 = vsel %vm9024, %v9707, %v9706
  %v9709 = vrot.slane %v8979, 6
  %v9710 = vsel %vm9027, %v9709, %v9708
  %v9711 = vrot.slane %v8981, 5
  %v9712 = vsel %vm9030, %v9711, %v9710
  %v9713 = vrot.slane %v8983, 4
  %v9714 = vsel %vm9033, %v9713, %v9712
  %v9715 = vrot.slane %v8985, 3
  %v9716 = vsel %vm9036, %v9715, %v9714
  %v9717 = vrot.slane %v8987, 2
  %v9718 = vsel %vm9039, %v9717, %v9716
  %9719 = vrot.lane.b32.xlu0 %v9676, 72
  %v9720 = vpop.permute.xlu0 %9719
  %9721 = vrot.lane.b32.xlu0 %v9690, 72
  %v9722 = vpop.permute.xlu0 %9721
  %9723 = vrot.lane.b32.xlu0 %v9704, 72
  %v9724 = vpop.permute.xlu0 %9723
  %9725 = vrot.lane.b32.xlu0 %v9718, 72
  %v9726 = vpop.permute.xlu0 %9725
  %v9731 = vrot.slane %v8925, 2
  %v9732 = vrot.slane %v8927, 1
  %v9733 = vsel %vm9021, %v9732, %v9731
  %v9734 = vsel %vm9024, %v8929, %v9733
  %v9735 = vrot.slane %v8931, 7
  %v9736 = vsel %vm9027, %v9735, %v9734
  %v9737 = vrot.slane %v8933, 6
  %v9738 = vsel %vm9030, %v9737, %v9736
  %v9739 = vrot.slane %v8935, 5
  %v9740 = vsel %vm9033, %v9739, %v9738
  %v9741 = vrot.slane %v8937, 4
  %v9742 = vsel %vm9036, %v9741, %v9740
  %v9743 = vrot.slane %v8939, 3
  %v9744 = vsel %vm9039, %v9743, %v9742
  %v9745 = vrot.slane %v8941, 2
  %v9746 = vrot.slane %v8943, 1
  %v9747 = vsel %vm9021, %v9746, %v9745
  %v9748 = vsel %vm9024, %v8945, %v9747
  %v9749 = vrot.slane %v8947, 7
  %v9750 = vsel %vm9027, %v9749, %v9748
  %v9751 = vrot.slane %v8949, 6
  %v9752 = vsel %vm9030, %v9751, %v9750
  %v9753 = vrot.slane %v8951, 5
  %v9754 = vsel %vm9033, %v9753, %v9752
  %v9755 = vrot.slane %v8953, 4
  %v9756 = vsel %vm9036, %v9755, %v9754
  %v9757 = vrot.slane %v8955, 3
  %v9758 = vsel %vm9039, %v9757, %v9756
  %v9759 = vrot.slane %v8957, 2
  %v9760 = vrot.slane %v8959, 1
  %v9761 = vsel %vm9021, %v9760, %v9759
  %v9762 = vsel %vm9024, %v8961, %v9761
  %v9763 = vrot.slane %v8963, 7
  %v9764 = vsel %vm9027, %v9763, %v9762
  %v9765 = vrot.slane %v8965, 6
  %v9766 = vsel %vm9030, %v9765, %v9764
  %v9767 = vrot.slane %v8967, 5
  %v9768 = vsel %vm9033, %v9767, %v9766
  %v9769 = vrot.slane %v8969, 4
  %v9770 = vsel %vm9036, %v9769, %v9768
  %v9771 = vrot.slane %v8971, 3
  %v9772 = vsel %vm9039, %v9771, %v9770
  %v9773 = vrot.slane %v8973, 2
  %v9774 = vrot.slane %v8975, 1
  %v9775 = vsel %vm9021, %v9774, %v9773
  %v9776 = vsel %vm9024, %v8977, %v9775
  %v9777 = vrot.slane %v8979, 7
  %v9778 = vsel %vm9027, %v9777, %v9776
  %v9779 = vrot.slane %v8981, 6
  %v9780 = vsel %vm9030, %v9779, %v9778
  %v9781 = vrot.slane %v8983, 5
  %v9782 = vsel %vm9033, %v9781, %v9780
  %v9783 = vrot.slane %v8985, 4
  %v9784 = vsel %vm9036, %v9783, %v9782
  %v9785 = vrot.slane %v8987, 3
  %v9786 = vsel %vm9039, %v9785, %v9784
  %9787 = vrot.lane.b32.xlu0 %v9744, 80
  %v9788 = vpop.permute.xlu0 %9787
  %9789 = vrot.lane.b32.xlu0 %v9758, 80
  %v9790 = vpop.permute.xlu0 %9789
  %9791 = vrot.lane.b32.xlu0 %v9772, 80
  %v9792 = vpop.permute.xlu0 %9791
  %9793 = vrot.lane.b32.xlu0 %v9786, 80
  %v9794 = vpop.permute.xlu0 %9793
  %v9799 = vrot.slane %v8925, 3
  %v9800 = vrot.slane %v8927, 2
  %v9801 = vsel %vm9021, %v9800, %v9799
  %v9802 = vrot.slane %v8929, 1
  %v9803 = vsel %vm9024, %v9802, %v9801
  %v9804 = vsel %vm9027, %v8931, %v9803
  %v9805 = vrot.slane %v8933, 7
  %v9806 = vsel %vm9030, %v9805, %v9804
  %v9807 = vrot.slane %v8935, 6
  %v9808 = vsel %vm9033, %v9807, %v9806
  %v9809 = vrot.slane %v8937, 5
  %v9810 = vsel %vm9036, %v9809, %v9808
  %v9811 = vrot.slane %v8939, 4
  %v9812 = vsel %vm9039, %v9811, %v9810
  %v9813 = vrot.slane %v8941, 3
  %v9814 = vrot.slane %v8943, 2
  %v9815 = vsel %vm9021, %v9814, %v9813
  %v9816 = vrot.slane %v8945, 1
  %v9817 = vsel %vm9024, %v9816, %v9815
  %v9818 = vsel %vm9027, %v8947, %v9817
  %v9819 = vrot.slane %v8949, 7
  %v9820 = vsel %vm9030, %v9819, %v9818
  %v9821 = vrot.slane %v8951, 6
  %v9822 = vsel %vm9033, %v9821, %v9820
  %v9823 = vrot.slane %v8953, 5
  %v9824 = vsel %vm9036, %v9823, %v9822
  %v9825 = vrot.slane %v8955, 4
  %v9826 = vsel %vm9039, %v9825, %v9824
  %v9827 = vrot.slane %v8957, 3
  %v9828 = vrot.slane %v8959, 2
  %v9829 = vsel %vm9021, %v9828, %v9827
  %v9830 = vrot.slane %v8961, 1
  %v9831 = vsel %vm9024, %v9830, %v9829
  %v9832 = vsel %vm9027, %v8963, %v9831
  %v9833 = vrot.slane %v8965, 7
  %v9834 = vsel %vm9030, %v9833, %v9832
  %v9835 = vrot.slane %v8967, 6
  %v9836 = vsel %vm9033, %v9835, %v9834
  %v9837 = vrot.slane %v8969, 5
  %v9838 = vsel %vm9036, %v9837, %v9836
  %v9839 = vrot.slane %v8971, 4
  %v9840 = vsel %vm9039, %v9839, %v9838
  %v9841 = vrot.slane %v8973, 3
  %v9842 = vrot.slane %v8975, 2
  %v9843 = vsel %vm9021, %v9842, %v9841
  %v9844 = vrot.slane %v8977, 1
  %v9845 = vsel %vm9024, %v9844, %v9843
  %v9846 = vsel %vm9027, %v8979, %v9845
  %v9847 = vrot.slane %v8981, 7
  %v9848 = vsel %vm9030, %v9847, %v9846
  %v9849 = vrot.slane %v8983, 6
  %v9850 = vsel %vm9033, %v9849, %v9848
  %v9851 = vrot.slane %v8985, 5
  %v9852 = vsel %vm9036, %v9851, %v9850
  %v9853 = vrot.slane %v8987, 4
  %v9854 = vsel %vm9039, %v9853, %v9852
  %9855 = vrot.lane.b32.xlu0 %v9812, 88
  %v9856 = vpop.permute.xlu0 %9855
  %9857 = vrot.lane.b32.xlu0 %v9826, 88
  %v9858 = vpop.permute.xlu0 %9857
  %9859 = vrot.lane.b32.xlu0 %v9840, 88
  %v9860 = vpop.permute.xlu0 %9859
  %9861 = vrot.lane.b32.xlu0 %v9854, 88
  %v9862 = vpop.permute.xlu0 %9861
  %v9867 = vrot.slane %v8925, 4
  %v9868 = vrot.slane %v8927, 3
  %v9869 = vsel %vm9021, %v9868, %v9867
  %v9870 = vrot.slane %v8929, 2
  %v9871 = vsel %vm9024, %v9870, %v9869
  %v9872 = vrot.slane %v8931, 1
  %v9873 = vsel %vm9027, %v9872, %v9871
  %v9874 = vsel %vm9030, %v8933, %v9873
  %v9875 = vrot.slane %v8935, 7
  %v9876 = vsel %vm9033, %v9875, %v9874
  %v9877 = vrot.slane %v8937, 6
  %v9878 = vsel %vm9036, %v9877, %v9876
  %v9879 = vrot.slane %v8939, 5
  %v9880 = vsel %vm9039, %v9879, %v9878
  %v9881 = vrot.slane %v8941, 4
  %v9882 = vrot.slane %v8943, 3
  %v9883 = vsel %vm9021, %v9882, %v9881
  %v9884 = vrot.slane %v8945, 2
  %v9885 = vsel %vm9024, %v9884, %v9883
  %v9886 = vrot.slane %v8947, 1
  %v9887 = vsel %vm9027, %v9886, %v9885
  %v9888 = vsel %vm9030, %v8949, %v9887
  %v9889 = vrot.slane %v8951, 7
  %v9890 = vsel %vm9033, %v9889, %v9888
  %v9891 = vrot.slane %v8953, 6
  %v9892 = vsel %vm9036, %v9891, %v9890
  %v9893 = vrot.slane %v8955, 5
  %v9894 = vsel %vm9039, %v9893, %v9892
  %v9895 = vrot.slane %v8957, 4
  %v9896 = vrot.slane %v8959, 3
  %v9897 = vsel %vm9021, %v9896, %v9895
  %v9898 = vrot.slane %v8961, 2
  %v9899 = vsel %vm9024, %v9898, %v9897
  %v9900 = vrot.slane %v8963, 1
  %v9901 = vsel %vm9027, %v9900, %v9899
  %v9902 = vsel %vm9030, %v8965, %v9901
  %v9903 = vrot.slane %v8967, 7
  %v9904 = vsel %vm9033, %v9903, %v9902
  %v9905 = vrot.slane %v8969, 6
  %v9906 = vsel %vm9036, %v9905, %v9904
  %v9907 = vrot.slane %v8971, 5
  %v9908 = vsel %vm9039, %v9907, %v9906
  %v9909 = vrot.slane %v8973, 4
  %v9910 = vrot.slane %v8975, 3
  %v9911 = vsel %vm9021, %v9910, %v9909
  %v9912 = vrot.slane %v8977, 2
  %v9913 = vsel %vm9024, %v9912, %v9911
  %v9914 = vrot.slane %v8979, 1
  %v9915 = vsel %vm9027, %v9914, %v9913
  %v9916 = vsel %vm9030, %v8981, %v9915
  %v9917 = vrot.slane %v8983, 7
  %v9918 = vsel %vm9033, %v9917, %v9916
  %v9919 = vrot.slane %v8985, 6
  %v9920 = vsel %vm9036, %v9919, %v9918
  %v9921 = vrot.slane %v8987, 5
  %v9922 = vsel %vm9039, %v9921, %v9920
  %9923 = vrot.lane.b32.xlu0 %v9880, 96
  %v9924 = vpop.permute.xlu0 %9923
  %9925 = vrot.lane.b32.xlu0 %v9894, 96
  %v9926 = vpop.permute.xlu0 %9925
  %9927 = vrot.lane.b32.xlu0 %v9908, 96
  %v9928 = vpop.permute.xlu0 %9927
  %9929 = vrot.lane.b32.xlu0 %v9922, 96
  %v9930 = vpop.permute.xlu0 %9929
  %v9935 = vrot.slane %v8925, 5
  %v9936 = vrot.slane %v8927, 4
  %v9937 = vsel %vm9021, %v9936, %v9935
  %v9938 = vrot.slane %v8929, 3
  %v9939 = vsel %vm9024, %v9938, %v9937
  %v9940 = vrot.slane %v8931, 2
  %v9941 = vsel %vm9027, %v9940, %v9939
  %v9942 = vrot.slane %v8933, 1
  %v9943 = vsel %vm9030, %v9942, %v9941
  %v9944 = vsel %vm9033, %v8935, %v9943
  %v9945 = vrot.slane %v8937, 7
  %v9946 = vsel %vm9036, %v9945, %v9944
  %v9947 = vrot.slane %v8939, 6
  %v9948 = vsel %vm9039, %v9947, %v9946
  %v9949 = vrot.slane %v8941, 5
  %v9950 = vrot.slane %v8943, 4
  %v9951 = vsel %vm9021, %v9950, %v9949
  %v9952 = vrot.slane %v8945, 3
  %v9953 = vsel %vm9024, %v9952, %v9951
  %v9954 = vrot.slane %v8947, 2
  %v9955 = vsel %vm9027, %v9954, %v9953
  %v9956 = vrot.slane %v8949, 1
  %v9957 = vsel %vm9030, %v9956, %v9955
  %v9958 = vsel %vm9033, %v8951, %v9957
  %v9959 = vrot.slane %v8953, 7
  %v9960 = vsel %vm9036, %v9959, %v9958
  %v9961 = vrot.slane %v8955, 6
  %v9962 = vsel %vm9039, %v9961, %v9960
  %v9963 = vrot.slane %v8957, 5
  %v9964 = vrot.slane %v8959, 4
  %v9965 = vsel %vm9021, %v9964, %v9963
  %v9966 = vrot.slane %v8961, 3
  %v9967 = vsel %vm9024, %v9966, %v9965
  %v9968 = vrot.slane %v8963, 2
  %v9969 = vsel %vm9027, %v9968, %v9967
  %v9970 = vrot.slane %v8965, 1
  %v9971 = vsel %vm9030, %v9970, %v9969
  %v9972 = vsel %vm9033, %v8967, %v9971
  %v9973 = vrot.slane %v8969, 7
  %v9974 = vsel %vm9036, %v9973, %v9972
  %v9975 = vrot.slane %v8971, 6
  %v9976 = vsel %vm9039, %v9975, %v9974
  %v9977 = vrot.slane %v8973, 5
  %v9978 = vrot.slane %v8975, 4
  %v9979 = vsel %vm9021, %v9978, %v9977
  %v9980 = vrot.slane %v8977, 3
  %v9981 = vsel %vm9024, %v9980, %v9979
  %v9982 = vrot.slane %v8979, 2
  %v9983 = vsel %vm9027, %v9982, %v9981
  %v9984 = vrot.slane %v8981, 1
  %v9985 = vsel %vm9030, %v9984, %v9983
  %v9986 = vsel %vm9033, %v8983, %v9985
  %v9987 = vrot.slane %v8985, 7
  %v9988 = vsel %vm9036, %v9987, %v9986
  %v9989 = vrot.slane %v8987, 6
  %v9990 = vsel %vm9039, %v9989, %v9988
  %9991 = vrot.lane.b32.xlu0 %v9948, 104
  %v9992 = vpop.permute.xlu0 %9991
  %9993 = vrot.lane.b32.xlu0 %v9962, 104
  %v9994 = vpop.permute.xlu0 %9993
  %9995 = vrot.lane.b32.xlu0 %v9976, 104
  %v9996 = vpop.permute.xlu0 %9995
  %9997 = vrot.lane.b32.xlu0 %v9990, 104
  %v9998 = vpop.permute.xlu0 %9997
  %v10003 = vrot.slane %v8925, 6
  %v10004 = vrot.slane %v8927, 5
  %v10005 = vsel %vm9021, %v10004, %v10003
  %v10006 = vrot.slane %v8929, 4
  %v10007 = vsel %vm9024, %v10006, %v10005
  %v10008 = vrot.slane %v8931, 3
  %v10009 = vsel %vm9027, %v10008, %v10007
  %v10010 = vrot.slane %v8933, 2
  %v10011 = vsel %vm9030, %v10010, %v10009
  %v10012 = vrot.slane %v8935, 1
  %v10013 = vsel %vm9033, %v10012, %v10011
  %v10014 = vsel %vm9036, %v8937, %v10013
  %v10015 = vrot.slane %v8939, 7
  %v10016 = vsel %vm9039, %v10015, %v10014
  %v10017 = vrot.slane %v8941, 6
  %v10018 = vrot.slane %v8943, 5
  %v10019 = vsel %vm9021, %v10018, %v10017
  %v10020 = vrot.slane %v8945, 4
  %v10021 = vsel %vm9024, %v10020, %v10019
  %v10022 = vrot.slane %v8947, 3
  %v10023 = vsel %vm9027, %v10022, %v10021
  %v10024 = vrot.slane %v8949, 2
  %v10025 = vsel %vm9030, %v10024, %v10023
  %v10026 = vrot.slane %v8951, 1
  %v10027 = vsel %vm9033, %v10026, %v10025
  %v10028 = vsel %vm9036, %v8953, %v10027
  %v10029 = vrot.slane %v8955, 7
  %v10030 = vsel %vm9039, %v10029, %v10028
  %v10031 = vrot.slane %v8957, 6
  %v10032 = vrot.slane %v8959, 5
  %v10033 = vsel %vm9021, %v10032, %v10031
  %v10034 = vrot.slane %v8961, 4
  %v10035 = vsel %vm9024, %v10034, %v10033
  %v10036 = vrot.slane %v8963, 3
  %v10037 = vsel %vm9027, %v10036, %v10035
  %v10038 = vrot.slane %v8965, 2
  %v10039 = vsel %vm9030, %v10038, %v10037
  %v10040 = vrot.slane %v8967, 1
  %v10041 = vsel %vm9033, %v10040, %v10039
  %v10042 = vsel %vm9036, %v8969, %v10041
  %v10043 = vrot.slane %v8971, 7
  %v10044 = vsel %vm9039, %v10043, %v10042
  %v10045 = vrot.slane %v8973, 6
  %v10046 = vrot.slane %v8975, 5
  %v10047 = vsel %vm9021, %v10046, %v10045
  %v10048 = vrot.slane %v8977, 4
  %v10049 = vsel %vm9024, %v10048, %v10047
  %v10050 = vrot.slane %v8979, 3
  %v10051 = vsel %vm9027, %v10050, %v10049
  %v10052 = vrot.slane %v8981, 2
  %v10053 = vsel %vm9030, %v10052, %v10051
  %v10054 = vrot.slane %v8983, 1
  %v10055 = vsel %vm9033, %v10054, %v10053
  %v10056 = vsel %vm9036, %v8985, %v10055
  %v10057 = vrot.slane %v8987, 7
  %v10058 = vsel %vm9039, %v10057, %v10056
  %10059 = vrot.lane.b32.xlu0 %v10016, 112
  %v10060 = vpop.permute.xlu0 %10059
  %10061 = vrot.lane.b32.xlu0 %v10030, 112
  %v10062 = vpop.permute.xlu0 %10061
  %10063 = vrot.lane.b32.xlu0 %v10044, 112
  %v10064 = vpop.permute.xlu0 %10063
  %10065 = vrot.lane.b32.xlu0 %v10058, 112
  %v10066 = vpop.permute.xlu0 %10065
  %v10071 = vrot.slane %v8925, 7
  %v10072 = vrot.slane %v8927, 6
  %v10073 = vsel %vm9021, %v10072, %v10071
  %v10074 = vrot.slane %v8929, 5
  %v10075 = vsel %vm9024, %v10074, %v10073
  %v10076 = vrot.slane %v8931, 4
  %v10077 = vsel %vm9027, %v10076, %v10075
  %v10078 = vrot.slane %v8933, 3
  %v10079 = vsel %vm9030, %v10078, %v10077
  %v10080 = vrot.slane %v8935, 2
  %v10081 = vsel %vm9033, %v10080, %v10079
  %v10082 = vrot.slane %v8937, 1
  %v10083 = vsel %vm9036, %v10082, %v10081
  %v10084 = vsel %vm9039, %v8939, %v10083
  %v10085 = vrot.slane %v8941, 7
  %v10086 = vrot.slane %v8943, 6
  %v10087 = vsel %vm9021, %v10086, %v10085
  %v10088 = vrot.slane %v8945, 5
  %v10089 = vsel %vm9024, %v10088, %v10087
  %v10090 = vrot.slane %v8947, 4
  %v10091 = vsel %vm9027, %v10090, %v10089
  %v10092 = vrot.slane %v8949, 3
  %v10093 = vsel %vm9030, %v10092, %v10091
  %v10094 = vrot.slane %v8951, 2
  %v10095 = vsel %vm9033, %v10094, %v10093
  %v10096 = vrot.slane %v8953, 1
  %v10097 = vsel %vm9036, %v10096, %v10095
  %v10098 = vsel %vm9039, %v8955, %v10097
  %v10099 = vrot.slane %v8957, 7
  %v10100 = vrot.slane %v8959, 6
  %v10101 = vsel %vm9021, %v10100, %v10099
  %v10102 = vrot.slane %v8961, 5
  %v10103 = vsel %vm9024, %v10102, %v10101
  %v10104 = vrot.slane %v8963, 4
  %v10105 = vsel %vm9027, %v10104, %v10103
  %v10106 = vrot.slane %v8965, 3
  %v10107 = vsel %vm9030, %v10106, %v10105
  %v10108 = vrot.slane %v8967, 2
  %v10109 = vsel %vm9033, %v10108, %v10107
  %v10110 = vrot.slane %v8969, 1
  %v10111 = vsel %vm9036, %v10110, %v10109
  %v10112 = vsel %vm9039, %v8971, %v10111
  %v10113 = vrot.slane %v8973, 7
  %v10114 = vrot.slane %v8975, 6
  %v10115 = vsel %vm9021, %v10114, %v10113
  %v10116 = vrot.slane %v8977, 5
  %v10117 = vsel %vm9024, %v10116, %v10115
  %v10118 = vrot.slane %v8979, 4
  %v10119 = vsel %vm9027, %v10118, %v10117
  %v10120 = vrot.slane %v8981, 3
  %v10121 = vsel %vm9030, %v10120, %v10119
  %v10122 = vrot.slane %v8983, 2
  %v10123 = vsel %vm9033, %v10122, %v10121
  %v10124 = vrot.slane %v8985, 1
  %v10125 = vsel %vm9036, %v10124, %v10123
  %v10126 = vsel %vm9039, %v8987, %v10125
  %10127 = vrot.lane.b32.xlu0 %v10084, 120
  %v10128 = vpop.permute.xlu0 %10127
  %10129 = vrot.lane.b32.xlu0 %v10098, 120
  %v10130 = vpop.permute.xlu0 %10129
  %10131 = vrot.lane.b32.xlu0 %v10112, 120
  %v10132 = vpop.permute.xlu0 %10131
  %10133 = vrot.lane.b32.xlu0 %v10126, 120
  %v10134 = vpop.permute.xlu0 %10133
  %v10139 = vsel %vm2954, %v9040, %v9144
  %v10140 = vsel %vm2954, %v9054, %v9146
  %v10141 = vsel %vm2954, %v9068, %v9148
  %v10142 = vsel %vm2954, %v9082, %v9150
  %v10143 = vsel %vm3084, %v10139, %v9212
  %v10144 = vsel %vm3084, %v10140, %v9214
  %v10145 = vsel %vm3084, %v10141, %v9216
  %v10146 = vsel %vm3084, %v10142, %v9218
  %v10147 = vsel %vm3214, %v10143, %v9280
  %v10148 = vsel %vm3214, %v10144, %v9282
  %v10149 = vsel %vm3214, %v10145, %v9284
  %v10150 = vsel %vm3214, %v10146, %v9286
  %v10151 = vsel %vm3344, %v10147, %v9348
  %v10152 = vsel %vm3344, %v10148, %v9350
  %v10153 = vsel %vm3344, %v10149, %v9352
  %v10154 = vsel %vm3344, %v10150, %v9354
  %v10155 = vsel %vm7596, %v10151, %v9416
  %v10156 = vsel %vm7596, %v10152, %v9418
  %v10157 = vsel %vm7596, %v10153, %v9420
  %v10158 = vsel %vm7596, %v10154, %v9422
  %v10159 = vsel %vm7661, %v10155, %v9484
  %v10160 = vsel %vm7661, %v10156, %v9486
  %v10161 = vsel %vm7661, %v10157, %v9488
  %v10162 = vsel %vm7661, %v10158, %v9490
  %v10163 = vsel %vm7726, %v10159, %v9552
  %v10164 = vsel %vm7726, %v10160, %v9554
  %v10165 = vsel %vm7726, %v10161, %v9556
  %v10166 = vsel %vm7726, %v10162, %v9558
  %v10167 = vsel %vm7791, %v10163, %v9652
  %v10168 = vsel %vm7791, %v10164, %v9654
  %v10169 = vsel %vm7791, %v10165, %v9656
  %v10170 = vsel %vm7791, %v10166, %v9658
  %v10171 = vsel %vm7865, %v10167, %v9720
  %v10172 = vsel %vm7865, %v10168, %v9722
  %v10173 = vsel %vm7865, %v10169, %v9724
  %v10174 = vsel %vm7865, %v10170, %v9726
  %vm10175 = vcmask 654336
  %v10176 = vsel %vm10175, %v10171, %v9788
  %v10177 = vsel %vm10175, %v10172, %v9790
  %v10178 = vsel %vm10175, %v10173, %v9792
  %v10179 = vsel %vm10175, %v10174, %v9794
  %vm10180 = vcmask 719872
  %v10181 = vsel %vm10180, %v10176, %v9856
  %v10182 = vsel %vm10180, %v10177, %v9858
  %v10183 = vsel %vm10180, %v10178, %v9860
  %v10184 = vsel %vm10180, %v10179, %v9862
  %vm10185 = vcmask 785408
  %v10186 = vsel %vm10185, %v10181, %v9924
  %v10187 = vsel %vm10185, %v10182, %v9926
  %v10188 = vsel %vm10185, %v10183, %v9928
  %v10189 = vsel %vm10185, %v10184, %v9930
  %vm10190 = vcmask 850944
  %v10191 = vsel %vm10190, %v10186, %v9992
  %v10192 = vsel %vm10190, %v10187, %v9994
  %v10193 = vsel %vm10190, %v10188, %v9996
  %v10194 = vsel %vm10190, %v10189, %v9998
  %vm10195 = vcmask 916480
  %v10196 = vsel %vm10195, %v10191, %v10060
  %v10197 = vsel %vm10195, %v10192, %v10062
  %v10198 = vsel %vm10195, %v10193, %v10064
  %v10199 = vsel %vm10195, %v10194, %v10066
  %vm10200 = vcmask 982016
  %v10201 = vsel %vm10200, %v10196, %v10128
  %v10202 = vsel %vm10200, %v10197, %v10130
  %v10203 = vsel %vm10200, %v10198, %v10132
  %v10204 = vsel %vm10200, %v10199, %v10134
  %10205 = vst [vmem:[%s7] sm:$0xff] %v10201
  %10206 = vst [vmem:[%s7 + $0x8] sm:$0xff] %v10202
  %10207 = vst [vmem:[%s7 + $0x10] sm:$0xff] %v10203
  %10208 = vst [vmem:[%s7 + $0x18] sm:$0xff] %v10204
  // Predicated region
  $region30: #{double_conv_forward.1} parent=0 // pred_check
    _
  $region31: #{double_conv_forward.1} parent=0 // pred_check_branch
    %10210 = sbr.rel (0) target = $region33
  $region32: #{double_conv_forward.1} parent=0 // pred_region
    _
  $region33: #{double_conv_forward.1} parent=0 // pred_fallthru
    _
  // Predicated region
  $region34: #{double_conv_forward.1} parent=0 // pred_check
    _
  $region35: #{double_conv_forward.1} parent=0 // pred_check_branch
    %10212 = sbr.rel (0) target = $region37
  $region36: #{double_conv_forward.1} parent=0 // pred_region
    _
  $region37: #{double_conv_forward.1} parent=0 // pred_fallthru
    _

</llo_original>
